<compile_context>
chip_gen: v7x
topology: tpu7x:2x2x1
jax: 0.10.0
libtpu: 0.0.40
codegen_flags: <defaults>
</compile_context>

<pallas_src>
import jax
import jax.numpy as jnp
from jax.experimental import pallas as pl
from jax.experimental.pallas import tpu as pltpu


def conv_relu_pool_kernel(p_ref, w_ref, b_ref, o_ref):
    """Fused 3x3 valid conv (im2col matmul) + 2x2/2 maxpool + bias + ReLU.

    p_ref: (1, 4, P, 9*Cin) bf16 -- 4 = 2x2 pool-window offsets, P = Hp*Wp
    w_ref: (9*Cin, Cout)    bf16
    b_ref: (1, Cout)        f32
    o_ref: (1, P, Cout)     bf16
    """
    w = w_ref[...]
    m = None
    for q in range(4):  # static unroll over the 2x2 pooling window (Ref views, no relayout)
        v = jnp.dot(p_ref[0, q], w, preferred_element_type=jnp.float32)
        m = v if m is None else jnp.maximum(m, v)
    # bias + ReLU after the max: max_q ReLU(v_q + b) == ReLU(max_q v_q + b)
    o_ref[0] = jnp.maximum(m + b_ref[...], 0.0).astype(o_ref.dtype)


def conv_relu_pool(patches, w, b):
    N, _, P, K = patches.shape
    Cout = w.shape[1]
    return pl.pallas_call(
        conv_relu_pool_kernel,
        out_shape=jax.ShapeDtypeStruct((N, P, Cout), jnp.bfloat16),
        grid=(N,),
        in_specs=[
            pl.BlockSpec((1, 4, P, K), lambda n: (n, 0, 0, 0)),
            pl.BlockSpec((K, Cout), lambda n: (0, 0)),
            pl.BlockSpec((1, Cout), lambda n: (0, 0)),
        ],
        out_specs=pl.BlockSpec((1, P, Cout), lambda n: (n, 0, 0)),
        compiler_params=pltpu.CompilerParams(dimension_semantics=("parallel",)),
    )(patches, w, b)


def conv_gap_classifier_kernel(p_ref, w4_ref, b4_ref, w1_ref, b1_ref,
                               w2_ref, b2_ref, o_ref):
    """Conv block 4 + adaptive_avg_pool2d(.,1) + Linear(256->128) + Linear(128->nc).

    p_ref: (1, 4, P, 9*128) bf16; o_ref: (1, 1, num_classes) f32.
    """
    w4 = w4_ref[...]
    m = None
    for q in range(4):
        v = jnp.dot(p_ref[0, q], w4, preferred_element_type=jnp.float32)
        m = v if m is None else jnp.maximum(m, v)
    y = jnp.maximum(m + b4_ref[...], 0.0)            # (P, 256) f32
    g = jnp.mean(y, axis=0, keepdims=True)           # global average pool -> (1, 256)
    h = jnp.dot(g.astype(jnp.bfloat16), w1_ref[...],
                preferred_element_type=jnp.float32) + b1_ref[...]
    # TODO(synk): nn.Dropout2d(p=0.4) is identity at inference time; not applied.
    o = jnp.dot(h.astype(jnp.bfloat16), w2_ref[...],
                preferred_element_type=jnp.float32) + b2_ref[...]
    o_ref[0] = o.astype(o_ref.dtype)


def conv_gap_classifier(patches, w4, b4, w1, b1, w2, b2):
    N, _, P, K = patches.shape
    C4 = w4.shape[1]
    nc = w2.shape[1]
    return pl.pallas_call(
        conv_gap_classifier_kernel,
        out_shape=jax.ShapeDtypeStruct((N, 1, nc), jnp.float32),
        grid=(N,),
        in_specs=[
            pl.BlockSpec((1, 4, P, K), lambda n: (n, 0, 0, 0)),
            pl.BlockSpec((K, C4), lambda n: (0, 0)),
            pl.BlockSpec((1, C4), lambda n: (0, 0)),
            pl.BlockSpec(w1.shape, lambda n: (0, 0)),
            pl.BlockSpec(b1.shape, lambda n: (0, 0)),
            pl.BlockSpec(w2.shape, lambda n: (0, 0)),
            pl.BlockSpec(b2.shape, lambda n: (0, 0)),
        ],
        out_specs=pl.BlockSpec((1, 1, nc), lambda n: (n, 0, 0)),
        compiler_params=pltpu.CompilerParams(dimension_semantics=("parallel",)),
    )(patches, w4, b4, w1, b1, w2, b2)


def extract_pool_patches(x):
    """Glue (plain JAX): im2col taps for a 3x3 valid conv, grouped by the 4
    pixels of each 2x2 pooling window.

    x: (N, H, W, Cin) -> patches (N, 4, Hp*Wp, 9*Cin), plus (Hp, Wp).
    """
    N, H, W, Cin = x.shape
    Hc, Wc = H - 2, W - 2
    Hp, Wp = Hc // 2, Wc // 2
    # taps ordered (dy, dx) row-major, concatenated on channels -> matches the
    # (dy*3+dx)*Cin + cin flattening of the HWIO conv weight.
    taps = [x[:, dy:dy + Hc, dx:dx + Wc, :] for dy in range(3) for dx in range(3)]
    big = jnp.concatenate(taps, axis=-1)                      # (N, Hc, Wc, 9*Cin)
    groups = [big[:, oh:oh + 2 * Hp:2, ow:ow + 2 * Wp:2, :]
              for oh in range(2) for ow in range(2)]          # 4 x (N, Hp, Wp, 9*Cin)
    p = jnp.stack(groups, axis=1)                             # (N, 4, Hp, Wp, 9*Cin)
    return p.reshape(N, 4, Hp * Wp, 9 * Cin), (Hp, Wp)


def init_params(key, num_classes):
    chans = [3, 32, 64, 128, 256]
    params = {"conv": []}
    for i in range(4):
        cin, cout = chans[i], chans[i + 1]
        key, kw = jax.random.split(key)
        fan_in = 9 * cin
        w = jax.random.normal(kw, (3, 3, cin, cout), jnp.float32) * (2.0 / fan_in) ** 0.5
        # HWIO -> (9*Cin, Cout); row index = (dy*3+dx)*Cin + cin, matching the
        # tap order of extract_pool_patches.  (Real PyTorch weights are OIHW and
        # would need a (2,3,1,0) permute to HWIO before this reshape.)
        params["conv"].append((w.reshape(9 * cin, cout).astype(jnp.bfloat16),
                               jnp.zeros((1, cout), jnp.float32)))
    key, k1, k2 = jax.random.split(key, 3)
    params["fc1"] = ((jax.random.normal(k1, (256, 128), jnp.float32)
                      * (1.0 / 256) ** 0.5).astype(jnp.bfloat16),
                     jnp.zeros((1, 128), jnp.float32))
    params["fc2"] = ((jax.random.normal(k2, (128, num_classes), jnp.float32)
                      * (1.0 / 128) ** 0.5).astype(jnp.bfloat16),
                     jnp.zeros((1, num_classes), jnp.float32))
    return params


@jax.jit
def medical_mnist_cnn_forward(x_nchw, params):
    # NCHW at the boundary (PyTorch); NHWC + bf16 inside (channels on lanes).
    x = jnp.transpose(x_nchw, (0, 2, 3, 1)).astype(jnp.bfloat16)
    N = x.shape[0]
    for w, b in params["conv"][:3]:
        patches, (hp, wp) = extract_pool_patches(x)
        y = conv_relu_pool(patches, w, b)                     # (N, Hp*Wp, Cout)
        x = y.reshape(N, hp, wp, w.shape[1])
    patches, _ = extract_pool_patches(x)                      # layer-4 patches
    w4, b4 = params["conv"][3]
    w1, b1 = params["fc1"]
    w2, b2 = params["fc2"]
    out = conv_gap_classifier(patches, w4, b4, w1, b1, w2, b2)  # (N, 1, nc)
    return out.reshape(N, w2.shape[1])


if __name__ == "__main__":
    key = jax.random.PRNGKey(0)
    kx, kp = jax.random.split(key)
    num_classes = 6
    # 48x48 is the smallest "round" spatial size surviving 4x (conv3x3 valid + pool2):
    # 48 -> 23 -> 10 -> 4 -> 1.
    x = jax.random.normal(kx, (2, 3, 48, 48), jnp.float32)
    params = init_params(kp, num_classes)
    out = jax.block_until_ready(medical_mnist_cnn_forward(x, params))
    assert out.shape == (2, num_classes), out.shape
    print("KERNEL_OK")
</pallas_src>

<mosaic_0001>
module attributes {stable_mosaic.version = 11 : i64} {
  func.func @conv_relu_pool_kernel(%arg0: i32, %arg1: memref<1x4x529x27xbf16, #tpu.memory_space<vmem>>, %arg2: memref<27x32xbf16, #tpu.memory_space<vmem>>, %arg3: memref<1x32xf32, #tpu.memory_space<vmem>>, %arg4: memref<1x529x32xbf16, #tpu.memory_space<vmem>>) attributes {dimension_semantics = [#tpu.dimension_semantics<parallel>], iteration_bounds = array<i64: 2>, scalar_prefetch = 0 : i64, scratch_operands = 0 : i64, tpu.core_type = #tpu.core_type<tc>, window_params = [{transform_indices = @transform_0, window_bounds = array<i64: 1, 4, 529, 27>}, {pipeline_mode = #tpu.pipeline_mode<synchronous>, transform_indices = @transform_1, window_bounds = array<i64: 27, 32>}, {pipeline_mode = #tpu.pipeline_mode<synchronous>, transform_indices = @transform_2, window_bounds = array<i64: 1, 32>}, {transform_indices = @transform_3, window_bounds = array<i64: 1, 529, 32>}]} {
    %c0 = arith.constant 0 : index
    %c0_0 = arith.constant 0 : index
    %0 = vector.load %arg2[%c0, %c0_0] : memref<27x32xbf16, #tpu.memory_space<vmem>>, vector<27x32xbf16>
    %c0_1 = arith.constant 0 : index
    %c0_2 = arith.constant 0 : index
    %c0_3 = arith.constant 0 : index
    %c0_4 = arith.constant 0 : index
    %1 = vector.load %arg1[%c0_1, %c0_2, %c0_3, %c0_4] : memref<1x4x529x27xbf16, #tpu.memory_space<vmem>>, vector<1x1x529x27xbf16>
    %2 = vector.shape_cast %1 : vector<1x1x529x27xbf16> to vector<529x27xbf16>
    %cst = arith.constant dense<0.000000e+00> : vector<529x32xf32>
    %3 = tpu.matmul %2, %0, %cst {dimension_numbers = #tpu.dot_dimension_numbers<[1], [0], [0], [1], [0, 0, 1, 1], [], []>} : vector<529x27xbf16>, vector<27x32xbf16>, vector<529x32xf32> -> vector<529x32xf32>
    %c0_5 = arith.constant 0 : index
    %c1 = arith.constant 1 : index
    %c0_6 = arith.constant 0 : index
    %c0_7 = arith.constant 0 : index
    %4 = vector.load %arg1[%c0_5, %c1, %c0_6, %c0_7] : memref<1x4x529x27xbf16, #tpu.memory_space<vmem>>, vector<1x1x529x27xbf16>
    %5 = vector.shape_cast %4 : vector<1x1x529x27xbf16> to vector<529x27xbf16>
    %cst_8 = arith.constant dense<0.000000e+00> : vector<529x32xf32>
    %6 = tpu.matmul %5, %0, %cst_8 {dimension_numbers = #tpu.dot_dimension_numbers<[1], [0], [0], [1], [0, 0, 1, 1], [], []>} : vector<529x27xbf16>, vector<27x32xbf16>, vector<529x32xf32> -> vector<529x32xf32>
    %7 = arith.maximumf %3, %6 : vector<529x32xf32>
    %c0_9 = arith.constant 0 : index
    %c2 = arith.constant 2 : index
    %c0_10 = arith.constant 0 : index
    %c0_11 = arith.constant 0 : index
    %8 = vector.load %arg1[%c0_9, %c2, %c0_10, %c0_11] : memref<1x4x529x27xbf16, #tpu.memory_space<vmem>>, vector<1x1x529x27xbf16>
    %9 = vector.shape_cast %8 : vector<1x1x529x27xbf16> to vector<529x27xbf16>
    %cst_12 = arith.constant dense<0.000000e+00> : vector<529x32xf32>
    %10 = tpu.matmul %9, %0, %cst_12 {dimension_numbers = #tpu.dot_dimension_numbers<[1], [0], [0], [1], [0, 0, 1, 1], [], []>} : vector<529x27xbf16>, vector<27x32xbf16>, vector<529x32xf32> -> vector<529x32xf32>
    %11 = arith.maximumf %7, %10 : vector<529x32xf32>
    %c0_13 = arith.constant 0 : index
    %c3 = arith.constant 3 : index
    %c0_14 = arith.constant 0 : index
    %c0_15 = arith.constant 0 : index
    %12 = vector.load %arg1[%c0_13, %c3, %c0_14, %c0_15] : memref<1x4x529x27xbf16, #tpu.memory_space<vmem>>, vector<1x1x529x27xbf16>
    %13 = vector.shape_cast %12 : vector<1x1x529x27xbf16> to vector<529x27xbf16>
    %cst_16 = arith.constant dense<0.000000e+00> : vector<529x32xf32>
    %14 = tpu.matmul %13, %0, %cst_16 {dimension_numbers = #tpu.dot_dimension_numbers<[1], [0], [0], [1], [0, 0, 1, 1], [], []>} : vector<529x27xbf16>, vector<27x32xbf16>, vector<529x32xf32> -> vector<529x32xf32>
    %15 = arith.maximumf %11, %14 : vector<529x32xf32>
    %c0_17 = arith.constant 0 : index
    %c0_18 = arith.constant 0 : index
    %16 = vector.load %arg3[%c0_17, %c0_18] : memref<1x32xf32, #tpu.memory_space<vmem>>, vector<1x32xf32>
    %17 = vector.broadcast %16 : vector<1x32xf32> to vector<529x32xf32>
    %18 = arith.addf %15, %17 : vector<529x32xf32>
    %cst_19 = arith.constant 0.000000e+00 : f32
    %19 = vector.broadcast %cst_19 : f32 to vector<529x32xf32>
    %20 = arith.maximumf %18, %19 : vector<529x32xf32>
    %21 = arith.truncf %20 : vector<529x32xf32> to vector<529x32xbf16>
    %c0_20 = arith.constant 0 : index
    %c0_21 = arith.constant 0 : index
    %c0_22 = arith.constant 0 : index
    %22 = vector.load %arg4[%c0_20, %c0_21, %c0_22] : memref<1x529x32xbf16, #tpu.memory_space<vmem>>, vector<1x529x32xbf16>
    %23 = vector.shape_cast %22 : vector<1x529x32xbf16> to vector<529x32xbf16>
    %24 = vector.shape_cast %21 : vector<529x32xbf16> to vector<1x529x32xbf16>
    tpu.vector_store %arg4[%c0_20, %c0_21, %c0_22], %24 {strides = array<i32>} : memref<1x529x32xbf16, #tpu.memory_space<vmem>>, vector<1x529x32xbf16>,
    return
  }
  func.func @transform_0(%arg0: i32) -> (i32, i32, i32, i32) {
    %c0_i32 = arith.constant 0 : i32
    %c0_i32_0 = arith.constant 0 : i32
    %c0_i32_1 = arith.constant 0 : i32
    %c0_i32_2 = arith.constant 0 : i32
    return %arg0, %c0_i32, %c0_i32_0, %c0_i32_1 : i32, i32, i32, i32
  }
  func.func @transform_1(%arg0: i32) -> (i32, i32) {
    %c0_i32 = arith.constant 0 : i32
    %c0_i32_0 = arith.constant 0 : i32
    %c0_i32_1 = arith.constant 0 : i32
    return %c0_i32, %c0_i32_0 : i32, i32
  }
  func.func @transform_2(%arg0: i32) -> (i32, i32) {
    %c0_i32 = arith.constant 0 : i32
    %c0_i32_0 = arith.constant 0 : i32
    %c0_i32_1 = arith.constant 0 : i32
    return %c0_i32, %c0_i32_0 : i32, i32
  }
  func.func @transform_3(%arg0: i32) -> (i32, i32, i32) {
    %c0_i32 = arith.constant 0 : i32
    %c0_i32_0 = arith.constant 0 : i32
    %c0_i32_1 = arith.constant 0 : i32
    return %arg0, %c0_i32, %c0_i32_0 : i32, i32, i32
  }
}

module attributes {stable_mosaic.version = 11 : i64} {
  func.func @conv_relu_pool_kernel(%arg0: i32, %arg1: memref<1x4x100x288xbf16, #tpu.memory_space<vmem>>, %arg2: memref<288x64xbf16, #tpu.memory_space<vmem>>, %arg3: memref<1x64xf32, #tpu.memory_space<vmem>>, %arg4: memref<1x100x64xbf16, #tpu.memory_space<vmem>>) attributes {dimension_semantics = [#tpu.dimension_semantics<parallel>], iteration_bounds = array<i64: 2>, scalar_prefetch = 0 : i64, scratch_operands = 0 : i64, tpu.core_type = #tpu.core_type<tc>, window_params = [{transform_indices = @transform_0, window_bounds = array<i64: 1, 4, 100, 288>}, {pipeline_mode = #tpu.pipeline_mode<synchronous>, transform_indices = @transform_1, window_bounds = array<i64: 288, 64>}, {pipeline_mode = #tpu.pipeline_mode<synchronous>, transform_indices = @transform_2, window_bounds = array<i64: 1, 64>}, {transform_indices = @transform_3, window_bounds = array<i64: 1, 100, 64>}]} {
    %c0 = arith.constant 0 : index
    %c0_0 = arith.constant 0 : index
    %0 = vector.load %arg2[%c0, %c0_0] : memref<288x64xbf16, #tpu.memory_space<vmem>>, vector<288x64xbf16>
    %c0_1 = arith.constant 0 : index
    %c0_2 = arith.constant 0 : index
    %c0_3 = arith.constant 0 : index
    %c0_4 = arith.constant 0 : index
    %1 = vector.load %arg1[%c0_1, %c0_2, %c0_3, %c0_4] : memref<1x4x100x288xbf16, #tpu.memory_space<vmem>>, vector<1x1x100x288xbf16>
    %2 = vector.shape_cast %1 : vector<1x1x100x288xbf16> to vector<100x288xbf16>
    %cst = arith.constant dense<0.000000e+00> : vector<100x64xf32>
    %3 = tpu.matmul %2, %0, %cst {dimension_numbers = #tpu.dot_dimension_numbers<[1], [0], [0], [1], [0, 0, 1, 1], [], []>} : vector<100x288xbf16>, vector<288x64xbf16>, vector<100x64xf32> -> vector<100x64xf32>
    %c0_5 = arith.constant 0 : index
    %c1 = arith.constant 1 : index
    %c0_6 = arith.constant 0 : index
    %c0_7 = arith.constant 0 : index
    %4 = vector.load %arg1[%c0_5, %c1, %c0_6, %c0_7] : memref<1x4x100x288xbf16, #tpu.memory_space<vmem>>, vector<1x1x100x288xbf16>
    %5 = vector.shape_cast %4 : vector<1x1x100x288xbf16> to vector<100x288xbf16>
    %cst_8 = arith.constant dense<0.000000e+00> : vector<100x64xf32>
    %6 = tpu.matmul %5, %0, %cst_8 {dimension_numbers = #tpu.dot_dimension_numbers<[1], [0], [0], [1], [0, 0, 1, 1], [], []>} : vector<100x288xbf16>, vector<288x64xbf16>, vector<100x64xf32> -> vector<100x64xf32>
    %7 = arith.maximumf %3, %6 : vector<100x64xf32>
    %c0_9 = arith.constant 0 : index
    %c2 = arith.constant 2 : index
    %c0_10 = arith.constant 0 : index
    %c0_11 = arith.constant 0 : index
    %8 = vector.load %arg1[%c0_9, %c2, %c0_10, %c0_11] : memref<1x4x100x288xbf16, #tpu.memory_space<vmem>>, vector<1x1x100x288xbf16>
    %9 = vector.shape_cast %8 : vector<1x1x100x288xbf16> to vector<100x288xbf16>
    %cst_12 = arith.constant dense<0.000000e+00> : vector<100x64xf32>
    %10 = tpu.matmul %9, %0, %cst_12 {dimension_numbers = #tpu.dot_dimension_numbers<[1], [0], [0], [1], [0, 0, 1, 1], [], []>} : vector<100x288xbf16>, vector<288x64xbf16>, vector<100x64xf32> -> vector<100x64xf32>
    %11 = arith.maximumf %7, %10 : vector<100x64xf32>
    %c0_13 = arith.constant 0 : index
    %c3 = arith.constant 3 : index
    %c0_14 = arith.constant 0 : index
    %c0_15 = arith.constant 0 : index
    %12 = vector.load %arg1[%c0_13, %c3, %c0_14, %c0_15] : memref<1x4x100x288xbf16, #tpu.memory_space<vmem>>, vector<1x1x100x288xbf16>
    %13 = vector.shape_cast %12 : vector<1x1x100x288xbf16> to vector<100x288xbf16>
    %cst_16 = arith.constant dense<0.000000e+00> : vector<100x64xf32>
    %14 = tpu.matmul %13, %0, %cst_16 {dimension_numbers = #tpu.dot_dimension_numbers<[1], [0], [0], [1], [0, 0, 1, 1], [], []>} : vector<100x288xbf16>, vector<288x64xbf16>, vector<100x64xf32> -> vector<100x64xf32>
    %15 = arith.maximumf %11, %14 : vector<100x64xf32>
    %c0_17 = arith.constant 0 : index
    %c0_18 = arith.constant 0 : index
    %16 = vector.load %arg3[%c0_17, %c0_18] : memref<1x64xf32, #tpu.memory_space<vmem>>, vector<1x64xf32>
    %17 = vector.broadcast %16 : vector<1x64xf32> to vector<100x64xf32>
    %18 = arith.addf %15, %17 : vector<100x64xf32>
    %cst_19 = arith.constant 0.000000e+00 : f32
    %19 = vector.broadcast %cst_19 : f32 to vector<100x64xf32>
    %20 = arith.maximumf %18, %19 : vector<100x64xf32>
    %21 = arith.truncf %20 : vector<100x64xf32> to vector<100x64xbf16>
    %c0_20 = arith.constant 0 : index
    %c0_21 = arith.constant 0 : index
    %c0_22 = arith.constant 0 : index
    %22 = vector.load %arg4[%c0_20, %c0_21, %c0_22] : memref<1x100x64xbf16, #tpu.memory_space<vmem>>, vector<1x100x64xbf16>
    %23 = vector.shape_cast %22 : vector<1x100x64xbf16> to vector<100x64xbf16>
    %24 = vector.shape_cast %21 : vector<100x64xbf16> to vector<1x100x64xbf16>
    tpu.vector_store %arg4[%c0_20, %c0_21, %c0_22], %24 {strides = array<i32>} : memref<1x100x64xbf16, #tpu.memory_space<vmem>>, vector<1x100x64xbf16>,
    return
  }
  func.func @transform_0(%arg0: i32) -> (i32, i32, i32, i32) {
    %c0_i32 = arith.constant 0 : i32
    %c0_i32_0 = arith.constant 0 : i32
    %c0_i32_1 = arith.constant 0 : i32
    %c0_i32_2 = arith.constant 0 : i32
    return %arg0, %c0_i32, %c0_i32_0, %c0_i32_1 : i32, i32, i32, i32
  }
  func.func @transform_1(%arg0: i32) -> (i32, i32) {
    %c0_i32 = arith.constant 0 : i32
    %c0_i32_0 = arith.constant 0 : i32
    %c0_i32_1 = arith.constant 0 : i32
    return %c0_i32, %c0_i32_0 : i32, i32
  }
  func.func @transform_2(%arg0: i32) -> (i32, i32) {
    %c0_i32 = arith.constant 0 : i32
    %c0_i32_0 = arith.constant 0 : i32
    %c0_i32_1 = arith.constant 0 : i32
    return %c0_i32, %c0_i32_0 : i32, i32
  }
  func.func @transform_3(%arg0: i32) -> (i32, i32, i32) {
    %c0_i32 = arith.constant 0 : i32
    %c0_i32_0 = arith.constant 0 : i32
    %c0_i32_1 = arith.constant 0 : i32
    return %arg0, %c0_i32, %c0_i32_0 : i32, i32, i32
  }
}

module attributes {stable_mosaic.version = 11 : i64} {
  func.func @conv_relu_pool_kernel(%arg0: i32, %arg1: memref<1x4x16x576xbf16, #tpu.memory_space<vmem>>, %arg2: memref<576x128xbf16, #tpu.memory_space<vmem>>, %arg3: memref<1x128xf32, #tpu.memory_space<vmem>>, %arg4: memref<1x16x128xbf16, #tpu.memory_space<vmem>>) attributes {dimension_semantics = [#tpu.dimension_semantics<parallel>], iteration_bounds = array<i64: 2>, scalar_prefetch = 0 : i64, scratch_operands = 0 : i64, tpu.core_type = #tpu.core_type<tc>, window_params = [{transform_indices = @transform_0, window_bounds = array<i64: 1, 4, 16, 576>}, {pipeline_mode = #tpu.pipeline_mode<synchronous>, transform_indices = @transform_1, window_bounds = array<i64: 576, 128>}, {pipeline_mode = #tpu.pipeline_mode<synchronous>, transform_indices = @transform_2, window_bounds = array<i64: 1, 128>}, {transform_indices = @transform_3, window_bounds = array<i64: 1, 16, 128>}]} {
    %c0 = arith.constant 0 : index
    %c0_0 = arith.constant 0 : index
    %0 = vector.load %arg2[%c0, %c0_0] : memref<576x128xbf16, #tpu.memory_space<vmem>>, vector<576x128xbf16>
    %c0_1 = arith.constant 0 : index
    %c0_2 = arith.constant 0 : index
    %c0_3 = arith.constant 0 : index
    %c0_4 = arith.constant 0 : index
    %1 = vector.load %arg1[%c0_1, %c0_2, %c0_3, %c0_4] : memref<1x4x16x576xbf16, #tpu.memory_space<vmem>>, vector<1x1x16x576xbf16>
    %2 = vector.shape_cast %1 : vector<1x1x16x576xbf16> to vector<16x576xbf16>
    %cst = arith.constant dense<0.000000e+00> : vector<16x128xf32>
    %3 = tpu.matmul %2, %0, %cst {dimension_numbers = #tpu.dot_dimension_numbers<[1], [0], [0], [1], [0, 0, 1, 1], [], []>} : vector<16x576xbf16>, vector<576x128xbf16>, vector<16x128xf32> -> vector<16x128xf32>
    %c0_5 = arith.constant 0 : index
    %c1 = arith.constant 1 : index
    %c0_6 = arith.constant 0 : index
    %c0_7 = arith.constant 0 : index
    %4 = vector.load %arg1[%c0_5, %c1, %c0_6, %c0_7] : memref<1x4x16x576xbf16, #tpu.memory_space<vmem>>, vector<1x1x16x576xbf16>
    %5 = vector.shape_cast %4 : vector<1x1x16x576xbf16> to vector<16x576xbf16>
    %cst_8 = arith.constant dense<0.000000e+00> : vector<16x128xf32>
    %6 = tpu.matmul %5, %0, %cst_8 {dimension_numbers = #tpu.dot_dimension_numbers<[1], [0], [0], [1], [0, 0, 1, 1], [], []>} : vector<16x576xbf16>, vector<576x128xbf16>, vector<16x128xf32> -> vector<16x128xf32>
    %7 = arith.maximumf %3, %6 : vector<16x128xf32>
    %c0_9 = arith.constant 0 : index
    %c2 = arith.constant 2 : index
    %c0_10 = arith.constant 0 : index
    %c0_11 = arith.constant 0 : index
    %8 = vector.load %arg1[%c0_9, %c2, %c0_10, %c0_11] : memref<1x4x16x576xbf16, #tpu.memory_space<vmem>>, vector<1x1x16x576xbf16>
    %9 = vector.shape_cast %8 : vector<1x1x16x576xbf16> to vector<16x576xbf16>
    %cst_12 = arith.constant dense<0.000000e+00> : vector<16x128xf32>
    %10 = tpu.matmul %9, %0, %cst_12 {dimension_numbers = #tpu.dot_dimension_numbers<[1], [0], [0], [1], [0, 0, 1, 1], [], []>} : vector<16x576xbf16>, vector<576x128xbf16>, vector<16x128xf32> -> vector<16x128xf32>
    %11 = arith.maximumf %7, %10 : vector<16x128xf32>
    %c0_13 = arith.constant 0 : index
    %c3 = arith.constant 3 : index
    %c0_14 = arith.constant 0 : index
    %c0_15 = arith.constant 0 : index
    %12 = vector.load %arg1[%c0_13, %c3, %c0_14, %c0_15] : memref<1x4x16x576xbf16, #tpu.memory_space<vmem>>, vector<1x1x16x576xbf16>
    %13 = vector.shape_cast %12 : vector<1x1x16x576xbf16> to vector<16x576xbf16>
    %cst_16 = arith.constant dense<0.000000e+00> : vector<16x128xf32>
    %14 = tpu.matmul %13, %0, %cst_16 {dimension_numbers = #tpu.dot_dimension_numbers<[1], [0], [0], [1], [0, 0, 1, 1], [], []>} : vector<16x576xbf16>, vector<576x128xbf16>, vector<16x128xf32> -> vector<16x128xf32>
    %15 = arith.maximumf %11, %14 : vector<16x128xf32>
    %c0_17 = arith.constant 0 : index
    %c0_18 = arith.constant 0 : index
    %16 = vector.load %arg3[%c0_17, %c0_18] : memref<1x128xf32, #tpu.memory_space<vmem>>, vector<1x128xf32>
    %17 = vector.broadcast %16 : vector<1x128xf32> to vector<16x128xf32>
    %18 = arith.addf %15, %17 : vector<16x128xf32>
    %cst_19 = arith.constant 0.000000e+00 : f32
    %19 = vector.broadcast %cst_19 : f32 to vector<16x128xf32>
    %20 = arith.maximumf %18, %19 : vector<16x128xf32>
    %21 = arith.truncf %20 : vector<16x128xf32> to vector<16x128xbf16>
    %c0_20 = arith.constant 0 : index
    %c0_21 = arith.constant 0 : index
    %c0_22 = arith.constant 0 : index
    %22 = vector.load %arg4[%c0_20, %c0_21, %c0_22] : memref<1x16x128xbf16, #tpu.memory_space<vmem>>, vector<1x16x128xbf16>
    %23 = vector.shape_cast %22 : vector<1x16x128xbf16> to vector<16x128xbf16>
    %24 = vector.shape_cast %21 : vector<16x128xbf16> to vector<1x16x128xbf16>
    tpu.vector_store %arg4[%c0_20, %c0_21, %c0_22], %24 {strides = array<i32>} : memref<1x16x128xbf16, #tpu.memory_space<vmem>>, vector<1x16x128xbf16>,
    return
  }
  func.func @transform_0(%arg0: i32) -> (i32, i32, i32, i32) {
    %c0_i32 = arith.constant 0 : i32
    %c0_i32_0 = arith.constant 0 : i32
    %c0_i32_1 = arith.constant 0 : i32
    %c0_i32_2 = arith.constant 0 : i32
    return %arg0, %c0_i32, %c0_i32_0, %c0_i32_1 : i32, i32, i32, i32
  }
  func.func @transform_1(%arg0: i32) -> (i32, i32) {
    %c0_i32 = arith.constant 0 : i32
    %c0_i32_0 = arith.constant 0 : i32
    %c0_i32_1 = arith.constant 0 : i32
    return %c0_i32, %c0_i32_0 : i32, i32
  }
  func.func @transform_2(%arg0: i32) -> (i32, i32) {
    %c0_i32 = arith.constant 0 : i32
    %c0_i32_0 = arith.constant 0 : i32
    %c0_i32_1 = arith.constant 0 : i32
    return %c0_i32, %c0_i32_0 : i32, i32
  }
  func.func @transform_3(%arg0: i32) -> (i32, i32, i32) {
    %c0_i32 = arith.constant 0 : i32
    %c0_i32_0 = arith.constant 0 : i32
    %c0_i32_1 = arith.constant 0 : i32
    return %arg0, %c0_i32, %c0_i32_0 : i32, i32, i32
  }
}

module attributes {stable_mosaic.version = 11 : i64} {
  func.func @conv_gap_classifier_kernel(%arg0: i32, %arg1: memref<1x4x1x1152xbf16, #tpu.memory_space<vmem>>, %arg2: memref<1152x256xbf16, #tpu.memory_space<vmem>>, %arg3: memref<1x256xf32, #tpu.memory_space<vmem>>, %arg4: memref<256x128xbf16, #tpu.memory_space<vmem>>, %arg5: memref<1x128xf32, #tpu.memory_space<vmem>>, %arg6: memref<128x6xbf16, #tpu.memory_space<vmem>>, %arg7: memref<1x6xf32, #tpu.memory_space<vmem>>, %arg8: memref<1x1x6xf32, #tpu.memory_space<vmem>>) attributes {dimension_semantics = [#tpu.dimension_semantics<parallel>], iteration_bounds = array<i64: 2>, scalar_prefetch = 0 : i64, scratch_operands = 0 : i64, tpu.core_type = #tpu.core_type<tc>, window_params = [{transform_indices = @transform_0, window_bounds = array<i64: 1, 4, 1, 1152>}, {pipeline_mode = #tpu.pipeline_mode<synchronous>, transform_indices = @transform_1, window_bounds = array<i64: 1152, 256>}, {pipeline_mode = #tpu.pipeline_mode<synchronous>, transform_indices = @transform_2, window_bounds = array<i64: 1, 256>}, {pipeline_mode = #tpu.pipeline_mode<synchronous>, transform_indices = @transform_3, window_bounds = array<i64: 256, 128>}, {pipeline_mode = #tpu.pipeline_mode<synchronous>, transform_indices = @transform_4, window_bounds = array<i64: 1, 128>}, {pipeline_mode = #tpu.pipeline_mode<synchronous>, transform_indices = @transform_5, window_bounds = array<i64: 128, 6>}, {pipeline_mode = #tpu.pipeline_mode<synchronous>, transform_indices = @transform_6, window_bounds = array<i64: 1, 6>}, {transform_indices = @transform_7, window_bounds = array<i64: 1, 1, 6>}]} {
    %c0 = arith.constant 0 : index
    %c0_0 = arith.constant 0 : index
    %0 = vector.load %arg2[%c0, %c0_0] : memref<1152x256xbf16, #tpu.memory_space<vmem>>, vector<1152x256xbf16>
    %c0_1 = arith.constant 0 : index
    %c0_2 = arith.constant 0 : index
    %c0_3 = arith.constant 0 : index
    %c0_4 = arith.constant 0 : index
    %1 = vector.load %arg1[%c0_1, %c0_2, %c0_3, %c0_4] : memref<1x4x1x1152xbf16, #tpu.memory_space<vmem>>, vector<1x1x1x1152xbf16>
    %2 = vector.shape_cast %1 : vector<1x1x1x1152xbf16> to vector<1x1152xbf16>
    %cst = arith.constant dense<0.000000e+00> : vector<1x256xf32>
    %3 = tpu.matmul %2, %0, %cst {dimension_numbers = #tpu.dot_dimension_numbers<[1], [0], [0], [1], [0, 0, 1, 1], [], []>} : vector<1x1152xbf16>, vector<1152x256xbf16>, vector<1x256xf32> -> vector<1x256xf32>
    %c0_5 = arith.constant 0 : index
    %c1 = arith.constant 1 : index
    %c0_6 = arith.constant 0 : index
    %c0_7 = arith.constant 0 : index
    %4 = vector.load %arg1[%c0_5, %c1, %c0_6, %c0_7] : memref<1x4x1x1152xbf16, #tpu.memory_space<vmem>>, vector<1x1x1x1152xbf16>
    %5 = vector.shape_cast %4 : vector<1x1x1x1152xbf16> to vector<1x1152xbf16>
    %cst_8 = arith.constant dense<0.000000e+00> : vector<1x256xf32>
    %6 = tpu.matmul %5, %0, %cst_8 {dimension_numbers = #tpu.dot_dimension_numbers<[1], [0], [0], [1], [0, 0, 1, 1], [], []>} : vector<1x1152xbf16>, vector<1152x256xbf16>, vector<1x256xf32> -> vector<1x256xf32>
    %7 = arith.maximumf %3, %6 : vector<1x256xf32>
    %c0_9 = arith.constant 0 : index
    %c2 = arith.constant 2 : index
    %c0_10 = arith.constant 0 : index
    %c0_11 = arith.constant 0 : index
    %8 = vector.load %arg1[%c0_9, %c2, %c0_10, %c0_11] : memref<1x4x1x1152xbf16, #tpu.memory_space<vmem>>, vector<1x1x1x1152xbf16>
    %9 = vector.shape_cast %8 : vector<1x1x1x1152xbf16> to vector<1x1152xbf16>
    %cst_12 = arith.constant dense<0.000000e+00> : vector<1x256xf32>
    %10 = tpu.matmul %9, %0, %cst_12 {dimension_numbers = #tpu.dot_dimension_numbers<[1], [0], [0], [1], [0, 0, 1, 1], [], []>} : vector<1x1152xbf16>, vector<1152x256xbf16>, vector<1x256xf32> -> vector<1x256xf32>
    %11 = arith.maximumf %7, %10 : vector<1x256xf32>
    %c0_13 = arith.constant 0 : index
    %c3 = arith.constant 3 : index
    %c0_14 = arith.constant 0 : index
    %c0_15 = arith.constant 0 : index
    %12 = vector.load %arg1[%c0_13, %c3, %c0_14, %c0_15] : memref<1x4x1x1152xbf16, #tpu.memory_space<vmem>>, vector<1x1x1x1152xbf16>
    %13 = vector.shape_cast %12 : vector<1x1x1x1152xbf16> to vector<1x1152xbf16>
    %cst_16 = arith.constant dense<0.000000e+00> : vector<1x256xf32>
    %14 = tpu.matmul %13, %0, %cst_16 {dimension_numbers = #tpu.dot_dimension_numbers<[1], [0], [0], [1], [0, 0, 1, 1], [], []>} : vector<1x1152xbf16>, vector<1152x256xbf16>, vector<1x256xf32> -> vector<1x256xf32>
    %15 = arith.maximumf %11, %14 : vector<1x256xf32>
    %c0_17 = arith.constant 0 : index
    %c0_18 = arith.constant 0 : index
    %16 = vector.load %arg3[%c0_17, %c0_18] : memref<1x256xf32, #tpu.memory_space<vmem>>, vector<1x256xf32>
    %17 = arith.addf %15, %16 : vector<1x256xf32>
    %cst_19 = arith.constant 0.000000e+00 : f32
    %18 = vector.broadcast %cst_19 : f32 to vector<1x256xf32>
    %19 = arith.maximumf %17, %18 : vector<1x256xf32>
    %cst_20 = arith.constant dense<0.000000e+00> : vector<256xf32>
    %20 = vector.multi_reduction <add>, %19, %cst_20 [0] : vector<1x256xf32> to vector<256xf32>
    %21 = vector.shape_cast %20 : vector<256xf32> to vector<1x256xf32>
    %cst_21 = arith.constant 1.000000e+00 : f32
    %22 = vector.broadcast %cst_21 : f32 to vector<1x256xf32>
    %23 = arith.divf %21, %22 : vector<1x256xf32>
    %24 = arith.truncf %23 : vector<1x256xf32> to vector<1x256xbf16>
    %c0_22 = arith.constant 0 : index
    %c0_23 = arith.constant 0 : index
    %25 = vector.load %arg4[%c0_22, %c0_23] : memref<256x128xbf16, #tpu.memory_space<vmem>>, vector<256x128xbf16>
    %cst_24 = arith.constant dense<0.000000e+00> : vector<1x128xf32>
    %26 = tpu.matmul %24, %25, %cst_24 {dimension_numbers = #tpu.dot_dimension_numbers<[1], [0], [0], [1], [0, 0, 1, 1], [], []>} : vector<1x256xbf16>, vector<256x128xbf16>, vector<1x128xf32> -> vector<1x128xf32>
    %c0_25 = arith.constant 0 : index
    %c0_26 = arith.constant 0 : index
    %27 = vector.load %arg5[%c0_25, %c0_26] : memref<1x128xf32, #tpu.memory_space<vmem>>, vector<1x128xf32>
    %28 = arith.addf %26, %27 : vector<1x128xf32>
    %29 = arith.truncf %28 : vector<1x128xf32> to vector<1x128xbf16>
    %c0_27 = arith.constant 0 : index
    %c0_28 = arith.constant 0 : index
    %30 = vector.load %arg6[%c0_27, %c0_28] : memref<128x6xbf16, #tpu.memory_space<vmem>>, vector<128x6xbf16>
    %cst_29 = arith.constant dense<0.000000e+00> : vector<1x6xf32>
    %31 = tpu.matmul %29, %30, %cst_29 {dimension_numbers = #tpu.dot_dimension_numbers<[1], [0], [0], [1], [0, 0, 1, 1], [], []>} : vector<1x128xbf16>, vector<128x6xbf16>, vector<1x6xf32> -> vector<1x6xf32>
    %c0_30 = arith.constant 0 : index
    %c0_31 = arith.constant 0 : index
    %32 = vector.load %arg7[%c0_30, %c0_31] : memref<1x6xf32, #tpu.memory_space<vmem>>, vector<1x6xf32>
    %33 = arith.addf %31, %32 : vector<1x6xf32>
    %c0_32 = arith.constant 0 : index
    %c0_33 = arith.constant 0 : index
    %c0_34 = arith.constant 0 : index
    %34 = vector.load %arg8[%c0_32, %c0_33, %c0_34] : memref<1x1x6xf32, #tpu.memory_space<vmem>>, vector<1x1x6xf32>
    %35 = vector.shape_cast %34 : vector<1x1x6xf32> to vector<1x6xf32>
    %36 = vector.shape_cast %33 : vector<1x6xf32> to vector<1x1x6xf32>
    tpu.vector_store %arg8[%c0_32, %c0_33, %c0_34], %36 {strides = array<i32>} : memref<1x1x6xf32, #tpu.memory_space<vmem>>, vector<1x1x6xf32>,
    return
  }
  func.func @transform_0(%arg0: i32) -> (i32, i32, i32, i32) {
    %c0_i32 = arith.constant 0 : i32
    %c0_i32_0 = arith.constant 0 : i32
    %c0_i32_1 = arith.constant 0 : i32
    %c0_i32_2 = arith.constant 0 : i32
    return %arg0, %c0_i32, %c0_i32_0, %c0_i32_1 : i32, i32, i32, i32
  }
  func.func @transform_1(%arg0: i32) -> (i32, i32) {
    %c0_i32 = arith.constant 0 : i32
    %c0_i32_0 = arith.constant 0 : i32
    %c0_i32_1 = arith.constant 0 : i32
    return %c0_i32, %c0_i32_0 : i32, i32
  }
  func.func @transform_2(%arg0: i32) -> (i32, i32) {
    %c0_i32 = arith.constant 0 : i32
    %c0_i32_0 = arith.constant 0 : i32
    %c0_i32_1 = arith.constant 0 : i32
    return %c0_i32, %c0_i32_0 : i32, i32
  }
  func.func @transform_3(%arg0: i32) -> (i32, i32) {
    %c0_i32 = arith.constant 0 : i32
    %c0_i32_0 = arith.constant 0 : i32
    %c0_i32_1 = arith.constant 0 : i32
    return %c0_i32, %c0_i32_0 : i32, i32
  }
  func.func @transform_4(%arg0: i32) -> (i32, i32) {
    %c0_i32 = arith.constant 0 : i32
    %c0_i32_0 = arith.constant 0 : i32
    %c0_i32_1 = arith.constant 0 : i32
    return %c0_i32, %c0_i32_0 : i32, i32
  }
  func.func @transform_5(%arg0: i32) -> (i32, i32) {
    %c0_i32 = arith.constant 0 : i32
    %c0_i32_0 = arith.constant 0 : i32
    %c0_i32_1 = arith.constant 0 : i32
    return %c0_i32, %c0_i32_0 : i32, i32
  }
  func.func @transform_6(%arg0: i32) -> (i32, i32) {
    %c0_i32 = arith.constant 0 : i32
    %c0_i32_0 = arith.constant 0 : i32
    %c0_i32_1 = arith.constant 0 : i32
    return %c0_i32, %c0_i32_0 : i32, i32
  }
  func.func @transform_7(%arg0: i32) -> (i32, i32, i32) {
    %c0_i32 = arith.constant 0 : i32
    %c0_i32_0 = arith.constant 0 : i32
    %c0_i32_1 = arith.constant 0 : i32
    return %arg0, %c0_i32, %c0_i32_0 : i32, i32, i32
  }
}

</mosaic_0001>

<llo_original>
// kernel: medical_mnist_cnn_forward.4
$region0: #{medical_mnist_cnn_forward.4}
  #allocation0 [shape = 'u32[]', space=smem, size = 0x4, offset = 0x4, fixed_abs, tag = 'smem constant byte address 0x4 - core index']
  #allocation1 [shape = 'u32[144,128]{1,0:T(1,128)}', space=vmem, size = 0x12000, scoped, tag = 'internal scratch']
  %s0 = inlined_call_operand.vmem [shape: bf16[2,4,529,27], index: 0, kind: input, shape index: {}]
  %s1 = inlined_call_operand.vmem [shape: bf16[27,32], index: 1, kind: input, shape index: {}]
  %s2 = inlined_call_operand.vmem [shape: f32[1,32], index: 2, kind: input, shape index: {}]
  %s3 = inlined_call_operand.vmem [shape: bf16[2,529,32], index: 3, kind: output, shape index: {}]
  %s4 = sld [smem:[#allocation0]]
  $region45: #{medical_mnist_cnn_forward.4} parent=0
    _
  %s6 = ssub.s32 1, %s4
  %s7 = scalar_select 0, %s6, %s4
  loop: start=0, step=1, limit=4
  $region2: #{medical_mnist_cnn_forward.4} parent=0 // loop_pre_header
    _
  $region3: #{medical_mnist_cnn_forward.4} parent=0 // loop_header
    %s9 = sphi 0, %s13
    %p10 = scmp.ge.s32.totalorder %s9, 4
    %s19 = sphi 0, %s21
    %s22 = sphi 0, %s19
    %s23 = sphi 0, %s22
    %s39 = sphi 0, %s23
    %s43 = sphi 0, %s43
    %s45 = sphi 0, %s43
    %s46 = sphi 0, %s45
    %s60 = sphi 0, %s46
    %s64 = sphi 0, %s64
    %s66 = sphi 0, %s64
    %s67 = sphi 0, %s66
    %s81 = sphi 0, %s67
    %s87 = sphi 0, %s89
    %s90 = sphi 0, %s87
    %s91 = sphi 0, %s90
    %s107 = sphi 0, %s91
  $region4: #{medical_mnist_cnn_forward.4} parent=0 // loop_header_branch
    %12 = sbr.rel (%p10) target = $region8
  $region5: #{medical_mnist_cnn_forward.4} parent=0 // loop_body
    %s14 = ssub.s32 %s9, 1
    %s15 = ssub.s32 %s9, 2
    %s16 = sadd.s32 %s9, 1
    %s17 = ssub.s32 %s9, %s16
    %p18 = scmp.eq.s32.totalorder %s17, 0
    %s20 = sadd.s32 %s19, 1
    %s21 = scalar_select %p18, %s19, %s20
    %p24 = pneg %p18
    %p25 = scmp.eq.s32.totalorder %s9, 1
    %p26 = por %p24, %p25
    %p27 = scmp.ne.s32.totalorder %s19, %s22
    %p28 = scmp.eq.s32.totalorder %s9, 0
    %p29 = por %p27, %p28
    %p30 = scmp.ne.s32.totalorder %s19, %s22
    %p31 = scmp.eq.s32.totalorder %s14, 1
    %p32 = por %p30, %p31
    %p33 = scmp.ne.s32.totalorder %s22, %s23
    %p34 = scmp.eq.s32.totalorder %s14, 0
    %p35 = por %p33, %p34
    %p36 = scmp.ne.s32.totalorder %s22, %s23
    %p37 = scmp.eq.s32.totalorder %s15, 1
    %p38 = por %p36, %p37
    %p40 = scmp.ne.s32.totalorder %s23, %s39
    %p41 = scmp.eq.s32.totalorder %s15, 0
    %p42 = por %p40, %p41
    %s44 = sadd.s32 %s43, 1
    %p47 = scmp.eq.s32.totalorder %s9, 1
    %p48 = scmp.ne.s32.totalorder %s43, %s45
    %p49 = scmp.eq.s32.totalorder %s9, 0
    %p50 = por %p48, %p49
    %p51 = scmp.ne.s32.totalorder %s43, %s45
    %p52 = scmp.eq.s32.totalorder %s14, 1
    %p53 = por %p51, %p52
    %p54 = scmp.ne.s32.totalorder %s45, %s46
    %p55 = scmp.eq.s32.totalorder %s14, 0
    %p56 = por %p54, %p55
    %p57 = scmp.ne.s32.totalorder %s45, %s46
    %p58 = scmp.eq.s32.totalorder %s15, 1
    %p59 = por %p57, %p58
    %p61 = scmp.ne.s32.totalorder %s46, %s60
    %p62 = scmp.eq.s32.totalorder %s15, 0
    %p63 = por %p61, %p62
    %s65 = sadd.s32 %s64, 1
    %p68 = scmp.eq.s32.totalorder %s9, 1
    %p69 = scmp.ne.s32.totalorder %s64, %s66
    %p70 = scmp.eq.s32.totalorder %s9, 0
    %p71 = por %p69, %p70
    %p72 = scmp.ne.s32.totalorder %s64, %s66
    %p73 = scmp.eq.s32.totalorder %s14, 1
    %p74 = por %p72, %p73
    %p75 = scmp.ne.s32.totalorder %s66, %s67
    %p76 = scmp.eq.s32.totalorder %s14, 0
    %p77 = por %p75, %p76
    %p78 = scmp.ne.s32.totalorder %s66, %s67
    %p79 = scmp.eq.s32.totalorder %s15, 1
    %p80 = por %p78, %p79
    %p82 = scmp.ne.s32.totalorder %s67, %s81
    %p83 = scmp.eq.s32.totalorder %s15, 0
    %p84 = por %p82, %p83
    %s85 = ssub.s32 %s9, %s16
    %p86 = scmp.eq.s32.totalorder %s85, 0
    %s88 = sadd.s32 %s87, 1
    %s89 = scalar_select %p86, %s87, %s88
    %p92 = pneg %p86
    %p93 = scmp.eq.s32.totalorder %s9, 1
    %p94 = por %p92, %p93
    %p95 = scmp.ne.s32.totalorder %s87, %s90
    %p96 = scmp.eq.s32.totalorder %s9, 0
    %p97 = por %p95, %p96
    %p98 = scmp.ne.s32.totalorder %s87, %s90
    %p99 = scmp.eq.s32.totalorder %s14, 1
    %p100 = por %p98, %p99
    %p101 = scmp.ne.s32.totalorder %s90, %s91
    %p102 = scmp.eq.s32.totalorder %s14, 0
    %p103 = por %p101, %p102
    %p104 = scmp.ne.s32.totalorder %s90, %s91
    %p105 = scmp.eq.s32.totalorder %s15, 1
    %p106 = por %p104, %p105
    %p108 = scmp.ne.s32.totalorder %s91, %s107
    %p109 = scmp.eq.s32.totalorder %s15, 0
    %p110 = por %p108, %p109
    %p111 = scmp.le.s32.totalorder 1, %s9
    %p112 = scmp.lt.s32.totalorder %s9, 3
    %p113 = pnand %p111, %p112
    %p114 = pneg %p113
    // Predicated region
    $region9: #{medical_mnist_cnn_forward.4} parent=5 // pred_check
      _
    $region10: #{medical_mnist_cnn_forward.4} parent=5 // pred_check_branch
      %116 = sbr.rel (%p113) target = $region12
    $region11: #{medical_mnist_cnn_forward.4} parent=5 // pred_region
      %s117 = ssub.s32 %s9, 1
      // Predicated region
      $region13: #{medical_mnist_cnn_forward.4} parent=11 // pred_check
        %p118 = pneg %p56
      $region14: #{medical_mnist_cnn_forward.4} parent=11 // pred_check_branch
        %120 = sbr.rel (%p118) target = $region16
      $region15: #{medical_mnist_cnn_forward.4} parent=11 // pred_region
        _
      $region16: #{medical_mnist_cnn_forward.4} parent=11 // pred_fallthru
        _
      // Predicated region
      $region17: #{medical_mnist_cnn_forward.4} parent=11 // pred_check
        %p121 = pneg %p77
      $region18: #{medical_mnist_cnn_forward.4} parent=11 // pred_check_branch
        %123 = sbr.rel (%p121) target = $region20
      $region19: #{medical_mnist_cnn_forward.4} parent=11 // pred_region
        _
      $region20: #{medical_mnist_cnn_forward.4} parent=11 // pred_fallthru
        _
    $region12: #{medical_mnist_cnn_forward.4} parent=5 // pred_fallthru
      _
    %p124 = scmp.lt.s32.totalorder %s9, 2
    // Predicated region
    $region21: #{medical_mnist_cnn_forward.4} parent=5 // pred_check
      %p125 = pneg %p124
    $region22: #{medical_mnist_cnn_forward.4} parent=5 // pred_check_branch
      %127 = sbr.rel (%p125) target = $region24
    $region23: #{medical_mnist_cnn_forward.4} parent=5 // pred_region
      // Predicated region
      $region25: #{medical_mnist_cnn_forward.4} parent=23 // pred_check
        %p128 = pneg %p29
      $region26: #{medical_mnist_cnn_forward.4} parent=23 // pred_check_branch
        %130 = sbr.rel (%p128) target = $region28
      $region27: #{medical_mnist_cnn_forward.4} parent=23 // pred_region
        %p131 = scmp.lt.s32.totalorder %s9, 1
        %s132 = scalar_select %p131, %s9, 1
        %s133 = smul.addr %s132, 268
        %s134 = smul.addr %s133, 4
        %s135 = scalar_lea.vmem %s0, %s134
      $region28: #{medical_mnist_cnn_forward.4} parent=23 // pred_fallthru
        _
    $region24: #{medical_mnist_cnn_forward.4} parent=5 // pred_fallthru
      _
    %p136 = scmp.le.s32.totalorder 1, %s9
    %p137 = scmp.lt.s32.totalorder %s9, 3
    %p138 = pnand %p136, %p137
    %p139 = pneg %p138
    // Predicated region
    $region29: #{medical_mnist_cnn_forward.4} parent=5 // pred_check
      _
    $region30: #{medical_mnist_cnn_forward.4} parent=5 // pred_check_branch
      %141 = sbr.rel (%p138) target = $region32
    $region31: #{medical_mnist_cnn_forward.4} parent=5 // pred_region
      %s142 = ssub.s32 %s9, 1
      %p143 = scmp.lt.s32.totalorder %s14, 1
      %s144 = scalar_select %p143, %s14, 1
      %s145 = smul.addr %s144, 268
      %s146 = smul.addr %s145, 4
      %s147 = scalar_lea.vmem %s0, %s146
      %p148 = pneg %p35
      %p149 = pneg %p32
      %p150 = pneg %p56
      %p151 = pneg %p53
      %p152 = pneg %p77
      %p153 = pneg %p74
      %p154 = pneg %p103
      %p155 = pneg %p100
      %p156 = scmp.lt.s32.totalorder %s14, 1
      %s157 = scalar_select %p156, %s14, 1
      %s158 = smul.addr %s157, 67
      %s159 = smul.addr %s158, 4
      %s160 = scalar_lea.vmem %s3, %s159
      %p161 = scmp.lt.s32.totalorder %s14, 1
      %s162 = scalar_select %p161, %s14, 1
      %s163 = smul.addr %s162, 268
      %s164 = smul.addr %s163, 4
      %s165 = scalar_lea.vmem %s0, %s164
      %p166 = scmp.lt.s32.totalorder %s14, 1
      %s167 = scalar_select %p166, %s14, 1
      %s168 = smul.addr %s167, 67
      %s169 = smul.addr %s168, 4
      %s170 = scalar_lea.vmem %s3, %s169
      %v172 = vld [vmem:[%s1] sm:$0xf]
      %v173 = vld [vmem:[%s1 + $0x4] sm:$0xf]
      %v174 = vld [vmem:[%s1 + $0x8] sm:$0xf]
      %v175 = vld [vmem:[%s1 + $0xc] sm:$0x3]
      %v176 = vld [vmem:[%s165] sm:$0xf]
      %v177 = vld [vmem:[%s165 + $0x4] sm:$0xf]
      %v178 = vld [vmem:[%s165 + $0x8] sm:$0xf]
      %v179 = vld [vmem:[%s165 + $0xc] sm:$0xf]
      %v180 = vld [vmem:[%s165 + $0x10] sm:$0xf]
      %v181 = vld [vmem:[%s165 + $0x14] sm:$0xf]
      %v182 = vld [vmem:[%s165 + $0x18] sm:$0xf]
      %v183 = vld [vmem:[%s165 + $0x1c] sm:$0xf]
      %v184 = vld [vmem:[%s165 + $0x20] sm:$0xf]
      %v185 = vld [vmem:[%s165 + $0x24] sm:$0xf]
      %v186 = vld [vmem:[%s165 + $0x28] sm:$0xf]
      %v187 = vld [vmem:[%s165 + $0x2c] sm:$0xf]
      %v188 = vld [vmem:[%s165 + $0x30] sm:$0xf]
      %v189 = vld [vmem:[%s165 + $0x34] sm:$0xf]
      %v190 = vld [vmem:[%s165 + $0x38] sm:$0xf]
      %v191 = vld [vmem:[%s165 + $0x3c] sm:$0xf]
      %v192 = vld [vmem:[%s165 + $0x40] sm:$0xf]
      %v193 = vld [vmem:[%s165 + $0x44] sm:$0xf]
      %v194 = vld [vmem:[%s165 + $0x48] sm:$0xf]
      %v195 = vld [vmem:[%s165 + $0x4c] sm:$0xf]
      %v196 = vld [vmem:[%s165 + $0x50] sm:$0xf]
      %v197 = vld [vmem:[%s165 + $0x54] sm:$0xf]
      %v198 = vld [vmem:[%s165 + $0x58] sm:$0xf]
      %v199 = vld [vmem:[%s165 + $0x5c] sm:$0xf]
      %v200 = vld [vmem:[%s165 + $0x60] sm:$0xf]
      %v201 = vld [vmem:[%s165 + $0x64] sm:$0xf]
      %v202 = vld [vmem:[%s165 + $0x68] sm:$0xf]
      %v203 = vld [vmem:[%s165 + $0x6c] sm:$0xf]
      %v204 = vld [vmem:[%s165 + $0x70] sm:$0xf]
      %v205 = vld [vmem:[%s165 + $0x74] sm:$0xf]
      %v206 = vld [vmem:[%s165 + $0x78] sm:$0xf]
      %v207 = vld [vmem:[%s165 + $0x7c] sm:$0xf]
      %v208 = vld [vmem:[%s165 + $0x80] sm:$0xf]
      %v209 = vld [vmem:[%s165 + $0x84] sm:$0xf]
      %v210 = vld [vmem:[%s165 + $0x88] sm:$0xf]
      %v211 = vld [vmem:[%s165 + $0x8c] sm:$0xf]
      %v212 = vld [vmem:[%s165 + $0x90] sm:$0xf]
      %v213 = vld [vmem:[%s165 + $0x94] sm:$0xf]
      %v214 = vld [vmem:[%s165 + $0x98] sm:$0xf]
      %v215 = vld [vmem:[%s165 + $0x9c] sm:$0xf]
      %v216 = vld [vmem:[%s165 + $0xa0] sm:$0xf]
      %v217 = vld [vmem:[%s165 + $0xa4] sm:$0xf]
      %v218 = vld [vmem:[%s165 + $0xa8] sm:$0xf]
      %v219 = vld [vmem:[%s165 + $0xac] sm:$0xf]
      %v220 = vld [vmem:[%s165 + $0xb0] sm:$0xf]
      %v221 = vld [vmem:[%s165 + $0xb4] sm:$0xf]
      %v222 = vld [vmem:[%s165 + $0xb8] sm:$0xf]
      %v223 = vld [vmem:[%s165 + $0xbc] sm:$0xf]
      %v224 = vld [vmem:[%s165 + $0xc0] sm:$0xf]
      %v225 = vld [vmem:[%s165 + $0xc4] sm:$0xf]
      %v226 = vld [vmem:[%s165 + $0xc8] sm:$0xf]
      %v227 = vld [vmem:[%s165 + $0xcc] sm:$0xf]
      %v228 = vld [vmem:[%s165 + $0xd0] sm:$0xf]
      %v229 = vld [vmem:[%s165 + $0xd4] sm:$0xf]
      %v230 = vld [vmem:[%s165 + $0xd8] sm:$0xf]
      %v231 = vld [vmem:[%s165 + $0xdc] sm:$0xf]
      %v232 = vld [vmem:[%s165 + $0xe0] sm:$0xf]
      %v233 = vld [vmem:[%s165 + $0xe4] sm:$0xf]
      %v234 = vld [vmem:[%s165 + $0xe8] sm:$0xf]
      %v235 = vld [vmem:[%s165 + $0xec] sm:$0xf]
      %v236 = vld [vmem:[%s165 + $0xf0] sm:$0xf]
      %v237 = vld [vmem:[%s165 + $0xf4] sm:$0xf]
      %v238 = vld [vmem:[%s165 + $0xf8] sm:$0xf]
      %v239 = vld [vmem:[%s165 + $0xfc] sm:$0xf]
      %v240 = vld [vmem:[%s165 + $0x100] sm:$0xf]
      %v241 = vld [vmem:[%s165 + $0x104] sm:$0xf]
      %v242 = vld [vmem:[%s165 + $0x108] sm:$0x1]
      %v310 = vunpack.c.l.b16 %v176
      %v311 = vunpack.c.l.b16 %v177
      %v312 = vunpack.c.l.b16 %v178
      %v313 = vunpack.c.l.b16 %v179
      %v314 = vunpack.c.l.b16 %v180
      %v315 = vunpack.c.l.b16 %v181
      %v316 = vunpack.c.l.b16 %v182
      %v317 = vunpack.c.l.b16 %v183
      %v318 = vunpack.c.l.b16 %v184
      %v319 = vunpack.c.l.b16 %v185
      %v320 = vunpack.c.l.b16 %v186
      %v321 = vunpack.c.l.b16 %v187
      %v322 = vunpack.c.l.b16 %v188
      %v323 = vunpack.c.l.b16 %v189
      %v324 = vunpack.c.l.b16 %v190
      %v325 = vunpack.c.l.b16 %v191
      %v326 = vunpack.c.l.b16 %v192
      %v327 = vunpack.c.l.b16 %v193
      %v328 = vunpack.c.l.b16 %v194
      %v329 = vunpack.c.l.b16 %v195
      %v330 = vunpack.c.l.b16 %v196
      %v331 = vunpack.c.l.b16 %v197
      %v332 = vunpack.c.l.b16 %v198
      %v333 = vunpack.c.l.b16 %v199
      %v334 = vunpack.c.l.b16 %v200
      %v335 = vunpack.c.l.b16 %v201
      %v336 = vunpack.c.l.b16 %v202
      %v337 = vunpack.c.l.b16 %v203
      %v338 = vunpack.c.l.b16 %v204
      %v339 = vunpack.c.l.b16 %v205
      %v340 = vunpack.c.l.b16 %v206
      %v341 = vunpack.c.l.b16 %v207
      %v342 = vunpack.c.l.b16 %v208
      %v343 = vunpack.c.l.b16 %v209
      %v344 = vunpack.c.l.b16 %v210
      %v345 = vunpack.c.l.b16 %v211
      %v346 = vunpack.c.l.b16 %v212
      %v347 = vunpack.c.l.b16 %v213
      %v348 = vunpack.c.l.b16 %v214
      %v349 = vunpack.c.l.b16 %v215
      %v350 = vunpack.c.l.b16 %v216
      %v351 = vunpack.c.l.b16 %v217
      %v352 = vunpack.c.l.b16 %v218
      %v353 = vunpack.c.l.b16 %v219
      %v354 = vunpack.c.l.b16 %v220
      %v355 = vunpack.c.l.b16 %v221
      %v356 = vunpack.c.l.b16 %v222
      %v357 = vunpack.c.l.b16 %v223
      %v358 = vunpack.c.l.b16 %v224
      %v359 = vunpack.c.l.b16 %v225
      %v360 = vunpack.c.l.b16 %v226
      %v361 = vunpack.c.l.b16 %v227
      %v362 = vunpack.c.l.b16 %v228
      %v363 = vunpack.c.l.b16 %v229
      %v364 = vunpack.c.l.b16 %v230
      %v365 = vunpack.c.l.b16 %v231
      %v366 = vunpack.c.l.b16 %v232
      %v367 = vunpack.c.l.b16 %v233
      %v368 = vunpack.c.l.b16 %v234
      %v369 = vunpack.c.l.b16 %v235
      %v370 = vunpack.c.l.b16 %v236
      %v371 = vunpack.c.l.b16 %v237
      %v372 = vunpack.c.l.b16 %v238
      %v373 = vunpack.c.l.b16 %v239
      %v374 = vunpack.c.l.b16 %v240
      %v375 = vunpack.c.l.b16 %v241
      %v376 = vunpack.c.l.b16 %v242
      %v377 = vpack.c.b16 %v311, %v310
      %v378 = vpack.c.b16 %v313, %v312
      %v379 = vpack.c.b16 %v315, %v314
      %v380 = vpack.c.b16 %v317, %v316
      %v381 = vpack.c.b16 %v319, %v318
      %v382 = vpack.c.b16 %v321, %v320
      %v383 = vpack.c.b16 %v323, %v322
      %v384 = vpack.c.b16 %v325, %v324
      %v385 = vpack.c.b16 %v327, %v326
      %v386 = vpack.c.b16 %v329, %v328
      %v387 = vpack.c.b16 %v331, %v330
      %v388 = vpack.c.b16 %v333, %v332
      %v389 = vpack.c.b16 %v335, %v334
      %v390 = vpack.c.b16 %v337, %v336
      %v391 = vpack.c.b16 %v339, %v338
      %v392 = vpack.c.b16 %v341, %v340
      %v393 = vpack.c.b16 %v343, %v342
      %v394 = vpack.c.b16 %v345, %v344
      %v395 = vpack.c.b16 %v347, %v346
      %v396 = vpack.c.b16 %v349, %v348
      %v397 = vpack.c.b16 %v351, %v350
      %v398 = vpack.c.b16 %v353, %v352
      %v399 = vpack.c.b16 %v355, %v354
      %v400 = vpack.c.b16 %v357, %v356
      %v401 = vpack.c.b16 %v359, %v358
      %v402 = vpack.c.b16 %v361, %v360
      %v403 = vpack.c.b16 %v363, %v362
      %v404 = vpack.c.b16 %v365, %v364
      %v405 = vpack.c.b16 %v367, %v366
      %v406 = vpack.c.b16 %v369, %v368
      %v407 = vpack.c.b16 %v371, %v370
      %v408 = vpack.c.b16 %v373, %v372
      %v409 = vpack.c.b16 %v375, %v374
      %v410 = vpack.c.b16 %v376, %v376
      %v415 = vunpack.c.l.b16 %v172
      %v416 = vunpack.c.l.b16 %v173
      %v417 = vunpack.c.l.b16 %v174
      %v418 = vunpack.c.l.b16 %v175
      %v419 = vpack.c.b16 %v416, %v415
      %v420 = vpack.c.b16 %v418, %v417
      %vm422 = vcmask 220160
      %v424 = vsel %vm422, %v377, 0
      %v427 = vsel %vm422, %v378, 0
      %v430 = vsel %vm422, %v379, 0
      %v433 = vsel %vm422, %v380, 0
      %v436 = vsel %vm422, %v381, 0
      %v439 = vsel %vm422, %v382, 0
      %v442 = vsel %vm422, %v383, 0
      %v445 = vsel %vm422, %v384, 0
      %v448 = vsel %vm422, %v385, 0
      %v451 = vsel %vm422, %v386, 0
      %v454 = vsel %vm422, %v387, 0
      %v457 = vsel %vm422, %v388, 0
      %v460 = vsel %vm422, %v389, 0
      %v463 = vsel %vm422, %v390, 0
      %v466 = vsel %vm422, %v391, 0
      %v469 = vsel %vm422, %v392, 0
      %v472 = vsel %vm422, %v393, 0
      %v475 = vsel %vm422, %v394, 0
      %v478 = vsel %vm422, %v395, 0
      %v481 = vsel %vm422, %v396, 0
      %v484 = vsel %vm422, %v397, 0
      %v487 = vsel %vm422, %v398, 0
      %v490 = vsel %vm422, %v399, 0
      %v493 = vsel %vm422, %v400, 0
      %v496 = vsel %vm422, %v401, 0
      %v499 = vsel %vm422, %v402, 0
      %v502 = vsel %vm422, %v403, 0
      %v505 = vsel %vm422, %v404, 0
      %v508 = vsel %vm422, %v405, 0
      %v511 = vsel %vm422, %v406, 0
      %v514 = vsel %vm422, %v407, 0
      %v517 = vsel %vm422, %v408, 0
      %v520 = vsel %vm422, %v409, 0
      %v523 = vsel %vm422, %v410, 0
      %vm525 = vcmask 1044480
      %vm526 = vcmask 1045504
      %v527 = vsel %vm525, 4294967295, 65535
      %v528 = vsel %vm526, %v527, 0
      %v530 = vand.u32 %v420, %v528
      %532 = vmatprep.subr.bf16.mxu0 0
      %533 = vmatpush1.bf16.msra.mxu0 %v419
      %534 = vmatprep.subr.bf16.mxu0 0
      %535 = vmatpush1.bf16.msra.mxu0 %v530
      %536 = vmatprep.subr.bf16.mxu0 0
      %537 = vmatpush1.bf16.msra.mxu0 0
      %538 = vmatprep.subr.bf16.mxu0 0
      %539 = vmatpush1.bf16.msra.mxu0 0
      %540 = vmatprep.subr.bf16.mxu0 0
      %541 = vmatpush1.bf16.msra.mxu0 0
      %542 = vmatprep.subr.bf16.mxu0 0
      %543 = vmatpush1.bf16.msra.mxu0 0
      %544 = vmatprep.subr.bf16.mxu0 0
      %545 = vmatpush1.bf16.msra.mxu0 0
      %546 = vmatprep.subr.bf16.mxu0 0
      %547 = vmatpush1.bf16.msra.mxu0 0
      %548 = vmatprep.subr.bf16.mxu0 0
      %549 = vmatpush1.bf16.msra.mxu0 0
      %550 = vmatprep.subr.bf16.mxu0 0
      %551 = vmatpush1.bf16.msra.mxu0 0
      %552 = vmatprep.subr.bf16.mxu0 0
      %553 = vmatpush1.bf16.msra.mxu0 0
      %554 = vmatprep.subr.bf16.mxu0 0
      %555 = vmatpush1.bf16.msra.mxu0 0
      %556 = vmatprep.subr.bf16.mxu0 0
      %557 = vmatpush1.bf16.msra.mxu0 0
      %558 = vmatprep.subr.bf16.mxu0 0
      %559 = vmatpush1.bf16.msra.mxu0 0
      %560 = vmatprep.subr.bf16.mxu0 0
      %561 = vmatpush1.bf16.msra.mxu0 0
      %562 = vmatprep.subr.bf16.mxu0 0
      %563 = vmatpush1.bf16.msra.mxu0 0
      %564 = vmatprep.mubr.bf16.mxu0 0
      %565 = vmatmul.mubr.bf16.gmra.mrb[0].mxu0 %v424
      %v566 = vpop.f32.mrb[0].mxu0
      %v567 = vadd.f32 0.0, %v566
      %v568 = vpop.f32.mrb[0].mxu0
      %v569 = vpop.f32.mrb[0].mxu0
      %v570 = vadd.f32 0.0, %v569
      %v571 = vpop.f32.mrb[0].mxu0
      %572 = vmatprep.mubr.bf16.mxu0 0
      %573 = vmatmul.mubr.bf16.gmra.mrb[0].mxu0 %v427
      %v574 = vpop.f32.mrb[0].mxu0
      %v575 = vadd.f32 0.0, %v574
      %v576 = vpop.f32.mrb[0].mxu0
      %v577 = vpop.f32.mrb[0].mxu0
      %v578 = vadd.f32 0.0, %v577
      %v579 = vpop.f32.mrb[0].mxu0
      %580 = vmatprep.mubr.bf16.mxu0 0
      %581 = vmatmul.mubr.bf16.gmra.mrb[0].mxu0 %v430
      %v582 = vpop.f32.mrb[0].mxu0
      %v583 = vadd.f32 0.0, %v582
      %v584 = vpop.f32.mrb[0].mxu0
      %v585 = vpop.f32.mrb[0].mxu0
      %v586 = vadd.f32 0.0, %v585
      %v587 = vpop.f32.mrb[0].mxu0
      %588 = vmatprep.mubr.bf16.mxu0 0
      %589 = vmatmul.mubr.bf16.gmra.mrb[0].mxu0 %v433
      %v590 = vpop.f32.mrb[0].mxu0
      %v591 = vadd.f32 0.0, %v590
      %v592 = vpop.f32.mrb[0].mxu0
      %v593 = vpop.f32.mrb[0].mxu0
      %v594 = vadd.f32 0.0, %v593
      %v595 = vpop.f32.mrb[0].mxu0
      %596 = vmatprep.mubr.bf16.mxu0 0
      %597 = vmatmul.mubr.bf16.gmra.mrb[0].mxu0 %v436
      %v598 = vpop.f32.mrb[0].mxu0
      %v599 = vadd.f32 0.0, %v598
      %v600 = vpop.f32.mrb[0].mxu0
      %v601 = vpop.f32.mrb[0].mxu0
      %v602 = vadd.f32 0.0, %v601
      %v603 = vpop.f32.mrb[0].mxu0
      %604 = vmatprep.mubr.bf16.mxu0 0
      %605 = vmatmul.mubr.bf16.gmra.mrb[0].mxu0 %v439
      %v606 = vpop.f32.mrb[0].mxu0
      %v607 = vadd.f32 0.0, %v606
      %v608 = vpop.f32.mrb[0].mxu0
      %v609 = vpop.f32.mrb[0].mxu0
      %v610 = vadd.f32 0.0, %v609
      %v611 = vpop.f32.mrb[0].mxu0
      %612 = vmatprep.mubr.bf16.mxu0 0
      %613 = vmatmul.mubr.bf16.gmra.mrb[0].mxu0 %v442
      %v614 = vpop.f32.mrb[0].mxu0
      %v615 = vadd.f32 0.0, %v614
      %v616 = vpop.f32.mrb[0].mxu0
      %v617 = vpop.f32.mrb[0].mxu0
      %v618 = vadd.f32 0.0, %v617
      %v619 = vpop.f32.mrb[0].mxu0
      %620 = vmatprep.mubr.bf16.mxu0 0
      %621 = vmatmul.mubr.bf16.gmra.mrb[0].mxu0 %v445
      %v622 = vpop.f32.mrb[0].mxu0
      %v623 = vadd.f32 0.0, %v622
      %v624 = vpop.f32.mrb[0].mxu0
      %v625 = vpop.f32.mrb[0].mxu0
      %v626 = vadd.f32 0.0, %v625
      %v627 = vpop.f32.mrb[0].mxu0
      %628 = vmatprep.mubr.bf16.mxu0 0
      %629 = vmatmul.mubr.bf16.gmra.mrb[0].mxu0 %v448
      %v630 = vpop.f32.mrb[0].mxu0
      %v631 = vadd.f32 0.0, %v630
      %v632 = vpop.f32.mrb[0].mxu0
      %v633 = vpop.f32.mrb[0].mxu0
      %v634 = vadd.f32 0.0, %v633
      %v635 = vpop.f32.mrb[0].mxu0
      %636 = vmatprep.mubr.bf16.mxu0 0
      %637 = vmatmul.mubr.bf16.gmra.mrb[0].mxu0 %v451
      %v638 = vpop.f32.mrb[0].mxu0
      %v639 = vadd.f32 0.0, %v638
      %v640 = vpop.f32.mrb[0].mxu0
      %v641 = vpop.f32.mrb[0].mxu0
      %v642 = vadd.f32 0.0, %v641
      %v643 = vpop.f32.mrb[0].mxu0
      %644 = vmatprep.mubr.bf16.mxu0 0
      %645 = vmatmul.mubr.bf16.gmra.mrb[0].mxu0 %v454
      %v646 = vpop.f32.mrb[0].mxu0
      %v647 = vadd.f32 0.0, %v646
      %v648 = vpop.f32.mrb[0].mxu0
      %v649 = vpop.f32.mrb[0].mxu0
      %v650 = vadd.f32 0.0, %v649
      %v651 = vpop.f32.mrb[0].mxu0
      %652 = vmatprep.mubr.bf16.mxu0 0
      %653 = vmatmul.mubr.bf16.gmra.mrb[0].mxu0 %v457
      %v654 = vpop.f32.mrb[0].mxu0
      %v655 = vadd.f32 0.0, %v654
      %v656 = vpop.f32.mrb[0].mxu0
      %v657 = vpop.f32.mrb[0].mxu0
      %v658 = vadd.f32 0.0, %v657
      %v659 = vpop.f32.mrb[0].mxu0
      %660 = vmatprep.mubr.bf16.mxu0 0
      %661 = vmatmul.mubr.bf16.gmra.mrb[0].mxu0 %v460
      %v662 = vpop.f32.mrb[0].mxu0
      %v663 = vadd.f32 0.0, %v662
      %v664 = vpop.f32.mrb[0].mxu0
      %v665 = vpop.f32.mrb[0].mxu0
      %v666 = vadd.f32 0.0, %v665
      %v667 = vpop.f32.mrb[0].mxu0
      %668 = vmatprep.mubr.bf16.mxu0 0
      %669 = vmatmul.mubr.bf16.gmra.mrb[0].mxu0 %v463
      %v670 = vpop.f32.mrb[0].mxu0
      %v671 = vadd.f32 0.0, %v670
      %v672 = vpop.f32.mrb[0].mxu0
      %v673 = vpop.f32.mrb[0].mxu0
      %v674 = vadd.f32 0.0, %v673
      %v675 = vpop.f32.mrb[0].mxu0
      %676 = vmatprep.mubr.bf16.mxu0 0
      %677 = vmatmul.mubr.bf16.gmra.mrb[0].mxu0 %v466
      %v678 = vpop.f32.mrb[0].mxu0
      %v679 = vadd.f32 0.0, %v678
      %v680 = vpop.f32.mrb[0].mxu0
      %v681 = vpop.f32.mrb[0].mxu0
      %v682 = vadd.f32 0.0, %v681
      %v683 = vpop.f32.mrb[0].mxu0
      %684 = vmatprep.mubr.bf16.mxu0 0
      %685 = vmatmul.mubr.bf16.gmra.mrb[0].mxu0 %v469
      %v686 = vpop.f32.mrb[0].mxu0
      %v687 = vadd.f32 0.0, %v686
      %v688 = vpop.f32.mrb[0].mxu0
      %v689 = vpop.f32.mrb[0].mxu0
      %v690 = vadd.f32 0.0, %v689
      %v691 = vpop.f32.mrb[0].mxu0
      %692 = vmatprep.mubr.bf16.mxu0 0
      %693 = vmatmul.mubr.bf16.gmra.mrb[0].mxu0 %v472
      %v694 = vpop.f32.mrb[0].mxu0
      %v695 = vadd.f32 0.0, %v694
      %v696 = vpop.f32.mrb[0].mxu0
      %v697 = vpop.f32.mrb[0].mxu0
      %v698 = vadd.f32 0.0, %v697
      %v699 = vpop.f32.mrb[0].mxu0
      %700 = vmatprep.mubr.bf16.mxu0 0
      %701 = vmatmul.mubr.bf16.gmra.mrb[0].mxu0 %v475
      %v702 = vpop.f32.mrb[0].mxu0
      %v703 = vadd.f32 0.0, %v702
      %v704 = vpop.f32.mrb[0].mxu0
      %v705 = vpop.f32.mrb[0].mxu0
      %v706 = vadd.f32 0.0, %v705
      %v707 = vpop.f32.mrb[0].mxu0
      %708 = vmatprep.mubr.bf16.mxu0 0
      %709 = vmatmul.mubr.bf16.gmra.mrb[0].mxu0 %v478
      %v710 = vpop.f32.mrb[0].mxu0
      %v711 = vadd.f32 0.0, %v710
      %v712 = vpop.f32.mrb[0].mxu0
      %v713 = vpop.f32.mrb[0].mxu0
      %v714 = vadd.f32 0.0, %v713
      %v715 = vpop.f32.mrb[0].mxu0
      %716 = vmatprep.mubr.bf16.mxu0 0
      %717 = vmatmul.mubr.bf16.gmra.mrb[0].mxu0 %v481
      %v718 = vpop.f32.mrb[0].mxu0
      %v719 = vadd.f32 0.0, %v718
      %v720 = vpop.f32.mrb[0].mxu0
      %v721 = vpop.f32.mrb[0].mxu0
      %v722 = vadd.f32 0.0, %v721
      %v723 = vpop.f32.mrb[0].mxu0
      %724 = vmatprep.mubr.bf16.mxu0 0
      %725 = vmatmul.mubr.bf16.gmra.mrb[0].mxu0 %v484
      %v726 = vpop.f32.mrb[0].mxu0
      %v727 = vadd.f32 0.0, %v726
      %v728 = vpop.f32.mrb[0].mxu0
      %v729 = vpop.f32.mrb[0].mxu0
      %v730 = vadd.f32 0.0, %v729
      %v731 = vpop.f32.mrb[0].mxu0
      %732 = vmatprep.mubr.bf16.mxu0 0
      %733 = vmatmul.mubr.bf16.gmra.mrb[0].mxu0 %v487
      %v734 = vpop.f32.mrb[0].mxu0
      %v735 = vadd.f32 0.0, %v734
      %v736 = vpop.f32.mrb[0].mxu0
      %v737 = vpop.f32.mrb[0].mxu0
      %v738 = vadd.f32 0.0, %v737
      %v739 = vpop.f32.mrb[0].mxu0
      %740 = vmatprep.mubr.bf16.mxu0 0
      %741 = vmatmul.mubr.bf16.gmra.mrb[0].mxu0 %v490
      %v742 = vpop.f32.mrb[0].mxu0
      %v743 = vadd.f32 0.0, %v742
      %v744 = vpop.f32.mrb[0].mxu0
      %v745 = vpop.f32.mrb[0].mxu0
      %v746 = vadd.f32 0.0, %v745
      %v747 = vpop.f32.mrb[0].mxu0
      %748 = vmatprep.mubr.bf16.mxu0 0
      %749 = vmatmul.mubr.bf16.gmra.mrb[0].mxu0 %v493
      %v750 = vpop.f32.mrb[0].mxu0
      %v751 = vadd.f32 0.0, %v750
      %v752 = vpop.f32.mrb[0].mxu0
      %v753 = vpop.f32.mrb[0].mxu0
      %v754 = vadd.f32 0.0, %v753
      %v755 = vpop.f32.mrb[0].mxu0
      %756 = vmatprep.mubr.bf16.mxu0 0
      %757 = vmatmul.mubr.bf16.gmra.mrb[0].mxu0 %v496
      %v758 = vpop.f32.mrb[0].mxu0
      %v759 = vadd.f32 0.0, %v758
      %v760 = vpop.f32.mrb[0].mxu0
      %v761 = vpop.f32.mrb[0].mxu0
      %v762 = vadd.f32 0.0, %v761
      %v763 = vpop.f32.mrb[0].mxu0
      %764 = vmatprep.mubr.bf16.mxu0 0
      %765 = vmatmul.mubr.bf16.gmra.mrb[0].mxu0 %v499
      %v766 = vpop.f32.mrb[0].mxu0
      %v767 = vadd.f32 0.0, %v766
      %v768 = vpop.f32.mrb[0].mxu0
      %v769 = vpop.f32.mrb[0].mxu0
      %v770 = vadd.f32 0.0, %v769
      %v771 = vpop.f32.mrb[0].mxu0
      %772 = vmatprep.mubr.bf16.mxu0 0
      %773 = vmatmul.mubr.bf16.gmra.mrb[0].mxu0 %v502
      %v774 = vpop.f32.mrb[0].mxu0
      %v775 = vadd.f32 0.0, %v774
      %v776 = vpop.f32.mrb[0].mxu0
      %v777 = vpop.f32.mrb[0].mxu0
      %v778 = vadd.f32 0.0, %v777
      %v779 = vpop.f32.mrb[0].mxu0
      %780 = vmatprep.mubr.bf16.mxu0 0
      %781 = vmatmul.mubr.bf16.gmra.mrb[0].mxu0 %v505
      %v782 = vpop.f32.mrb[0].mxu0
      %v783 = vadd.f32 0.0, %v782
      %v784 = vpop.f32.mrb[0].mxu0
      %v785 = vpop.f32.mrb[0].mxu0
      %v786 = vadd.f32 0.0, %v785
      %v787 = vpop.f32.mrb[0].mxu0
      %788 = vmatprep.mubr.bf16.mxu0 0
      %789 = vmatmul.mubr.bf16.gmra.mrb[0].mxu0 %v508
      %v790 = vpop.f32.mrb[0].mxu0
      %v791 = vadd.f32 0.0, %v790
      %v792 = vpop.f32.mrb[0].mxu0
      %v793 = vpop.f32.mrb[0].mxu0
      %v794 = vadd.f32 0.0, %v793
      %v795 = vpop.f32.mrb[0].mxu0
      %796 = vmatprep.mubr.bf16.mxu0 0
      %797 = vmatmul.mubr.bf16.gmra.mrb[0].mxu0 %v511
      %v798 = vpop.f32.mrb[0].mxu0
      %v799 = vadd.f32 0.0, %v798
      %v800 = vpop.f32.mrb[0].mxu0
      %v801 = vpop.f32.mrb[0].mxu0
      %v802 = vadd.f32 0.0, %v801
      %v803 = vpop.f32.mrb[0].mxu0
      %804 = vmatprep.mubr.bf16.mxu0 0
      %805 = vmatmul.mubr.bf16.gmra.mrb[0].mxu0 %v514
      %v806 = vpop.f32.mrb[0].mxu0
      %v807 = vadd.f32 0.0, %v806
      %v808 = vpop.f32.mrb[0].mxu0
      %v809 = vpop.f32.mrb[0].mxu0
      %v810 = vadd.f32 0.0, %v809
      %v811 = vpop.f32.mrb[0].mxu0
      %812 = vmatprep.mubr.bf16.mxu0 0
      %813 = vmatmul.mubr.bf16.gmra.mrb[0].mxu0 %v517
      %v814 = vpop.f32.mrb[0].mxu0
      %v815 = vadd.f32 0.0, %v814
      %v816 = vpop.f32.mrb[0].mxu0
      %v817 = vpop.f32.mrb[0].mxu0
      %v818 = vadd.f32 0.0, %v817
      %v819 = vpop.f32.mrb[0].mxu0
      %820 = vmatprep.mubr.bf16.mxu0 0
      %821 = vmatmul.mubr.bf16.gmra.mrb[0].mxu0 %v520
      %v822 = vpop.f32.mrb[0].mxu0
      %v823 = vadd.f32 0.0, %v822
      %v824 = vpop.f32.mrb[0].mxu0
      %v825 = vpop.f32.mrb[0].mxu0
      %v826 = vadd.f32 0.0, %v825
      %v827 = vpop.f32.mrb[0].mxu0
      %828 = vmatprep.mubr.bf16.mxu0 0
      %829 = vmatmul.mubr.bf16.gmra.mrb[0].mxu0 %v523
      %v830 = vpop.f32.mrb[0].mxu0
      %v831 = vadd.f32 0.0, %v830
      %v832 = vpop.f32.mrb[0].mxu0
      %v833 = vpop.f32.mrb[0].mxu0
      %v834 = vpop.f32.mrb[0].mxu0
      %835 = vdwg.mxu0
      %s836 = scalar_lea.vmem %s165, 268
      %v837 = vld [vmem:[%s836] sm:$0xf]
      %v838 = vld [vmem:[%s836 + $0x4] sm:$0xf]
      %v839 = vld [vmem:[%s836 + $0x8] sm:$0xf]
      %v840 = vld [vmem:[%s836 + $0xc] sm:$0xf]
      %v841 = vld [vmem:[%s836 + $0x10] sm:$0xf]
      %v842 = vld [vmem:[%s836 + $0x14] sm:$0xf]
      %v843 = vld [vmem:[%s836 + $0x18] sm:$0xf]
      %v844 = vld [vmem:[%s836 + $0x1c] sm:$0xf]
      %v845 = vld [vmem:[%s836 + $0x20] sm:$0xf]
      %v846 = vld [vmem:[%s836 + $0x24] sm:$0xf]
      %v847 = vld [vmem:[%s836 + $0x28] sm:$0xf]
      %v848 = vld [vmem:[%s836 + $0x2c] sm:$0xf]
      %v849 = vld [vmem:[%s836 + $0x30] sm:$0xf]
      %v850 = vld [vmem:[%s836 + $0x34] sm:$0xf]
      %v851 = vld [vmem:[%s836 + $0x38] sm:$0xf]
      %v852 = vld [vmem:[%s836 + $0x3c] sm:$0xf]
      %v853 = vld [vmem:[%s836 + $0x40] sm:$0xf]
      %v854 = vld [vmem:[%s836 + $0x44] sm:$0xf]
      %v855 = vld [vmem:[%s836 + $0x48] sm:$0xf]
      %v856 = vld [vmem:[%s836 + $0x4c] sm:$0xf]
      %v857 = vld [vmem:[%s836 + $0x50] sm:$0xf]
      %v858 = vld [vmem:[%s836 + $0x54] sm:$0xf]
      %v859 = vld [vmem:[%s836 + $0x58] sm:$0xf]
      %v860 = vld [vmem:[%s836 + $0x5c] sm:$0xf]
      %v861 = vld [vmem:[%s836 + $0x60] sm:$0xf]
      %v862 = vld [vmem:[%s836 + $0x64] sm:$0xf]
      %v863 = vld [vmem:[%s836 + $0x68] sm:$0xf]
      %v864 = vld [vmem:[%s836 + $0x6c] sm:$0xf]
      %v865 = vld [vmem:[%s836 + $0x70] sm:$0xf]
      %v866 = vld [vmem:[%s836 + $0x74] sm:$0xf]
      %v867 = vld [vmem:[%s836 + $0x78] sm:$0xf]
      %v868 = vld [vmem:[%s836 + $0x7c] sm:$0xf]
      %v869 = vld [vmem:[%s836 + $0x80] sm:$0xf]
      %v870 = vld [vmem:[%s836 + $0x84] sm:$0xf]
      %v871 = vld [vmem:[%s836 + $0x88] sm:$0xf]
      %v872 = vld [vmem:[%s836 + $0x8c] sm:$0xf]
      %v873 = vld [vmem:[%s836 + $0x90] sm:$0xf]
      %v874 = vld [vmem:[%s836 + $0x94] sm:$0xf]
      %v875 = vld [vmem:[%s836 + $0x98] sm:$0xf]
      %v876 = vld [vmem:[%s836 + $0x9c] sm:$0xf]
      %v877 = vld [vmem:[%s836 + $0xa0] sm:$0xf]
      %v878 = vld [vmem:[%s836 + $0xa4] sm:$0xf]
      %v879 = vld [vmem:[%s836 + $0xa8] sm:$0xf]
      %v880 = vld [vmem:[%s836 + $0xac] sm:$0xf]
      %v881 = vld [vmem:[%s836 + $0xb0] sm:$0xf]
      %v882 = vld [vmem:[%s836 + $0xb4] sm:$0xf]
      %v883 = vld [vmem:[%s836 + $0xb8] sm:$0xf]
      %v884 = vld [vmem:[%s836 + $0xbc] sm:$0xf]
      %v885 = vld [vmem:[%s836 + $0xc0] sm:$0xf]
      %v886 = vld [vmem:[%s836 + $0xc4] sm:$0xf]
      %v887 = vld [vmem:[%s836 + $0xc8] sm:$0xf]
      %v888 = vld [vmem:[%s836 + $0xcc] sm:$0xf]
      %v889 = vld [vmem:[%s836 + $0xd0] sm:$0xf]
      %v890 = vld [vmem:[%s836 + $0xd4] sm:$0xf]
      %v891 = vld [vmem:[%s836 + $0xd8] sm:$0xf]
      %v892 = vld [vmem:[%s836 + $0xdc] sm:$0xf]
      %v893 = vld [vmem:[%s836 + $0xe0] sm:$0xf]
      %v894 = vld [vmem:[%s836 + $0xe4] sm:$0xf]
      %v895 = vld [vmem:[%s836 + $0xe8] sm:$0xf]
      %v896 = vld [vmem:[%s836 + $0xec] sm:$0xf]
      %v897 = vld [vmem:[%s836 + $0xf0] sm:$0xf]
      %v898 = vld [vmem:[%s836 + $0xf4] sm:$0xf]
      %v899 = vld [vmem:[%s836 + $0xf8] sm:$0xf]
      %v900 = vld [vmem:[%s836 + $0xfc] sm:$0xf]
      %v901 = vld [vmem:[%s836 + $0x100] sm:$0xf]
      %v902 = vld [vmem:[%s836 + $0x104] sm:$0xf]
      %v903 = vld [vmem:[%s836 + $0x108] sm:$0x1]
      %v971 = vunpack.c.l.b16 %v837
      %v972 = vunpack.c.l.b16 %v838
      %v973 = vunpack.c.l.b16 %v839
      %v974 = vunpack.c.l.b16 %v840
      %v975 = vunpack.c.l.b16 %v841
      %v976 = vunpack.c.l.b16 %v842
      %v977 = vunpack.c.l.b16 %v843
      %v978 = vunpack.c.l.b16 %v844
      %v979 = vunpack.c.l.b16 %v845
      %v980 = vunpack.c.l.b16 %v846
      %v981 = vunpack.c.l.b16 %v847
      %v982 = vunpack.c.l.b16 %v848
      %v983 = vunpack.c.l.b16 %v849
      %v984 = vunpack.c.l.b16 %v850
      %v985 = vunpack.c.l.b16 %v851
      %v986 = vunpack.c.l.b16 %v852
      %v987 = vunpack.c.l.b16 %v853
      %v988 = vunpack.c.l.b16 %v854
      %v989 = vunpack.c.l.b16 %v855
      %v990 = vunpack.c.l.b16 %v856
      %v991 = vunpack.c.l.b16 %v857
      %v992 = vunpack.c.l.b16 %v858
      %v993 = vunpack.c.l.b16 %v859
      %v994 = vunpack.c.l.b16 %v860
      %v995 = vunpack.c.l.b16 %v861
      %v996 = vunpack.c.l.b16 %v862
      %v997 = vunpack.c.l.b16 %v863
      %v998 = vunpack.c.l.b16 %v864
      %v999 = vunpack.c.l.b16 %v865
      %v1000 = vunpack.c.l.b16 %v866
      %v1001 = vunpack.c.l.b16 %v867
      %v1002 = vunpack.c.l.b16 %v868
      %v1003 = vunpack.c.l.b16 %v869
      %v1004 = vunpack.c.l.b16 %v870
      %v1005 = vunpack.c.l.b16 %v871
      %v1006 = vunpack.c.l.b16 %v872
      %v1007 = vunpack.c.l.b16 %v873
      %v1008 = vunpack.c.l.b16 %v874
      %v1009 = vunpack.c.l.b16 %v875
      %v1010 = vunpack.c.l.b16 %v876
      %v1011 = vunpack.c.l.b16 %v877
      %v1012 = vunpack.c.l.b16 %v878
      %v1013 = vunpack.c.l.b16 %v879
      %v1014 = vunpack.c.l.b16 %v880
      %v1015 = vunpack.c.l.b16 %v881
      %v1016 = vunpack.c.l.b16 %v882
      %v1017 = vunpack.c.l.b16 %v883
      %v1018 = vunpack.c.l.b16 %v884
      %v1019 = vunpack.c.l.b16 %v885
      %v1020 = vunpack.c.l.b16 %v886
      %v1021 = vunpack.c.l.b16 %v887
      %v1022 = vunpack.c.l.b16 %v888
      %v1023 = vunpack.c.l.b16 %v889
      %v1024 = vunpack.c.l.b16 %v890
      %v1025 = vunpack.c.l.b16 %v891
      %v1026 = vunpack.c.l.b16 %v892
      %v1027 = vunpack.c.l.b16 %v893
      %v1028 = vunpack.c.l.b16 %v894
      %v1029 = vunpack.c.l.b16 %v895
      %v1030 = vunpack.c.l.b16 %v896
      %v1031 = vunpack.c.l.b16 %v897
      %v1032 = vunpack.c.l.b16 %v898
      %v1033 = vunpack.c.l.b16 %v899
      %v1034 = vunpack.c.l.b16 %v900
      %v1035 = vunpack.c.l.b16 %v901
      %v1036 = vunpack.c.l.b16 %v902
      %v1037 = vunpack.c.l.b16 %v903
      %v1038 = vpack.c.b16 %v972, %v971
      %v1039 = vpack.c.b16 %v974, %v973
      %v1040 = vpack.c.b16 %v976, %v975
      %v1041 = vpack.c.b16 %v978, %v977
      %v1042 = vpack.c.b16 %v980, %v979
      %v1043 = vpack.c.b16 %v982, %v981
      %v1044 = vpack.c.b16 %v984, %v983
      %v1045 = vpack.c.b16 %v986, %v985
      %v1046 = vpack.c.b16 %v988, %v987
      %v1047 = vpack.c.b16 %v990, %v989
      %v1048 = vpack.c.b16 %v992, %v991
      %v1049 = vpack.c.b16 %v994, %v993
      %v1050 = vpack.c.b16 %v996, %v995
      %v1051 = vpack.c.b16 %v998, %v997
      %v1052 = vpack.c.b16 %v1000, %v999
      %v1053 = vpack.c.b16 %v1002, %v1001
      %v1054 = vpack.c.b16 %v1004, %v1003
      %v1055 = vpack.c.b16 %v1006, %v1005
      %v1056 = vpack.c.b16 %v1008, %v1007
      %v1057 = vpack.c.b16 %v1010, %v1009
      %v1058 = vpack.c.b16 %v1012, %v1011
      %v1059 = vpack.c.b16 %v1014, %v1013
      %v1060 = vpack.c.b16 %v1016, %v1015
      %v1061 = vpack.c.b16 %v1018, %v1017
      %v1062 = vpack.c.b16 %v1020, %v1019
      %v1063 = vpack.c.b16 %v1022, %v1021
      %v1064 = vpack.c.b16 %v1024, %v1023
      %v1065 = vpack.c.b16 %v1026, %v1025
      %v1066 = vpack.c.b16 %v1028, %v1027
      %v1067 = vpack.c.b16 %v1030, %v1029
      %v1068 = vpack.c.b16 %v1032, %v1031
      %v1069 = vpack.c.b16 %v1034, %v1033
      %v1070 = vpack.c.b16 %v1036, %v1035
      %v1071 = vpack.c.b16 %v1037, %v1037
      %v1073 = vsel %vm422, %v1038, 0
      %v1076 = vsel %vm422, %v1039, 0
      %v1079 = vsel %vm422, %v1040, 0
      %v1082 = vsel %vm422, %v1041, 0
      %v1085 = vsel %vm422, %v1042, 0
      %v1088 = vsel %vm422, %v1043, 0
      %v1091 = vsel %vm422, %v1044, 0
      %v1094 = vsel %vm422, %v1045, 0
      %v1097 = vsel %vm422, %v1046, 0
      %v1100 = vsel %vm422, %v1047, 0
      %v1103 = vsel %vm422, %v1048, 0
      %v1106 = vsel %vm422, %v1049, 0
      %v1109 = vsel %vm422, %v1050, 0
      %v1112 = vsel %vm422, %v1051, 0
      %v1115 = vsel %vm422, %v1052, 0
      %v1118 = vsel %vm422, %v1053, 0
      %v1121 = vsel %vm422, %v1054, 0
      %v1124 = vsel %vm422, %v1055, 0
      %v1127 = vsel %vm422, %v1056, 0
      %v1130 = vsel %vm422, %v1057, 0
      %v1133 = vsel %vm422, %v1058, 0
      %v1136 = vsel %vm422, %v1059, 0
      %v1139 = vsel %vm422, %v1060, 0
      %v1142 = vsel %vm422, %v1061, 0
      %v1145 = vsel %vm422, %v1062, 0
      %v1148 = vsel %vm422, %v1063, 0
      %v1151 = vsel %vm422, %v1064, 0
      %v1154 = vsel %vm422, %v1065, 0
      %v1157 = vsel %vm422, %v1066, 0
      %v1160 = vsel %vm422, %v1067, 0
      %v1163 = vsel %vm422, %v1068, 0
      %v1166 = vsel %vm422, %v1069, 0
      %v1169 = vsel %vm422, %v1070, 0
      %v1172 = vsel %vm422, %v1071, 0
      %1174 = vmatprep.subr.bf16.mxu0 0
      %1175 = vmatpush1.bf16.msra.mxu0 %v419
      %1176 = vmatprep.subr.bf16.mxu0 0
      %1177 = vmatpush1.bf16.msra.mxu0 %v530
      %1178 = vmatprep.subr.bf16.mxu0 0
      %1179 = vmatpush1.bf16.msra.mxu0 0
      %1180 = vmatprep.subr.bf16.mxu0 0
      %1181 = vmatpush1.bf16.msra.mxu0 0
      %1182 = vmatprep.subr.bf16.mxu0 0
      %1183 = vmatpush1.bf16.msra.mxu0 0
      %1184 = vmatprep.subr.bf16.mxu0 0
      %1185 = vmatpush1.bf16.msra.mxu0 0
      %1186 = vmatprep.subr.bf16.mxu0 0
      %1187 = vmatpush1.bf16.msra.mxu0 0
      %1188 = vmatprep.subr.bf16.mxu0 0
      %1189 = vmatpush1.bf16.msra.mxu0 0
      %1190 = vmatprep.subr.bf16.mxu0 0
      %1191 = vmatpush1.bf16.msra.mxu0 0
      %1192 = vmatprep.subr.bf16.mxu0 0
      %1193 = vmatpush1.bf16.msra.mxu0 0
      %1194 = vmatprep.subr.bf16.mxu0 0
      %1195 = vmatpush1.bf16.msra.mxu0 0
      %1196 = vmatprep.subr.bf16.mxu0 0
      %1197 = vmatpush1.bf16.msra.mxu0 0
      %1198 = vmatprep.subr.bf16.mxu0 0
      %1199 = vmatpush1.bf16.msra.mxu0 0
      %1200 = vmatprep.subr.bf16.mxu0 0
      %1201 = vmatpush1.bf16.msra.mxu0 0
      %1202 = vmatprep.subr.bf16.mxu0 0
      %1203 = vmatpush1.bf16.msra.mxu0 0
      %1204 = vmatprep.subr.bf16.mxu0 0
      %1205 = vmatpush1.bf16.msra.mxu0 0
      %1206 = vmatprep.mubr.bf16.mxu0 0
      %1207 = vmatmul.mubr.bf16.gmra.mrb[0].mxu0 %v1073
      %v1208 = vpop.f32.mrb[0].mxu0
      %v1209 = vadd.f32 0.0, %v1208
      %v1210 = vpop.f32.mrb[0].mxu0
      %v1211 = vpop.f32.mrb[0].mxu0
      %v1212 = vadd.f32 0.0, %v1211
      %v1213 = vpop.f32.mrb[0].mxu0
      %1214 = vmatprep.mubr.bf16.mxu0 0
      %1215 = vmatmul.mubr.bf16.gmra.mrb[0].mxu0 %v1076
      %v1216 = vpop.f32.mrb[0].mxu0
      %v1217 = vadd.f32 0.0, %v1216
      %v1218 = vpop.f32.mrb[0].mxu0
      %v1219 = vpop.f32.mrb[0].mxu0
      %v1220 = vadd.f32 0.0, %v1219
      %v1221 = vpop.f32.mrb[0].mxu0
      %1222 = vmatprep.mubr.bf16.mxu0 0
      %1223 = vmatmul.mubr.bf16.gmra.mrb[0].mxu0 %v1079
      %v1224 = vpop.f32.mrb[0].mxu0
      %v1225 = vadd.f32 0.0, %v1224
      %v1226 = vpop.f32.mrb[0].mxu0
      %v1227 = vpop.f32.mrb[0].mxu0
      %v1228 = vadd.f32 0.0, %v1227
      %v1229 = vpop.f32.mrb[0].mxu0
      %1230 = vmatprep.mubr.bf16.mxu0 0
      %1231 = vmatmul.mubr.bf16.gmra.mrb[0].mxu0 %v1082
      %v1232 = vpop.f32.mrb[0].mxu0
      %v1233 = vadd.f32 0.0, %v1232
      %v1234 = vpop.f32.mrb[0].mxu0
      %v1235 = vpop.f32.mrb[0].mxu0
      %v1236 = vadd.f32 0.0, %v1235
      %v1237 = vpop.f32.mrb[0].mxu0
      %1238 = vmatprep.mubr.bf16.mxu0 0
      %1239 = vmatmul.mubr.bf16.gmra.mrb[0].mxu0 %v1085
      %v1240 = vpop.f32.mrb[0].mxu0
      %v1241 = vadd.f32 0.0, %v1240
      %v1242 = vpop.f32.mrb[0].mxu0
      %v1243 = vpop.f32.mrb[0].mxu0
      %v1244 = vadd.f32 0.0, %v1243
      %v1245 = vpop.f32.mrb[0].mxu0
      %1246 = vmatprep.mubr.bf16.mxu0 0
      %1247 = vmatmul.mubr.bf16.gmra.mrb[0].mxu0 %v1088
      %v1248 = vpop.f32.mrb[0].mxu0
      %v1249 = vadd.f32 0.0, %v1248
      %v1250 = vpop.f32.mrb[0].mxu0
      %v1251 = vpop.f32.mrb[0].mxu0
      %v1252 = vadd.f32 0.0, %v1251
      %v1253 = vpop.f32.mrb[0].mxu0
      %1254 = vmatprep.mubr.bf16.mxu0 0
      %1255 = vmatmul.mubr.bf16.gmra.mrb[0].mxu0 %v1091
      %v1256 = vpop.f32.mrb[0].mxu0
      %v1257 = vadd.f32 0.0, %v1256
      %v1258 = vpop.f32.mrb[0].mxu0
      %v1259 = vpop.f32.mrb[0].mxu0
      %v1260 = vadd.f32 0.0, %v1259
      %v1261 = vpop.f32.mrb[0].mxu0
      %1262 = vmatprep.mubr.bf16.mxu0 0
      %1263 = vmatmul.mubr.bf16.gmra.mrb[0].mxu0 %v1094
      %v1264 = vpop.f32.mrb[0].mxu0
      %v1265 = vadd.f32 0.0, %v1264
      %v1266 = vpop.f32.mrb[0].mxu0
      %v1267 = vpop.f32.mrb[0].mxu0
      %v1268 = vadd.f32 0.0, %v1267
      %v1269 = vpop.f32.mrb[0].mxu0
      %1270 = vmatprep.mubr.bf16.mxu0 0
      %1271 = vmatmul.mubr.bf16.gmra.mrb[0].mxu0 %v1097
      %v1272 = vpop.f32.mrb[0].mxu0
      %v1273 = vadd.f32 0.0, %v1272
      %v1274 = vpop.f32.mrb[0].mxu0
      %v1275 = vpop.f32.mrb[0].mxu0
      %v1276 = vadd.f32 0.0, %v1275
      %v1277 = vpop.f32.mrb[0].mxu0
      %1278 = vmatprep.mubr.bf16.mxu0 0
      %1279 = vmatmul.mubr.bf16.gmra.mrb[0].mxu0 %v1100
      %v1280 = vpop.f32.mrb[0].mxu0
      %v1281 = vadd.f32 0.0, %v1280
      %v1282 = vpop.f32.mrb[0].mxu0
      %v1283 = vpop.f32.mrb[0].mxu0
      %v1284 = vadd.f32 0.0, %v1283
      %v1285 = vpop.f32.mrb[0].mxu0
      %1286 = vmatprep.mubr.bf16.mxu0 0
      %1287 = vmatmul.mubr.bf16.gmra.mrb[0].mxu0 %v1103
      %v1288 = vpop.f32.mrb[0].mxu0
      %v1289 = vadd.f32 0.0, %v1288
      %v1290 = vpop.f32.mrb[0].mxu0
      %v1291 = vpop.f32.mrb[0].mxu0
      %v1292 = vadd.f32 0.0, %v1291
      %v1293 = vpop.f32.mrb[0].mxu0
      %1294 = vmatprep.mubr.bf16.mxu0 0
      %1295 = vmatmul.mubr.bf16.gmra.mrb[0].mxu0 %v1106
      %v1296 = vpop.f32.mrb[0].mxu0
      %v1297 = vadd.f32 0.0, %v1296
      %v1298 = vpop.f32.mrb[0].mxu0
      %v1299 = vpop.f32.mrb[0].mxu0
      %v1300 = vadd.f32 0.0, %v1299
      %v1301 = vpop.f32.mrb[0].mxu0
      %1302 = vmatprep.mubr.bf16.mxu0 0
      %1303 = vmatmul.mubr.bf16.gmra.mrb[0].mxu0 %v1109
      %v1304 = vpop.f32.mrb[0].mxu0
      %v1305 = vadd.f32 0.0, %v1304
      %v1306 = vpop.f32.mrb[0].mxu0
      %v1307 = vpop.f32.mrb[0].mxu0
      %v1308 = vadd.f32 0.0, %v1307
      %v1309 = vpop.f32.mrb[0].mxu0
      %1310 = vmatprep.mubr.bf16.mxu0 0
      %1311 = vmatmul.mubr.bf16.gmra.mrb[0].mxu0 %v1112
      %v1312 = vpop.f32.mrb[0].mxu0
      %v1313 = vadd.f32 0.0, %v1312
      %v1314 = vpop.f32.mrb[0].mxu0
      %v1315 = vpop.f32.mrb[0].mxu0
      %v1316 = vadd.f32 0.0, %v1315
      %v1317 = vpop.f32.mrb[0].mxu0
      %1318 = vmatprep.mubr.bf16.mxu0 0
      %1319 = vmatmul.mubr.bf16.gmra.mrb[0].mxu0 %v1115
      %v1320 = vpop.f32.mrb[0].mxu0
      %v1321 = vadd.f32 0.0, %v1320
      %v1322 = vpop.f32.mrb[0].mxu0
      %v1323 = vpop.f32.mrb[0].mxu0
      %v1324 = vadd.f32 0.0, %v1323
      %v1325 = vpop.f32.mrb[0].mxu0
      %1326 = vmatprep.mubr.bf16.mxu0 0
      %1327 = vmatmul.mubr.bf16.gmra.mrb[0].mxu0 %v1118
      %v1328 = vpop.f32.mrb[0].mxu0
      %v1329 = vadd.f32 0.0, %v1328
      %v1330 = vpop.f32.mrb[0].mxu0
      %v1331 = vpop.f32.mrb[0].mxu0
      %v1332 = vadd.f32 0.0, %v1331
      %v1333 = vpop.f32.mrb[0].mxu0
      %1334 = vmatprep.mubr.bf16.mxu0 0
      %1335 = vmatmul.mubr.bf16.gmra.mrb[0].mxu0 %v1121
      %v1336 = vpop.f32.mrb[0].mxu0
      %v1337 = vadd.f32 0.0, %v1336
      %v1338 = vpop.f32.mrb[0].mxu0
      %v1339 = vpop.f32.mrb[0].mxu0
      %v1340 = vadd.f32 0.0, %v1339
      %v1341 = vpop.f32.mrb[0].mxu0
      %1342 = vmatprep.mubr.bf16.mxu0 0
      %1343 = vmatmul.mubr.bf16.gmra.mrb[0].mxu0 %v1124
      %v1344 = vpop.f32.mrb[0].mxu0
      %v1345 = vadd.f32 0.0, %v1344
      %v1346 = vpop.f32.mrb[0].mxu0
      %v1347 = vpop.f32.mrb[0].mxu0
      %v1348 = vadd.f32 0.0, %v1347
      %v1349 = vpop.f32.mrb[0].mxu0
      %1350 = vmatprep.mubr.bf16.mxu0 0
      %1351 = vmatmul.mubr.bf16.gmra.mrb[0].mxu0 %v1127
      %v1352 = vpop.f32.mrb[0].mxu0
      %v1353 = vadd.f32 0.0, %v1352
      %v1354 = vpop.f32.mrb[0].mxu0
      %v1355 = vpop.f32.mrb[0].mxu0
      %v1356 = vadd.f32 0.0, %v1355
      %v1357 = vpop.f32.mrb[0].mxu0
      %1358 = vmatprep.mubr.bf16.mxu0 0
      %1359 = vmatmul.mubr.bf16.gmra.mrb[0].mxu0 %v1130
      %v1360 = vpop.f32.mrb[0].mxu0
      %v1361 = vadd.f32 0.0, %v1360
      %v1362 = vpop.f32.mrb[0].mxu0
      %v1363 = vpop.f32.mrb[0].mxu0
      %v1364 = vadd.f32 0.0, %v1363
      %v1365 = vpop.f32.mrb[0].mxu0
      %1366 = vmatprep.mubr.bf16.mxu0 0
      %1367 = vmatmul.mubr.bf16.gmra.mrb[0].mxu0 %v1133
      %v1368 = vpop.f32.mrb[0].mxu0
      %v1369 = vadd.f32 0.0, %v1368
      %v1370 = vpop.f32.mrb[0].mxu0
      %v1371 = vpop.f32.mrb[0].mxu0
      %v1372 = vadd.f32 0.0, %v1371
      %v1373 = vpop.f32.mrb[0].mxu0
      %1374 = vmatprep.mubr.bf16.mxu0 0
      %1375 = vmatmul.mubr.bf16.gmra.mrb[0].mxu0 %v1136
      %v1376 = vpop.f32.mrb[0].mxu0
      %v1377 = vadd.f32 0.0, %v1376
      %v1378 = vpop.f32.mrb[0].mxu0
      %v1379 = vpop.f32.mrb[0].mxu0
      %v1380 = vadd.f32 0.0, %v1379
      %v1381 = vpop.f32.mrb[0].mxu0
      %1382 = vmatprep.mubr.bf16.mxu0 0
      %1383 = vmatmul.mubr.bf16.gmra.mrb[0].mxu0 %v1139
      %v1384 = vpop.f32.mrb[0].mxu0
      %v1385 = vadd.f32 0.0, %v1384
      %v1386 = vpop.f32.mrb[0].mxu0
      %v1387 = vpop.f32.mrb[0].mxu0
      %v1388 = vadd.f32 0.0, %v1387
      %v1389 = vpop.f32.mrb[0].mxu0
      %1390 = vmatprep.mubr.bf16.mxu0 0
      %1391 = vmatmul.mubr.bf16.gmra.mrb[0].mxu0 %v1142
      %v1392 = vpop.f32.mrb[0].mxu0
      %v1393 = vadd.f32 0.0, %v1392
      %v1394 = vpop.f32.mrb[0].mxu0
      %v1395 = vpop.f32.mrb[0].mxu0
      %v1396 = vadd.f32 0.0, %v1395
      %v1397 = vpop.f32.mrb[0].mxu0
      %1398 = vmatprep.mubr.bf16.mxu0 0
      %1399 = vmatmul.mubr.bf16.gmra.mrb[0].mxu0 %v1145
      %v1400 = vpop.f32.mrb[0].mxu0
      %v1401 = vadd.f32 0.0, %v1400
      %v1402 = vpop.f32.mrb[0].mxu0
      %v1403 = vpop.f32.mrb[0].mxu0
      %v1404 = vadd.f32 0.0, %v1403
      %v1405 = vpop.f32.mrb[0].mxu0
      %1406 = vmatprep.mubr.bf16.mxu0 0
      %1407 = vmatmul.mubr.bf16.gmra.mrb[0].mxu0 %v1148
      %v1408 = vpop.f32.mrb[0].mxu0
      %v1409 = vadd.f32 0.0, %v1408
      %v1410 = vpop.f32.mrb[0].mxu0
      %v1411 = vpop.f32.mrb[0].mxu0
      %v1412 = vadd.f32 0.0, %v1411
      %v1413 = vpop.f32.mrb[0].mxu0
      %1414 = vmatprep.mubr.bf16.mxu0 0
      %1415 = vmatmul.mubr.bf16.gmra.mrb[0].mxu0 %v1151
      %v1416 = vpop.f32.mrb[0].mxu0
      %v1417 = vadd.f32 0.0, %v1416
      %v1418 = vpop.f32.mrb[0].mxu0
      %v1419 = vpop.f32.mrb[0].mxu0
      %v1420 = vadd.f32 0.0, %v1419
      %v1421 = vpop.f32.mrb[0].mxu0
      %1422 = vmatprep.mubr.bf16.mxu0 0
      %1423 = vmatmul.mubr.bf16.gmra.mrb[0].mxu0 %v1154
      %v1424 = vpop.f32.mrb[0].mxu0
      %v1425 = vadd.f32 0.0, %v1424
      %v1426 = vpop.f32.mrb[0].mxu0
      %v1427 = vpop.f32.mrb[0].mxu0
      %v1428 = vadd.f32 0.0, %v1427
      %v1429 = vpop.f32.mrb[0].mxu0
      %1430 = vmatprep.mubr.bf16.mxu0 0
      %1431 = vmatmul.mubr.bf16.gmra.mrb[0].mxu0 %v1157
      %v1432 = vpop.f32.mrb[0].mxu0
      %v1433 = vadd.f32 0.0, %v1432
      %v1434 = vpop.f32.mrb[0].mxu0
      %v1435 = vpop.f32.mrb[0].mxu0
      %v1436 = vadd.f32 0.0, %v1435
      %v1437 = vpop.f32.mrb[0].mxu0
      %1438 = vmatprep.mubr.bf16.mxu0 0
      %1439 = vmatmul.mubr.bf16.gmra.mrb[0].mxu0 %v1160
      %v1440 = vpop.f32.mrb[0].mxu0
      %v1441 = vadd.f32 0.0, %v1440
      %v1442 = vpop.f32.mrb[0].mxu0
      %v1443 = vpop.f32.mrb[0].mxu0
      %v1444 = vadd.f32 0.0, %v1443
      %v1445 = vpop.f32.mrb[0].mxu0
      %1446 = vmatprep.mubr.bf16.mxu0 0
      %1447 = vmatmul.mubr.bf16.gmra.mrb[0].mxu0 %v1163
      %v1448 = vpop.f32.mrb[0].mxu0
      %v1449 = vadd.f32 0.0, %v1448
      %v1450 = vpop.f32.mrb[0].mxu0
      %v1451 = vpop.f32.mrb[0].mxu0
      %v1452 = vadd.f32 0.0, %v1451
      %v1453 = vpop.f32.mrb[0].mxu0
      %1454 = vmatprep.mubr.bf16.mxu0 0
      %1455 = vmatmul.mubr.bf16.gmra.mrb[0].mxu0 %v1166
      %v1456 = vpop.f32.mrb[0].mxu0
      %v1457 = vadd.f32 0.0, %v1456
      %v1458 = vpop.f32.mrb[0].mxu0
      %v1459 = vpop.f32.mrb[0].mxu0
      %v1460 = vadd.f32 0.0, %v1459
      %v1461 = vpop.f32.mrb[0].mxu0
      %1462 = vmatprep.mubr.bf16.mxu0 0
      %1463 = vmatmul.mubr.bf16.gmra.mrb[0].mxu0 %v1169
      %v1464 = vpop.f32.mrb[0].mxu0
      %v1465 = vadd.f32 0.0, %v1464
      %v1466 = vpop.f32.mrb[0].mxu0
      %v1467 = vpop.f32.mrb[0].mxu0
      %v1468 = vadd.f32 0.0, %v1467
      %v1469 = vpop.f32.mrb[0].mxu0
      %1470 = vmatprep.mubr.bf16.mxu0 0
      %1471 = vmatmul.mubr.bf16.gmra.mrb[0].mxu0 %v1172
      %v1472 = vpop.f32.mrb[0].mxu0
      %v1473 = vadd.f32 0.0, %v1472
      %v1474 = vpop.f32.mrb[0].mxu0
      %v1475 = vpop.f32.mrb[0].mxu0
      %v1476 = vpop.f32.mrb[0].mxu0
      %1477 = vdwg.mxu0
      %v1478 = vmax.f32 %v567, %v1209
      %v1479 = vmax.f32 %v570, %v1212
      %v1480 = vmax.f32 %v575, %v1217
      %v1481 = vmax.f32 %v578, %v1220
      %v1482 = vmax.f32 %v583, %v1225
      %v1483 = vmax.f32 %v586, %v1228
      %v1484 = vmax.f32 %v591, %v1233
      %v1485 = vmax.f32 %v594, %v1236
      %v1486 = vmax.f32 %v599, %v1241
      %v1487 = vmax.f32 %v602, %v1244
      %v1488 = vmax.f32 %v607, %v1249
      %v1489 = vmax.f32 %v610, %v1252
      %v1490 = vmax.f32 %v615, %v1257
      %v1491 = vmax.f32 %v618, %v1260
      %v1492 = vmax.f32 %v623, %v1265
      %v1493 = vmax.f32 %v626, %v1268
      %v1494 = vmax.f32 %v631, %v1273
      %v1495 = vmax.f32 %v634, %v1276
      %v1496 = vmax.f32 %v639, %v1281
      %v1497 = vmax.f32 %v642, %v1284
      %v1498 = vmax.f32 %v647, %v1289
      %v1499 = vmax.f32 %v650, %v1292
      %v1500 = vmax.f32 %v655, %v1297
      %v1501 = vmax.f32 %v658, %v1300
      %v1502 = vmax.f32 %v663, %v1305
      %v1503 = vmax.f32 %v666, %v1308
      %v1504 = vmax.f32 %v671, %v1313
      %v1505 = vmax.f32 %v674, %v1316
      %v1506 = vmax.f32 %v679, %v1321
      %v1507 = vmax.f32 %v682, %v1324
      %v1508 = vmax.f32 %v687, %v1329
      %v1509 = vmax.f32 %v690, %v1332
      %v1510 = vmax.f32 %v695, %v1337
      %v1511 = vmax.f32 %v698, %v1340
      %v1512 = vmax.f32 %v703, %v1345
      %v1513 = vmax.f32 %v706, %v1348
      %v1514 = vmax.f32 %v711, %v1353
      %v1515 = vmax.f32 %v714, %v1356
      %v1516 = vmax.f32 %v719, %v1361
      %v1517 = vmax.f32 %v722, %v1364
      %v1518 = vmax.f32 %v727, %v1369
      %v1519 = vmax.f32 %v730, %v1372
      %v1520 = vmax.f32 %v735, %v1377
      %v1521 = vmax.f32 %v738, %v1380
      %v1522 = vmax.f32 %v743, %v1385
      %v1523 = vmax.f32 %v746, %v1388
      %v1524 = vmax.f32 %v751, %v1393
      %v1525 = vmax.f32 %v754, %v1396
      %v1526 = vmax.f32 %v759, %v1401
      %v1527 = vmax.f32 %v762, %v1404
      %v1528 = vmax.f32 %v767, %v1409
      %v1529 = vmax.f32 %v770, %v1412
      %v1530 = vmax.f32 %v775, %v1417
      %v1531 = vmax.f32 %v778, %v1420
      %v1532 = vmax.f32 %v783, %v1425
      %v1533 = vmax.f32 %v786, %v1428
      %v1534 = vmax.f32 %v791, %v1433
      %v1535 = vmax.f32 %v794, %v1436
      %v1536 = vmax.f32 %v799, %v1441
      %v1537 = vmax.f32 %v802, %v1444
      %v1538 = vmax.f32 %v807, %v1449
      %v1539 = vmax.f32 %v810, %v1452
      %v1540 = vmax.f32 %v815, %v1457
      %v1541 = vmax.f32 %v818, %v1460
      %v1542 = vmax.f32 %v823, %v1465
      %v1543 = vmax.f32 %v826, %v1468
      %v1544 = vmax.f32 %v831, %v1473
      %s1545 = scalar_lea.vmem %s165, 536
      %v1546 = vld [vmem:[%s1545] sm:$0xf]
      %v1547 = vld [vmem:[%s1545 + $0x4] sm:$0xf]
      %v1548 = vld [vmem:[%s1545 + $0x8] sm:$0xf]
      %v1549 = vld [vmem:[%s1545 + $0xc] sm:$0xf]
      %v1550 = vld [vmem:[%s1545 + $0x10] sm:$0xf]
      %v1551 = vld [vmem:[%s1545 + $0x14] sm:$0xf]
      %v1552 = vld [vmem:[%s1545 + $0x18] sm:$0xf]
      %v1553 = vld [vmem:[%s1545 + $0x1c] sm:$0xf]
      %v1554 = vld [vmem:[%s1545 + $0x20] sm:$0xf]
      %v1555 = vld [vmem:[%s1545 + $0x24] sm:$0xf]
      %v1556 = vld [vmem:[%s1545 + $0x28] sm:$0xf]
      %v1557 = vld [vmem:[%s1545 + $0x2c] sm:$0xf]
      %v1558 = vld [vmem:[%s1545 + $0x30] sm:$0xf]
      %v1559 = vld [vmem:[%s1545 + $0x34] sm:$0xf]
      %v1560 = vld [vmem:[%s1545 + $0x38] sm:$0xf]
      %v1561 = vld [vmem:[%s1545 + $0x3c] sm:$0xf]
      %v1562 = vld [vmem:[%s1545 + $0x40] sm:$0xf]
      %v1563 = vld [vmem:[%s1545 + $0x44] sm:$0xf]
      %v1564 = vld [vmem:[%s1545 + $0x48] sm:$0xf]
      %v1565 = vld [vmem:[%s1545 + $0x4c] sm:$0xf]
      %v1566 = vld [vmem:[%s1545 + $0x50] sm:$0xf]
      %v1567 = vld [vmem:[%s1545 + $0x54] sm:$0xf]
      %v1568 = vld [vmem:[%s1545 + $0x58] sm:$0xf]
      %v1569 = vld [vmem:[%s1545 + $0x5c] sm:$0xf]
      %v1570 = vld [vmem:[%s1545 + $0x60] sm:$0xf]
      %v1571 = vld [vmem:[%s1545 + $0x64] sm:$0xf]
      %v1572 = vld [vmem:[%s1545 + $0x68] sm:$0xf]
      %v1573 = vld [vmem:[%s1545 + $0x6c] sm:$0xf]
      %v1574 = vld [vmem:[%s1545 + $0x70] sm:$0xf]
      %v1575 = vld [vmem:[%s1545 + $0x74] sm:$0xf]
      %v1576 = vld [vmem:[%s1545 + $0x78] sm:$0xf]
      %v1577 = vld [vmem:[%s1545 + $0x7c] sm:$0xf]
      %v1578 = vld [vmem:[%s1545 + $0x80] sm:$0xf]
      %v1579 = vld [vmem:[%s1545 + $0x84] sm:$0xf]
      %v1580 = vld [vmem:[%s1545 + $0x88] sm:$0xf]
      %v1581 = vld [vmem:[%s1545 + $0x8c] sm:$0xf]
      %v1582 = vld [vmem:[%s1545 + $0x90] sm:$0xf]
      %v1583 = vld [vmem:[%s1545 + $0x94] sm:$0xf]
      %v1584 = vld [vmem:[%s1545 + $0x98] sm:$0xf]
      %v1585 = vld [vmem:[%s1545 + $0x9c] sm:$0xf]
      %v1586 = vld [vmem:[%s1545 + $0xa0] sm:$0xf]
      %v1587 = vld [vmem:[%s1545 + $0xa4] sm:$0xf]
      %v1588 = vld [vmem:[%s1545 + $0xa8] sm:$0xf]
      %v1589 = vld [vmem:[%s1545 + $0xac] sm:$0xf]
      %v1590 = vld [vmem:[%s1545 + $0xb0] sm:$0xf]
      %v1591 = vld [vmem:[%s1545 + $0xb4] sm:$0xf]
      %v1592 = vld [vmem:[%s1545 + $0xb8] sm:$0xf]
      %v1593 = vld [vmem:[%s1545 + $0xbc] sm:$0xf]
      %v1594 = vld [vmem:[%s1545 + $0xc0] sm:$0xf]
      %v1595 = vld [vmem:[%s1545 + $0xc4] sm:$0xf]
      %v1596 = vld [vmem:[%s1545 + $0xc8] sm:$0xf]
      %v1597 = vld [vmem:[%s1545 + $0xcc] sm:$0xf]
      %v1598 = vld [vmem:[%s1545 + $0xd0] sm:$0xf]
      %v1599 = vld [vmem:[%s1545 + $0xd4] sm:$0xf]
      %v1600 = vld [vmem:[%s1545 + $0xd8] sm:$0xf]
      %v1601 = vld [vmem:[%s1545 + $0xdc] sm:$0xf]
      %v1602 = vld [vmem:[%s1545 + $0xe0] sm:$0xf]
      %v1603 = vld [vmem:[%s1545 + $0xe4] sm:$0xf]
      %v1604 = vld [vmem:[%s1545 + $0xe8] sm:$0xf]
      %v1605 = vld [vmem:[%s1545 + $0xec] sm:$0xf]
      %v1606 = vld [vmem:[%s1545 + $0xf0] sm:$0xf]
      %v1607 = vld [vmem:[%s1545 + $0xf4] sm:$0xf]
      %v1608 = vld [vmem:[%s1545 + $0xf8] sm:$0xf]
      %v1609 = vld [vmem:[%s1545 + $0xfc] sm:$0xf]
      %v1610 = vld [vmem:[%s1545 + $0x100] sm:$0xf]
      %v1611 = vld [vmem:[%s1545 + $0x104] sm:$0xf]
      %v1612 = vld [vmem:[%s1545 + $0x108] sm:$0x1]
      %v1680 = vunpack.c.l.b16 %v1546
      %v1681 = vunpack.c.l.b16 %v1547
      %v1682 = vunpack.c.l.b16 %v1548
      %v1683 = vunpack.c.l.b16 %v1549
      %v1684 = vunpack.c.l.b16 %v1550
      %v1685 = vunpack.c.l.b16 %v1551
      %v1686 = vunpack.c.l.b16 %v1552
      %v1687 = vunpack.c.l.b16 %v1553
      %v1688 = vunpack.c.l.b16 %v1554
      %v1689 = vunpack.c.l.b16 %v1555
      %v1690 = vunpack.c.l.b16 %v1556
      %v1691 = vunpack.c.l.b16 %v1557
      %v1692 = vunpack.c.l.b16 %v1558
      %v1693 = vunpack.c.l.b16 %v1559
      %v1694 = vunpack.c.l.b16 %v1560
      %v1695 = vunpack.c.l.b16 %v1561
      %v1696 = vunpack.c.l.b16 %v1562
      %v1697 = vunpack.c.l.b16 %v1563
      %v1698 = vunpack.c.l.b16 %v1564
      %v1699 = vunpack.c.l.b16 %v1565
      %v1700 = vunpack.c.l.b16 %v1566
      %v1701 = vunpack.c.l.b16 %v1567
      %v1702 = vunpack.c.l.b16 %v1568
      %v1703 = vunpack.c.l.b16 %v1569
      %v1704 = vunpack.c.l.b16 %v1570
      %v1705 = vunpack.c.l.b16 %v1571
      %v1706 = vunpack.c.l.b16 %v1572
      %v1707 = vunpack.c.l.b16 %v1573
      %v1708 = vunpack.c.l.b16 %v1574
      %v1709 = vunpack.c.l.b16 %v1575
      %v1710 = vunpack.c.l.b16 %v1576
      %v1711 = vunpack.c.l.b16 %v1577
      %v1712 = vunpack.c.l.b16 %v1578
      %v1713 = vunpack.c.l.b16 %v1579
      %v1714 = vunpack.c.l.b16 %v1580
      %v1715 = vunpack.c.l.b16 %v1581
      %v1716 = vunpack.c.l.b16 %v1582
      %v1717 = vunpack.c.l.b16 %v1583
      %v1718 = vunpack.c.l.b16 %v1584
      %v1719 = vunpack.c.l.b16 %v1585
      %v1720 = vunpack.c.l.b16 %v1586
      %v1721 = vunpack.c.l.b16 %v1587
      %v1722 = vunpack.c.l.b16 %v1588
      %v1723 = vunpack.c.l.b16 %v1589
      %v1724 = vunpack.c.l.b16 %v1590
      %v1725 = vunpack.c.l.b16 %v1591
      %v1726 = vunpack.c.l.b16 %v1592
      %v1727 = vunpack.c.l.b16 %v1593
      %v1728 = vunpack.c.l.b16 %v1594
      %v1729 = vunpack.c.l.b16 %v1595
      %v1730 = vunpack.c.l.b16 %v1596
      %v1731 = vunpack.c.l.b16 %v1597
      %v1732 = vunpack.c.l.b16 %v1598
      %v1733 = vunpack.c.l.b16 %v1599
      %v1734 = vunpack.c.l.b16 %v1600
      %v1735 = vunpack.c.l.b16 %v1601
      %v1736 = vunpack.c.l.b16 %v1602
      %v1737 = vunpack.c.l.b16 %v1603
      %v1738 = vunpack.c.l.b16 %v1604
      %v1739 = vunpack.c.l.b16 %v1605
      %v1740 = vunpack.c.l.b16 %v1606
      %v1741 = vunpack.c.l.b16 %v1607
      %v1742 = vunpack.c.l.b16 %v1608
      %v1743 = vunpack.c.l.b16 %v1609
      %v1744 = vunpack.c.l.b16 %v1610
      %v1745 = vunpack.c.l.b16 %v1611
      %v1746 = vunpack.c.l.b16 %v1612
      %v1747 = vpack.c.b16 %v1681, %v1680
      %v1748 = vpack.c.b16 %v1683, %v1682
      %v1749 = vpack.c.b16 %v1685, %v1684
      %v1750 = vpack.c.b16 %v1687, %v1686
      %v1751 = vpack.c.b16 %v1689, %v1688
      %v1752 = vpack.c.b16 %v1691, %v1690
      %v1753 = vpack.c.b16 %v1693, %v1692
      %v1754 = vpack.c.b16 %v1695, %v1694
      %v1755 = vpack.c.b16 %v1697, %v1696
      %v1756 = vpack.c.b16 %v1699, %v1698
      %v1757 = vpack.c.b16 %v1701, %v1700
      %v1758 = vpack.c.b16 %v1703, %v1702
      %v1759 = vpack.c.b16 %v1705, %v1704
      %v1760 = vpack.c.b16 %v1707, %v1706
      %v1761 = vpack.c.b16 %v1709, %v1708
      %v1762 = vpack.c.b16 %v1711, %v1710
      %v1763 = vpack.c.b16 %v1713, %v1712
      %v1764 = vpack.c.b16 %v1715, %v1714
      %v1765 = vpack.c.b16 %v1717, %v1716
      %v1766 = vpack.c.b16 %v1719, %v1718
      %v1767 = vpack.c.b16 %v1721, %v1720
      %v1768 = vpack.c.b16 %v1723, %v1722
      %v1769 = vpack.c.b16 %v1725, %v1724
      %v1770 = vpack.c.b16 %v1727, %v1726
      %v1771 = vpack.c.b16 %v1729, %v1728
      %v1772 = vpack.c.b16 %v1731, %v1730
      %v1773 = vpack.c.b16 %v1733, %v1732
      %v1774 = vpack.c.b16 %v1735, %v1734
      %v1775 = vpack.c.b16 %v1737, %v1736
      %v1776 = vpack.c.b16 %v1739, %v1738
      %v1777 = vpack.c.b16 %v1741, %v1740
      %v1778 = vpack.c.b16 %v1743, %v1742
      %v1779 = vpack.c.b16 %v1745, %v1744
      %v1780 = vpack.c.b16 %v1746, %v1746
      %v1782 = vsel %vm422, %v1747, 0
      %v1785 = vsel %vm422, %v1748, 0
      %v1788 = vsel %vm422, %v1749, 0
      %v1791 = vsel %vm422, %v1750, 0
      %v1794 = vsel %vm422, %v1751, 0
      %v1797 = vsel %vm422, %v1752, 0
      %v1800 = vsel %vm422, %v1753, 0
      %v1803 = vsel %vm422, %v1754, 0
      %v1806 = vsel %vm422, %v1755, 0
      %v1809 = vsel %vm422, %v1756, 0
      %v1812 = vsel %vm422, %v1757, 0
      %v1815 = vsel %vm422, %v1758, 0
      %v1818 = vsel %vm422, %v1759, 0
      %v1821 = vsel %vm422, %v1760, 0
      %v1824 = vsel %vm422, %v1761, 0
      %v1827 = vsel %vm422, %v1762, 0
      %v1830 = vsel %vm422, %v1763, 0
      %v1833 = vsel %vm422, %v1764, 0
      %v1836 = vsel %vm422, %v1765, 0
      %v1839 = vsel %vm422, %v1766, 0
      %v1842 = vsel %vm422, %v1767, 0
      %v1845 = vsel %vm422, %v1768, 0
      %v1848 = vsel %vm422, %v1769, 0
      %v1851 = vsel %vm422, %v1770, 0
      %v1854 = vsel %vm422, %v1771, 0
      %v1857 = vsel %vm422, %v1772, 0
      %v1860 = vsel %vm422, %v1773, 0
      %v1863 = vsel %vm422, %v1774, 0
      %v1866 = vsel %vm422, %v1775, 0
      %v1869 = vsel %vm422, %v1776, 0
      %v1872 = vsel %vm422, %v1777, 0
      %v1875 = vsel %vm422, %v1778, 0
      %v1878 = vsel %vm422, %v1779, 0
      %v1881 = vsel %vm422, %v1780, 0
      %1883 = vmatprep.subr.bf16.mxu0 0
      %1884 = vmatpush1.bf16.msra.mxu0 %v419
      %1885 = vmatprep.subr.bf16.mxu0 0
      %1886 = vmatpush1.bf16.msra.mxu0 %v530
      %1887 = vmatprep.subr.bf16.mxu0 0
      %1888 = vmatpush1.bf16.msra.mxu0 0
      %1889 = vmatprep.subr.bf16.mxu0 0
      %1890 = vmatpush1.bf16.msra.mxu0 0
      %1891 = vmatprep.subr.bf16.mxu0 0
      %1892 = vmatpush1.bf16.msra.mxu0 0
      %1893 = vmatprep.subr.bf16.mxu0 0
      %1894 = vmatpush1.bf16.msra.mxu0 0
      %1895 = vmatprep.subr.bf16.mxu0 0
      %1896 = vmatpush1.bf16.msra.mxu0 0
      %1897 = vmatprep.subr.bf16.mxu0 0
      %1898 = vmatpush1.bf16.msra.mxu0 0
      %1899 = vmatprep.subr.bf16.mxu0 0
      %1900 = vmatpush1.bf16.msra.mxu0 0
      %1901 = vmatprep.subr.bf16.mxu0 0
      %1902 = vmatpush1.bf16.msra.mxu0 0
      %1903 = vmatprep.subr.bf16.mxu0 0
      %1904 = vmatpush1.bf16.msra.mxu0 0
      %1905 = vmatprep.subr.bf16.mxu0 0
      %1906 = vmatpush1.bf16.msra.mxu0 0
      %1907 = vmatprep.subr.bf16.mxu0 0
      %1908 = vmatpush1.bf16.msra.mxu0 0
      %1909 = vmatprep.subr.bf16.mxu0 0
      %1910 = vmatpush1.bf16.msra.mxu0 0
      %1911 = vmatprep.subr.bf16.mxu0 0
      %1912 = vmatpush1.bf16.msra.mxu0 0
      %1913 = vmatprep.subr.bf16.mxu0 0
      %1914 = vmatpush1.bf16.msra.mxu0 0
      %1915 = vmatprep.mubr.bf16.mxu0 0
      %1916 = vmatmul.mubr.bf16.gmra.mrb[0].mxu0 %v1782
      %v1917 = vpop.f32.mrb[0].mxu0
      %v1918 = vadd.f32 0.0, %v1917
      %v1919 = vpop.f32.mrb[0].mxu0
      %v1920 = vpop.f32.mrb[0].mxu0
      %v1921 = vadd.f32 0.0, %v1920
      %v1922 = vpop.f32.mrb[0].mxu0
      %1923 = vmatprep.mubr.bf16.mxu0 0
      %1924 = vmatmul.mubr.bf16.gmra.mrb[0].mxu0 %v1785
      %v1925 = vpop.f32.mrb[0].mxu0
      %v1926 = vadd.f32 0.0, %v1925
      %v1927 = vpop.f32.mrb[0].mxu0
      %v1928 = vpop.f32.mrb[0].mxu0
      %v1929 = vadd.f32 0.0, %v1928
      %v1930 = vpop.f32.mrb[0].mxu0
      %1931 = vmatprep.mubr.bf16.mxu0 0
      %1932 = vmatmul.mubr.bf16.gmra.mrb[0].mxu0 %v1788
      %v1933 = vpop.f32.mrb[0].mxu0
      %v1934 = vadd.f32 0.0, %v1933
      %v1935 = vpop.f32.mrb[0].mxu0
      %v1936 = vpop.f32.mrb[0].mxu0
      %v1937 = vadd.f32 0.0, %v1936
      %v1938 = vpop.f32.mrb[0].mxu0
      %1939 = vmatprep.mubr.bf16.mxu0 0
      %1940 = vmatmul.mubr.bf16.gmra.mrb[0].mxu0 %v1791
      %v1941 = vpop.f32.mrb[0].mxu0
      %v1942 = vadd.f32 0.0, %v1941
      %v1943 = vpop.f32.mrb[0].mxu0
      %v1944 = vpop.f32.mrb[0].mxu0
      %v1945 = vadd.f32 0.0, %v1944
      %v1946 = vpop.f32.mrb[0].mxu0
      %1947 = vmatprep.mubr.bf16.mxu0 0
      %1948 = vmatmul.mubr.bf16.gmra.mrb[0].mxu0 %v1794
      %v1949 = vpop.f32.mrb[0].mxu0
      %v1950 = vadd.f32 0.0, %v1949
      %v1951 = vpop.f32.mrb[0].mxu0
      %v1952 = vpop.f32.mrb[0].mxu0
      %v1953 = vadd.f32 0.0, %v1952
      %v1954 = vpop.f32.mrb[0].mxu0
      %1955 = vmatprep.mubr.bf16.mxu0 0
      %1956 = vmatmul.mubr.bf16.gmra.mrb[0].mxu0 %v1797
      %v1957 = vpop.f32.mrb[0].mxu0
      %v1958 = vadd.f32 0.0, %v1957
      %v1959 = vpop.f32.mrb[0].mxu0
      %v1960 = vpop.f32.mrb[0].mxu0
      %v1961 = vadd.f32 0.0, %v1960
      %v1962 = vpop.f32.mrb[0].mxu0
      %1963 = vmatprep.mubr.bf16.mxu0 0
      %1964 = vmatmul.mubr.bf16.gmra.mrb[0].mxu0 %v1800
      %v1965 = vpop.f32.mrb[0].mxu0
      %v1966 = vadd.f32 0.0, %v1965
      %v1967 = vpop.f32.mrb[0].mxu0
      %v1968 = vpop.f32.mrb[0].mxu0
      %v1969 = vadd.f32 0.0, %v1968
      %v1970 = vpop.f32.mrb[0].mxu0
      %1971 = vmatprep.mubr.bf16.mxu0 0
      %1972 = vmatmul.mubr.bf16.gmra.mrb[0].mxu0 %v1803
      %v1973 = vpop.f32.mrb[0].mxu0
      %v1974 = vadd.f32 0.0, %v1973
      %v1975 = vpop.f32.mrb[0].mxu0
      %v1976 = vpop.f32.mrb[0].mxu0
      %v1977 = vadd.f32 0.0, %v1976
      %v1978 = vpop.f32.mrb[0].mxu0
      %1979 = vmatprep.mubr.bf16.mxu0 0
      %1980 = vmatmul.mubr.bf16.gmra.mrb[0].mxu0 %v1806
      %v1981 = vpop.f32.mrb[0].mxu0
      %v1982 = vadd.f32 0.0, %v1981
      %v1983 = vpop.f32.mrb[0].mxu0
      %v1984 = vpop.f32.mrb[0].mxu0
      %v1985 = vadd.f32 0.0, %v1984
      %v1986 = vpop.f32.mrb[0].mxu0
      %1987 = vmatprep.mubr.bf16.mxu0 0
      %1988 = vmatmul.mubr.bf16.gmra.mrb[0].mxu0 %v1809
      %v1989 = vpop.f32.mrb[0].mxu0
      %v1990 = vadd.f32 0.0, %v1989
      %v1991 = vpop.f32.mrb[0].mxu0
      %v1992 = vpop.f32.mrb[0].mxu0
      %v1993 = vadd.f32 0.0, %v1992
      %v1994 = vpop.f32.mrb[0].mxu0
      %1995 = vmatprep.mubr.bf16.mxu0 0
      %1996 = vmatmul.mubr.bf16.gmra.mrb[0].mxu0 %v1812
      %v1997 = vpop.f32.mrb[0].mxu0
      %v1998 = vadd.f32 0.0, %v1997
      %v1999 = vpop.f32.mrb[0].mxu0
      %v2000 = vpop.f32.mrb[0].mxu0
      %v2001 = vadd.f32 0.0, %v2000
      %v2002 = vpop.f32.mrb[0].mxu0
      %2003 = vmatprep.mubr.bf16.mxu0 0
      %2004 = vmatmul.mubr.bf16.gmra.mrb[0].mxu0 %v1815
      %v2005 = vpop.f32.mrb[0].mxu0
      %v2006 = vadd.f32 0.0, %v2005
      %v2007 = vpop.f32.mrb[0].mxu0
      %v2008 = vpop.f32.mrb[0].mxu0
      %v2009 = vadd.f32 0.0, %v2008
      %v2010 = vpop.f32.mrb[0].mxu0
      %2011 = vmatprep.mubr.bf16.mxu0 0
      %2012 = vmatmul.mubr.bf16.gmra.mrb[0].mxu0 %v1818
      %v2013 = vpop.f32.mrb[0].mxu0
      %v2014 = vadd.f32 0.0, %v2013
      %v2015 = vpop.f32.mrb[0].mxu0
      %v2016 = vpop.f32.mrb[0].mxu0
      %v2017 = vadd.f32 0.0, %v2016
      %v2018 = vpop.f32.mrb[0].mxu0
      %2019 = vmatprep.mubr.bf16.mxu0 0
      %2020 = vmatmul.mubr.bf16.gmra.mrb[0].mxu0 %v1821
      %v2021 = vpop.f32.mrb[0].mxu0
      %v2022 = vadd.f32 0.0, %v2021
      %v2023 = vpop.f32.mrb[0].mxu0
      %v2024 = vpop.f32.mrb[0].mxu0
      %v2025 = vadd.f32 0.0, %v2024
      %v2026 = vpop.f32.mrb[0].mxu0
      %2027 = vmatprep.mubr.bf16.mxu0 0
      %2028 = vmatmul.mubr.bf16.gmra.mrb[0].mxu0 %v1824
      %v2029 = vpop.f32.mrb[0].mxu0
      %v2030 = vadd.f32 0.0, %v2029
      %v2031 = vpop.f32.mrb[0].mxu0
      %v2032 = vpop.f32.mrb[0].mxu0
      %v2033 = vadd.f32 0.0, %v2032
      %v2034 = vpop.f32.mrb[0].mxu0
      %2035 = vmatprep.mubr.bf16.mxu0 0
      %2036 = vmatmul.mubr.bf16.gmra.mrb[0].mxu0 %v1827
      %v2037 = vpop.f32.mrb[0].mxu0
      %v2038 = vadd.f32 0.0, %v2037
      %v2039 = vpop.f32.mrb[0].mxu0
      %v2040 = vpop.f32.mrb[0].mxu0
      %v2041 = vadd.f32 0.0, %v2040
      %v2042 = vpop.f32.mrb[0].mxu0
      %2043 = vmatprep.mubr.bf16.mxu0 0
      %2044 = vmatmul.mubr.bf16.gmra.mrb[0].mxu0 %v1830
      %v2045 = vpop.f32.mrb[0].mxu0
      %v2046 = vadd.f32 0.0, %v2045
      %v2047 = vpop.f32.mrb[0].mxu0
      %v2048 = vpop.f32.mrb[0].mxu0
      %v2049 = vadd.f32 0.0, %v2048
      %v2050 = vpop.f32.mrb[0].mxu0
      %2051 = vmatprep.mubr.bf16.mxu0 0
      %2052 = vmatmul.mubr.bf16.gmra.mrb[0].mxu0 %v1833
      %v2053 = vpop.f32.mrb[0].mxu0
      %v2054 = vadd.f32 0.0, %v2053
      %v2055 = vpop.f32.mrb[0].mxu0
      %v2056 = vpop.f32.mrb[0].mxu0
      %v2057 = vadd.f32 0.0, %v2056
      %v2058 = vpop.f32.mrb[0].mxu0
      %2059 = vmatprep.mubr.bf16.mxu0 0
      %2060 = vmatmul.mubr.bf16.gmra.mrb[0].mxu0 %v1836
      %v2061 = vpop.f32.mrb[0].mxu0
      %v2062 = vadd.f32 0.0, %v2061
      %v2063 = vpop.f32.mrb[0].mxu0
      %v2064 = vpop.f32.mrb[0].mxu0
      %v2065 = vadd.f32 0.0, %v2064
      %v2066 = vpop.f32.mrb[0].mxu0
      %2067 = vmatprep.mubr.bf16.mxu0 0
      %2068 = vmatmul.mubr.bf16.gmra.mrb[0].mxu0 %v1839
      %v2069 = vpop.f32.mrb[0].mxu0
      %v2070 = vadd.f32 0.0, %v2069
      %v2071 = vpop.f32.mrb[0].mxu0
      %v2072 = vpop.f32.mrb[0].mxu0
      %v2073 = vadd.f32 0.0, %v2072
      %v2074 = vpop.f32.mrb[0].mxu0
      %2075 = vmatprep.mubr.bf16.mxu0 0
      %2076 = vmatmul.mubr.bf16.gmra.mrb[0].mxu0 %v1842
      %v2077 = vpop.f32.mrb[0].mxu0
      %v2078 = vadd.f32 0.0, %v2077
      %v2079 = vpop.f32.mrb[0].mxu0
      %v2080 = vpop.f32.mrb[0].mxu0
      %v2081 = vadd.f32 0.0, %v2080
      %v2082 = vpop.f32.mrb[0].mxu0
      %2083 = vmatprep.mubr.bf16.mxu0 0
      %2084 = vmatmul.mubr.bf16.gmra.mrb[0].mxu0 %v1845
      %v2085 = vpop.f32.mrb[0].mxu0
      %v2086 = vadd.f32 0.0, %v2085
      %v2087 = vpop.f32.mrb[0].mxu0
      %v2088 = vpop.f32.mrb[0].mxu0
      %v2089 = vadd.f32 0.0, %v2088
      %v2090 = vpop.f32.mrb[0].mxu0
      %2091 = vmatprep.mubr.bf16.mxu0 0
      %2092 = vmatmul.mubr.bf16.gmra.mrb[0].mxu0 %v1848
      %v2093 = vpop.f32.mrb[0].mxu0
      %v2094 = vadd.f32 0.0, %v2093
      %v2095 = vpop.f32.mrb[0].mxu0
      %v2096 = vpop.f32.mrb[0].mxu0
      %v2097 = vadd.f32 0.0, %v2096
      %v2098 = vpop.f32.mrb[0].mxu0
      %2099 = vmatprep.mubr.bf16.mxu0 0
      %2100 = vmatmul.mubr.bf16.gmra.mrb[0].mxu0 %v1851
      %v2101 = vpop.f32.mrb[0].mxu0
      %v2102 = vadd.f32 0.0, %v2101
      %v2103 = vpop.f32.mrb[0].mxu0
      %v2104 = vpop.f32.mrb[0].mxu0
      %v2105 = vadd.f32 0.0, %v2104
      %v2106 = vpop.f32.mrb[0].mxu0
      %2107 = vmatprep.mubr.bf16.mxu0 0
      %2108 = vmatmul.mubr.bf16.gmra.mrb[0].mxu0 %v1854
      %v2109 = vpop.f32.mrb[0].mxu0
      %v2110 = vadd.f32 0.0, %v2109
      %v2111 = vpop.f32.mrb[0].mxu0
      %v2112 = vpop.f32.mrb[0].mxu0
      %v2113 = vadd.f32 0.0, %v2112
      %v2114 = vpop.f32.mrb[0].mxu0
      %2115 = vmatprep.mubr.bf16.mxu0 0
      %2116 = vmatmul.mubr.bf16.gmra.mrb[0].mxu0 %v1857
      %v2117 = vpop.f32.mrb[0].mxu0
      %v2118 = vadd.f32 0.0, %v2117
      %v2119 = vpop.f32.mrb[0].mxu0
      %v2120 = vpop.f32.mrb[0].mxu0
      %v2121 = vadd.f32 0.0, %v2120
      %v2122 = vpop.f32.mrb[0].mxu0
      %2123 = vmatprep.mubr.bf16.mxu0 0
      %2124 = vmatmul.mubr.bf16.gmra.mrb[0].mxu0 %v1860
      %v2125 = vpop.f32.mrb[0].mxu0
      %v2126 = vadd.f32 0.0, %v2125
      %v2127 = vpop.f32.mrb[0].mxu0
      %v2128 = vpop.f32.mrb[0].mxu0
      %v2129 = vadd.f32 0.0, %v2128
      %v2130 = vpop.f32.mrb[0].mxu0
      %2131 = vmatprep.mubr.bf16.mxu0 0
      %2132 = vmatmul.mubr.bf16.gmra.mrb[0].mxu0 %v1863
      %v2133 = vpop.f32.mrb[0].mxu0
      %v2134 = vadd.f32 0.0, %v2133
      %v2135 = vpop.f32.mrb[0].mxu0
      %v2136 = vpop.f32.mrb[0].mxu0
      %v2137 = vadd.f32 0.0, %v2136
      %v2138 = vpop.f32.mrb[0].mxu0
      %2139 = vmatprep.mubr.bf16.mxu0 0
      %2140 = vmatmul.mubr.bf16.gmra.mrb[0].mxu0 %v1866
      %v2141 = vpop.f32.mrb[0].mxu0
      %v2142 = vadd.f32 0.0, %v2141
      %v2143 = vpop.f32.mrb[0].mxu0
      %v2144 = vpop.f32.mrb[0].mxu0
      %v2145 = vadd.f32 0.0, %v2144
      %v2146 = vpop.f32.mrb[0].mxu0
      %2147 = vmatprep.mubr.bf16.mxu0 0
      %2148 = vmatmul.mubr.bf16.gmra.mrb[0].mxu0 %v1869
      %v2149 = vpop.f32.mrb[0].mxu0
      %v2150 = vadd.f32 0.0, %v2149
      %v2151 = vpop.f32.mrb[0].mxu0
      %v2152 = vpop.f32.mrb[0].mxu0
      %v2153 = vadd.f32 0.0, %v2152
      %v2154 = vpop.f32.mrb[0].mxu0
      %2155 = vmatprep.mubr.bf16.mxu0 0
      %2156 = vmatmul.mubr.bf16.gmra.mrb[0].mxu0 %v1872
      %v2157 = vpop.f32.mrb[0].mxu0
      %v2158 = vadd.f32 0.0, %v2157
      %v2159 = vpop.f32.mrb[0].mxu0
      %v2160 = vpop.f32.mrb[0].mxu0
      %v2161 = vadd.f32 0.0, %v2160
      %v2162 = vpop.f32.mrb[0].mxu0
      %2163 = vmatprep.mubr.bf16.mxu0 0
      %2164 = vmatmul.mubr.bf16.gmra.mrb[0].mxu0 %v1875
      %v2165 = vpop.f32.mrb[0].mxu0
      %v2166 = vadd.f32 0.0, %v2165
      %v2167 = vpop.f32.mrb[0].mxu0
      %v2168 = vpop.f32.mrb[0].mxu0
      %v2169 = vadd.f32 0.0, %v2168
      %v2170 = vpop.f32.mrb[0].mxu0
      %2171 = vmatprep.mubr.bf16.mxu0 0
      %2172 = vmatmul.mubr.bf16.gmra.mrb[0].mxu0 %v1878
      %v2173 = vpop.f32.mrb[0].mxu0
      %v2174 = vadd.f32 0.0, %v2173
      %v2175 = vpop.f32.mrb[0].mxu0
      %v2176 = vpop.f32.mrb[0].mxu0
      %v2177 = vadd.f32 0.0, %v2176
      %v2178 = vpop.f32.mrb[0].mxu0
      %2179 = vmatprep.mubr.bf16.mxu0 0
      %2180 = vmatmul.mubr.bf16.gmra.mrb[0].mxu0 %v1881
      %v2181 = vpop.f32.mrb[0].mxu0
      %v2182 = vadd.f32 0.0, %v2181
      %v2183 = vpop.f32.mrb[0].mxu0
      %v2184 = vpop.f32.mrb[0].mxu0
      %v2185 = vpop.f32.mrb[0].mxu0
      %2186 = vdwg.mxu0
      %v2187 = vmax.f32 %v1478, %v1918
      %v2188 = vmax.f32 %v1479, %v1921
      %v2189 = vmax.f32 %v1480, %v1926
      %v2190 = vmax.f32 %v1481, %v1929
      %v2191 = vmax.f32 %v1482, %v1934
      %v2192 = vmax.f32 %v1483, %v1937
      %v2193 = vmax.f32 %v1484, %v1942
      %v2194 = vmax.f32 %v1485, %v1945
      %v2195 = vmax.f32 %v1486, %v1950
      %v2196 = vmax.f32 %v1487, %v1953
      %v2197 = vmax.f32 %v1488, %v1958
      %v2198 = vmax.f32 %v1489, %v1961
      %v2199 = vmax.f32 %v1490, %v1966
      %v2200 = vmax.f32 %v1491, %v1969
      %v2201 = vmax.f32 %v1492, %v1974
      %v2202 = vmax.f32 %v1493, %v1977
      %v2203 = vmax.f32 %v1494, %v1982
      %v2204 = vmax.f32 %v1495, %v1985
      %v2205 = vmax.f32 %v1496, %v1990
      %v2206 = vmax.f32 %v1497, %v1993
      %v2207 = vmax.f32 %v1498, %v1998
      %v2208 = vmax.f32 %v1499, %v2001
      %v2209 = vmax.f32 %v1500, %v2006
      %v2210 = vmax.f32 %v1501, %v2009
      %v2211 = vmax.f32 %v1502, %v2014
      %v2212 = vmax.f32 %v1503, %v2017
      %v2213 = vmax.f32 %v1504, %v2022
      %v2214 = vmax.f32 %v1505, %v2025
      %v2215 = vmax.f32 %v1506, %v2030
      %v2216 = vmax.f32 %v1507, %v2033
      %v2217 = vmax.f32 %v1508, %v2038
      %v2218 = vmax.f32 %v1509, %v2041
      %v2219 = vmax.f32 %v1510, %v2046
      %v2220 = vmax.f32 %v1511, %v2049
      %v2221 = vmax.f32 %v1512, %v2054
      %v2222 = vmax.f32 %v1513, %v2057
      %v2223 = vmax.f32 %v1514, %v2062
      %v2224 = vmax.f32 %v1515, %v2065
      %v2225 = vmax.f32 %v1516, %v2070
      %v2226 = vmax.f32 %v1517, %v2073
      %v2227 = vmax.f32 %v1518, %v2078
      %v2228 = vmax.f32 %v1519, %v2081
      %v2229 = vmax.f32 %v1520, %v2086
      %v2230 = vmax.f32 %v1521, %v2089
      %v2231 = vmax.f32 %v1522, %v2094
      %v2232 = vmax.f32 %v1523, %v2097
      %v2233 = vmax.f32 %v1524, %v2102
      %v2234 = vmax.f32 %v1525, %v2105
      %v2235 = vmax.f32 %v1526, %v2110
      %v2236 = vmax.f32 %v1527, %v2113
      %v2237 = vmax.f32 %v1528, %v2118
      %v2238 = vmax.f32 %v1529, %v2121
      %v2239 = vmax.f32 %v1530, %v2126
      %v2240 = vmax.f32 %v1531, %v2129
      %v2241 = vmax.f32 %v1532, %v2134
      %v2242 = vmax.f32 %v1533, %v2137
      %v2243 = vmax.f32 %v1534, %v2142
      %v2244 = vmax.f32 %v1535, %v2145
      %v2245 = vmax.f32 %v1536, %v2150
      %v2246 = vmax.f32 %v1537, %v2153
      %v2247 = vmax.f32 %v1538, %v2158
      %v2248 = vmax.f32 %v1539, %v2161
      %v2249 = vmax.f32 %v1540, %v2166
      %v2250 = vmax.f32 %v1541, %v2169
      %v2251 = vmax.f32 %v1542, %v2174
      %v2252 = vmax.f32 %v1543, %v2177
      %v2253 = vmax.f32 %v1544, %v2182
      %s2254 = scalar_lea.vmem %s165, 804
      %v2255 = vld [vmem:[%s2254] sm:$0xf]
      %v2256 = vld [vmem:[%s2254 + $0x4] sm:$0xf]
      %v2257 = vld [vmem:[%s2254 + $0x8] sm:$0xf]
      %v2258 = vld [vmem:[%s2254 + $0xc] sm:$0xf]
      %v2259 = vld [vmem:[%s2254 + $0x10] sm:$0xf]
      %v2260 = vld [vmem:[%s2254 + $0x14] sm:$0xf]
      %v2261 = vld [vmem:[%s2254 + $0x18] sm:$0xf]
      %v2262 = vld [vmem:[%s2254 + $0x1c] sm:$0xf]
      %v2263 = vld [vmem:[%s2254 + $0x20] sm:$0xf]
      %v2264 = vld [vmem:[%s2254 + $0x24] sm:$0xf]
      %v2265 = vld [vmem:[%s2254 + $0x28] sm:$0xf]
      %v2266 = vld [vmem:[%s2254 + $0x2c] sm:$0xf]
      %v2267 = vld [vmem:[%s2254 + $0x30] sm:$0xf]
      %v2268 = vld [vmem:[%s2254 + $0x34] sm:$0xf]
      %v2269 = vld [vmem:[%s2254 + $0x38] sm:$0xf]
      %v2270 = vld [vmem:[%s2254 + $0x3c] sm:$0xf]
      %v2271 = vld [vmem:[%s2254 + $0x40] sm:$0xf]
      %v2272 = vld [vmem:[%s2254 + $0x44] sm:$0xf]
      %v2273 = vld [vmem:[%s2254 + $0x48] sm:$0xf]
      %v2274 = vld [vmem:[%s2254 + $0x4c] sm:$0xf]
      %v2275 = vld [vmem:[%s2254 + $0x50] sm:$0xf]
      %v2276 = vld [vmem:[%s2254 + $0x54] sm:$0xf]
      %v2277 = vld [vmem:[%s2254 + $0x58] sm:$0xf]
      %v2278 = vld [vmem:[%s2254 + $0x5c] sm:$0xf]
      %v2279 = vld [vmem:[%s2254 + $0x60] sm:$0xf]
      %v2280 = vld [vmem:[%s2254 + $0x64] sm:$0xf]
      %v2281 = vld [vmem:[%s2254 + $0x68] sm:$0xf]
      %v2282 = vld [vmem:[%s2254 + $0x6c] sm:$0xf]
      %v2283 = vld [vmem:[%s2254 + $0x70] sm:$0xf]
      %v2284 = vld [vmem:[%s2254 + $0x74] sm:$0xf]
      %v2285 = vld [vmem:[%s2254 + $0x78] sm:$0xf]
      %v2286 = vld [vmem:[%s2254 + $0x7c] sm:$0xf]
      %v2287 = vld [vmem:[%s2254 + $0x80] sm:$0xf]
      %v2288 = vld [vmem:[%s2254 + $0x84] sm:$0xf]
      %v2289 = vld [vmem:[%s2254 + $0x88] sm:$0xf]
      %v2290 = vld [vmem:[%s2254 + $0x8c] sm:$0xf]
      %v2291 = vld [vmem:[%s2254 + $0x90] sm:$0xf]
      %v2292 = vld [vmem:[%s2254 + $0x94] sm:$0xf]
      %v2293 = vld [vmem:[%s2254 + $0x98] sm:$0xf]
      %v2294 = vld [vmem:[%s2254 + $0x9c] sm:$0xf]
      %v2295 = vld [vmem:[%s2254 + $0xa0] sm:$0xf]
      %v2296 = vld [vmem:[%s2254 + $0xa4] sm:$0xf]
      %v2297 = vld [vmem:[%s2254 + $0xa8] sm:$0xf]
      %v2298 = vld [vmem:[%s2254 + $0xac] sm:$0xf]
      %v2299 = vld [vmem:[%s2254 + $0xb0] sm:$0xf]
      %v2300 = vld [vmem:[%s2254 + $0xb4] sm:$0xf]
      %v2301 = vld [vmem:[%s2254 + $0xb8] sm:$0xf]
      %v2302 = vld [vmem:[%s2254 + $0xbc] sm:$0xf]
      %v2303 = vld [vmem:[%s2254 + $0xc0] sm:$0xf]
      %v2304 = vld [vmem:[%s2254 + $0xc4] sm:$0xf]
      %v2305 = vld [vmem:[%s2254 + $0xc8] sm:$0xf]
      %v2306 = vld [vmem:[%s2254 + $0xcc] sm:$0xf]
      %v2307 = vld [vmem:[%s2254 + $0xd0] sm:$0xf]
      %v2308 = vld [vmem:[%s2254 + $0xd4] sm:$0xf]
      %v2309 = vld [vmem:[%s2254 + $0xd8] sm:$0xf]
      %v2310 = vld [vmem:[%s2254 + $0xdc] sm:$0xf]
      %v2311 = vld [vmem:[%s2254 + $0xe0] sm:$0xf]
      %v2312 = vld [vmem:[%s2254 + $0xe4] sm:$0xf]
      %v2313 = vld [vmem:[%s2254 + $0xe8] sm:$0xf]
      %v2314 = vld [vmem:[%s2254 + $0xec] sm:$0xf]
      %v2315 = vld [vmem:[%s2254 + $0xf0] sm:$0xf]
      %v2316 = vld [vmem:[%s2254 + $0xf4] sm:$0xf]
      %v2317 = vld [vmem:[%s2254 + $0xf8] sm:$0xf]
      %v2318 = vld [vmem:[%s2254 + $0xfc] sm:$0xf]
      %v2319 = vld [vmem:[%s2254 + $0x100] sm:$0xf]
      %v2320 = vld [vmem:[%s2254 + $0x104] sm:$0xf]
      %v2321 = vld [vmem:[%s2254 + $0x108] sm:$0x1]
      %v2389 = vunpack.c.l.b16 %v2255
      %v2390 = vunpack.c.l.b16 %v2256
      %v2391 = vunpack.c.l.b16 %v2257
      %v2392 = vunpack.c.l.b16 %v2258
      %v2393 = vunpack.c.l.b16 %v2259
      %v2394 = vunpack.c.l.b16 %v2260
      %v2395 = vunpack.c.l.b16 %v2261
      %v2396 = vunpack.c.l.b16 %v2262
      %v2397 = vunpack.c.l.b16 %v2263
      %v2398 = vunpack.c.l.b16 %v2264
      %v2399 = vunpack.c.l.b16 %v2265
      %v2400 = vunpack.c.l.b16 %v2266
      %v2401 = vunpack.c.l.b16 %v2267
      %v2402 = vunpack.c.l.b16 %v2268
      %v2403 = vunpack.c.l.b16 %v2269
      %v2404 = vunpack.c.l.b16 %v2270
      %v2405 = vunpack.c.l.b16 %v2271
      %v2406 = vunpack.c.l.b16 %v2272
      %v2407 = vunpack.c.l.b16 %v2273
      %v2408 = vunpack.c.l.b16 %v2274
      %v2409 = vunpack.c.l.b16 %v2275
      %v2410 = vunpack.c.l.b16 %v2276
      %v2411 = vunpack.c.l.b16 %v2277
      %v2412 = vunpack.c.l.b16 %v2278
      %v2413 = vunpack.c.l.b16 %v2279
      %v2414 = vunpack.c.l.b16 %v2280
      %v2415 = vunpack.c.l.b16 %v2281
      %v2416 = vunpack.c.l.b16 %v2282
      %v2417 = vunpack.c.l.b16 %v2283
      %v2418 = vunpack.c.l.b16 %v2284
      %v2419 = vunpack.c.l.b16 %v2285
      %v2420 = vunpack.c.l.b16 %v2286
      %v2421 = vunpack.c.l.b16 %v2287
      %v2422 = vunpack.c.l.b16 %v2288
      %v2423 = vunpack.c.l.b16 %v2289
      %v2424 = vunpack.c.l.b16 %v2290
      %v2425 = vunpack.c.l.b16 %v2291
      %v2426 = vunpack.c.l.b16 %v2292
      %v2427 = vunpack.c.l.b16 %v2293
      %v2428 = vunpack.c.l.b16 %v2294
      %v2429 = vunpack.c.l.b16 %v2295
      %v2430 = vunpack.c.l.b16 %v2296
      %v2431 = vunpack.c.l.b16 %v2297
      %v2432 = vunpack.c.l.b16 %v2298
      %v2433 = vunpack.c.l.b16 %v2299
      %v2434 = vunpack.c.l.b16 %v2300
      %v2435 = vunpack.c.l.b16 %v2301
      %v2436 = vunpack.c.l.b16 %v2302
      %v2437 = vunpack.c.l.b16 %v2303
      %v2438 = vunpack.c.l.b16 %v2304
      %v2439 = vunpack.c.l.b16 %v2305
      %v2440 = vunpack.c.l.b16 %v2306
      %v2441 = vunpack.c.l.b16 %v2307
      %v2442 = vunpack.c.l.b16 %v2308
      %v2443 = vunpack.c.l.b16 %v2309
      %v2444 = vunpack.c.l.b16 %v2310
      %v2445 = vunpack.c.l.b16 %v2311
      %v2446 = vunpack.c.l.b16 %v2312
      %v2447 = vunpack.c.l.b16 %v2313
      %v2448 = vunpack.c.l.b16 %v2314
      %v2449 = vunpack.c.l.b16 %v2315
      %v2450 = vunpack.c.l.b16 %v2316
      %v2451 = vunpack.c.l.b16 %v2317
      %v2452 = vunpack.c.l.b16 %v2318
      %v2453 = vunpack.c.l.b16 %v2319
      %v2454 = vunpack.c.l.b16 %v2320
      %v2455 = vunpack.c.l.b16 %v2321
      %v2456 = vpack.c.b16 %v2390, %v2389
      %v2457 = vpack.c.b16 %v2392, %v2391
      %v2458 = vpack.c.b16 %v2394, %v2393
      %v2459 = vpack.c.b16 %v2396, %v2395
      %v2460 = vpack.c.b16 %v2398, %v2397
      %v2461 = vpack.c.b16 %v2400, %v2399
      %v2462 = vpack.c.b16 %v2402, %v2401
      %v2463 = vpack.c.b16 %v2404, %v2403
      %v2464 = vpack.c.b16 %v2406, %v2405
      %v2465 = vpack.c.b16 %v2408, %v2407
      %v2466 = vpack.c.b16 %v2410, %v2409
      %v2467 = vpack.c.b16 %v2412, %v2411
      %v2468 = vpack.c.b16 %v2414, %v2413
      %v2469 = vpack.c.b16 %v2416, %v2415
      %v2470 = vpack.c.b16 %v2418, %v2417
      %v2471 = vpack.c.b16 %v2420, %v2419
      %v2472 = vpack.c.b16 %v2422, %v2421
      %v2473 = vpack.c.b16 %v2424, %v2423
      %v2474 = vpack.c.b16 %v2426, %v2425
      %v2475 = vpack.c.b16 %v2428, %v2427
      %v2476 = vpack.c.b16 %v2430, %v2429
      %v2477 = vpack.c.b16 %v2432, %v2431
      %v2478 = vpack.c.b16 %v2434, %v2433
      %v2479 = vpack.c.b16 %v2436, %v2435
      %v2480 = vpack.c.b16 %v2438, %v2437
      %v2481 = vpack.c.b16 %v2440, %v2439
      %v2482 = vpack.c.b16 %v2442, %v2441
      %v2483 = vpack.c.b16 %v2444, %v2443
      %v2484 = vpack.c.b16 %v2446, %v2445
      %v2485 = vpack.c.b16 %v2448, %v2447
      %v2486 = vpack.c.b16 %v2450, %v2449
      %v2487 = vpack.c.b16 %v2452, %v2451
      %v2488 = vpack.c.b16 %v2454, %v2453
      %v2489 = vpack.c.b16 %v2455, %v2455
      %v2491 = vsel %vm422, %v2456, 0
      %v2494 = vsel %vm422, %v2457, 0
      %v2497 = vsel %vm422, %v2458, 0
      %v2500 = vsel %vm422, %v2459, 0
      %v2503 = vsel %vm422, %v2460, 0
      %v2506 = vsel %vm422, %v2461, 0
      %v2509 = vsel %vm422, %v2462, 0
      %v2512 = vsel %vm422, %v2463, 0
      %v2515 = vsel %vm422, %v2464, 0
      %v2518 = vsel %vm422, %v2465, 0
      %v2521 = vsel %vm422, %v2466, 0
      %v2524 = vsel %vm422, %v2467, 0
      %v2527 = vsel %vm422, %v2468, 0
      %v2530 = vsel %vm422, %v2469, 0
      %v2533 = vsel %vm422, %v2470, 0
      %v2536 = vsel %vm422, %v2471, 0
      %v2539 = vsel %vm422, %v2472, 0
      %v2542 = vsel %vm422, %v2473, 0
      %v2545 = vsel %vm422, %v2474, 0
      %v2548 = vsel %vm422, %v2475, 0
      %v2551 = vsel %vm422, %v2476, 0
      %v2554 = vsel %vm422, %v2477, 0
      %v2557 = vsel %vm422, %v2478, 0
      %v2560 = vsel %vm422, %v2479, 0
      %v2563 = vsel %vm422, %v2480, 0
      %v2566 = vsel %vm422, %v2481, 0
      %v2569 = vsel %vm422, %v2482, 0
      %v2572 = vsel %vm422, %v2483, 0
      %v2575 = vsel %vm422, %v2484, 0
      %v2578 = vsel %vm422, %v2485, 0
      %v2581 = vsel %vm422, %v2486, 0
      %v2584 = vsel %vm422, %v2487, 0
      %v2587 = vsel %vm422, %v2488, 0
      %v2590 = vsel %vm422, %v2489, 0
      %2592 = vmatprep.subr.bf16.mxu0 0
      %2593 = vmatpush1.bf16.msra.mxu0 %v419
      %2594 = vmatprep.subr.bf16.mxu0 0
      %2595 = vmatpush1.bf16.msra.mxu0 %v530
      %2596 = vmatprep.subr.bf16.mxu0 0
      %2597 = vmatpush1.bf16.msra.mxu0 0
      %2598 = vmatprep.subr.bf16.mxu0 0
      %2599 = vmatpush1.bf16.msra.mxu0 0
      %2600 = vmatprep.subr.bf16.mxu0 0
      %2601 = vmatpush1.bf16.msra.mxu0 0
      %2602 = vmatprep.subr.bf16.mxu0 0
      %2603 = vmatpush1.bf16.msra.mxu0 0
      %2604 = vmatprep.subr.bf16.mxu0 0
      %2605 = vmatpush1.bf16.msra.mxu0 0
      %2606 = vmatprep.subr.bf16.mxu0 0
      %2607 = vmatpush1.bf16.msra.mxu0 0
      %2608 = vmatprep.subr.bf16.mxu0 0
      %2609 = vmatpush1.bf16.msra.mxu0 0
      %2610 = vmatprep.subr.bf16.mxu0 0
      %2611 = vmatpush1.bf16.msra.mxu0 0
      %2612 = vmatprep.subr.bf16.mxu0 0
      %2613 = vmatpush1.bf16.msra.mxu0 0
      %2614 = vmatprep.subr.bf16.mxu0 0
      %2615 = vmatpush1.bf16.msra.mxu0 0
      %2616 = vmatprep.subr.bf16.mxu0 0
      %2617 = vmatpush1.bf16.msra.mxu0 0
      %2618 = vmatprep.subr.bf16.mxu0 0
      %2619 = vmatpush1.bf16.msra.mxu0 0
      %2620 = vmatprep.subr.bf16.mxu0 0
      %2621 = vmatpush1.bf16.msra.mxu0 0
      %2622 = vmatprep.subr.bf16.mxu0 0
      %2623 = vmatpush1.bf16.msra.mxu0 0
      %2624 = vmatprep.mubr.bf16.mxu0 0
      %2625 = vmatmul.mubr.bf16.gmra.mrb[0].mxu0 %v2491
      %v2626 = vpop.f32.mrb[0].mxu0
      %v2627 = vadd.f32 0.0, %v2626
      %v2628 = vpop.f32.mrb[0].mxu0
      %v2629 = vpop.f32.mrb[0].mxu0
      %v2630 = vadd.f32 0.0, %v2629
      %v2631 = vpop.f32.mrb[0].mxu0
      %2632 = vmatprep.mubr.bf16.mxu0 0
      %2633 = vmatmul.mubr.bf16.gmra.mrb[0].mxu0 %v2494
      %v2634 = vpop.f32.mrb[0].mxu0
      %v2635 = vadd.f32 0.0, %v2634
      %v2636 = vpop.f32.mrb[0].mxu0
      %v2637 = vpop.f32.mrb[0].mxu0
      %v2638 = vadd.f32 0.0, %v2637
      %v2639 = vpop.f32.mrb[0].mxu0
      %2640 = vmatprep.mubr.bf16.mxu0 0
      %2641 = vmatmul.mubr.bf16.gmra.mrb[0].mxu0 %v2497
      %v2642 = vpop.f32.mrb[0].mxu0
      %v2643 = vadd.f32 0.0, %v2642
      %v2644 = vpop.f32.mrb[0].mxu0
      %v2645 = vpop.f32.mrb[0].mxu0
      %v2646 = vadd.f32 0.0, %v2645
      %v2647 = vpop.f32.mrb[0].mxu0
      %2648 = vmatprep.mubr.bf16.mxu0 0
      %2649 = vmatmul.mubr.bf16.gmra.mrb[0].mxu0 %v2500
      %v2650 = vpop.f32.mrb[0].mxu0
      %v2651 = vadd.f32 0.0, %v2650
      %v2652 = vpop.f32.mrb[0].mxu0
      %v2653 = vpop.f32.mrb[0].mxu0
      %v2654 = vadd.f32 0.0, %v2653
      %v2655 = vpop.f32.mrb[0].mxu0
      %2656 = vmatprep.mubr.bf16.mxu0 0
      %2657 = vmatmul.mubr.bf16.gmra.mrb[0].mxu0 %v2503
      %v2658 = vpop.f32.mrb[0].mxu0
      %v2659 = vadd.f32 0.0, %v2658
      %v2660 = vpop.f32.mrb[0].mxu0
      %v2661 = vpop.f32.mrb[0].mxu0
      %v2662 = vadd.f32 0.0, %v2661
      %v2663 = vpop.f32.mrb[0].mxu0
      %2664 = vmatprep.mubr.bf16.mxu0 0
      %2665 = vmatmul.mubr.bf16.gmra.mrb[0].mxu0 %v2506
      %v2666 = vpop.f32.mrb[0].mxu0
      %v2667 = vadd.f32 0.0, %v2666
      %v2668 = vpop.f32.mrb[0].mxu0
      %v2669 = vpop.f32.mrb[0].mxu0
      %v2670 = vadd.f32 0.0, %v2669
      %v2671 = vpop.f32.mrb[0].mxu0
      %2672 = vmatprep.mubr.bf16.mxu0 0
      %2673 = vmatmul.mubr.bf16.gmra.mrb[0].mxu0 %v2509
      %v2674 = vpop.f32.mrb[0].mxu0
      %v2675 = vadd.f32 0.0, %v2674
      %v2676 = vpop.f32.mrb[0].mxu0
      %v2677 = vpop.f32.mrb[0].mxu0
      %v2678 = vadd.f32 0.0, %v2677
      %v2679 = vpop.f32.mrb[0].mxu0
      %2680 = vmatprep.mubr.bf16.mxu0 0
      %2681 = vmatmul.mubr.bf16.gmra.mrb[0].mxu0 %v2512
      %v2682 = vpop.f32.mrb[0].mxu0
      %v2683 = vadd.f32 0.0, %v2682
      %v2684 = vpop.f32.mrb[0].mxu0
      %v2685 = vpop.f32.mrb[0].mxu0
      %v2686 = vadd.f32 0.0, %v2685
      %v2687 = vpop.f32.mrb[0].mxu0
      %2688 = vmatprep.mubr.bf16.mxu0 0
      %2689 = vmatmul.mubr.bf16.gmra.mrb[0].mxu0 %v2515
      %v2690 = vpop.f32.mrb[0].mxu0
      %v2691 = vadd.f32 0.0, %v2690
      %v2692 = vpop.f32.mrb[0].mxu0
      %v2693 = vpop.f32.mrb[0].mxu0
      %v2694 = vadd.f32 0.0, %v2693
      %v2695 = vpop.f32.mrb[0].mxu0
      %2696 = vmatprep.mubr.bf16.mxu0 0
      %2697 = vmatmul.mubr.bf16.gmra.mrb[0].mxu0 %v2518
      %v2698 = vpop.f32.mrb[0].mxu0
      %v2699 = vadd.f32 0.0, %v2698
      %v2700 = vpop.f32.mrb[0].mxu0
      %v2701 = vpop.f32.mrb[0].mxu0
      %v2702 = vadd.f32 0.0, %v2701
      %v2703 = vpop.f32.mrb[0].mxu0
      %2704 = vmatprep.mubr.bf16.mxu0 0
      %2705 = vmatmul.mubr.bf16.gmra.mrb[0].mxu0 %v2521
      %v2706 = vpop.f32.mrb[0].mxu0
      %v2707 = vadd.f32 0.0, %v2706
      %v2708 = vpop.f32.mrb[0].mxu0
      %v2709 = vpop.f32.mrb[0].mxu0
      %v2710 = vadd.f32 0.0, %v2709
      %v2711 = vpop.f32.mrb[0].mxu0
      %2712 = vmatprep.mubr.bf16.mxu0 0
      %2713 = vmatmul.mubr.bf16.gmra.mrb[0].mxu0 %v2524
      %v2714 = vpop.f32.mrb[0].mxu0
      %v2715 = vadd.f32 0.0, %v2714
      %v2716 = vpop.f32.mrb[0].mxu0
      %v2717 = vpop.f32.mrb[0].mxu0
      %v2718 = vadd.f32 0.0, %v2717
      %v2719 = vpop.f32.mrb[0].mxu0
      %2720 = vmatprep.mubr.bf16.mxu0 0
      %2721 = vmatmul.mubr.bf16.gmra.mrb[0].mxu0 %v2527
      %v2722 = vpop.f32.mrb[0].mxu0
      %v2723 = vadd.f32 0.0, %v2722
      %v2724 = vpop.f32.mrb[0].mxu0
      %v2725 = vpop.f32.mrb[0].mxu0
      %v2726 = vadd.f32 0.0, %v2725
      %v2727 = vpop.f32.mrb[0].mxu0
      %2728 = vmatprep.mubr.bf16.mxu0 0
      %2729 = vmatmul.mubr.bf16.gmra.mrb[0].mxu0 %v2530
      %v2730 = vpop.f32.mrb[0].mxu0
      %v2731 = vadd.f32 0.0, %v2730
      %v2732 = vpop.f32.mrb[0].mxu0
      %v2733 = vpop.f32.mrb[0].mxu0
      %v2734 = vadd.f32 0.0, %v2733
      %v2735 = vpop.f32.mrb[0].mxu0
      %2736 = vmatprep.mubr.bf16.mxu0 0
      %2737 = vmatmul.mubr.bf16.gmra.mrb[0].mxu0 %v2533
      %v2738 = vpop.f32.mrb[0].mxu0
      %v2739 = vadd.f32 0.0, %v2738
      %v2740 = vpop.f32.mrb[0].mxu0
      %v2741 = vpop.f32.mrb[0].mxu0
      %v2742 = vadd.f32 0.0, %v2741
      %v2743 = vpop.f32.mrb[0].mxu0
      %2744 = vmatprep.mubr.bf16.mxu0 0
      %2745 = vmatmul.mubr.bf16.gmra.mrb[0].mxu0 %v2536
      %v2746 = vpop.f32.mrb[0].mxu0
      %v2747 = vadd.f32 0.0, %v2746
      %v2748 = vpop.f32.mrb[0].mxu0
      %v2749 = vpop.f32.mrb[0].mxu0
      %v2750 = vadd.f32 0.0, %v2749
      %v2751 = vpop.f32.mrb[0].mxu0
      %2752 = vmatprep.mubr.bf16.mxu0 0
      %2753 = vmatmul.mubr.bf16.gmra.mrb[0].mxu0 %v2539
      %v2754 = vpop.f32.mrb[0].mxu0
      %v2755 = vadd.f32 0.0, %v2754
      %v2756 = vpop.f32.mrb[0].mxu0
      %v2757 = vpop.f32.mrb[0].mxu0
      %v2758 = vadd.f32 0.0, %v2757
      %v2759 = vpop.f32.mrb[0].mxu0
      %2760 = vmatprep.mubr.bf16.mxu0 0
      %2761 = vmatmul.mubr.bf16.gmra.mrb[0].mxu0 %v2542
      %v2762 = vpop.f32.mrb[0].mxu0
      %v2763 = vadd.f32 0.0, %v2762
      %v2764 = vpop.f32.mrb[0].mxu0
      %v2765 = vpop.f32.mrb[0].mxu0
      %v2766 = vadd.f32 0.0, %v2765
      %v2767 = vpop.f32.mrb[0].mxu0
      %2768 = vmatprep.mubr.bf16.mxu0 0
      %2769 = vmatmul.mubr.bf16.gmra.mrb[0].mxu0 %v2545
      %v2770 = vpop.f32.mrb[0].mxu0
      %v2771 = vadd.f32 0.0, %v2770
      %v2772 = vpop.f32.mrb[0].mxu0
      %v2773 = vpop.f32.mrb[0].mxu0
      %v2774 = vadd.f32 0.0, %v2773
      %v2775 = vpop.f32.mrb[0].mxu0
      %2776 = vmatprep.mubr.bf16.mxu0 0
      %2777 = vmatmul.mubr.bf16.gmra.mrb[0].mxu0 %v2548
      %v2778 = vpop.f32.mrb[0].mxu0
      %v2779 = vadd.f32 0.0, %v2778
      %v2780 = vpop.f32.mrb[0].mxu0
      %v2781 = vpop.f32.mrb[0].mxu0
      %v2782 = vadd.f32 0.0, %v2781
      %v2783 = vpop.f32.mrb[0].mxu0
      %2784 = vmatprep.mubr.bf16.mxu0 0
      %2785 = vmatmul.mubr.bf16.gmra.mrb[0].mxu0 %v2551
      %v2786 = vpop.f32.mrb[0].mxu0
      %v2787 = vadd.f32 0.0, %v2786
      %v2788 = vpop.f32.mrb[0].mxu0
      %v2789 = vpop.f32.mrb[0].mxu0
      %v2790 = vadd.f32 0.0, %v2789
      %v2791 = vpop.f32.mrb[0].mxu0
      %2792 = vmatprep.mubr.bf16.mxu0 0
      %2793 = vmatmul.mubr.bf16.gmra.mrb[0].mxu0 %v2554
      %v2794 = vpop.f32.mrb[0].mxu0
      %v2795 = vadd.f32 0.0, %v2794
      %v2796 = vpop.f32.mrb[0].mxu0
      %v2797 = vpop.f32.mrb[0].mxu0
      %v2798 = vadd.f32 0.0, %v2797
      %v2799 = vpop.f32.mrb[0].mxu0
      %2800 = vmatprep.mubr.bf16.mxu0 0
      %2801 = vmatmul.mubr.bf16.gmra.mrb[0].mxu0 %v2557
      %v2802 = vpop.f32.mrb[0].mxu0
      %v2803 = vadd.f32 0.0, %v2802
      %v2804 = vpop.f32.mrb[0].mxu0
      %v2805 = vpop.f32.mrb[0].mxu0
      %v2806 = vadd.f32 0.0, %v2805
      %v2807 = vpop.f32.mrb[0].mxu0
      %2808 = vmatprep.mubr.bf16.mxu0 0
      %2809 = vmatmul.mubr.bf16.gmra.mrb[0].mxu0 %v2560
      %v2810 = vpop.f32.mrb[0].mxu0
      %v2811 = vadd.f32 0.0, %v2810
      %v2812 = vpop.f32.mrb[0].mxu0
      %v2813 = vpop.f32.mrb[0].mxu0
      %v2814 = vadd.f32 0.0, %v2813
      %v2815 = vpop.f32.mrb[0].mxu0
      %2816 = vmatprep.mubr.bf16.mxu0 0
      %2817 = vmatmul.mubr.bf16.gmra.mrb[0].mxu0 %v2563
      %v2818 = vpop.f32.mrb[0].mxu0
      %v2819 = vadd.f32 0.0, %v2818
      %v2820 = vpop.f32.mrb[0].mxu0
      %v2821 = vpop.f32.mrb[0].mxu0
      %v2822 = vadd.f32 0.0, %v2821
      %v2823 = vpop.f32.mrb[0].mxu0
      %2824 = vmatprep.mubr.bf16.mxu0 0
      %2825 = vmatmul.mubr.bf16.gmra.mrb[0].mxu0 %v2566
      %v2826 = vpop.f32.mrb[0].mxu0
      %v2827 = vadd.f32 0.0, %v2826
      %v2828 = vpop.f32.mrb[0].mxu0
      %v2829 = vpop.f32.mrb[0].mxu0
      %v2830 = vadd.f32 0.0, %v2829
      %v2831 = vpop.f32.mrb[0].mxu0
      %2832 = vmatprep.mubr.bf16.mxu0 0
      %2833 = vmatmul.mubr.bf16.gmra.mrb[0].mxu0 %v2569
      %v2834 = vpop.f32.mrb[0].mxu0
      %v2835 = vadd.f32 0.0, %v2834
      %v2836 = vpop.f32.mrb[0].mxu0
      %v2837 = vpop.f32.mrb[0].mxu0
      %v2838 = vadd.f32 0.0, %v2837
      %v2839 = vpop.f32.mrb[0].mxu0
      %2840 = vmatprep.mubr.bf16.mxu0 0
      %2841 = vmatmul.mubr.bf16.gmra.mrb[0].mxu0 %v2572
      %v2842 = vpop.f32.mrb[0].mxu0
      %v2843 = vadd.f32 0.0, %v2842
      %v2844 = vpop.f32.mrb[0].mxu0
      %v2845 = vpop.f32.mrb[0].mxu0
      %v2846 = vadd.f32 0.0, %v2845
      %v2847 = vpop.f32.mrb[0].mxu0
      %2848 = vmatprep.mubr.bf16.mxu0 0
      %2849 = vmatmul.mubr.bf16.gmra.mrb[0].mxu0 %v2575
      %v2850 = vpop.f32.mrb[0].mxu0
      %v2851 = vadd.f32 0.0, %v2850
      %v2852 = vpop.f32.mrb[0].mxu0
      %v2853 = vpop.f32.mrb[0].mxu0
      %v2854 = vadd.f32 0.0, %v2853
      %v2855 = vpop.f32.mrb[0].mxu0
      %2856 = vmatprep.mubr.bf16.mxu0 0
      %2857 = vmatmul.mubr.bf16.gmra.mrb[0].mxu0 %v2578
      %v2858 = vpop.f32.mrb[0].mxu0
      %v2859 = vadd.f32 0.0, %v2858
      %v2860 = vpop.f32.mrb[0].mxu0
      %v2861 = vpop.f32.mrb[0].mxu0
      %v2862 = vadd.f32 0.0, %v2861
      %v2863 = vpop.f32.mrb[0].mxu0
      %2864 = vmatprep.mubr.bf16.mxu0 0
      %2865 = vmatmul.mubr.bf16.gmra.mrb[0].mxu0 %v2581
      %v2866 = vpop.f32.mrb[0].mxu0
      %v2867 = vadd.f32 0.0, %v2866
      %v2868 = vpop.f32.mrb[0].mxu0
      %v2869 = vpop.f32.mrb[0].mxu0
      %v2870 = vadd.f32 0.0, %v2869
      %v2871 = vpop.f32.mrb[0].mxu0
      %2872 = vmatprep.mubr.bf16.mxu0 0
      %2873 = vmatmul.mubr.bf16.gmra.mrb[0].mxu0 %v2584
      %v2874 = vpop.f32.mrb[0].mxu0
      %v2875 = vadd.f32 0.0, %v2874
      %v2876 = vpop.f32.mrb[0].mxu0
      %v2877 = vpop.f32.mrb[0].mxu0
      %v2878 = vadd.f32 0.0, %v2877
      %v2879 = vpop.f32.mrb[0].mxu0
      %2880 = vmatprep.mubr.bf16.mxu0 0
      %2881 = vmatmul.mubr.bf16.gmra.mrb[0].mxu0 %v2587
      %v2882 = vpop.f32.mrb[0].mxu0
      %v2883 = vadd.f32 0.0, %v2882
      %v2884 = vpop.f32.mrb[0].mxu0
      %v2885 = vpop.f32.mrb[0].mxu0
      %v2886 = vadd.f32 0.0, %v2885
      %v2887 = vpop.f32.mrb[0].mxu0
      %2888 = vmatprep.mubr.bf16.mxu0 0
      %2889 = vmatmul.mubr.bf16.gmra.mrb[0].mxu0 %v2590
      %v2890 = vpop.f32.mrb[0].mxu0
      %v2891 = vadd.f32 0.0, %v2890
      %v2892 = vpop.f32.mrb[0].mxu0
      %v2893 = vpop.f32.mrb[0].mxu0
      %v2894 = vpop.f32.mrb[0].mxu0
      %2895 = vdwg.mxu0
      %v2896 = vmax.f32 %v2187, %v2627
      %v2897 = vmax.f32 %v2188, %v2630
      %v2898 = vmax.f32 %v2189, %v2635
      %v2899 = vmax.f32 %v2190, %v2638
      %v2900 = vmax.f32 %v2191, %v2643
      %v2901 = vmax.f32 %v2192, %v2646
      %v2902 = vmax.f32 %v2193, %v2651
      %v2903 = vmax.f32 %v2194, %v2654
      %v2904 = vmax.f32 %v2195, %v2659
      %v2905 = vmax.f32 %v2196, %v2662
      %v2906 = vmax.f32 %v2197, %v2667
      %v2907 = vmax.f32 %v2198, %v2670
      %v2908 = vmax.f32 %v2199, %v2675
      %v2909 = vmax.f32 %v2200, %v2678
      %v2910 = vmax.f32 %v2201, %v2683
      %v2911 = vmax.f32 %v2202, %v2686
      %v2912 = vmax.f32 %v2203, %v2691
      %v2913 = vmax.f32 %v2204, %v2694
      %v2914 = vmax.f32 %v2205, %v2699
      %v2915 = vmax.f32 %v2206, %v2702
      %v2916 = vmax.f32 %v2207, %v2707
      %v2917 = vmax.f32 %v2208, %v2710
      %v2918 = vmax.f32 %v2209, %v2715
      %v2919 = vmax.f32 %v2210, %v2718
      %v2920 = vmax.f32 %v2211, %v2723
      %v2921 = vmax.f32 %v2212, %v2726
      %v2922 = vmax.f32 %v2213, %v2731
      %v2923 = vmax.f32 %v2214, %v2734
      %v2924 = vmax.f32 %v2215, %v2739
      %v2925 = vmax.f32 %v2216, %v2742
      %v2926 = vmax.f32 %v2217, %v2747
      %v2927 = vmax.f32 %v2218, %v2750
      %v2928 = vmax.f32 %v2219, %v2755
      %v2929 = vmax.f32 %v2220, %v2758
      %v2930 = vmax.f32 %v2221, %v2763
      %v2931 = vmax.f32 %v2222, %v2766
      %v2932 = vmax.f32 %v2223, %v2771
      %v2933 = vmax.f32 %v2224, %v2774
      %v2934 = vmax.f32 %v2225, %v2779
      %v2935 = vmax.f32 %v2226, %v2782
      %v2936 = vmax.f32 %v2227, %v2787
      %v2937 = vmax.f32 %v2228, %v2790
      %v2938 = vmax.f32 %v2229, %v2795
      %v2939 = vmax.f32 %v2230, %v2798
      %v2940 = vmax.f32 %v2231, %v2803
      %v2941 = vmax.f32 %v2232, %v2806
      %v2942 = vmax.f32 %v2233, %v2811
      %v2943 = vmax.f32 %v2234, %v2814
      %v2944 = vmax.f32 %v2235, %v2819
      %v2945 = vmax.f32 %v2236, %v2822
      %v2946 = vmax.f32 %v2237, %v2827
      %v2947 = vmax.f32 %v2238, %v2830
      %v2948 = vmax.f32 %v2239, %v2835
      %v2949 = vmax.f32 %v2240, %v2838
      %v2950 = vmax.f32 %v2241, %v2843
      %v2951 = vmax.f32 %v2242, %v2846
      %v2952 = vmax.f32 %v2243, %v2851
      %v2953 = vmax.f32 %v2244, %v2854
      %v2954 = vmax.f32 %v2245, %v2859
      %v2955 = vmax.f32 %v2246, %v2862
      %v2956 = vmax.f32 %v2247, %v2867
      %v2957 = vmax.f32 %v2248, %v2870
      %v2958 = vmax.f32 %v2249, %v2875
      %v2959 = vmax.f32 %v2250, %v2878
      %v2960 = vmax.f32 %v2251, %v2883
      %v2961 = vmax.f32 %v2252, %v2886
      %v2962 = vmax.f32 %v2253, %v2891
      %v2963 = vld [vmem:[%s2] sm:$0x1]
      %v2965 = vlaneseq
      %v2966 = vshrl.u32 %v2965, 7
      %v2967 = vsub.s32 0, %v2966
      %v2968 = vrot.slane %v2963, %v2967
      %v2970 = vadd.f32 %v2896, %v2968
      %v2971 = vadd.f32 %v2897, %v2968
      %v2972 = vadd.f32 %v2898, %v2968
      %v2973 = vadd.f32 %v2899, %v2968
      %v2974 = vadd.f32 %v2900, %v2968
      %v2975 = vadd.f32 %v2901, %v2968
      %v2976 = vadd.f32 %v2902, %v2968
      %v2977 = vadd.f32 %v2903, %v2968
      %v2978 = vadd.f32 %v2904, %v2968
      %v2979 = vadd.f32 %v2905, %v2968
      %v2980 = vadd.f32 %v2906, %v2968
      %v2981 = vadd.f32 %v2907, %v2968
      %v2982 = vadd.f32 %v2908, %v2968
      %v2983 = vadd.f32 %v2909, %v2968
      %v2984 = vadd.f32 %v2910, %v2968
      %v2985 = vadd.f32 %v2911, %v2968
      %v2986 = vadd.f32 %v2912, %v2968
      %v2987 = vadd.f32 %v2913, %v2968
      %v2988 = vadd.f32 %v2914, %v2968
      %v2989 = vadd.f32 %v2915, %v2968
      %v2990 = vadd.f32 %v2916, %v2968
      %v2991 = vadd.f32 %v2917, %v2968
      %v2992 = vadd.f32 %v2918, %v2968
      %v2993 = vadd.f32 %v2919, %v2968
      %v2994 = vadd.f32 %v2920, %v2968
      %v2995 = vadd.f32 %v2921, %v2968
      %v2996 = vadd.f32 %v2922, %v2968
      %v2997 = vadd.f32 %v2923, %v2968
      %v2998 = vadd.f32 %v2924, %v2968
      %v2999 = vadd.f32 %v2925, %v2968
      %v3000 = vadd.f32 %v2926, %v2968
      %v3001 = vadd.f32 %v2927, %v2968
      %v3002 = vadd.f32 %v2928, %v2968
      %v3003 = vadd.f32 %v2929, %v2968
      %v3004 = vadd.f32 %v2930, %v2968
      %v3005 = vadd.f32 %v2931, %v2968
      %v3006 = vadd.f32 %v2932, %v2968
      %v3007 = vadd.f32 %v2933, %v2968
      %v3008 = vadd.f32 %v2934, %v2968
      %v3009 = vadd.f32 %v2935, %v2968
      %v3010 = vadd.f32 %v2936, %v2968
      %v3011 = vadd.f32 %v2937, %v2968
      %v3012 = vadd.f32 %v2938, %v2968
      %v3013 = vadd.f32 %v2939, %v2968
      %v3014 = vadd.f32 %v2940, %v2968
      %v3015 = vadd.f32 %v2941, %v2968
      %v3016 = vadd.f32 %v2942, %v2968
      %v3017 = vadd.f32 %v2943, %v2968
      %v3018 = vadd.f32 %v2944, %v2968
      %v3019 = vadd.f32 %v2945, %v2968
      %v3020 = vadd.f32 %v2946, %v2968
      %v3021 = vadd.f32 %v2947, %v2968
      %v3022 = vadd.f32 %v2948, %v2968
      %v3023 = vadd.f32 %v2949, %v2968
      %v3024 = vadd.f32 %v2950, %v2968
      %v3025 = vadd.f32 %v2951, %v2968
      %v3026 = vadd.f32 %v2952, %v2968
      %v3027 = vadd.f32 %v2953, %v2968
      %v3028 = vadd.f32 %v2954, %v2968
      %v3029 = vadd.f32 %v2955, %v2968
      %v3030 = vadd.f32 %v2956, %v2968
      %v3031 = vadd.f32 %v2957, %v2968
      %v3032 = vadd.f32 %v2958, %v2968
      %v3033 = vadd.f32 %v2959, %v2968
      %v3034 = vadd.f32 %v2960, %v2968
      %v3035 = vadd.f32 %v2961, %v2968
      %v3036 = vadd.f32 %v2962, %v2968
      %v3037 = vmax.f32 %v2970, 0.0
      %v3038 = vmax.f32 %v2971, 0.0
      %v3039 = vmax.f32 %v2972, 0.0
      %v3040 = vmax.f32 %v2973, 0.0
      %v3041 = vmax.f32 %v2974, 0.0
      %v3042 = vmax.f32 %v2975, 0.0
      %v3043 = vmax.f32 %v2976, 0.0
      %v3044 = vmax.f32 %v2977, 0.0
      %v3045 = vmax.f32 %v2978, 0.0
      %v3046 = vmax.f32 %v2979, 0.0
      %v3047 = vmax.f32 %v2980, 0.0
      %v3048 = vmax.f32 %v2981, 0.0
      %v3049 = vmax.f32 %v2982, 0.0
      %v3050 = vmax.f32 %v2983, 0.0
      %v3051 = vmax.f32 %v2984, 0.0
      %v3052 = vmax.f32 %v2985, 0.0
      %v3053 = vmax.f32 %v2986, 0.0
      %v3054 = vmax.f32 %v2987, 0.0
      %v3055 = vmax.f32 %v2988, 0.0
      %v3056 = vmax.f32 %v2989, 0.0
      %v3057 = vmax.f32 %v2990, 0.0
      %v3058 = vmax.f32 %v2991, 0.0
      %v3059 = vmax.f32 %v2992, 0.0
      %v3060 = vmax.f32 %v2993, 0.0
      %v3061 = vmax.f32 %v2994, 0.0
      %v3062 = vmax.f32 %v2995, 0.0
      %v3063 = vmax.f32 %v2996, 0.0
      %v3064 = vmax.f32 %v2997, 0.0
      %v3065 = vmax.f32 %v2998, 0.0
      %v3066 = vmax.f32 %v2999, 0.0
      %v3067 = vmax.f32 %v3000, 0.0
      %v3068 = vmax.f32 %v3001, 0.0
      %v3069 = vmax.f32 %v3002, 0.0
      %v3070 = vmax.f32 %v3003, 0.0
      %v3071 = vmax.f32 %v3004, 0.0
      %v3072 = vmax.f32 %v3005, 0.0
      %v3073 = vmax.f32 %v3006, 0.0
      %v3074 = vmax.f32 %v3007, 0.0
      %v3075 = vmax.f32 %v3008, 0.0
      %v3076 = vmax.f32 %v3009, 0.0
      %v3077 = vmax.f32 %v3010, 0.0
      %v3078 = vmax.f32 %v3011, 0.0
      %v3079 = vmax.f32 %v3012, 0.0
      %v3080 = vmax.f32 %v3013, 0.0
      %v3081 = vmax.f32 %v3014, 0.0
      %v3082 = vmax.f32 %v3015, 0.0
      %v3083 = vmax.f32 %v3016, 0.0
      %v3084 = vmax.f32 %v3017, 0.0
      %v3085 = vmax.f32 %v3018, 0.0
      %v3086 = vmax.f32 %v3019, 0.0
      %v3087 = vmax.f32 %v3020, 0.0
      %v3088 = vmax.f32 %v3021, 0.0
      %v3089 = vmax.f32 %v3022, 0.0
      %v3090 = vmax.f32 %v3023, 0.0
      %v3091 = vmax.f32 %v3024, 0.0
      %v3092 = vmax.f32 %v3025, 0.0
      %v3093 = vmax.f32 %v3026, 0.0
      %v3094 = vmax.f32 %v3027, 0.0
      %v3095 = vmax.f32 %v3028, 0.0
      %v3096 = vmax.f32 %v3029, 0.0
      %v3097 = vmax.f32 %v3030, 0.0
      %v3098 = vmax.f32 %v3031, 0.0
      %v3099 = vmax.f32 %v3032, 0.0
      %v3100 = vmax.f32 %v3033, 0.0
      %v3101 = vmax.f32 %v3034, 0.0
      %v3102 = vmax.f32 %v3035, 0.0
      %v3103 = vmax.f32 %v3036, 0.0
      %v3104 = vpack.c.bf16 %v3038, %v3037
      %v3105 = vpack.c.bf16 %v3040, %v3039
      %v3106 = vpack.c.bf16 %v3042, %v3041
      %v3107 = vpack.c.bf16 %v3044, %v3043
      %v3108 = vpack.c.bf16 %v3046, %v3045
      %v3109 = vpack.c.bf16 %v3048, %v3047
      %v3110 = vpack.c.bf16 %v3050, %v3049
      %v3111 = vpack.c.bf16 %v3052, %v3051
      %v3112 = vpack.c.bf16 %v3054, %v3053
      %v3113 = vpack.c.bf16 %v3056, %v3055
      %v3114 = vpack.c.bf16 %v3058, %v3057
      %v3115 = vpack.c.bf16 %v3060, %v3059
      %v3116 = vpack.c.bf16 %v3062, %v3061
      %v3117 = vpack.c.bf16 %v3064, %v3063
      %v3118 = vpack.c.bf16 %v3066, %v3065
      %v3119 = vpack.c.bf16 %v3068, %v3067
      %v3120 = vpack.c.bf16 %v3070, %v3069
      %v3121 = vpack.c.bf16 %v3072, %v3071
      %v3122 = vpack.c.bf16 %v3074, %v3073
      %v3123 = vpack.c.bf16 %v3076, %v3075
      %v3124 = vpack.c.bf16 %v3078, %v3077
      %v3125 = vpack.c.bf16 %v3080, %v3079
      %v3126 = vpack.c.bf16 %v3082, %v3081
      %v3127 = vpack.c.bf16 %v3084, %v3083
      %v3128 = vpack.c.bf16 %v3086, %v3085
      %v3129 = vpack.c.bf16 %v3088, %v3087
      %v3130 = vpack.c.bf16 %v3090, %v3089
      %v3131 = vpack.c.bf16 %v3092, %v3091
      %v3132 = vpack.c.bf16 %v3094, %v3093
      %v3133 = vpack.c.bf16 %v3096, %v3095
      %v3134 = vpack.c.bf16 %v3098, %v3097
      %v3135 = vpack.c.bf16 %v3100, %v3099
      %v3136 = vpack.c.bf16 %v3102, %v3101
      %v3137 = vpack.c.bf16 %v3103, %v3103
      %v3172 = vunpack.c.l.b16 %v3104
      %v3173 = vunpack.c.h.b16 %v3104
      %v3174 = vunpack.c.l.b16 %v3105
      %v3175 = vunpack.c.h.b16 %v3105
      %v3176 = vunpack.c.l.b16 %v3106
      %v3177 = vunpack.c.h.b16 %v3106
      %v3178 = vunpack.c.l.b16 %v3107
      %v3179 = vunpack.c.h.b16 %v3107
      %v3180 = vunpack.c.l.b16 %v3108
      %v3181 = vunpack.c.h.b16 %v3108
      %v3182 = vunpack.c.l.b16 %v3109
      %v3183 = vunpack.c.h.b16 %v3109
      %v3184 = vunpack.c.l.b16 %v3110
      %v3185 = vunpack.c.h.b16 %v3110
      %v3186 = vunpack.c.l.b16 %v3111
      %v3187 = vunpack.c.h.b16 %v3111
      %v3188 = vunpack.c.l.b16 %v3112
      %v3189 = vunpack.c.h.b16 %v3112
      %v3190 = vunpack.c.l.b16 %v3113
      %v3191 = vunpack.c.h.b16 %v3113
      %v3192 = vunpack.c.l.b16 %v3114
      %v3193 = vunpack.c.h.b16 %v3114
      %v3194 = vunpack.c.l.b16 %v3115
      %v3195 = vunpack.c.h.b16 %v3115
      %v3196 = vunpack.c.l.b16 %v3116
      %v3197 = vunpack.c.h.b16 %v3116
      %v3198 = vunpack.c.l.b16 %v3117
      %v3199 = vunpack.c.h.b16 %v3117
      %v3200 = vunpack.c.l.b16 %v3118
      %v3201 = vunpack.c.h.b16 %v3118
      %v3202 = vunpack.c.l.b16 %v3119
      %v3203 = vunpack.c.h.b16 %v3119
      %v3204 = vunpack.c.l.b16 %v3120
      %v3205 = vunpack.c.h.b16 %v3120
      %v3206 = vunpack.c.l.b16 %v3121
      %v3207 = vunpack.c.h.b16 %v3121
      %v3208 = vunpack.c.l.b16 %v3122
      %v3209 = vunpack.c.h.b16 %v3122
      %v3210 = vunpack.c.l.b16 %v3123
      %v3211 = vunpack.c.h.b16 %v3123
      %v3212 = vunpack.c.l.b16 %v3124
      %v3213 = vunpack.c.h.b16 %v3124
      %v3214 = vunpack.c.l.b16 %v3125
      %v3215 = vunpack.c.h.b16 %v3125
      %v3216 = vunpack.c.l.b16 %v3126
      %v3217 = vunpack.c.h.b16 %v3126
      %v3218 = vunpack.c.l.b16 %v3127
      %v3219 = vunpack.c.h.b16 %v3127
      %v3220 = vunpack.c.l.b16 %v3128
      %v3221 = vunpack.c.h.b16 %v3128
      %v3222 = vunpack.c.l.b16 %v3129
      %v3223 = vunpack.c.h.b16 %v3129
      %v3224 = vunpack.c.l.b16 %v3130
      %v3225 = vunpack.c.h.b16 %v3130
      %v3226 = vunpack.c.l.b16 %v3131
      %v3227 = vunpack.c.h.b16 %v3131
      %v3228 = vunpack.c.l.b16 %v3132
      %v3229 = vunpack.c.h.b16 %v3132
      %v3230 = vunpack.c.l.b16 %v3133
      %v3231 = vunpack.c.h.b16 %v3133
      %v3232 = vunpack.c.l.b16 %v3134
      %v3233 = vunpack.c.h.b16 %v3134
      %v3234 = vunpack.c.l.b16 %v3135
      %v3235 = vunpack.c.h.b16 %v3135
      %v3236 = vunpack.c.l.b16 %v3136
      %v3237 = vunpack.c.h.b16 %v3136
      %v3238 = vunpack.c.l.b16 %v3137
      %v3239 = vpack.c.b16 %v3172, %v3172
      %v3240 = vpack.c.b16 %v3173, %v3173
      %v3241 = vpack.c.b16 %v3174, %v3174
      %v3242 = vpack.c.b16 %v3175, %v3175
      %v3243 = vpack.c.b16 %v3176, %v3176
      %v3244 = vpack.c.b16 %v3177, %v3177
      %v3245 = vpack.c.b16 %v3178, %v3178
      %v3246 = vpack.c.b16 %v3179, %v3179
      %v3247 = vpack.c.b16 %v3180, %v3180
      %v3248 = vpack.c.b16 %v3181, %v3181
      %v3249 = vpack.c.b16 %v3182, %v3182
      %v3250 = vpack.c.b16 %v3183, %v3183
      %v3251 = vpack.c.b16 %v3184, %v3184
      %v3252 = vpack.c.b16 %v3185, %v3185
      %v3253 = vpack.c.b16 %v3186, %v3186
      %v3254 = vpack.c.b16 %v3187, %v3187
      %v3255 = vpack.c.b16 %v3188, %v3188
      %v3256 = vpack.c.b16 %v3189, %v3189
      %v3257 = vpack.c.b16 %v3190, %v3190
      %v3258 = vpack.c.b16 %v3191, %v3191
      %v3259 = vpack.c.b16 %v3192, %v3192
      %v3260 = vpack.c.b16 %v3193, %v3193
      %v3261 = vpack.c.b16 %v3194, %v3194
      %v3262 = vpack.c.b16 %v3195, %v3195
      %v3263 = vpack.c.b16 %v3196, %v3196
      %v3264 = vpack.c.b16 %v3197, %v3197
      %v3265 = vpack.c.b16 %v3198, %v3198
      %v3266 = vpack.c.b16 %v3199, %v3199
      %v3267 = vpack.c.b16 %v3200, %v3200
      %v3268 = vpack.c.b16 %v3201, %v3201
      %v3269 = vpack.c.b16 %v3202, %v3202
      %v3270 = vpack.c.b16 %v3203, %v3203
      %v3271 = vpack.c.b16 %v3204, %v3204
      %v3272 = vpack.c.b16 %v3205, %v3205
      %v3273 = vpack.c.b16 %v3206, %v3206
      %v3274 = vpack.c.b16 %v3207, %v3207
      %v3275 = vpack.c.b16 %v3208, %v3208
      %v3276 = vpack.c.b16 %v3209, %v3209
      %v3277 = vpack.c.b16 %v3210, %v3210
      %v3278 = vpack.c.b16 %v3211, %v3211
      %v3279 = vpack.c.b16 %v3212, %v3212
      %v3280 = vpack.c.b16 %v3213, %v3213
      %v3281 = vpack.c.b16 %v3214, %v3214
      %v3282 = vpack.c.b16 %v3215, %v3215
      %v3283 = vpack.c.b16 %v3216, %v3216
      %v3284 = vpack.c.b16 %v3217, %v3217
      %v3285 = vpack.c.b16 %v3218, %v3218
      %v3286 = vpack.c.b16 %v3219, %v3219
      %v3287 = vpack.c.b16 %v3220, %v3220
      %v3288 = vpack.c.b16 %v3221, %v3221
      %v3289 = vpack.c.b16 %v3222, %v3222
      %v3290 = vpack.c.b16 %v3223, %v3223
      %v3291 = vpack.c.b16 %v3224, %v3224
      %v3292 = vpack.c.b16 %v3225, %v3225
      %v3293 = vpack.c.b16 %v3226, %v3226
      %v3294 = vpack.c.b16 %v3227, %v3227
      %v3295 = vpack.c.b16 %v3228, %v3228
      %v3296 = vpack.c.b16 %v3229, %v3229
      %v3297 = vpack.c.b16 %v3230, %v3230
      %v3298 = vpack.c.b16 %v3231, %v3231
      %v3299 = vpack.c.b16 %v3232, %v3232
      %v3300 = vpack.c.b16 %v3233, %v3233
      %v3301 = vpack.c.b16 %v3234, %v3234
      %v3302 = vpack.c.b16 %v3235, %v3235
      %v3303 = vpack.c.b16 %v3236, %v3236
      %v3304 = vpack.c.b16 %v3237, %v3237
      %v3305 = vpack.c.b16 %v3238, %v3238
      %vm3373 = vcmask 257024
      %3374 = vst.msk [vmem:[%s170] sm:$0xf] %vm3373, %v3239
      %3375 = vst.msk [vmem:[%s170 + $0x4] sm:$0xf] %vm3373, %v3240
      %3376 = vst.msk [vmem:[%s170 + $0x8] sm:$0xf] %vm3373, %v3241
      %3377 = vst.msk [vmem:[%s170 + $0xc] sm:$0xf] %vm3373, %v3242
      %3378 = vst.msk [vmem:[%s170 + $0x10] sm:$0xf] %vm3373, %v3243
      %3379 = vst.msk [vmem:[%s170 + $0x14] sm:$0xf] %vm3373, %v3244
      %3380 = vst.msk [vmem:[%s170 + $0x18] sm:$0xf] %vm3373, %v3245
      %3381 = vst.msk [vmem:[%s170 + $0x1c] sm:$0xf] %vm3373, %v3246
      %3382 = vst.msk [vmem:[%s170 + $0x20] sm:$0xf] %vm3373, %v3247
      %3383 = vst.msk [vmem:[%s170 + $0x24] sm:$0xf] %vm3373, %v3248
      %3384 = vst.msk [vmem:[%s170 + $0x28] sm:$0xf] %vm3373, %v3249
      %3385 = vst.msk [vmem:[%s170 + $0x2c] sm:$0xf] %vm3373, %v3250
      %3386 = vst.msk [vmem:[%s170 + $0x30] sm:$0xf] %vm3373, %v3251
      %3387 = vst.msk [vmem:[%s170 + $0x34] sm:$0xf] %vm3373, %v3252
      %3388 = vst.msk [vmem:[%s170 + $0x38] sm:$0xf] %vm3373, %v3253
      %3389 = vst.msk [vmem:[%s170 + $0x3c] sm:$0xf] %vm3373, %v3254
      %3390 = vst.msk [vmem:[%s170 + $0x40] sm:$0xf] %vm3373, %v3255
      %3391 = vst.msk [vmem:[%s170 + $0x44] sm:$0xf] %vm3373, %v3256
      %3392 = vst.msk [vmem:[%s170 + $0x48] sm:$0xf] %vm3373, %v3257
      %3393 = vst.msk [vmem:[%s170 + $0x4c] sm:$0xf] %vm3373, %v3258
      %3394 = vst.msk [vmem:[%s170 + $0x50] sm:$0xf] %vm3373, %v3259
      %3395 = vst.msk [vmem:[%s170 + $0x54] sm:$0xf] %vm3373, %v3260
      %3396 = vst.msk [vmem:[%s170 + $0x58] sm:$0xf] %vm3373, %v3261
      %3397 = vst.msk [vmem:[%s170 + $0x5c] sm:$0xf] %vm3373, %v3262
      %3398 = vst.msk [vmem:[%s170 + $0x60] sm:$0xf] %vm3373, %v3263
      %3399 = vst.msk [vmem:[%s170 + $0x64] sm:$0xf] %vm3373, %v3264
      %3400 = vst.msk [vmem:[%s170 + $0x68] sm:$0xf] %vm3373, %v3265
      %3401 = vst.msk [vmem:[%s170 + $0x6c] sm:$0xf] %vm3373, %v3266
      %3402 = vst.msk [vmem:[%s170 + $0x70] sm:$0xf] %vm3373, %v3267
      %3403 = vst.msk [vmem:[%s170 + $0x74] sm:$0xf] %vm3373, %v3268
      %3404 = vst.msk [vmem:[%s170 + $0x78] sm:$0xf] %vm3373, %v3269
      %3405 = vst.msk [vmem:[%s170 + $0x7c] sm:$0xf] %vm3373, %v3270
      %3406 = vst.msk [vmem:[%s170 + $0x80] sm:$0xf] %vm3373, %v3271
      %3407 = vst.msk [vmem:[%s170 + $0x84] sm:$0xf] %vm3373, %v3272
      %3408 = vst.msk [vmem:[%s170 + $0x88] sm:$0xf] %vm3373, %v3273
      %3409 = vst.msk [vmem:[%s170 + $0x8c] sm:$0xf] %vm3373, %v3274
      %3410 = vst.msk [vmem:[%s170 + $0x90] sm:$0xf] %vm3373, %v3275
      %3411 = vst.msk [vmem:[%s170 + $0x94] sm:$0xf] %vm3373, %v3276
      %3412 = vst.msk [vmem:[%s170 + $0x98] sm:$0xf] %vm3373, %v3277
      %3413 = vst.msk [vmem:[%s170 + $0x9c] sm:$0xf] %vm3373, %v3278
      %3414 = vst.msk [vmem:[%s170 + $0xa0] sm:$0xf] %vm3373, %v3279
      %3415 = vst.msk [vmem:[%s170 + $0xa4] sm:$0xf] %vm3373, %v3280
      %3416 = vst.msk [vmem:[%s170 + $0xa8] sm:$0xf] %vm3373, %v3281
      %3417 = vst.msk [vmem:[%s170 + $0xac] sm:$0xf] %vm3373, %v3282
      %3418 = vst.msk [vmem:[%s170 + $0xb0] sm:$0xf] %vm3373, %v3283
      %3419 = vst.msk [vmem:[%s170 + $0xb4] sm:$0xf] %vm3373, %v3284
      %3420 = vst.msk [vmem:[%s170 + $0xb8] sm:$0xf] %vm3373, %v3285
      %3421 = vst.msk [vmem:[%s170 + $0xbc] sm:$0xf] %vm3373, %v3286
      %3422 = vst.msk [vmem:[%s170 + $0xc0] sm:$0xf] %vm3373, %v3287
      %3423 = vst.msk [vmem:[%s170 + $0xc4] sm:$0xf] %vm3373, %v3288
      %3424 = vst.msk [vmem:[%s170 + $0xc8] sm:$0xf] %vm3373, %v3289
      %3425 = vst.msk [vmem:[%s170 + $0xcc] sm:$0xf] %vm3373, %v3290
      %3426 = vst.msk [vmem:[%s170 + $0xd0] sm:$0xf] %vm3373, %v3291
      %3427 = vst.msk [vmem:[%s170 + $0xd4] sm:$0xf] %vm3373, %v3292
      %3428 = vst.msk [vmem:[%s170 + $0xd8] sm:$0xf] %vm3373, %v3293
      %3429 = vst.msk [vmem:[%s170 + $0xdc] sm:$0xf] %vm3373, %v3294
      %3430 = vst.msk [vmem:[%s170 + $0xe0] sm:$0xf] %vm3373, %v3295
      %3431 = vst.msk [vmem:[%s170 + $0xe4] sm:$0xf] %vm3373, %v3296
      %3432 = vst.msk [vmem:[%s170 + $0xe8] sm:$0xf] %vm3373, %v3297
      %3433 = vst.msk [vmem:[%s170 + $0xec] sm:$0xf] %vm3373, %v3298
      %3434 = vst.msk [vmem:[%s170 + $0xf0] sm:$0xf] %vm3373, %v3299
      %3435 = vst.msk [vmem:[%s170 + $0xf4] sm:$0xf] %vm3373, %v3300
      %3436 = vst.msk [vmem:[%s170 + $0xf8] sm:$0xf] %vm3373, %v3301
      %3437 = vst.msk [vmem:[%s170 + $0xfc] sm:$0xf] %vm3373, %v3302
      %3438 = vst.msk [vmem:[%s170 + $0x100] sm:$0xf] %vm3373, %v3303
      %3439 = vst.msk [vmem:[%s170 + $0x104] sm:$0xf] %vm3373, %v3304
      %vm3440 = vcmask 253952
      %vm3441 = vsmask.f32 256
      %vm3442 = vmand %vm3440, %vm3441
      %v3443 = vld [vmem:[%s170 + $0x108] sm:$0x1]
      %v3444 = vsel %vm3442, %v3305, %v3443
      %3445 = vst [vmem:[%s170 + $0x108] sm:$0x1] %v3444
      %p3446 = scmp.lt.s32.totalorder %s14, 1
      %s3447 = scalar_select %p3446, %s14, 1
      %s3448 = smul.addr %s3447, 67
      %s3449 = smul.addr %s3448, 4
      %s3450 = scalar_lea.vmem %s3, %s3449
      // Predicated region
      $region33: #{medical_mnist_cnn_forward.4} parent=31 // pred_check
        %p3451 = pneg %p100
      $region34: #{medical_mnist_cnn_forward.4} parent=31 // pred_check_branch
        %3453 = sbr.rel (%p3451) target = $region36
      $region35: #{medical_mnist_cnn_forward.4} parent=31 // pred_region
        _
      $region36: #{medical_mnist_cnn_forward.4} parent=31 // pred_fallthru
        _
    $region32: #{medical_mnist_cnn_forward.4} parent=5 // pred_fallthru
      _
    %p3454 = scmp.le.s32.totalorder 2, %s9
    // Predicated region
    $region37: #{medical_mnist_cnn_forward.4} parent=5 // pred_check
      %p3455 = pneg %p3454
    $region38: #{medical_mnist_cnn_forward.4} parent=5 // pred_check_branch
      %3457 = sbr.rel (%p3455) target = $region40
    $region39: #{medical_mnist_cnn_forward.4} parent=5 // pred_region
      %s3458 = ssub.s32 %s9, 2
      // Predicated region
      $region41: #{medical_mnist_cnn_forward.4} parent=39 // pred_check
        %p3459 = pneg %p106
      $region42: #{medical_mnist_cnn_forward.4} parent=39 // pred_check_branch
        %3461 = sbr.rel (%p3459) target = $region44
      $region43: #{medical_mnist_cnn_forward.4} parent=39 // pred_region
        %p3462 = scmp.lt.s32.totalorder %s15, 1
        %s3463 = scalar_select %p3462, %s15, 1
        %s3464 = smul.addr %s3463, 67
        %s3465 = smul.addr %s3464, 4
        %s3466 = scalar_lea.vmem %s3, %s3465
      $region44: #{medical_mnist_cnn_forward.4} parent=39 // pred_fallthru
        _
    $region40: #{medical_mnist_cnn_forward.4} parent=5 // pred_fallthru
      _
  $region6: #{medical_mnist_cnn_forward.4} parent=0 // loop_footer
    %s13 = sadd.s32 1, %s9
  $region7: #{medical_mnist_cnn_forward.4} parent=0 // loop_footer_branch
    %8 = sbr.rel target = $region3
  $region8: #{medical_mnist_cnn_forward.4} parent=0 // loop_exit
    _

// kernel: medical_mnist_cnn_forward.5
$region0: #{medical_mnist_cnn_forward.5}
  #allocation0 [shape = 'u32[]', space=smem, size = 0x4, offset = 0x4, fixed_abs, tag = 'smem constant byte address 0x4 - core index']
  #allocation1 [shape = 'u32[144,128]{1,0:T(1,128)}', space=vmem, size = 0x12000, scoped, tag = 'internal scratch']
  %s0 = inlined_call_operand.vmem [shape: bf16[2,4,100,288], index: 0, kind: input, shape index: {}]
  %s1 = inlined_call_operand.vmem [shape: bf16[288,64], index: 1, kind: input, shape index: {}]
  %s2 = inlined_call_operand.vmem [shape: f32[1,64], index: 2, kind: input, shape index: {}]
  %s3 = inlined_call_operand.vmem [shape: bf16[2,100,64], index: 3, kind: output, shape index: {}]
  %s4 = sld [smem:[#allocation0]]
  $region45: #{medical_mnist_cnn_forward.5} parent=0
    _
  %s6 = ssub.s32 1, %s4
  %s7 = scalar_select 0, %s6, %s4
  loop: start=0, step=1, limit=4
  $region2: #{medical_mnist_cnn_forward.5} parent=0 // loop_pre_header
    _
  $region3: #{medical_mnist_cnn_forward.5} parent=0 // loop_header
    %s9 = sphi 0, %s13
    %p10 = scmp.ge.s32.totalorder %s9, 4
    %s19 = sphi 0, %s21
    %s22 = sphi 0, %s19
    %s23 = sphi 0, %s22
    %s39 = sphi 0, %s23
    %s43 = sphi 0, %s43
    %s45 = sphi 0, %s43
    %s46 = sphi 0, %s45
    %s60 = sphi 0, %s46
    %s64 = sphi 0, %s64
    %s66 = sphi 0, %s64
    %s67 = sphi 0, %s66
    %s81 = sphi 0, %s67
    %s87 = sphi 0, %s89
    %s90 = sphi 0, %s87
    %s91 = sphi 0, %s90
    %s107 = sphi 0, %s91
  $region4: #{medical_mnist_cnn_forward.5} parent=0 // loop_header_branch
    %12 = sbr.rel (%p10) target = $region8
  $region5: #{medical_mnist_cnn_forward.5} parent=0 // loop_body
    %s14 = ssub.s32 %s9, 1
    %s15 = ssub.s32 %s9, 2
    %s16 = sadd.s32 %s9, 1
    %s17 = ssub.s32 %s9, %s16
    %p18 = scmp.eq.s32.totalorder %s17, 0
    %s20 = sadd.s32 %s19, 1
    %s21 = scalar_select %p18, %s19, %s20
    %p24 = pneg %p18
    %p25 = scmp.eq.s32.totalorder %s9, 1
    %p26 = por %p24, %p25
    %p27 = scmp.ne.s32.totalorder %s19, %s22
    %p28 = scmp.eq.s32.totalorder %s9, 0
    %p29 = por %p27, %p28
    %p30 = scmp.ne.s32.totalorder %s19, %s22
    %p31 = scmp.eq.s32.totalorder %s14, 1
    %p32 = por %p30, %p31
    %p33 = scmp.ne.s32.totalorder %s22, %s23
    %p34 = scmp.eq.s32.totalorder %s14, 0
    %p35 = por %p33, %p34
    %p36 = scmp.ne.s32.totalorder %s22, %s23
    %p37 = scmp.eq.s32.totalorder %s15, 1
    %p38 = por %p36, %p37
    %p40 = scmp.ne.s32.totalorder %s23, %s39
    %p41 = scmp.eq.s32.totalorder %s15, 0
    %p42 = por %p40, %p41
    %s44 = sadd.s32 %s43, 1
    %p47 = scmp.eq.s32.totalorder %s9, 1
    %p48 = scmp.ne.s32.totalorder %s43, %s45
    %p49 = scmp.eq.s32.totalorder %s9, 0
    %p50 = por %p48, %p49
    %p51 = scmp.ne.s32.totalorder %s43, %s45
    %p52 = scmp.eq.s32.totalorder %s14, 1
    %p53 = por %p51, %p52
    %p54 = scmp.ne.s32.totalorder %s45, %s46
    %p55 = scmp.eq.s32.totalorder %s14, 0
    %p56 = por %p54, %p55
    %p57 = scmp.ne.s32.totalorder %s45, %s46
    %p58 = scmp.eq.s32.totalorder %s15, 1
    %p59 = por %p57, %p58
    %p61 = scmp.ne.s32.totalorder %s46, %s60
    %p62 = scmp.eq.s32.totalorder %s15, 0
    %p63 = por %p61, %p62
    %s65 = sadd.s32 %s64, 1
    %p68 = scmp.eq.s32.totalorder %s9, 1
    %p69 = scmp.ne.s32.totalorder %s64, %s66
    %p70 = scmp.eq.s32.totalorder %s9, 0
    %p71 = por %p69, %p70
    %p72 = scmp.ne.s32.totalorder %s64, %s66
    %p73 = scmp.eq.s32.totalorder %s14, 1
    %p74 = por %p72, %p73
    %p75 = scmp.ne.s32.totalorder %s66, %s67
    %p76 = scmp.eq.s32.totalorder %s14, 0
    %p77 = por %p75, %p76
    %p78 = scmp.ne.s32.totalorder %s66, %s67
    %p79 = scmp.eq.s32.totalorder %s15, 1
    %p80 = por %p78, %p79
    %p82 = scmp.ne.s32.totalorder %s67, %s81
    %p83 = scmp.eq.s32.totalorder %s15, 0
    %p84 = por %p82, %p83
    %s85 = ssub.s32 %s9, %s16
    %p86 = scmp.eq.s32.totalorder %s85, 0
    %s88 = sadd.s32 %s87, 1
    %s89 = scalar_select %p86, %s87, %s88
    %p92 = pneg %p86
    %p93 = scmp.eq.s32.totalorder %s9, 1
    %p94 = por %p92, %p93
    %p95 = scmp.ne.s32.totalorder %s87, %s90
    %p96 = scmp.eq.s32.totalorder %s9, 0
    %p97 = por %p95, %p96
    %p98 = scmp.ne.s32.totalorder %s87, %s90
    %p99 = scmp.eq.s32.totalorder %s14, 1
    %p100 = por %p98, %p99
    %p101 = scmp.ne.s32.totalorder %s90, %s91
    %p102 = scmp.eq.s32.totalorder %s14, 0
    %p103 = por %p101, %p102
    %p104 = scmp.ne.s32.totalorder %s90, %s91
    %p105 = scmp.eq.s32.totalorder %s15, 1
    %p106 = por %p104, %p105
    %p108 = scmp.ne.s32.totalorder %s91, %s107
    %p109 = scmp.eq.s32.totalorder %s15, 0
    %p110 = por %p108, %p109
    %p111 = scmp.le.s32.totalorder 1, %s9
    %p112 = scmp.lt.s32.totalorder %s9, 3
    %p113 = pnand %p111, %p112
    %p114 = pneg %p113
    // Predicated region
    $region9: #{medical_mnist_cnn_forward.5} parent=5 // pred_check
      _
    $region10: #{medical_mnist_cnn_forward.5} parent=5 // pred_check_branch
      %116 = sbr.rel (%p113) target = $region12
    $region11: #{medical_mnist_cnn_forward.5} parent=5 // pred_region
      %s117 = ssub.s32 %s9, 1
      // Predicated region
      $region13: #{medical_mnist_cnn_forward.5} parent=11 // pred_check
        %p118 = pneg %p56
      $region14: #{medical_mnist_cnn_forward.5} parent=11 // pred_check_branch
        %120 = sbr.rel (%p118) target = $region16
      $region15: #{medical_mnist_cnn_forward.5} parent=11 // pred_region
        _
      $region16: #{medical_mnist_cnn_forward.5} parent=11 // pred_fallthru
        _
      // Predicated region
      $region17: #{medical_mnist_cnn_forward.5} parent=11 // pred_check
        %p121 = pneg %p77
      $region18: #{medical_mnist_cnn_forward.5} parent=11 // pred_check_branch
        %123 = sbr.rel (%p121) target = $region20
      $region19: #{medical_mnist_cnn_forward.5} parent=11 // pred_region
        _
      $region20: #{medical_mnist_cnn_forward.5} parent=11 // pred_fallthru
        _
    $region12: #{medical_mnist_cnn_forward.5} parent=5 // pred_fallthru
      _
    %p124 = scmp.lt.s32.totalorder %s9, 2
    // Predicated region
    $region21: #{medical_mnist_cnn_forward.5} parent=5 // pred_check
      %p125 = pneg %p124
    $region22: #{medical_mnist_cnn_forward.5} parent=5 // pred_check_branch
      %127 = sbr.rel (%p125) target = $region24
    $region23: #{medical_mnist_cnn_forward.5} parent=5 // pred_region
      // Predicated region
      $region25: #{medical_mnist_cnn_forward.5} parent=23 // pred_check
        %p128 = pneg %p29
      $region26: #{medical_mnist_cnn_forward.5} parent=23 // pred_check_branch
        %130 = sbr.rel (%p128) target = $region28
      $region27: #{medical_mnist_cnn_forward.5} parent=23 // pred_region
        %p131 = scmp.lt.s32.totalorder %s9, 1
        %s132 = scalar_select %p131, %s9, 1
        %s133 = smul.addr %s132, 156
        %s134 = smul.addr %s133, 4
        %s135 = scalar_lea.vmem %s0, %s134
      $region28: #{medical_mnist_cnn_forward.5} parent=23 // pred_fallthru
        _
    $region24: #{medical_mnist_cnn_forward.5} parent=5 // pred_fallthru
      _
    %p136 = scmp.le.s32.totalorder 1, %s9
    %p137 = scmp.lt.s32.totalorder %s9, 3
    %p138 = pnand %p136, %p137
    %p139 = pneg %p138
    // Predicated region
    $region29: #{medical_mnist_cnn_forward.5} parent=5 // pred_check
      _
    $region30: #{medical_mnist_cnn_forward.5} parent=5 // pred_check_branch
      %141 = sbr.rel (%p138) target = $region32
    $region31: #{medical_mnist_cnn_forward.5} parent=5 // pred_region
      %s142 = ssub.s32 %s9, 1
      %p143 = scmp.lt.s32.totalorder %s14, 1
      %s144 = scalar_select %p143, %s14, 1
      %s145 = smul.addr %s144, 156
      %s146 = smul.addr %s145, 4
      %s147 = scalar_lea.vmem %s0, %s146
      %p148 = pneg %p35
      %p149 = pneg %p32
      %p150 = pneg %p56
      %p151 = pneg %p53
      %p152 = pneg %p77
      %p153 = pneg %p74
      %p154 = pneg %p103
      %p155 = pneg %p100
      %p156 = scmp.lt.s32.totalorder %s14, 1
      %s157 = scalar_select %p156, %s14, 1
      %s158 = smul.addr %s157, 13
      %s159 = smul.addr %s158, 4
      %s160 = scalar_lea.vmem %s3, %s159
      %p161 = scmp.lt.s32.totalorder %s14, 1
      %s162 = scalar_select %p161, %s14, 1
      %s163 = smul.addr %s162, 156
      %s164 = smul.addr %s163, 4
      %s165 = scalar_lea.vmem %s0, %s164
      %p166 = scmp.lt.s32.totalorder %s14, 1
      %s167 = scalar_select %p166, %s14, 1
      %s168 = smul.addr %s167, 13
      %s169 = smul.addr %s168, 4
      %s170 = scalar_lea.vmem %s3, %s169
      %v172 = vld [vmem:[%s1] sm:$0xf]
      %v173 = vld [vmem:[%s1 + $0x4] sm:$0xf]
      %v174 = vld [vmem:[%s1 + $0x8] sm:$0xf]
      %v175 = vld [vmem:[%s1 + $0xc] sm:$0xf]
      %v176 = vld [vmem:[%s1 + $0x10] sm:$0xf]
      %v177 = vld [vmem:[%s1 + $0x14] sm:$0xf]
      %v178 = vld [vmem:[%s1 + $0x18] sm:$0xf]
      %v179 = vld [vmem:[%s1 + $0x1c] sm:$0xf]
      %v180 = vld [vmem:[%s1 + $0x20] sm:$0xf]
      %v181 = vld [vmem:[%s1 + $0x24] sm:$0xf]
      %v182 = vld [vmem:[%s1 + $0x28] sm:$0xf]
      %v183 = vld [vmem:[%s1 + $0x2c] sm:$0xf]
      %v184 = vld [vmem:[%s1 + $0x30] sm:$0xf]
      %v185 = vld [vmem:[%s1 + $0x34] sm:$0xf]
      %v186 = vld [vmem:[%s1 + $0x38] sm:$0xf]
      %v187 = vld [vmem:[%s1 + $0x3c] sm:$0xf]
      %v188 = vld [vmem:[%s1 + $0x40] sm:$0xf]
      %v189 = vld [vmem:[%s1 + $0x44] sm:$0xf]
      %v190 = vld [vmem:[%s1 + $0x48] sm:$0xf]
      %v191 = vld [vmem:[%s1 + $0x4c] sm:$0xf]
      %v192 = vld [vmem:[%s1 + $0x50] sm:$0xf]
      %v193 = vld [vmem:[%s1 + $0x54] sm:$0xf]
      %v194 = vld [vmem:[%s1 + $0x58] sm:$0xf]
      %v195 = vld [vmem:[%s1 + $0x5c] sm:$0xf]
      %v196 = vld [vmem:[%s1 + $0x60] sm:$0xf]
      %v197 = vld [vmem:[%s1 + $0x64] sm:$0xf]
      %v198 = vld [vmem:[%s1 + $0x68] sm:$0xf]
      %v199 = vld [vmem:[%s1 + $0x6c] sm:$0xf]
      %v200 = vld [vmem:[%s1 + $0x70] sm:$0xf]
      %v201 = vld [vmem:[%s1 + $0x74] sm:$0xf]
      %v202 = vld [vmem:[%s1 + $0x78] sm:$0xf]
      %v203 = vld [vmem:[%s1 + $0x7c] sm:$0xf]
      %v204 = vld [vmem:[%s1 + $0x80] sm:$0xf]
      %v205 = vld [vmem:[%s1 + $0x84] sm:$0xf]
      %v206 = vld [vmem:[%s1 + $0x88] sm:$0xf]
      %v207 = vld [vmem:[%s1 + $0x8c] sm:$0xf]
      %v208 = vld [vmem:[%s165] sm:$0xff]
      %v209 = vld [vmem:[%s165 + $0x8] sm:$0xf]
      %v210 = vld [vmem:[%s165 + $0xc] sm:$0xff]
      %v211 = vld [vmem:[%s165 + $0x14] sm:$0xf]
      %v212 = vld [vmem:[%s165 + $0x18] sm:$0xff]
      %v213 = vld [vmem:[%s165 + $0x20] sm:$0xf]
      %v214 = vld [vmem:[%s165 + $0x24] sm:$0xff]
      %v215 = vld [vmem:[%s165 + $0x2c] sm:$0xf]
      %v216 = vld [vmem:[%s165 + $0x30] sm:$0xff]
      %v217 = vld [vmem:[%s165 + $0x38] sm:$0xf]
      %v218 = vld [vmem:[%s165 + $0x3c] sm:$0xff]
      %v219 = vld [vmem:[%s165 + $0x44] sm:$0xf]
      %v220 = vld [vmem:[%s165 + $0x48] sm:$0xff]
      %v221 = vld [vmem:[%s165 + $0x50] sm:$0xf]
      %v222 = vld [vmem:[%s165 + $0x54] sm:$0xff]
      %v223 = vld [vmem:[%s165 + $0x5c] sm:$0xf]
      %v224 = vld [vmem:[%s165 + $0x60] sm:$0xff]
      %v225 = vld [vmem:[%s165 + $0x68] sm:$0xf]
      %v226 = vld [vmem:[%s165 + $0x6c] sm:$0xff]
      %v227 = vld [vmem:[%s165 + $0x74] sm:$0xf]
      %v228 = vld [vmem:[%s165 + $0x78] sm:$0xff]
      %v229 = vld [vmem:[%s165 + $0x80] sm:$0xf]
      %v230 = vld [vmem:[%s165 + $0x84] sm:$0xff]
      %v231 = vld [vmem:[%s165 + $0x8c] sm:$0xf]
      %v232 = vld [vmem:[%s165 + $0x90] sm:$0x33]
      %v233 = vld [vmem:[%s165 + $0x98] sm:$0x3]
      %v260 = vunpack.c.l.b16 %v208
      %v261 = vunpack.c.h.b16 %v208
      %v262 = vunpack.c.l.b16 %v209
      %v263 = vunpack.c.l.b16 %v210
      %v264 = vunpack.c.h.b16 %v210
      %v265 = vunpack.c.l.b16 %v211
      %v266 = vunpack.c.l.b16 %v212
      %v267 = vunpack.c.h.b16 %v212
      %v268 = vunpack.c.l.b16 %v213
      %v269 = vunpack.c.l.b16 %v214
      %v270 = vunpack.c.h.b16 %v214
      %v271 = vunpack.c.l.b16 %v215
      %v272 = vunpack.c.l.b16 %v216
      %v273 = vunpack.c.h.b16 %v216
      %v274 = vunpack.c.l.b16 %v217
      %v275 = vunpack.c.l.b16 %v218
      %v276 = vunpack.c.h.b16 %v218
      %v277 = vunpack.c.l.b16 %v219
      %v278 = vunpack.c.l.b16 %v220
      %v279 = vunpack.c.h.b16 %v220
      %v280 = vunpack.c.l.b16 %v221
      %v281 = vunpack.c.l.b16 %v222
      %v282 = vunpack.c.h.b16 %v222
      %v283 = vunpack.c.l.b16 %v223
      %v284 = vunpack.c.l.b16 %v224
      %v285 = vunpack.c.h.b16 %v224
      %v286 = vunpack.c.l.b16 %v225
      %v287 = vunpack.c.l.b16 %v226
      %v288 = vunpack.c.h.b16 %v226
      %v289 = vunpack.c.l.b16 %v227
      %v290 = vunpack.c.l.b16 %v228
      %v291 = vunpack.c.h.b16 %v228
      %v292 = vunpack.c.l.b16 %v229
      %v293 = vunpack.c.l.b16 %v230
      %v294 = vunpack.c.h.b16 %v230
      %v295 = vunpack.c.l.b16 %v231
      %v296 = vunpack.c.l.b16 %v232
      %v297 = vunpack.c.h.b16 %v232
      %v298 = vunpack.c.l.b16 %v233
      %v299 = vpack.c.b16 %v263, %v260
      %v300 = vpack.c.b16 %v264, %v261
      %v301 = vpack.c.b16 %v265, %v262
      %v302 = vpack.c.b16 %v269, %v266
      %v303 = vpack.c.b16 %v270, %v267
      %v304 = vpack.c.b16 %v271, %v268
      %v305 = vpack.c.b16 %v275, %v272
      %v306 = vpack.c.b16 %v276, %v273
      %v307 = vpack.c.b16 %v277, %v274
      %v308 = vpack.c.b16 %v281, %v278
      %v309 = vpack.c.b16 %v282, %v279
      %v310 = vpack.c.b16 %v283, %v280
      %v311 = vpack.c.b16 %v287, %v284
      %v312 = vpack.c.b16 %v288, %v285
      %v313 = vpack.c.b16 %v289, %v286
      %v314 = vpack.c.b16 %v293, %v290
      %v315 = vpack.c.b16 %v294, %v291
      %v316 = vpack.c.b16 %v295, %v292
      %v317 = vpack.c.b16 %v296, %v296
      %v318 = vpack.c.b16 %v297, %v297
      %v319 = vpack.c.b16 %v298, %v298
      %v370 = vunpack.c.l.b16 %v172
      %v371 = vunpack.c.l.b16 %v173
      %v372 = vunpack.c.l.b16 %v174
      %v373 = vunpack.c.l.b16 %v175
      %v374 = vunpack.c.l.b16 %v176
      %v375 = vunpack.c.l.b16 %v177
      %v376 = vunpack.c.l.b16 %v178
      %v377 = vunpack.c.l.b16 %v179
      %v378 = vunpack.c.l.b16 %v180
      %v379 = vunpack.c.l.b16 %v181
      %v380 = vunpack.c.l.b16 %v182
      %v381 = vunpack.c.l.b16 %v183
      %v382 = vunpack.c.l.b16 %v184
      %v383 = vunpack.c.l.b16 %v185
      %v384 = vunpack.c.l.b16 %v186
      %v385 = vunpack.c.l.b16 %v187
      %v386 = vunpack.c.l.b16 %v188
      %v387 = vunpack.c.l.b16 %v189
      %v388 = vunpack.c.l.b16 %v190
      %v389 = vunpack.c.l.b16 %v191
      %v390 = vunpack.c.l.b16 %v192
      %v391 = vunpack.c.l.b16 %v193
      %v392 = vunpack.c.l.b16 %v194
      %v393 = vunpack.c.l.b16 %v195
      %v394 = vunpack.c.l.b16 %v196
      %v395 = vunpack.c.l.b16 %v197
      %v396 = vunpack.c.l.b16 %v198
      %v397 = vunpack.c.l.b16 %v199
      %v398 = vunpack.c.l.b16 %v200
      %v399 = vunpack.c.l.b16 %v201
      %v400 = vunpack.c.l.b16 %v202
      %v401 = vunpack.c.l.b16 %v203
      %v402 = vunpack.c.l.b16 %v204
      %v403 = vunpack.c.l.b16 %v205
      %v404 = vunpack.c.l.b16 %v206
      %v405 = vunpack.c.l.b16 %v207
      %v406 = vpack.c.b16 %v371, %v370
      %v407 = vpack.c.b16 %v373, %v372
      %v408 = vpack.c.b16 %v375, %v374
      %v409 = vpack.c.b16 %v377, %v376
      %v410 = vpack.c.b16 %v379, %v378
      %v411 = vpack.c.b16 %v381, %v380
      %v412 = vpack.c.b16 %v383, %v382
      %v413 = vpack.c.b16 %v385, %v384
      %v414 = vpack.c.b16 %v387, %v386
      %v415 = vpack.c.b16 %v389, %v388
      %v416 = vpack.c.b16 %v391, %v390
      %v417 = vpack.c.b16 %v393, %v392
      %v418 = vpack.c.b16 %v395, %v394
      %v419 = vpack.c.b16 %v397, %v396
      %v420 = vpack.c.b16 %v399, %v398
      %v421 = vpack.c.b16 %v401, %v400
      %v422 = vpack.c.b16 %v403, %v402
      %v423 = vpack.c.b16 %v405, %v404
      %vm442 = vcmask 261120
      %v444 = vsel %vm442, %v301, 0
      %v447 = vsel %vm442, %v304, 0
      %v450 = vsel %vm442, %v307, 0
      %v453 = vsel %vm442, %v310, 0
      %v456 = vsel %vm442, %v313, 0
      %v459 = vsel %vm442, %v316, 0
      %v462 = vsel %vm442, %v319, 0
      %464 = vmatprep.subr.bf16.mxu0 0
      %465 = vmatpush1.bf16.msra.mxu0 %v406
      %466 = vmatprep.subr.bf16.mxu0 0
      %467 = vmatpush1.bf16.msra.mxu0 %v407
      %468 = vmatprep.subr.bf16.mxu0 0
      %469 = vmatpush1.bf16.msra.mxu0 %v408
      %470 = vmatprep.subr.bf16.mxu0 0
      %471 = vmatpush1.bf16.msra.mxu0 %v409
      %472 = vmatprep.subr.bf16.mxu0 0
      %473 = vmatpush1.bf16.msra.mxu0 %v410
      %474 = vmatprep.subr.bf16.mxu0 0
      %475 = vmatpush1.bf16.msra.mxu0 %v411
      %476 = vmatprep.subr.bf16.mxu0 0
      %477 = vmatpush1.bf16.msra.mxu0 %v412
      %478 = vmatprep.subr.bf16.mxu0 0
      %479 = vmatpush1.bf16.msra.mxu0 %v413
      %480 = vmatprep.subr.bf16.mxu0 0
      %481 = vmatpush1.bf16.msra.mxu0 %v414
      %482 = vmatprep.subr.bf16.mxu0 0
      %483 = vmatpush1.bf16.msra.mxu0 %v415
      %484 = vmatprep.subr.bf16.mxu0 0
      %485 = vmatpush1.bf16.msra.mxu0 %v416
      %486 = vmatprep.subr.bf16.mxu0 0
      %487 = vmatpush1.bf16.msra.mxu0 %v417
      %488 = vmatprep.subr.bf16.mxu0 0
      %489 = vmatpush1.bf16.msra.mxu0 %v418
      %490 = vmatprep.subr.bf16.mxu0 0
      %491 = vmatpush1.bf16.msra.mxu0 %v419
      %492 = vmatprep.subr.bf16.mxu0 0
      %493 = vmatpush1.bf16.msra.mxu0 %v420
      %494 = vmatprep.subr.bf16.mxu0 0
      %495 = vmatpush1.bf16.msra.mxu0 %v421
      %496 = vmatprep.mubr.bf16.mxu0 %v300
      %497 = vmatmul.mubr.bf16.gmra.mrb[0].mxu0 %v299
      %v498 = vpop.f32.mrb[0].mxu0
      %v499 = vadd.f32 0.0, %v498
      %v500 = vpop.f32.mrb[0].mxu0
      %v501 = vpop.f32.mrb[0].mxu0
      %v502 = vadd.f32 0.0, %v501
      %v503 = vpop.f32.mrb[0].mxu0
      %504 = vmatprep.mubr.bf16.mxu0 %v303
      %505 = vmatmul.mubr.bf16.gmra.mrb[0].mxu0 %v302
      %v506 = vpop.f32.mrb[0].mxu0
      %v507 = vadd.f32 0.0, %v506
      %v508 = vpop.f32.mrb[0].mxu0
      %v509 = vpop.f32.mrb[0].mxu0
      %v510 = vadd.f32 0.0, %v509
      %v511 = vpop.f32.mrb[0].mxu0
      %512 = vmatprep.mubr.bf16.mxu0 %v306
      %513 = vmatmul.mubr.bf16.gmra.mrb[0].mxu0 %v305
      %v514 = vpop.f32.mrb[0].mxu0
      %v515 = vadd.f32 0.0, %v514
      %v516 = vpop.f32.mrb[0].mxu0
      %v517 = vpop.f32.mrb[0].mxu0
      %v518 = vadd.f32 0.0, %v517
      %v519 = vpop.f32.mrb[0].mxu0
      %520 = vmatprep.mubr.bf16.mxu0 %v309
      %521 = vmatmul.mubr.bf16.gmra.mrb[0].mxu0 %v308
      %v522 = vpop.f32.mrb[0].mxu0
      %v523 = vadd.f32 0.0, %v522
      %v524 = vpop.f32.mrb[0].mxu0
      %v525 = vpop.f32.mrb[0].mxu0
      %v526 = vadd.f32 0.0, %v525
      %v527 = vpop.f32.mrb[0].mxu0
      %528 = vmatprep.mubr.bf16.mxu0 %v312
      %529 = vmatmul.mubr.bf16.gmra.mrb[0].mxu0 %v311
      %v530 = vpop.f32.mrb[0].mxu0
      %v531 = vadd.f32 0.0, %v530
      %v532 = vpop.f32.mrb[0].mxu0
      %v533 = vpop.f32.mrb[0].mxu0
      %v534 = vadd.f32 0.0, %v533
      %v535 = vpop.f32.mrb[0].mxu0
      %536 = vmatprep.mubr.bf16.mxu0 %v315
      %537 = vmatmul.mubr.bf16.gmra.mrb[0].mxu0 %v314
      %v538 = vpop.f32.mrb[0].mxu0
      %v539 = vadd.f32 0.0, %v538
      %v540 = vpop.f32.mrb[0].mxu0
      %v541 = vpop.f32.mrb[0].mxu0
      %v542 = vadd.f32 0.0, %v541
      %v543 = vpop.f32.mrb[0].mxu0
      %544 = vmatprep.mubr.bf16.mxu0 %v318
      %545 = vmatmul.mubr.bf16.gmra.mrb[0].mxu0 %v317
      %v546 = vpop.f32.mrb[0].mxu0
      %v547 = vadd.f32 0.0, %v546
      %v548 = vpop.f32.mrb[0].mxu0
      %v549 = vpop.f32.mrb[0].mxu0
      %v550 = vpop.f32.mrb[0].mxu0
      %551 = vdwg.mxu0
      %552 = vmatprep.subr.bf16.mxu0 0
      %553 = vmatpush1.bf16.msra.mxu0 %v422
      %554 = vmatprep.subr.bf16.mxu0 0
      %555 = vmatpush1.bf16.msra.mxu0 %v423
      %556 = vmatprep.subr.bf16.mxu0 0
      %557 = vmatpush1.bf16.msra.mxu0 0
      %558 = vmatprep.subr.bf16.mxu0 0
      %559 = vmatpush1.bf16.msra.mxu0 0
      %560 = vmatprep.subr.bf16.mxu0 0
      %561 = vmatpush1.bf16.msra.mxu0 0
      %562 = vmatprep.subr.bf16.mxu0 0
      %563 = vmatpush1.bf16.msra.mxu0 0
      %564 = vmatprep.subr.bf16.mxu0 0
      %565 = vmatpush1.bf16.msra.mxu0 0
      %566 = vmatprep.subr.bf16.mxu0 0
      %567 = vmatpush1.bf16.msra.mxu0 0
      %568 = vmatprep.subr.bf16.mxu0 0
      %569 = vmatpush1.bf16.msra.mxu0 0
      %570 = vmatprep.subr.bf16.mxu0 0
      %571 = vmatpush1.bf16.msra.mxu0 0
      %572 = vmatprep.subr.bf16.mxu0 0
      %573 = vmatpush1.bf16.msra.mxu0 0
      %574 = vmatprep.subr.bf16.mxu0 0
      %575 = vmatpush1.bf16.msra.mxu0 0
      %576 = vmatprep.subr.bf16.mxu0 0
      %577 = vmatpush1.bf16.msra.mxu0 0
      %578 = vmatprep.subr.bf16.mxu0 0
      %579 = vmatpush1.bf16.msra.mxu0 0
      %580 = vmatprep.subr.bf16.mxu0 0
      %581 = vmatpush1.bf16.msra.mxu0 0
      %582 = vmatprep.subr.bf16.mxu0 0
      %583 = vmatpush1.bf16.msra.mxu0 0
      %584 = vmatprep.mubr.bf16.mxu0 0
      %585 = vmatmul.mubr.bf16.gmra.mrb[0].mxu0 %v444
      %v586 = vpop.f32.mrb[0].mxu0
      %v587 = vadd.f32 %v499, %v586
      %v588 = vpop.f32.mrb[0].mxu0
      %v589 = vpop.f32.mrb[0].mxu0
      %v590 = vadd.f32 %v502, %v589
      %v591 = vpop.f32.mrb[0].mxu0
      %592 = vmatprep.mubr.bf16.mxu0 0
      %593 = vmatmul.mubr.bf16.gmra.mrb[0].mxu0 %v447
      %v594 = vpop.f32.mrb[0].mxu0
      %v595 = vadd.f32 %v507, %v594
      %v596 = vpop.f32.mrb[0].mxu0
      %v597 = vpop.f32.mrb[0].mxu0
      %v598 = vadd.f32 %v510, %v597
      %v599 = vpop.f32.mrb[0].mxu0
      %600 = vmatprep.mubr.bf16.mxu0 0
      %601 = vmatmul.mubr.bf16.gmra.mrb[0].mxu0 %v450
      %v602 = vpop.f32.mrb[0].mxu0
      %v603 = vadd.f32 %v515, %v602
      %v604 = vpop.f32.mrb[0].mxu0
      %v605 = vpop.f32.mrb[0].mxu0
      %v606 = vadd.f32 %v518, %v605
      %v607 = vpop.f32.mrb[0].mxu0
      %608 = vmatprep.mubr.bf16.mxu0 0
      %609 = vmatmul.mubr.bf16.gmra.mrb[0].mxu0 %v453
      %v610 = vpop.f32.mrb[0].mxu0
      %v611 = vadd.f32 %v523, %v610
      %v612 = vpop.f32.mrb[0].mxu0
      %v613 = vpop.f32.mrb[0].mxu0
      %v614 = vadd.f32 %v526, %v613
      %v615 = vpop.f32.mrb[0].mxu0
      %616 = vmatprep.mubr.bf16.mxu0 0
      %617 = vmatmul.mubr.bf16.gmra.mrb[0].mxu0 %v456
      %v618 = vpop.f32.mrb[0].mxu0
      %v619 = vadd.f32 %v531, %v618
      %v620 = vpop.f32.mrb[0].mxu0
      %v621 = vpop.f32.mrb[0].mxu0
      %v622 = vadd.f32 %v534, %v621
      %v623 = vpop.f32.mrb[0].mxu0
      %624 = vmatprep.mubr.bf16.mxu0 0
      %625 = vmatmul.mubr.bf16.gmra.mrb[0].mxu0 %v459
      %v626 = vpop.f32.mrb[0].mxu0
      %v627 = vadd.f32 %v539, %v626
      %v628 = vpop.f32.mrb[0].mxu0
      %v629 = vpop.f32.mrb[0].mxu0
      %v630 = vadd.f32 %v542, %v629
      %v631 = vpop.f32.mrb[0].mxu0
      %632 = vmatprep.mubr.bf16.mxu0 0
      %633 = vmatmul.mubr.bf16.gmra.mrb[0].mxu0 %v462
      %v634 = vpop.f32.mrb[0].mxu0
      %v635 = vadd.f32 %v547, %v634
      %v636 = vpop.f32.mrb[0].mxu0
      %v637 = vpop.f32.mrb[0].mxu0
      %v638 = vpop.f32.mrb[0].mxu0
      %639 = vdwg.mxu0
      %s640 = scalar_lea.vmem %s165, 156
      %v641 = vld [vmem:[%s640] sm:$0xff]
      %v642 = vld [vmem:[%s640 + $0x8] sm:$0xf]
      %v643 = vld [vmem:[%s640 + $0xc] sm:$0xff]
      %v644 = vld [vmem:[%s640 + $0x14] sm:$0xf]
      %v645 = vld [vmem:[%s640 + $0x18] sm:$0xff]
      %v646 = vld [vmem:[%s640 + $0x20] sm:$0xf]
      %v647 = vld [vmem:[%s640 + $0x24] sm:$0xff]
      %v648 = vld [vmem:[%s640 + $0x2c] sm:$0xf]
      %v649 = vld [vmem:[%s640 + $0x30] sm:$0xff]
      %v650 = vld [vmem:[%s640 + $0x38] sm:$0xf]
      %v651 = vld [vmem:[%s640 + $0x3c] sm:$0xff]
      %v652 = vld [vmem:[%s640 + $0x44] sm:$0xf]
      %v653 = vld [vmem:[%s640 + $0x48] sm:$0xff]
      %v654 = vld [vmem:[%s640 + $0x50] sm:$0xf]
      %v655 = vld [vmem:[%s640 + $0x54] sm:$0xff]
      %v656 = vld [vmem:[%s640 + $0x5c] sm:$0xf]
      %v657 = vld [vmem:[%s640 + $0x60] sm:$0xff]
      %v658 = vld [vmem:[%s640 + $0x68] sm:$0xf]
      %v659 = vld [vmem:[%s640 + $0x6c] sm:$0xff]
      %v660 = vld [vmem:[%s640 + $0x74] sm:$0xf]
      %v661 = vld [vmem:[%s640 + $0x78] sm:$0xff]
      %v662 = vld [vmem:[%s640 + $0x80] sm:$0xf]
      %v663 = vld [vmem:[%s640 + $0x84] sm:$0xff]
      %v664 = vld [vmem:[%s640 + $0x8c] sm:$0xf]
      %v665 = vld [vmem:[%s640 + $0x90] sm:$0x33]
      %v666 = vld [vmem:[%s640 + $0x98] sm:$0x3]
      %v693 = vunpack.c.l.b16 %v641
      %v694 = vunpack.c.h.b16 %v641
      %v695 = vunpack.c.l.b16 %v642
      %v696 = vunpack.c.l.b16 %v643
      %v697 = vunpack.c.h.b16 %v643
      %v698 = vunpack.c.l.b16 %v644
      %v699 = vunpack.c.l.b16 %v645
      %v700 = vunpack.c.h.b16 %v645
      %v701 = vunpack.c.l.b16 %v646
      %v702 = vunpack.c.l.b16 %v647
      %v703 = vunpack.c.h.b16 %v647
      %v704 = vunpack.c.l.b16 %v648
      %v705 = vunpack.c.l.b16 %v649
      %v706 = vunpack.c.h.b16 %v649
      %v707 = vunpack.c.l.b16 %v650
      %v708 = vunpack.c.l.b16 %v651
      %v709 = vunpack.c.h.b16 %v651
      %v710 = vunpack.c.l.b16 %v652
      %v711 = vunpack.c.l.b16 %v653
      %v712 = vunpack.c.h.b16 %v653
      %v713 = vunpack.c.l.b16 %v654
      %v714 = vunpack.c.l.b16 %v655
      %v715 = vunpack.c.h.b16 %v655
      %v716 = vunpack.c.l.b16 %v656
      %v717 = vunpack.c.l.b16 %v657
      %v718 = vunpack.c.h.b16 %v657
      %v719 = vunpack.c.l.b16 %v658
      %v720 = vunpack.c.l.b16 %v659
      %v721 = vunpack.c.h.b16 %v659
      %v722 = vunpack.c.l.b16 %v660
      %v723 = vunpack.c.l.b16 %v661
      %v724 = vunpack.c.h.b16 %v661
      %v725 = vunpack.c.l.b16 %v662
      %v726 = vunpack.c.l.b16 %v663
      %v727 = vunpack.c.h.b16 %v663
      %v728 = vunpack.c.l.b16 %v664
      %v729 = vunpack.c.l.b16 %v665
      %v730 = vunpack.c.h.b16 %v665
      %v731 = vunpack.c.l.b16 %v666
      %v732 = vpack.c.b16 %v696, %v693
      %v733 = vpack.c.b16 %v697, %v694
      %v734 = vpack.c.b16 %v698, %v695
      %v735 = vpack.c.b16 %v702, %v699
      %v736 = vpack.c.b16 %v703, %v700
      %v737 = vpack.c.b16 %v704, %v701
      %v738 = vpack.c.b16 %v708, %v705
      %v739 = vpack.c.b16 %v709, %v706
      %v740 = vpack.c.b16 %v710, %v707
      %v741 = vpack.c.b16 %v714, %v711
      %v742 = vpack.c.b16 %v715, %v712
      %v743 = vpack.c.b16 %v716, %v713
      %v744 = vpack.c.b16 %v720, %v717
      %v745 = vpack.c.b16 %v721, %v718
      %v746 = vpack.c.b16 %v722, %v719
      %v747 = vpack.c.b16 %v726, %v723
      %v748 = vpack.c.b16 %v727, %v724
      %v749 = vpack.c.b16 %v728, %v725
      %v750 = vpack.c.b16 %v729, %v729
      %v751 = vpack.c.b16 %v730, %v730
      %v752 = vpack.c.b16 %v731, %v731
      %v768 = vsel %vm442, %v734, 0
      %v771 = vsel %vm442, %v737, 0
      %v774 = vsel %vm442, %v740, 0
      %v777 = vsel %vm442, %v743, 0
      %v780 = vsel %vm442, %v746, 0
      %v783 = vsel %vm442, %v749, 0
      %v786 = vsel %vm442, %v752, 0
      %788 = vmatprep.subr.bf16.mxu0 0
      %789 = vmatpush1.bf16.msra.mxu0 %v406
      %790 = vmatprep.subr.bf16.mxu0 0
      %791 = vmatpush1.bf16.msra.mxu0 %v407
      %792 = vmatprep.subr.bf16.mxu0 0
      %793 = vmatpush1.bf16.msra.mxu0 %v408
      %794 = vmatprep.subr.bf16.mxu0 0
      %795 = vmatpush1.bf16.msra.mxu0 %v409
      %796 = vmatprep.subr.bf16.mxu0 0
      %797 = vmatpush1.bf16.msra.mxu0 %v410
      %798 = vmatprep.subr.bf16.mxu0 0
      %799 = vmatpush1.bf16.msra.mxu0 %v411
      %800 = vmatprep.subr.bf16.mxu0 0
      %801 = vmatpush1.bf16.msra.mxu0 %v412
      %802 = vmatprep.subr.bf16.mxu0 0
      %803 = vmatpush1.bf16.msra.mxu0 %v413
      %804 = vmatprep.subr.bf16.mxu0 0
      %805 = vmatpush1.bf16.msra.mxu0 %v414
      %806 = vmatprep.subr.bf16.mxu0 0
      %807 = vmatpush1.bf16.msra.mxu0 %v415
      %808 = vmatprep.subr.bf16.mxu0 0
      %809 = vmatpush1.bf16.msra.mxu0 %v416
      %810 = vmatprep.subr.bf16.mxu0 0
      %811 = vmatpush1.bf16.msra.mxu0 %v417
      %812 = vmatprep.subr.bf16.mxu0 0
      %813 = vmatpush1.bf16.msra.mxu0 %v418
      %814 = vmatprep.subr.bf16.mxu0 0
      %815 = vmatpush1.bf16.msra.mxu0 %v419
      %816 = vmatprep.subr.bf16.mxu0 0
      %817 = vmatpush1.bf16.msra.mxu0 %v420
      %818 = vmatprep.subr.bf16.mxu0 0
      %819 = vmatpush1.bf16.msra.mxu0 %v421
      %820 = vmatprep.mubr.bf16.mxu0 %v733
      %821 = vmatmul.mubr.bf16.gmra.mrb[0].mxu0 %v732
      %v822 = vpop.f32.mrb[0].mxu0
      %v823 = vadd.f32 0.0, %v822
      %v824 = vpop.f32.mrb[0].mxu0
      %v825 = vpop.f32.mrb[0].mxu0
      %v826 = vadd.f32 0.0, %v825
      %v827 = vpop.f32.mrb[0].mxu0
      %828 = vmatprep.mubr.bf16.mxu0 %v736
      %829 = vmatmul.mubr.bf16.gmra.mrb[0].mxu0 %v735
      %v830 = vpop.f32.mrb[0].mxu0
      %v831 = vadd.f32 0.0, %v830
      %v832 = vpop.f32.mrb[0].mxu0
      %v833 = vpop.f32.mrb[0].mxu0
      %v834 = vadd.f32 0.0, %v833
      %v835 = vpop.f32.mrb[0].mxu0
      %836 = vmatprep.mubr.bf16.mxu0 %v739
      %837 = vmatmul.mubr.bf16.gmra.mrb[0].mxu0 %v738
      %v838 = vpop.f32.mrb[0].mxu0
      %v839 = vadd.f32 0.0, %v838
      %v840 = vpop.f32.mrb[0].mxu0
      %v841 = vpop.f32.mrb[0].mxu0
      %v842 = vadd.f32 0.0, %v841
      %v843 = vpop.f32.mrb[0].mxu0
      %844 = vmatprep.mubr.bf16.mxu0 %v742
      %845 = vmatmul.mubr.bf16.gmra.mrb[0].mxu0 %v741
      %v846 = vpop.f32.mrb[0].mxu0
      %v847 = vadd.f32 0.0, %v846
      %v848 = vpop.f32.mrb[0].mxu0
      %v849 = vpop.f32.mrb[0].mxu0
      %v850 = vadd.f32 0.0, %v849
      %v851 = vpop.f32.mrb[0].mxu0
      %852 = vmatprep.mubr.bf16.mxu0 %v745
      %853 = vmatmul.mubr.bf16.gmra.mrb[0].mxu0 %v744
      %v854 = vpop.f32.mrb[0].mxu0
      %v855 = vadd.f32 0.0, %v854
      %v856 = vpop.f32.mrb[0].mxu0
      %v857 = vpop.f32.mrb[0].mxu0
      %v858 = vadd.f32 0.0, %v857
      %v859 = vpop.f32.mrb[0].mxu0
      %860 = vmatprep.mubr.bf16.mxu0 %v748
      %861 = vmatmul.mubr.bf16.gmra.mrb[0].mxu0 %v747
      %v862 = vpop.f32.mrb[0].mxu0
      %v863 = vadd.f32 0.0, %v862
      %v864 = vpop.f32.mrb[0].mxu0
      %v865 = vpop.f32.mrb[0].mxu0
      %v866 = vadd.f32 0.0, %v865
      %v867 = vpop.f32.mrb[0].mxu0
      %868 = vmatprep.mubr.bf16.mxu0 %v751
      %869 = vmatmul.mubr.bf16.gmra.mrb[0].mxu0 %v750
      %v870 = vpop.f32.mrb[0].mxu0
      %v871 = vadd.f32 0.0, %v870
      %v872 = vpop.f32.mrb[0].mxu0
      %v873 = vpop.f32.mrb[0].mxu0
      %v874 = vpop.f32.mrb[0].mxu0
      %875 = vdwg.mxu0
      %876 = vmatprep.subr.bf16.mxu0 0
      %877 = vmatpush1.bf16.msra.mxu0 %v422
      %878 = vmatprep.subr.bf16.mxu0 0
      %879 = vmatpush1.bf16.msra.mxu0 %v423
      %880 = vmatprep.subr.bf16.mxu0 0
      %881 = vmatpush1.bf16.msra.mxu0 0
      %882 = vmatprep.subr.bf16.mxu0 0
      %883 = vmatpush1.bf16.msra.mxu0 0
      %884 = vmatprep.subr.bf16.mxu0 0
      %885 = vmatpush1.bf16.msra.mxu0 0
      %886 = vmatprep.subr.bf16.mxu0 0
      %887 = vmatpush1.bf16.msra.mxu0 0
      %888 = vmatprep.subr.bf16.mxu0 0
      %889 = vmatpush1.bf16.msra.mxu0 0
      %890 = vmatprep.subr.bf16.mxu0 0
      %891 = vmatpush1.bf16.msra.mxu0 0
      %892 = vmatprep.subr.bf16.mxu0 0
      %893 = vmatpush1.bf16.msra.mxu0 0
      %894 = vmatprep.subr.bf16.mxu0 0
      %895 = vmatpush1.bf16.msra.mxu0 0
      %896 = vmatprep.subr.bf16.mxu0 0
      %897 = vmatpush1.bf16.msra.mxu0 0
      %898 = vmatprep.subr.bf16.mxu0 0
      %899 = vmatpush1.bf16.msra.mxu0 0
      %900 = vmatprep.subr.bf16.mxu0 0
      %901 = vmatpush1.bf16.msra.mxu0 0
      %902 = vmatprep.subr.bf16.mxu0 0
      %903 = vmatpush1.bf16.msra.mxu0 0
      %904 = vmatprep.subr.bf16.mxu0 0
      %905 = vmatpush1.bf16.msra.mxu0 0
      %906 = vmatprep.subr.bf16.mxu0 0
      %907 = vmatpush1.bf16.msra.mxu0 0
      %908 = vmatprep.mubr.bf16.mxu0 0
      %909 = vmatmul.mubr.bf16.gmra.mrb[0].mxu0 %v768
      %v910 = vpop.f32.mrb[0].mxu0
      %v911 = vadd.f32 %v823, %v910
      %v912 = vpop.f32.mrb[0].mxu0
      %v913 = vpop.f32.mrb[0].mxu0
      %v914 = vadd.f32 %v826, %v913
      %v915 = vpop.f32.mrb[0].mxu0
      %916 = vmatprep.mubr.bf16.mxu0 0
      %917 = vmatmul.mubr.bf16.gmra.mrb[0].mxu0 %v771
      %v918 = vpop.f32.mrb[0].mxu0
      %v919 = vadd.f32 %v831, %v918
      %v920 = vpop.f32.mrb[0].mxu0
      %v921 = vpop.f32.mrb[0].mxu0
      %v922 = vadd.f32 %v834, %v921
      %v923 = vpop.f32.mrb[0].mxu0
      %924 = vmatprep.mubr.bf16.mxu0 0
      %925 = vmatmul.mubr.bf16.gmra.mrb[0].mxu0 %v774
      %v926 = vpop.f32.mrb[0].mxu0
      %v927 = vadd.f32 %v839, %v926
      %v928 = vpop.f32.mrb[0].mxu0
      %v929 = vpop.f32.mrb[0].mxu0
      %v930 = vadd.f32 %v842, %v929
      %v931 = vpop.f32.mrb[0].mxu0
      %932 = vmatprep.mubr.bf16.mxu0 0
      %933 = vmatmul.mubr.bf16.gmra.mrb[0].mxu0 %v777
      %v934 = vpop.f32.mrb[0].mxu0
      %v935 = vadd.f32 %v847, %v934
      %v936 = vpop.f32.mrb[0].mxu0
      %v937 = vpop.f32.mrb[0].mxu0
      %v938 = vadd.f32 %v850, %v937
      %v939 = vpop.f32.mrb[0].mxu0
      %940 = vmatprep.mubr.bf16.mxu0 0
      %941 = vmatmul.mubr.bf16.gmra.mrb[0].mxu0 %v780
      %v942 = vpop.f32.mrb[0].mxu0
      %v943 = vadd.f32 %v855, %v942
      %v944 = vpop.f32.mrb[0].mxu0
      %v945 = vpop.f32.mrb[0].mxu0
      %v946 = vadd.f32 %v858, %v945
      %v947 = vpop.f32.mrb[0].mxu0
      %948 = vmatprep.mubr.bf16.mxu0 0
      %949 = vmatmul.mubr.bf16.gmra.mrb[0].mxu0 %v783
      %v950 = vpop.f32.mrb[0].mxu0
      %v951 = vadd.f32 %v863, %v950
      %v952 = vpop.f32.mrb[0].mxu0
      %v953 = vpop.f32.mrb[0].mxu0
      %v954 = vadd.f32 %v866, %v953
      %v955 = vpop.f32.mrb[0].mxu0
      %956 = vmatprep.mubr.bf16.mxu0 0
      %957 = vmatmul.mubr.bf16.gmra.mrb[0].mxu0 %v786
      %v958 = vpop.f32.mrb[0].mxu0
      %v959 = vadd.f32 %v871, %v958
      %v960 = vpop.f32.mrb[0].mxu0
      %v961 = vpop.f32.mrb[0].mxu0
      %v962 = vpop.f32.mrb[0].mxu0
      %963 = vdwg.mxu0
      %v964 = vmax.f32 %v587, %v911
      %v965 = vmax.f32 %v590, %v914
      %v966 = vmax.f32 %v595, %v919
      %v967 = vmax.f32 %v598, %v922
      %v968 = vmax.f32 %v603, %v927
      %v969 = vmax.f32 %v606, %v930
      %v970 = vmax.f32 %v611, %v935
      %v971 = vmax.f32 %v614, %v938
      %v972 = vmax.f32 %v619, %v943
      %v973 = vmax.f32 %v622, %v946
      %v974 = vmax.f32 %v627, %v951
      %v975 = vmax.f32 %v630, %v954
      %v976 = vmax.f32 %v635, %v959
      %s977 = scalar_lea.vmem %s165, 312
      %v978 = vld [vmem:[%s977] sm:$0xff]
      %v979 = vld [vmem:[%s977 + $0x8] sm:$0xf]
      %v980 = vld [vmem:[%s977 + $0xc] sm:$0xff]
      %v981 = vld [vmem:[%s977 + $0x14] sm:$0xf]
      %v982 = vld [vmem:[%s977 + $0x18] sm:$0xff]
      %v983 = vld [vmem:[%s977 + $0x20] sm:$0xf]
      %v984 = vld [vmem:[%s977 + $0x24] sm:$0xff]
      %v985 = vld [vmem:[%s977 + $0x2c] sm:$0xf]
      %v986 = vld [vmem:[%s977 + $0x30] sm:$0xff]
      %v987 = vld [vmem:[%s977 + $0x38] sm:$0xf]
      %v988 = vld [vmem:[%s977 + $0x3c] sm:$0xff]
      %v989 = vld [vmem:[%s977 + $0x44] sm:$0xf]
      %v990 = vld [vmem:[%s977 + $0x48] sm:$0xff]
      %v991 = vld [vmem:[%s977 + $0x50] sm:$0xf]
      %v992 = vld [vmem:[%s977 + $0x54] sm:$0xff]
      %v993 = vld [vmem:[%s977 + $0x5c] sm:$0xf]
      %v994 = vld [vmem:[%s977 + $0x60] sm:$0xff]
      %v995 = vld [vmem:[%s977 + $0x68] sm:$0xf]
      %v996 = vld [vmem:[%s977 + $0x6c] sm:$0xff]
      %v997 = vld [vmem:[%s977 + $0x74] sm:$0xf]
      %v998 = vld [vmem:[%s977 + $0x78] sm:$0xff]
      %v999 = vld [vmem:[%s977 + $0x80] sm:$0xf]
      %v1000 = vld [vmem:[%s977 + $0x84] sm:$0xff]
      %v1001 = vld [vmem:[%s977 + $0x8c] sm:$0xf]
      %v1002 = vld [vmem:[%s977 + $0x90] sm:$0x33]
      %v1003 = vld [vmem:[%s977 + $0x98] sm:$0x3]
      %v1030 = vunpack.c.l.b16 %v978
      %v1031 = vunpack.c.h.b16 %v978
      %v1032 = vunpack.c.l.b16 %v979
      %v1033 = vunpack.c.l.b16 %v980
      %v1034 = vunpack.c.h.b16 %v980
      %v1035 = vunpack.c.l.b16 %v981
      %v1036 = vunpack.c.l.b16 %v982
      %v1037 = vunpack.c.h.b16 %v982
      %v1038 = vunpack.c.l.b16 %v983
      %v1039 = vunpack.c.l.b16 %v984
      %v1040 = vunpack.c.h.b16 %v984
      %v1041 = vunpack.c.l.b16 %v985
      %v1042 = vunpack.c.l.b16 %v986
      %v1043 = vunpack.c.h.b16 %v986
      %v1044 = vunpack.c.l.b16 %v987
      %v1045 = vunpack.c.l.b16 %v988
      %v1046 = vunpack.c.h.b16 %v988
      %v1047 = vunpack.c.l.b16 %v989
      %v1048 = vunpack.c.l.b16 %v990
      %v1049 = vunpack.c.h.b16 %v990
      %v1050 = vunpack.c.l.b16 %v991
      %v1051 = vunpack.c.l.b16 %v992
      %v1052 = vunpack.c.h.b16 %v992
      %v1053 = vunpack.c.l.b16 %v993
      %v1054 = vunpack.c.l.b16 %v994
      %v1055 = vunpack.c.h.b16 %v994
      %v1056 = vunpack.c.l.b16 %v995
      %v1057 = vunpack.c.l.b16 %v996
      %v1058 = vunpack.c.h.b16 %v996
      %v1059 = vunpack.c.l.b16 %v997
      %v1060 = vunpack.c.l.b16 %v998
      %v1061 = vunpack.c.h.b16 %v998
      %v1062 = vunpack.c.l.b16 %v999
      %v1063 = vunpack.c.l.b16 %v1000
      %v1064 = vunpack.c.h.b16 %v1000
      %v1065 = vunpack.c.l.b16 %v1001
      %v1066 = vunpack.c.l.b16 %v1002
      %v1067 = vunpack.c.h.b16 %v1002
      %v1068 = vunpack.c.l.b16 %v1003
      %v1069 = vpack.c.b16 %v1033, %v1030
      %v1070 = vpack.c.b16 %v1034, %v1031
      %v1071 = vpack.c.b16 %v1035, %v1032
      %v1072 = vpack.c.b16 %v1039, %v1036
      %v1073 = vpack.c.b16 %v1040, %v1037
      %v1074 = vpack.c.b16 %v1041, %v1038
      %v1075 = vpack.c.b16 %v1045, %v1042
      %v1076 = vpack.c.b16 %v1046, %v1043
      %v1077 = vpack.c.b16 %v1047, %v1044
      %v1078 = vpack.c.b16 %v1051, %v1048
      %v1079 = vpack.c.b16 %v1052, %v1049
      %v1080 = vpack.c.b16 %v1053, %v1050
      %v1081 = vpack.c.b16 %v1057, %v1054
      %v1082 = vpack.c.b16 %v1058, %v1055
      %v1083 = vpack.c.b16 %v1059, %v1056
      %v1084 = vpack.c.b16 %v1063, %v1060
      %v1085 = vpack.c.b16 %v1064, %v1061
      %v1086 = vpack.c.b16 %v1065, %v1062
      %v1087 = vpack.c.b16 %v1066, %v1066
      %v1088 = vpack.c.b16 %v1067, %v1067
      %v1089 = vpack.c.b16 %v1068, %v1068
      %v1105 = vsel %vm442, %v1071, 0
      %v1108 = vsel %vm442, %v1074, 0
      %v1111 = vsel %vm442, %v1077, 0
      %v1114 = vsel %vm442, %v1080, 0
      %v1117 = vsel %vm442, %v1083, 0
      %v1120 = vsel %vm442, %v1086, 0
      %v1123 = vsel %vm442, %v1089, 0
      %1125 = vmatprep.subr.bf16.mxu0 0
      %1126 = vmatpush1.bf16.msra.mxu0 %v406
      %1127 = vmatprep.subr.bf16.mxu0 0
      %1128 = vmatpush1.bf16.msra.mxu0 %v407
      %1129 = vmatprep.subr.bf16.mxu0 0
      %1130 = vmatpush1.bf16.msra.mxu0 %v408
      %1131 = vmatprep.subr.bf16.mxu0 0
      %1132 = vmatpush1.bf16.msra.mxu0 %v409
      %1133 = vmatprep.subr.bf16.mxu0 0
      %1134 = vmatpush1.bf16.msra.mxu0 %v410
      %1135 = vmatprep.subr.bf16.mxu0 0
      %1136 = vmatpush1.bf16.msra.mxu0 %v411
      %1137 = vmatprep.subr.bf16.mxu0 0
      %1138 = vmatpush1.bf16.msra.mxu0 %v412
      %1139 = vmatprep.subr.bf16.mxu0 0
      %1140 = vmatpush1.bf16.msra.mxu0 %v413
      %1141 = vmatprep.subr.bf16.mxu0 0
      %1142 = vmatpush1.bf16.msra.mxu0 %v414
      %1143 = vmatprep.subr.bf16.mxu0 0
      %1144 = vmatpush1.bf16.msra.mxu0 %v415
      %1145 = vmatprep.subr.bf16.mxu0 0
      %1146 = vmatpush1.bf16.msra.mxu0 %v416
      %1147 = vmatprep.subr.bf16.mxu0 0
      %1148 = vmatpush1.bf16.msra.mxu0 %v417
      %1149 = vmatprep.subr.bf16.mxu0 0
      %1150 = vmatpush1.bf16.msra.mxu0 %v418
      %1151 = vmatprep.subr.bf16.mxu0 0
      %1152 = vmatpush1.bf16.msra.mxu0 %v419
      %1153 = vmatprep.subr.bf16.mxu0 0
      %1154 = vmatpush1.bf16.msra.mxu0 %v420
      %1155 = vmatprep.subr.bf16.mxu0 0
      %1156 = vmatpush1.bf16.msra.mxu0 %v421
      %1157 = vmatprep.mubr.bf16.mxu0 %v1070
      %1158 = vmatmul.mubr.bf16.gmra.mrb[0].mxu0 %v1069
      %v1159 = vpop.f32.mrb[0].mxu0
      %v1160 = vadd.f32 0.0, %v1159
      %v1161 = vpop.f32.mrb[0].mxu0
      %v1162 = vpop.f32.mrb[0].mxu0
      %v1163 = vadd.f32 0.0, %v1162
      %v1164 = vpop.f32.mrb[0].mxu0
      %1165 = vmatprep.mubr.bf16.mxu0 %v1073
      %1166 = vmatmul.mubr.bf16.gmra.mrb[0].mxu0 %v1072
      %v1167 = vpop.f32.mrb[0].mxu0
      %v1168 = vadd.f32 0.0, %v1167
      %v1169 = vpop.f32.mrb[0].mxu0
      %v1170 = vpop.f32.mrb[0].mxu0
      %v1171 = vadd.f32 0.0, %v1170
      %v1172 = vpop.f32.mrb[0].mxu0
      %1173 = vmatprep.mubr.bf16.mxu0 %v1076
      %1174 = vmatmul.mubr.bf16.gmra.mrb[0].mxu0 %v1075
      %v1175 = vpop.f32.mrb[0].mxu0
      %v1176 = vadd.f32 0.0, %v1175
      %v1177 = vpop.f32.mrb[0].mxu0
      %v1178 = vpop.f32.mrb[0].mxu0
      %v1179 = vadd.f32 0.0, %v1178
      %v1180 = vpop.f32.mrb[0].mxu0
      %1181 = vmatprep.mubr.bf16.mxu0 %v1079
      %1182 = vmatmul.mubr.bf16.gmra.mrb[0].mxu0 %v1078
      %v1183 = vpop.f32.mrb[0].mxu0
      %v1184 = vadd.f32 0.0, %v1183
      %v1185 = vpop.f32.mrb[0].mxu0
      %v1186 = vpop.f32.mrb[0].mxu0
      %v1187 = vadd.f32 0.0, %v1186
      %v1188 = vpop.f32.mrb[0].mxu0
      %1189 = vmatprep.mubr.bf16.mxu0 %v1082
      %1190 = vmatmul.mubr.bf16.gmra.mrb[0].mxu0 %v1081
      %v1191 = vpop.f32.mrb[0].mxu0
      %v1192 = vadd.f32 0.0, %v1191
      %v1193 = vpop.f32.mrb[0].mxu0
      %v1194 = vpop.f32.mrb[0].mxu0
      %v1195 = vadd.f32 0.0, %v1194
      %v1196 = vpop.f32.mrb[0].mxu0
      %1197 = vmatprep.mubr.bf16.mxu0 %v1085
      %1198 = vmatmul.mubr.bf16.gmra.mrb[0].mxu0 %v1084
      %v1199 = vpop.f32.mrb[0].mxu0
      %v1200 = vadd.f32 0.0, %v1199
      %v1201 = vpop.f32.mrb[0].mxu0
      %v1202 = vpop.f32.mrb[0].mxu0
      %v1203 = vadd.f32 0.0, %v1202
      %v1204 = vpop.f32.mrb[0].mxu0
      %1205 = vmatprep.mubr.bf16.mxu0 %v1088
      %1206 = vmatmul.mubr.bf16.gmra.mrb[0].mxu0 %v1087
      %v1207 = vpop.f32.mrb[0].mxu0
      %v1208 = vadd.f32 0.0, %v1207
      %v1209 = vpop.f32.mrb[0].mxu0
      %v1210 = vpop.f32.mrb[0].mxu0
      %v1211 = vpop.f32.mrb[0].mxu0
      %1212 = vdwg.mxu0
      %1213 = vmatprep.subr.bf16.mxu0 0
      %1214 = vmatpush1.bf16.msra.mxu0 %v422
      %1215 = vmatprep.subr.bf16.mxu0 0
      %1216 = vmatpush1.bf16.msra.mxu0 %v423
      %1217 = vmatprep.subr.bf16.mxu0 0
      %1218 = vmatpush1.bf16.msra.mxu0 0
      %1219 = vmatprep.subr.bf16.mxu0 0
      %1220 = vmatpush1.bf16.msra.mxu0 0
      %1221 = vmatprep.subr.bf16.mxu0 0
      %1222 = vmatpush1.bf16.msra.mxu0 0
      %1223 = vmatprep.subr.bf16.mxu0 0
      %1224 = vmatpush1.bf16.msra.mxu0 0
      %1225 = vmatprep.subr.bf16.mxu0 0
      %1226 = vmatpush1.bf16.msra.mxu0 0
      %1227 = vmatprep.subr.bf16.mxu0 0
      %1228 = vmatpush1.bf16.msra.mxu0 0
      %1229 = vmatprep.subr.bf16.mxu0 0
      %1230 = vmatpush1.bf16.msra.mxu0 0
      %1231 = vmatprep.subr.bf16.mxu0 0
      %1232 = vmatpush1.bf16.msra.mxu0 0
      %1233 = vmatprep.subr.bf16.mxu0 0
      %1234 = vmatpush1.bf16.msra.mxu0 0
      %1235 = vmatprep.subr.bf16.mxu0 0
      %1236 = vmatpush1.bf16.msra.mxu0 0
      %1237 = vmatprep.subr.bf16.mxu0 0
      %1238 = vmatpush1.bf16.msra.mxu0 0
      %1239 = vmatprep.subr.bf16.mxu0 0
      %1240 = vmatpush1.bf16.msra.mxu0 0
      %1241 = vmatprep.subr.bf16.mxu0 0
      %1242 = vmatpush1.bf16.msra.mxu0 0
      %1243 = vmatprep.subr.bf16.mxu0 0
      %1244 = vmatpush1.bf16.msra.mxu0 0
      %1245 = vmatprep.mubr.bf16.mxu0 0
      %1246 = vmatmul.mubr.bf16.gmra.mrb[0].mxu0 %v1105
      %v1247 = vpop.f32.mrb[0].mxu0
      %v1248 = vadd.f32 %v1160, %v1247
      %v1249 = vpop.f32.mrb[0].mxu0
      %v1250 = vpop.f32.mrb[0].mxu0
      %v1251 = vadd.f32 %v1163, %v1250
      %v1252 = vpop.f32.mrb[0].mxu0
      %1253 = vmatprep.mubr.bf16.mxu0 0
      %1254 = vmatmul.mubr.bf16.gmra.mrb[0].mxu0 %v1108
      %v1255 = vpop.f32.mrb[0].mxu0
      %v1256 = vadd.f32 %v1168, %v1255
      %v1257 = vpop.f32.mrb[0].mxu0
      %v1258 = vpop.f32.mrb[0].mxu0
      %v1259 = vadd.f32 %v1171, %v1258
      %v1260 = vpop.f32.mrb[0].mxu0
      %1261 = vmatprep.mubr.bf16.mxu0 0
      %1262 = vmatmul.mubr.bf16.gmra.mrb[0].mxu0 %v1111
      %v1263 = vpop.f32.mrb[0].mxu0
      %v1264 = vadd.f32 %v1176, %v1263
      %v1265 = vpop.f32.mrb[0].mxu0
      %v1266 = vpop.f32.mrb[0].mxu0
      %v1267 = vadd.f32 %v1179, %v1266
      %v1268 = vpop.f32.mrb[0].mxu0
      %1269 = vmatprep.mubr.bf16.mxu0 0
      %1270 = vmatmul.mubr.bf16.gmra.mrb[0].mxu0 %v1114
      %v1271 = vpop.f32.mrb[0].mxu0
      %v1272 = vadd.f32 %v1184, %v1271
      %v1273 = vpop.f32.mrb[0].mxu0
      %v1274 = vpop.f32.mrb[0].mxu0
      %v1275 = vadd.f32 %v1187, %v1274
      %v1276 = vpop.f32.mrb[0].mxu0
      %1277 = vmatprep.mubr.bf16.mxu0 0
      %1278 = vmatmul.mubr.bf16.gmra.mrb[0].mxu0 %v1117
      %v1279 = vpop.f32.mrb[0].mxu0
      %v1280 = vadd.f32 %v1192, %v1279
      %v1281 = vpop.f32.mrb[0].mxu0
      %v1282 = vpop.f32.mrb[0].mxu0
      %v1283 = vadd.f32 %v1195, %v1282
      %v1284 = vpop.f32.mrb[0].mxu0
      %1285 = vmatprep.mubr.bf16.mxu0 0
      %1286 = vmatmul.mubr.bf16.gmra.mrb[0].mxu0 %v1120
      %v1287 = vpop.f32.mrb[0].mxu0
      %v1288 = vadd.f32 %v1200, %v1287
      %v1289 = vpop.f32.mrb[0].mxu0
      %v1290 = vpop.f32.mrb[0].mxu0
      %v1291 = vadd.f32 %v1203, %v1290
      %v1292 = vpop.f32.mrb[0].mxu0
      %1293 = vmatprep.mubr.bf16.mxu0 0
      %1294 = vmatmul.mubr.bf16.gmra.mrb[0].mxu0 %v1123
      %v1295 = vpop.f32.mrb[0].mxu0
      %v1296 = vadd.f32 %v1208, %v1295
      %v1297 = vpop.f32.mrb[0].mxu0
      %v1298 = vpop.f32.mrb[0].mxu0
      %v1299 = vpop.f32.mrb[0].mxu0
      %1300 = vdwg.mxu0
      %v1301 = vmax.f32 %v964, %v1248
      %v1302 = vmax.f32 %v965, %v1251
      %v1303 = vmax.f32 %v966, %v1256
      %v1304 = vmax.f32 %v967, %v1259
      %v1305 = vmax.f32 %v968, %v1264
      %v1306 = vmax.f32 %v969, %v1267
      %v1307 = vmax.f32 %v970, %v1272
      %v1308 = vmax.f32 %v971, %v1275
      %v1309 = vmax.f32 %v972, %v1280
      %v1310 = vmax.f32 %v973, %v1283
      %v1311 = vmax.f32 %v974, %v1288
      %v1312 = vmax.f32 %v975, %v1291
      %v1313 = vmax.f32 %v976, %v1296
      %s1314 = scalar_lea.vmem %s165, 468
      %v1315 = vld [vmem:[%s1314] sm:$0xff]
      %v1316 = vld [vmem:[%s1314 + $0x8] sm:$0xf]
      %v1317 = vld [vmem:[%s1314 + $0xc] sm:$0xff]
      %v1318 = vld [vmem:[%s1314 + $0x14] sm:$0xf]
      %v1319 = vld [vmem:[%s1314 + $0x18] sm:$0xff]
      %v1320 = vld [vmem:[%s1314 + $0x20] sm:$0xf]
      %v1321 = vld [vmem:[%s1314 + $0x24] sm:$0xff]
      %v1322 = vld [vmem:[%s1314 + $0x2c] sm:$0xf]
      %v1323 = vld [vmem:[%s1314 + $0x30] sm:$0xff]
      %v1324 = vld [vmem:[%s1314 + $0x38] sm:$0xf]
      %v1325 = vld [vmem:[%s1314 + $0x3c] sm:$0xff]
      %v1326 = vld [vmem:[%s1314 + $0x44] sm:$0xf]
      %v1327 = vld [vmem:[%s1314 + $0x48] sm:$0xff]
      %v1328 = vld [vmem:[%s1314 + $0x50] sm:$0xf]
      %v1329 = vld [vmem:[%s1314 + $0x54] sm:$0xff]
      %v1330 = vld [vmem:[%s1314 + $0x5c] sm:$0xf]
      %v1331 = vld [vmem:[%s1314 + $0x60] sm:$0xff]
      %v1332 = vld [vmem:[%s1314 + $0x68] sm:$0xf]
      %v1333 = vld [vmem:[%s1314 + $0x6c] sm:$0xff]
      %v1334 = vld [vmem:[%s1314 + $0x74] sm:$0xf]
      %v1335 = vld [vmem:[%s1314 + $0x78] sm:$0xff]
      %v1336 = vld [vmem:[%s1314 + $0x80] sm:$0xf]
      %v1337 = vld [vmem:[%s1314 + $0x84] sm:$0xff]
      %v1338 = vld [vmem:[%s1314 + $0x8c] sm:$0xf]
      %v1339 = vld [vmem:[%s1314 + $0x90] sm:$0x33]
      %v1340 = vld [vmem:[%s1314 + $0x98] sm:$0x3]
      %v1367 = vunpack.c.l.b16 %v1315
      %v1368 = vunpack.c.h.b16 %v1315
      %v1369 = vunpack.c.l.b16 %v1316
      %v1370 = vunpack.c.l.b16 %v1317
      %v1371 = vunpack.c.h.b16 %v1317
      %v1372 = vunpack.c.l.b16 %v1318
      %v1373 = vunpack.c.l.b16 %v1319
      %v1374 = vunpack.c.h.b16 %v1319
      %v1375 = vunpack.c.l.b16 %v1320
      %v1376 = vunpack.c.l.b16 %v1321
      %v1377 = vunpack.c.h.b16 %v1321
      %v1378 = vunpack.c.l.b16 %v1322
      %v1379 = vunpack.c.l.b16 %v1323
      %v1380 = vunpack.c.h.b16 %v1323
      %v1381 = vunpack.c.l.b16 %v1324
      %v1382 = vunpack.c.l.b16 %v1325
      %v1383 = vunpack.c.h.b16 %v1325
      %v1384 = vunpack.c.l.b16 %v1326
      %v1385 = vunpack.c.l.b16 %v1327
      %v1386 = vunpack.c.h.b16 %v1327
      %v1387 = vunpack.c.l.b16 %v1328
      %v1388 = vunpack.c.l.b16 %v1329
      %v1389 = vunpack.c.h.b16 %v1329
      %v1390 = vunpack.c.l.b16 %v1330
      %v1391 = vunpack.c.l.b16 %v1331
      %v1392 = vunpack.c.h.b16 %v1331
      %v1393 = vunpack.c.l.b16 %v1332
      %v1394 = vunpack.c.l.b16 %v1333
      %v1395 = vunpack.c.h.b16 %v1333
      %v1396 = vunpack.c.l.b16 %v1334
      %v1397 = vunpack.c.l.b16 %v1335
      %v1398 = vunpack.c.h.b16 %v1335
      %v1399 = vunpack.c.l.b16 %v1336
      %v1400 = vunpack.c.l.b16 %v1337
      %v1401 = vunpack.c.h.b16 %v1337
      %v1402 = vunpack.c.l.b16 %v1338
      %v1403 = vunpack.c.l.b16 %v1339
      %v1404 = vunpack.c.h.b16 %v1339
      %v1405 = vunpack.c.l.b16 %v1340
      %v1406 = vpack.c.b16 %v1370, %v1367
      %v1407 = vpack.c.b16 %v1371, %v1368
      %v1408 = vpack.c.b16 %v1372, %v1369
      %v1409 = vpack.c.b16 %v1376, %v1373
      %v1410 = vpack.c.b16 %v1377, %v1374
      %v1411 = vpack.c.b16 %v1378, %v1375
      %v1412 = vpack.c.b16 %v1382, %v1379
      %v1413 = vpack.c.b16 %v1383, %v1380
      %v1414 = vpack.c.b16 %v1384, %v1381
      %v1415 = vpack.c.b16 %v1388, %v1385
      %v1416 = vpack.c.b16 %v1389, %v1386
      %v1417 = vpack.c.b16 %v1390, %v1387
      %v1418 = vpack.c.b16 %v1394, %v1391
      %v1419 = vpack.c.b16 %v1395, %v1392
      %v1420 = vpack.c.b16 %v1396, %v1393
      %v1421 = vpack.c.b16 %v1400, %v1397
      %v1422 = vpack.c.b16 %v1401, %v1398
      %v1423 = vpack.c.b16 %v1402, %v1399
      %v1424 = vpack.c.b16 %v1403, %v1403
      %v1425 = vpack.c.b16 %v1404, %v1404
      %v1426 = vpack.c.b16 %v1405, %v1405
      %v1442 = vsel %vm442, %v1408, 0
      %v1445 = vsel %vm442, %v1411, 0
      %v1448 = vsel %vm442, %v1414, 0
      %v1451 = vsel %vm442, %v1417, 0
      %v1454 = vsel %vm442, %v1420, 0
      %v1457 = vsel %vm442, %v1423, 0
      %v1460 = vsel %vm442, %v1426, 0
      %1462 = vmatprep.subr.bf16.mxu0 0
      %1463 = vmatpush1.bf16.msra.mxu0 %v406
      %1464 = vmatprep.subr.bf16.mxu0 0
      %1465 = vmatpush1.bf16.msra.mxu0 %v407
      %1466 = vmatprep.subr.bf16.mxu0 0
      %1467 = vmatpush1.bf16.msra.mxu0 %v408
      %1468 = vmatprep.subr.bf16.mxu0 0
      %1469 = vmatpush1.bf16.msra.mxu0 %v409
      %1470 = vmatprep.subr.bf16.mxu0 0
      %1471 = vmatpush1.bf16.msra.mxu0 %v410
      %1472 = vmatprep.subr.bf16.mxu0 0
      %1473 = vmatpush1.bf16.msra.mxu0 %v411
      %1474 = vmatprep.subr.bf16.mxu0 0
      %1475 = vmatpush1.bf16.msra.mxu0 %v412
      %1476 = vmatprep.subr.bf16.mxu0 0
      %1477 = vmatpush1.bf16.msra.mxu0 %v413
      %1478 = vmatprep.subr.bf16.mxu0 0
      %1479 = vmatpush1.bf16.msra.mxu0 %v414
      %1480 = vmatprep.subr.bf16.mxu0 0
      %1481 = vmatpush1.bf16.msra.mxu0 %v415
      %1482 = vmatprep.subr.bf16.mxu0 0
      %1483 = vmatpush1.bf16.msra.mxu0 %v416
      %1484 = vmatprep.subr.bf16.mxu0 0
      %1485 = vmatpush1.bf16.msra.mxu0 %v417
      %1486 = vmatprep.subr.bf16.mxu0 0
      %1487 = vmatpush1.bf16.msra.mxu0 %v418
      %1488 = vmatprep.subr.bf16.mxu0 0
      %1489 = vmatpush1.bf16.msra.mxu0 %v419
      %1490 = vmatprep.subr.bf16.mxu0 0
      %1491 = vmatpush1.bf16.msra.mxu0 %v420
      %1492 = vmatprep.subr.bf16.mxu0 0
      %1493 = vmatpush1.bf16.msra.mxu0 %v421
      %1494 = vmatprep.mubr.bf16.mxu0 %v1407
      %1495 = vmatmul.mubr.bf16.gmra.mrb[0].mxu0 %v1406
      %v1496 = vpop.f32.mrb[0].mxu0
      %v1497 = vadd.f32 0.0, %v1496
      %v1498 = vpop.f32.mrb[0].mxu0
      %v1499 = vpop.f32.mrb[0].mxu0
      %v1500 = vadd.f32 0.0, %v1499
      %v1501 = vpop.f32.mrb[0].mxu0
      %1502 = vmatprep.mubr.bf16.mxu0 %v1410
      %1503 = vmatmul.mubr.bf16.gmra.mrb[0].mxu0 %v1409
      %v1504 = vpop.f32.mrb[0].mxu0
      %v1505 = vadd.f32 0.0, %v1504
      %v1506 = vpop.f32.mrb[0].mxu0
      %v1507 = vpop.f32.mrb[0].mxu0
      %v1508 = vadd.f32 0.0, %v1507
      %v1509 = vpop.f32.mrb[0].mxu0
      %1510 = vmatprep.mubr.bf16.mxu0 %v1413
      %1511 = vmatmul.mubr.bf16.gmra.mrb[0].mxu0 %v1412
      %v1512 = vpop.f32.mrb[0].mxu0
      %v1513 = vadd.f32 0.0, %v1512
      %v1514 = vpop.f32.mrb[0].mxu0
      %v1515 = vpop.f32.mrb[0].mxu0
      %v1516 = vadd.f32 0.0, %v1515
      %v1517 = vpop.f32.mrb[0].mxu0
      %1518 = vmatprep.mubr.bf16.mxu0 %v1416
      %1519 = vmatmul.mubr.bf16.gmra.mrb[0].mxu0 %v1415
      %v1520 = vpop.f32.mrb[0].mxu0
      %v1521 = vadd.f32 0.0, %v1520
      %v1522 = vpop.f32.mrb[0].mxu0
      %v1523 = vpop.f32.mrb[0].mxu0
      %v1524 = vadd.f32 0.0, %v1523
      %v1525 = vpop.f32.mrb[0].mxu0
      %1526 = vmatprep.mubr.bf16.mxu0 %v1419
      %1527 = vmatmul.mubr.bf16.gmra.mrb[0].mxu0 %v1418
      %v1528 = vpop.f32.mrb[0].mxu0
      %v1529 = vadd.f32 0.0, %v1528
      %v1530 = vpop.f32.mrb[0].mxu0
      %v1531 = vpop.f32.mrb[0].mxu0
      %v1532 = vadd.f32 0.0, %v1531
      %v1533 = vpop.f32.mrb[0].mxu0
      %1534 = vmatprep.mubr.bf16.mxu0 %v1422
      %1535 = vmatmul.mubr.bf16.gmra.mrb[0].mxu0 %v1421
      %v1536 = vpop.f32.mrb[0].mxu0
      %v1537 = vadd.f32 0.0, %v1536
      %v1538 = vpop.f32.mrb[0].mxu0
      %v1539 = vpop.f32.mrb[0].mxu0
      %v1540 = vadd.f32 0.0, %v1539
      %v1541 = vpop.f32.mrb[0].mxu0
      %1542 = vmatprep.mubr.bf16.mxu0 %v1425
      %1543 = vmatmul.mubr.bf16.gmra.mrb[0].mxu0 %v1424
      %v1544 = vpop.f32.mrb[0].mxu0
      %v1545 = vadd.f32 0.0, %v1544
      %v1546 = vpop.f32.mrb[0].mxu0
      %v1547 = vpop.f32.mrb[0].mxu0
      %v1548 = vpop.f32.mrb[0].mxu0
      %1549 = vdwg.mxu0
      %1550 = vmatprep.subr.bf16.mxu0 0
      %1551 = vmatpush1.bf16.msra.mxu0 %v422
      %1552 = vmatprep.subr.bf16.mxu0 0
      %1553 = vmatpush1.bf16.msra.mxu0 %v423
      %1554 = vmatprep.subr.bf16.mxu0 0
      %1555 = vmatpush1.bf16.msra.mxu0 0
      %1556 = vmatprep.subr.bf16.mxu0 0
      %1557 = vmatpush1.bf16.msra.mxu0 0
      %1558 = vmatprep.subr.bf16.mxu0 0
      %1559 = vmatpush1.bf16.msra.mxu0 0
      %1560 = vmatprep.subr.bf16.mxu0 0
      %1561 = vmatpush1.bf16.msra.mxu0 0
      %1562 = vmatprep.subr.bf16.mxu0 0
      %1563 = vmatpush1.bf16.msra.mxu0 0
      %1564 = vmatprep.subr.bf16.mxu0 0
      %1565 = vmatpush1.bf16.msra.mxu0 0
      %1566 = vmatprep.subr.bf16.mxu0 0
      %1567 = vmatpush1.bf16.msra.mxu0 0
      %1568 = vmatprep.subr.bf16.mxu0 0
      %1569 = vmatpush1.bf16.msra.mxu0 0
      %1570 = vmatprep.subr.bf16.mxu0 0
      %1571 = vmatpush1.bf16.msra.mxu0 0
      %1572 = vmatprep.subr.bf16.mxu0 0
      %1573 = vmatpush1.bf16.msra.mxu0 0
      %1574 = vmatprep.subr.bf16.mxu0 0
      %1575 = vmatpush1.bf16.msra.mxu0 0
      %1576 = vmatprep.subr.bf16.mxu0 0
      %1577 = vmatpush1.bf16.msra.mxu0 0
      %1578 = vmatprep.subr.bf16.mxu0 0
      %1579 = vmatpush1.bf16.msra.mxu0 0
      %1580 = vmatprep.subr.bf16.mxu0 0
      %1581 = vmatpush1.bf16.msra.mxu0 0
      %1582 = vmatprep.mubr.bf16.mxu0 0
      %1583 = vmatmul.mubr.bf16.gmra.mrb[0].mxu0 %v1442
      %v1584 = vpop.f32.mrb[0].mxu0
      %v1585 = vadd.f32 %v1497, %v1584
      %v1586 = vpop.f32.mrb[0].mxu0
      %v1587 = vpop.f32.mrb[0].mxu0
      %v1588 = vadd.f32 %v1500, %v1587
      %v1589 = vpop.f32.mrb[0].mxu0
      %1590 = vmatprep.mubr.bf16.mxu0 0
      %1591 = vmatmul.mubr.bf16.gmra.mrb[0].mxu0 %v1445
      %v1592 = vpop.f32.mrb[0].mxu0
      %v1593 = vadd.f32 %v1505, %v1592
      %v1594 = vpop.f32.mrb[0].mxu0
      %v1595 = vpop.f32.mrb[0].mxu0
      %v1596 = vadd.f32 %v1508, %v1595
      %v1597 = vpop.f32.mrb[0].mxu0
      %1598 = vmatprep.mubr.bf16.mxu0 0
      %1599 = vmatmul.mubr.bf16.gmra.mrb[0].mxu0 %v1448
      %v1600 = vpop.f32.mrb[0].mxu0
      %v1601 = vadd.f32 %v1513, %v1600
      %v1602 = vpop.f32.mrb[0].mxu0
      %v1603 = vpop.f32.mrb[0].mxu0
      %v1604 = vadd.f32 %v1516, %v1603
      %v1605 = vpop.f32.mrb[0].mxu0
      %1606 = vmatprep.mubr.bf16.mxu0 0
      %1607 = vmatmul.mubr.bf16.gmra.mrb[0].mxu0 %v1451
      %v1608 = vpop.f32.mrb[0].mxu0
      %v1609 = vadd.f32 %v1521, %v1608
      %v1610 = vpop.f32.mrb[0].mxu0
      %v1611 = vpop.f32.mrb[0].mxu0
      %v1612 = vadd.f32 %v1524, %v1611
      %v1613 = vpop.f32.mrb[0].mxu0
      %1614 = vmatprep.mubr.bf16.mxu0 0
      %1615 = vmatmul.mubr.bf16.gmra.mrb[0].mxu0 %v1454
      %v1616 = vpop.f32.mrb[0].mxu0
      %v1617 = vadd.f32 %v1529, %v1616
      %v1618 = vpop.f32.mrb[0].mxu0
      %v1619 = vpop.f32.mrb[0].mxu0
      %v1620 = vadd.f32 %v1532, %v1619
      %v1621 = vpop.f32.mrb[0].mxu0
      %1622 = vmatprep.mubr.bf16.mxu0 0
      %1623 = vmatmul.mubr.bf16.gmra.mrb[0].mxu0 %v1457
      %v1624 = vpop.f32.mrb[0].mxu0
      %v1625 = vadd.f32 %v1537, %v1624
      %v1626 = vpop.f32.mrb[0].mxu0
      %v1627 = vpop.f32.mrb[0].mxu0
      %v1628 = vadd.f32 %v1540, %v1627
      %v1629 = vpop.f32.mrb[0].mxu0
      %1630 = vmatprep.mubr.bf16.mxu0 0
      %1631 = vmatmul.mubr.bf16.gmra.mrb[0].mxu0 %v1460
      %v1632 = vpop.f32.mrb[0].mxu0
      %v1633 = vadd.f32 %v1545, %v1632
      %v1634 = vpop.f32.mrb[0].mxu0
      %v1635 = vpop.f32.mrb[0].mxu0
      %v1636 = vpop.f32.mrb[0].mxu0
      %1637 = vdwg.mxu0
      %v1638 = vmax.f32 %v1301, %v1585
      %v1639 = vmax.f32 %v1302, %v1588
      %v1640 = vmax.f32 %v1303, %v1593
      %v1641 = vmax.f32 %v1304, %v1596
      %v1642 = vmax.f32 %v1305, %v1601
      %v1643 = vmax.f32 %v1306, %v1604
      %v1644 = vmax.f32 %v1307, %v1609
      %v1645 = vmax.f32 %v1308, %v1612
      %v1646 = vmax.f32 %v1309, %v1617
      %v1647 = vmax.f32 %v1310, %v1620
      %v1648 = vmax.f32 %v1311, %v1625
      %v1649 = vmax.f32 %v1312, %v1628
      %v1650 = vmax.f32 %v1313, %v1633
      %v1651 = vld [vmem:[%s2] sm:$0x1]
      %v1653 = vlaneseq
      %v1654 = vshrl.u32 %v1653, 7
      %v1655 = vsub.s32 0, %v1654
      %v1656 = vrot.slane %v1651, %v1655
      %v1658 = vadd.f32 %v1638, %v1656
      %v1659 = vadd.f32 %v1639, %v1656
      %v1660 = vadd.f32 %v1640, %v1656
      %v1661 = vadd.f32 %v1641, %v1656
      %v1662 = vadd.f32 %v1642, %v1656
      %v1663 = vadd.f32 %v1643, %v1656
      %v1664 = vadd.f32 %v1644, %v1656
      %v1665 = vadd.f32 %v1645, %v1656
      %v1666 = vadd.f32 %v1646, %v1656
      %v1667 = vadd.f32 %v1647, %v1656
      %v1668 = vadd.f32 %v1648, %v1656
      %v1669 = vadd.f32 %v1649, %v1656
      %v1670 = vadd.f32 %v1650, %v1656
      %v1671 = vmax.f32 %v1658, 0.0
      %v1672 = vmax.f32 %v1659, 0.0
      %v1673 = vmax.f32 %v1660, 0.0
      %v1674 = vmax.f32 %v1661, 0.0
      %v1675 = vmax.f32 %v1662, 0.0
      %v1676 = vmax.f32 %v1663, 0.0
      %v1677 = vmax.f32 %v1664, 0.0
      %v1678 = vmax.f32 %v1665, 0.0
      %v1679 = vmax.f32 %v1666, 0.0
      %v1680 = vmax.f32 %v1667, 0.0
      %v1681 = vmax.f32 %v1668, 0.0
      %v1682 = vmax.f32 %v1669, 0.0
      %v1683 = vmax.f32 %v1670, 0.0
      %v1684 = vpack.c.bf16 %v1672, %v1671
      %v1685 = vpack.c.bf16 %v1674, %v1673
      %v1686 = vpack.c.bf16 %v1676, %v1675
      %v1687 = vpack.c.bf16 %v1678, %v1677
      %v1688 = vpack.c.bf16 %v1680, %v1679
      %v1689 = vpack.c.bf16 %v1682, %v1681
      %v1690 = vpack.c.bf16 %v1683, %v1683
      %v1698 = vunpack.c.l.b16 %v1684
      %v1699 = vunpack.c.h.b16 %v1684
      %v1700 = vunpack.c.l.b16 %v1685
      %v1701 = vunpack.c.h.b16 %v1685
      %v1702 = vunpack.c.l.b16 %v1686
      %v1703 = vunpack.c.h.b16 %v1686
      %v1704 = vunpack.c.l.b16 %v1687
      %v1705 = vunpack.c.h.b16 %v1687
      %v1706 = vunpack.c.l.b16 %v1688
      %v1707 = vunpack.c.h.b16 %v1688
      %v1708 = vunpack.c.l.b16 %v1689
      %v1709 = vunpack.c.h.b16 %v1689
      %v1710 = vunpack.c.l.b16 %v1690
      %v1711 = vpack.c.b16 %v1698, %v1698
      %v1712 = vpack.c.b16 %v1699, %v1699
      %v1713 = vpack.c.b16 %v1700, %v1700
      %v1714 = vpack.c.b16 %v1701, %v1701
      %v1715 = vpack.c.b16 %v1702, %v1702
      %v1716 = vpack.c.b16 %v1703, %v1703
      %v1717 = vpack.c.b16 %v1704, %v1704
      %v1718 = vpack.c.b16 %v1705, %v1705
      %v1719 = vpack.c.b16 %v1706, %v1706
      %v1720 = vpack.c.b16 %v1707, %v1707
      %v1721 = vpack.c.b16 %v1708, %v1708
      %v1722 = vpack.c.b16 %v1709, %v1709
      %v1723 = vpack.c.b16 %v1710, %v1710
      %vm1737 = vcmask 519168
      %1738 = vst.msk [vmem:[%s170] sm:$0xf] %vm1737, %v1711
      %1739 = vst.msk [vmem:[%s170 + $0x4] sm:$0xf] %vm1737, %v1712
      %1740 = vst.msk [vmem:[%s170 + $0x8] sm:$0xf] %vm1737, %v1713
      %1741 = vst.msk [vmem:[%s170 + $0xc] sm:$0xf] %vm1737, %v1714
      %1742 = vst.msk [vmem:[%s170 + $0x10] sm:$0xf] %vm1737, %v1715
      %1743 = vst.msk [vmem:[%s170 + $0x14] sm:$0xf] %vm1737, %v1716
      %1744 = vst.msk [vmem:[%s170 + $0x18] sm:$0xf] %vm1737, %v1717
      %1745 = vst.msk [vmem:[%s170 + $0x1c] sm:$0xf] %vm1737, %v1718
      %1746 = vst.msk [vmem:[%s170 + $0x20] sm:$0xf] %vm1737, %v1719
      %1747 = vst.msk [vmem:[%s170 + $0x24] sm:$0xf] %vm1737, %v1720
      %1748 = vst.msk [vmem:[%s170 + $0x28] sm:$0xf] %vm1737, %v1721
      %1749 = vst.msk [vmem:[%s170 + $0x2c] sm:$0xf] %vm1737, %v1722
      %vm1750 = vcmask 517120
      %1751 = vst.msk [vmem:[%s170 + $0x30] sm:$0x3] %vm1750, %v1723
      %p1752 = scmp.lt.s32.totalorder %s14, 1
      %s1753 = scalar_select %p1752, %s14, 1
      %s1754 = smul.addr %s1753, 13
      %s1755 = smul.addr %s1754, 4
      %s1756 = scalar_lea.vmem %s3, %s1755
      // Predicated region
      $region33: #{medical_mnist_cnn_forward.5} parent=31 // pred_check
        %p1757 = pneg %p100
      $region34: #{medical_mnist_cnn_forward.5} parent=31 // pred_check_branch
        %1759 = sbr.rel (%p1757) target = $region36
      $region35: #{medical_mnist_cnn_forward.5} parent=31 // pred_region
        _
      $region36: #{medical_mnist_cnn_forward.5} parent=31 // pred_fallthru
        _
    $region32: #{medical_mnist_cnn_forward.5} parent=5 // pred_fallthru
      _
    %p1760 = scmp.le.s32.totalorder 2, %s9
    // Predicated region
    $region37: #{medical_mnist_cnn_forward.5} parent=5 // pred_check
      %p1761 = pneg %p1760
    $region38: #{medical_mnist_cnn_forward.5} parent=5 // pred_check_branch
      %1763 = sbr.rel (%p1761) target = $region40
    $region39: #{medical_mnist_cnn_forward.5} parent=5 // pred_region
      %s1764 = ssub.s32 %s9, 2
      // Predicated region
      $region41: #{medical_mnist_cnn_forward.5} parent=39 // pred_check
        %p1765 = pneg %p106
      $region42: #{medical_mnist_cnn_forward.5} parent=39 // pred_check_branch
        %1767 = sbr.rel (%p1765) target = $region44
      $region43: #{medical_mnist_cnn_forward.5} parent=39 // pred_region
        %p1768 = scmp.lt.s32.totalorder %s15, 1
        %s1769 = scalar_select %p1768, %s15, 1
        %s1770 = smul.addr %s1769, 13
        %s1771 = smul.addr %s1770, 4
        %s1772 = scalar_lea.vmem %s3, %s1771
      $region44: #{medical_mnist_cnn_forward.5} parent=39 // pred_fallthru
        _
    $region40: #{medical_mnist_cnn_forward.5} parent=5 // pred_fallthru
      _
  $region6: #{medical_mnist_cnn_forward.5} parent=0 // loop_footer
    %s13 = sadd.s32 1, %s9
  $region7: #{medical_mnist_cnn_forward.5} parent=0 // loop_footer_branch
    %8 = sbr.rel target = $region3
  $region8: #{medical_mnist_cnn_forward.5} parent=0 // loop_exit
    _

// kernel: medical_mnist_cnn_forward.6
$region0: #{medical_mnist_cnn_forward.6}
  #allocation0 [shape = 'u32[]', space=smem, size = 0x4, offset = 0x4, fixed_abs, tag = 'smem constant byte address 0x4 - core index']
  #allocation1 [shape = 'u32[144,128]{1,0:T(1,128)}', space=vmem, size = 0x12000, scoped, tag = 'internal scratch']
  %s0 = inlined_call_operand.vmem [shape: bf16[2,4,16,576], index: 0, kind: input, shape index: {}]
  %s1 = inlined_call_operand.vmem [shape: bf16[576,128], index: 1, kind: input, shape index: {}]
  %s2 = inlined_call_operand.vmem [shape: f32[1,128], index: 2, kind: input, shape index: {}]
  %s3 = inlined_call_operand.vmem [shape: bf16[2,16,128], index: 3, kind: output, shape index: {}]
  %s4 = sld [smem:[#allocation0]]
  $region45: #{medical_mnist_cnn_forward.6} parent=0
    _
  %s6 = ssub.s32 1, %s4
  %s7 = scalar_select 0, %s6, %s4
  loop: start=0, step=1, limit=4
  $region2: #{medical_mnist_cnn_forward.6} parent=0 // loop_pre_header
    _
  $region3: #{medical_mnist_cnn_forward.6} parent=0 // loop_header
    %s9 = sphi 0, %s13
    %p10 = scmp.ge.s32.totalorder %s9, 4
    %s19 = sphi 0, %s21
    %s22 = sphi 0, %s19
    %s23 = sphi 0, %s22
    %s39 = sphi 0, %s23
    %s43 = sphi 0, %s43
    %s45 = sphi 0, %s43
    %s46 = sphi 0, %s45
    %s60 = sphi 0, %s46
    %s64 = sphi 0, %s64
    %s66 = sphi 0, %s64
    %s67 = sphi 0, %s66
    %s81 = sphi 0, %s67
    %s87 = sphi 0, %s89
    %s90 = sphi 0, %s87
    %s91 = sphi 0, %s90
    %s107 = sphi 0, %s91
  $region4: #{medical_mnist_cnn_forward.6} parent=0 // loop_header_branch
    %12 = sbr.rel (%p10) target = $region8
  $region5: #{medical_mnist_cnn_forward.6} parent=0 // loop_body
    %s14 = ssub.s32 %s9, 1
    %s15 = ssub.s32 %s9, 2
    %s16 = sadd.s32 %s9, 1
    %s17 = ssub.s32 %s9, %s16
    %p18 = scmp.eq.s32.totalorder %s17, 0
    %s20 = sadd.s32 %s19, 1
    %s21 = scalar_select %p18, %s19, %s20
    %p24 = pneg %p18
    %p25 = scmp.eq.s32.totalorder %s9, 1
    %p26 = por %p24, %p25
    %p27 = scmp.ne.s32.totalorder %s19, %s22
    %p28 = scmp.eq.s32.totalorder %s9, 0
    %p29 = por %p27, %p28
    %p30 = scmp.ne.s32.totalorder %s19, %s22
    %p31 = scmp.eq.s32.totalorder %s14, 1
    %p32 = por %p30, %p31
    %p33 = scmp.ne.s32.totalorder %s22, %s23
    %p34 = scmp.eq.s32.totalorder %s14, 0
    %p35 = por %p33, %p34
    %p36 = scmp.ne.s32.totalorder %s22, %s23
    %p37 = scmp.eq.s32.totalorder %s15, 1
    %p38 = por %p36, %p37
    %p40 = scmp.ne.s32.totalorder %s23, %s39
    %p41 = scmp.eq.s32.totalorder %s15, 0
    %p42 = por %p40, %p41
    %s44 = sadd.s32 %s43, 1
    %p47 = scmp.eq.s32.totalorder %s9, 1
    %p48 = scmp.ne.s32.totalorder %s43, %s45
    %p49 = scmp.eq.s32.totalorder %s9, 0
    %p50 = por %p48, %p49
    %p51 = scmp.ne.s32.totalorder %s43, %s45
    %p52 = scmp.eq.s32.totalorder %s14, 1
    %p53 = por %p51, %p52
    %p54 = scmp.ne.s32.totalorder %s45, %s46
    %p55 = scmp.eq.s32.totalorder %s14, 0
    %p56 = por %p54, %p55
    %p57 = scmp.ne.s32.totalorder %s45, %s46
    %p58 = scmp.eq.s32.totalorder %s15, 1
    %p59 = por %p57, %p58
    %p61 = scmp.ne.s32.totalorder %s46, %s60
    %p62 = scmp.eq.s32.totalorder %s15, 0
    %p63 = por %p61, %p62
    %s65 = sadd.s32 %s64, 1
    %p68 = scmp.eq.s32.totalorder %s9, 1
    %p69 = scmp.ne.s32.totalorder %s64, %s66
    %p70 = scmp.eq.s32.totalorder %s9, 0
    %p71 = por %p69, %p70
    %p72 = scmp.ne.s32.totalorder %s64, %s66
    %p73 = scmp.eq.s32.totalorder %s14, 1
    %p74 = por %p72, %p73
    %p75 = scmp.ne.s32.totalorder %s66, %s67
    %p76 = scmp.eq.s32.totalorder %s14, 0
    %p77 = por %p75, %p76
    %p78 = scmp.ne.s32.totalorder %s66, %s67
    %p79 = scmp.eq.s32.totalorder %s15, 1
    %p80 = por %p78, %p79
    %p82 = scmp.ne.s32.totalorder %s67, %s81
    %p83 = scmp.eq.s32.totalorder %s15, 0
    %p84 = por %p82, %p83
    %s85 = ssub.s32 %s9, %s16
    %p86 = scmp.eq.s32.totalorder %s85, 0
    %s88 = sadd.s32 %s87, 1
    %s89 = scalar_select %p86, %s87, %s88
    %p92 = pneg %p86
    %p93 = scmp.eq.s32.totalorder %s9, 1
    %p94 = por %p92, %p93
    %p95 = scmp.ne.s32.totalorder %s87, %s90
    %p96 = scmp.eq.s32.totalorder %s9, 0
    %p97 = por %p95, %p96
    %p98 = scmp.ne.s32.totalorder %s87, %s90
    %p99 = scmp.eq.s32.totalorder %s14, 1
    %p100 = por %p98, %p99
    %p101 = scmp.ne.s32.totalorder %s90, %s91
    %p102 = scmp.eq.s32.totalorder %s14, 0
    %p103 = por %p101, %p102
    %p104 = scmp.ne.s32.totalorder %s90, %s91
    %p105 = scmp.eq.s32.totalorder %s15, 1
    %p106 = por %p104, %p105
    %p108 = scmp.ne.s32.totalorder %s91, %s107
    %p109 = scmp.eq.s32.totalorder %s15, 0
    %p110 = por %p108, %p109
    %p111 = scmp.le.s32.totalorder 1, %s9
    %p112 = scmp.lt.s32.totalorder %s9, 3
    %p113 = pnand %p111, %p112
    %p114 = pneg %p113
    // Predicated region
    $region9: #{medical_mnist_cnn_forward.6} parent=5 // pred_check
      _
    $region10: #{medical_mnist_cnn_forward.6} parent=5 // pred_check_branch
      %116 = sbr.rel (%p113) target = $region12
    $region11: #{medical_mnist_cnn_forward.6} parent=5 // pred_region
      %s117 = ssub.s32 %s9, 1
      // Predicated region
      $region13: #{medical_mnist_cnn_forward.6} parent=11 // pred_check
        %p118 = pneg %p56
      $region14: #{medical_mnist_cnn_forward.6} parent=11 // pred_check_branch
        %120 = sbr.rel (%p118) target = $region16
      $region15: #{medical_mnist_cnn_forward.6} parent=11 // pred_region
        _
      $region16: #{medical_mnist_cnn_forward.6} parent=11 // pred_fallthru
        _
      // Predicated region
      $region17: #{medical_mnist_cnn_forward.6} parent=11 // pred_check
        %p121 = pneg %p77
      $region18: #{medical_mnist_cnn_forward.6} parent=11 // pred_check_branch
        %123 = sbr.rel (%p121) target = $region20
      $region19: #{medical_mnist_cnn_forward.6} parent=11 // pred_region
        _
      $region20: #{medical_mnist_cnn_forward.6} parent=11 // pred_fallthru
        _
    $region12: #{medical_mnist_cnn_forward.6} parent=5 // pred_fallthru
      _
    %p124 = scmp.lt.s32.totalorder %s9, 2
    // Predicated region
    $region21: #{medical_mnist_cnn_forward.6} parent=5 // pred_check
      %p125 = pneg %p124
    $region22: #{medical_mnist_cnn_forward.6} parent=5 // pred_check_branch
      %127 = sbr.rel (%p125) target = $region24
    $region23: #{medical_mnist_cnn_forward.6} parent=5 // pred_region
      // Predicated region
      $region25: #{medical_mnist_cnn_forward.6} parent=23 // pred_check
        %p128 = pneg %p29
      $region26: #{medical_mnist_cnn_forward.6} parent=23 // pred_check_branch
        %130 = sbr.rel (%p128) target = $region28
      $region27: #{medical_mnist_cnn_forward.6} parent=23 // pred_region
        %p131 = scmp.lt.s32.totalorder %s9, 1
        %s132 = scalar_select %p131, %s9, 1
        %s133 = smul.addr %s132, 40
        %s134 = smul.addr %s133, 4
        %s135 = scalar_lea.vmem %s0, %s134
      $region28: #{medical_mnist_cnn_forward.6} parent=23 // pred_fallthru
        _
    $region24: #{medical_mnist_cnn_forward.6} parent=5 // pred_fallthru
      _
    %p136 = scmp.le.s32.totalorder 1, %s9
    %p137 = scmp.lt.s32.totalorder %s9, 3
    %p138 = pnand %p136, %p137
    %p139 = pneg %p138
    // Predicated region
    $region29: #{medical_mnist_cnn_forward.6} parent=5 // pred_check
      _
    $region30: #{medical_mnist_cnn_forward.6} parent=5 // pred_check_branch
      %141 = sbr.rel (%p138) target = $region32
    $region31: #{medical_mnist_cnn_forward.6} parent=5 // pred_region
      %s142 = ssub.s32 %s9, 1
      %p143 = scmp.lt.s32.totalorder %s14, 1
      %s144 = scalar_select %p143, %s14, 1
      %s145 = smul.addr %s144, 40
      %s146 = smul.addr %s145, 4
      %s147 = scalar_lea.vmem %s0, %s146
      %p148 = pneg %p35
      %p149 = pneg %p32
      %p150 = pneg %p56
      %p151 = pneg %p53
      %p152 = pneg %p77
      %p153 = pneg %p74
      %p154 = pneg %p103
      %p155 = pneg %p100
      %p156 = scmp.lt.s32.totalorder %s14, 1
      %s157 = scalar_select %p156, %s14, 1
      %s158 = smul.addr %s157, 2
      %s159 = smul.addr %s158, 4
      %s160 = scalar_lea.vmem %s3, %s159
      %p161 = scmp.lt.s32.totalorder %s14, 1
      %s162 = scalar_select %p161, %s14, 1
      %s163 = smul.addr %s162, 40
      %s164 = smul.addr %s163, 4
      %s165 = scalar_lea.vmem %s0, %s164
      %p166 = scmp.lt.s32.totalorder %s14, 1
      %s167 = scalar_select %p166, %s14, 1
      %s168 = smul.addr %s167, 2
      %s169 = smul.addr %s168, 4
      %s170 = scalar_lea.vmem %s3, %s169
      %v172 = vld [vmem:[%s1] sm:$0xf]
      %v173 = vld [vmem:[%s1 + $0x4] sm:$0xf]
      %v174 = vld [vmem:[%s1 + $0x8] sm:$0xf]
      %v175 = vld [vmem:[%s1 + $0xc] sm:$0xf]
      %v176 = vld [vmem:[%s1 + $0x10] sm:$0xf]
      %v177 = vld [vmem:[%s1 + $0x14] sm:$0xf]
      %v178 = vld [vmem:[%s1 + $0x18] sm:$0xf]
      %v179 = vld [vmem:[%s1 + $0x1c] sm:$0xf]
      %v180 = vld [vmem:[%s1 + $0x20] sm:$0xf]
      %v181 = vld [vmem:[%s1 + $0x24] sm:$0xf]
      %v182 = vld [vmem:[%s1 + $0x28] sm:$0xf]
      %v183 = vld [vmem:[%s1 + $0x2c] sm:$0xf]
      %v184 = vld [vmem:[%s1 + $0x30] sm:$0xf]
      %v185 = vld [vmem:[%s1 + $0x34] sm:$0xf]
      %v186 = vld [vmem:[%s1 + $0x38] sm:$0xf]
      %v187 = vld [vmem:[%s1 + $0x3c] sm:$0xf]
      %v188 = vld [vmem:[%s1 + $0x40] sm:$0xf]
      %v189 = vld [vmem:[%s1 + $0x44] sm:$0xf]
      %v190 = vld [vmem:[%s1 + $0x48] sm:$0xf]
      %v191 = vld [vmem:[%s1 + $0x4c] sm:$0xf]
      %v192 = vld [vmem:[%s1 + $0x50] sm:$0xf]
      %v193 = vld [vmem:[%s1 + $0x54] sm:$0xf]
      %v194 = vld [vmem:[%s1 + $0x58] sm:$0xf]
      %v195 = vld [vmem:[%s1 + $0x5c] sm:$0xf]
      %v196 = vld [vmem:[%s1 + $0x60] sm:$0xf]
      %v197 = vld [vmem:[%s1 + $0x64] sm:$0xf]
      %v198 = vld [vmem:[%s1 + $0x68] sm:$0xf]
      %v199 = vld [vmem:[%s1 + $0x6c] sm:$0xf]
      %v200 = vld [vmem:[%s1 + $0x70] sm:$0xf]
      %v201 = vld [vmem:[%s1 + $0x74] sm:$0xf]
      %v202 = vld [vmem:[%s1 + $0x78] sm:$0xf]
      %v203 = vld [vmem:[%s1 + $0x7c] sm:$0xf]
      %v204 = vld [vmem:[%s1 + $0x80] sm:$0xf]
      %v205 = vld [vmem:[%s1 + $0x84] sm:$0xf]
      %v206 = vld [vmem:[%s1 + $0x88] sm:$0xf]
      %v207 = vld [vmem:[%s1 + $0x8c] sm:$0xf]
      %v208 = vld [vmem:[%s1 + $0x90] sm:$0xf]
      %v209 = vld [vmem:[%s1 + $0x94] sm:$0xf]
      %v210 = vld [vmem:[%s1 + $0x98] sm:$0xf]
      %v211 = vld [vmem:[%s1 + $0x9c] sm:$0xf]
      %v212 = vld [vmem:[%s1 + $0xa0] sm:$0xf]
      %v213 = vld [vmem:[%s1 + $0xa4] sm:$0xf]
      %v214 = vld [vmem:[%s1 + $0xa8] sm:$0xf]
      %v215 = vld [vmem:[%s1 + $0xac] sm:$0xf]
      %v216 = vld [vmem:[%s1 + $0xb0] sm:$0xf]
      %v217 = vld [vmem:[%s1 + $0xb4] sm:$0xf]
      %v218 = vld [vmem:[%s1 + $0xb8] sm:$0xf]
      %v219 = vld [vmem:[%s1 + $0xbc] sm:$0xf]
      %v220 = vld [vmem:[%s1 + $0xc0] sm:$0xf]
      %v221 = vld [vmem:[%s1 + $0xc4] sm:$0xf]
      %v222 = vld [vmem:[%s1 + $0xc8] sm:$0xf]
      %v223 = vld [vmem:[%s1 + $0xcc] sm:$0xf]
      %v224 = vld [vmem:[%s1 + $0xd0] sm:$0xf]
      %v225 = vld [vmem:[%s1 + $0xd4] sm:$0xf]
      %v226 = vld [vmem:[%s1 + $0xd8] sm:$0xf]
      %v227 = vld [vmem:[%s1 + $0xdc] sm:$0xf]
      %v228 = vld [vmem:[%s1 + $0xe0] sm:$0xf]
      %v229 = vld [vmem:[%s1 + $0xe4] sm:$0xf]
      %v230 = vld [vmem:[%s1 + $0xe8] sm:$0xf]
      %v231 = vld [vmem:[%s1 + $0xec] sm:$0xf]
      %v232 = vld [vmem:[%s1 + $0xf0] sm:$0xf]
      %v233 = vld [vmem:[%s1 + $0xf4] sm:$0xf]
      %v234 = vld [vmem:[%s1 + $0xf8] sm:$0xf]
      %v235 = vld [vmem:[%s1 + $0xfc] sm:$0xf]
      %v236 = vld [vmem:[%s1 + $0x100] sm:$0xf]
      %v237 = vld [vmem:[%s1 + $0x104] sm:$0xf]
      %v238 = vld [vmem:[%s1 + $0x108] sm:$0xf]
      %v239 = vld [vmem:[%s1 + $0x10c] sm:$0xf]
      %v240 = vld [vmem:[%s1 + $0x110] sm:$0xf]
      %v241 = vld [vmem:[%s1 + $0x114] sm:$0xf]
      %v242 = vld [vmem:[%s1 + $0x118] sm:$0xf]
      %v243 = vld [vmem:[%s1 + $0x11c] sm:$0xf]
      %v244 = vld [vmem:[%s165] sm:$0xff]
      %v245 = vld [vmem:[%s165 + $0x8] sm:$0xff]
      %v246 = vld [vmem:[%s165 + $0x10] sm:$0xf]
      %v247 = vld [vmem:[%s165 + $0x14] sm:$0xff]
      %v248 = vld [vmem:[%s165 + $0x1c] sm:$0xff]
      %v249 = vld [vmem:[%s165 + $0x24] sm:$0xf]
      %v256 = vunpack.c.l.b16 %v244
      %v257 = vunpack.c.h.b16 %v244
      %v258 = vunpack.c.l.b16 %v245
      %v259 = vunpack.c.h.b16 %v245
      %v260 = vunpack.c.l.b16 %v246
      %v261 = vunpack.c.l.b16 %v247
      %v262 = vunpack.c.h.b16 %v247
      %v263 = vunpack.c.l.b16 %v248
      %v264 = vunpack.c.h.b16 %v248
      %v265 = vunpack.c.l.b16 %v249
      %v266 = vpack.c.b16 %v261, %v256
      %v267 = vpack.c.b16 %v262, %v257
      %v268 = vpack.c.b16 %v263, %v258
      %v269 = vpack.c.b16 %v264, %v259
      %v270 = vpack.c.b16 %v265, %v260
      %v347 = vunpack.c.l.b16 %v172
      %v348 = vunpack.c.l.b16 %v173
      %v349 = vunpack.c.l.b16 %v174
      %v350 = vunpack.c.l.b16 %v175
      %v351 = vunpack.c.l.b16 %v176
      %v352 = vunpack.c.l.b16 %v177
      %v353 = vunpack.c.l.b16 %v178
      %v354 = vunpack.c.l.b16 %v179
      %v355 = vunpack.c.l.b16 %v180
      %v356 = vunpack.c.l.b16 %v181
      %v357 = vunpack.c.l.b16 %v182
      %v358 = vunpack.c.l.b16 %v183
      %v359 = vunpack.c.l.b16 %v184
      %v360 = vunpack.c.l.b16 %v185
      %v361 = vunpack.c.l.b16 %v186
      %v362 = vunpack.c.l.b16 %v187
      %v363 = vunpack.c.l.b16 %v188
      %v364 = vunpack.c.l.b16 %v189
      %v365 = vunpack.c.l.b16 %v190
      %v366 = vunpack.c.l.b16 %v191
      %v367 = vunpack.c.l.b16 %v192
      %v368 = vunpack.c.l.b16 %v193
      %v369 = vunpack.c.l.b16 %v194
      %v370 = vunpack.c.l.b16 %v195
      %v371 = vunpack.c.l.b16 %v196
      %v372 = vunpack.c.l.b16 %v197
      %v373 = vunpack.c.l.b16 %v198
      %v374 = vunpack.c.l.b16 %v199
      %v375 = vunpack.c.l.b16 %v200
      %v376 = vunpack.c.l.b16 %v201
      %v377 = vunpack.c.l.b16 %v202
      %v378 = vunpack.c.l.b16 %v203
      %v379 = vunpack.c.l.b16 %v204
      %v380 = vunpack.c.l.b16 %v205
      %v381 = vunpack.c.l.b16 %v206
      %v382 = vunpack.c.l.b16 %v207
      %v383 = vunpack.c.l.b16 %v208
      %v384 = vunpack.c.l.b16 %v209
      %v385 = vunpack.c.l.b16 %v210
      %v386 = vunpack.c.l.b16 %v211
      %v387 = vunpack.c.l.b16 %v212
      %v388 = vunpack.c.l.b16 %v213
      %v389 = vunpack.c.l.b16 %v214
      %v390 = vunpack.c.l.b16 %v215
      %v391 = vunpack.c.l.b16 %v216
      %v392 = vunpack.c.l.b16 %v217
      %v393 = vunpack.c.l.b16 %v218
      %v394 = vunpack.c.l.b16 %v219
      %v395 = vunpack.c.l.b16 %v220
      %v396 = vunpack.c.l.b16 %v221
      %v397 = vunpack.c.l.b16 %v222
      %v398 = vunpack.c.l.b16 %v223
      %v399 = vunpack.c.l.b16 %v224
      %v400 = vunpack.c.l.b16 %v225
      %v401 = vunpack.c.l.b16 %v226
      %v402 = vunpack.c.l.b16 %v227
      %v403 = vunpack.c.l.b16 %v228
      %v404 = vunpack.c.l.b16 %v229
      %v405 = vunpack.c.l.b16 %v230
      %v406 = vunpack.c.l.b16 %v231
      %v407 = vunpack.c.l.b16 %v232
      %v408 = vunpack.c.l.b16 %v233
      %v409 = vunpack.c.l.b16 %v234
      %v410 = vunpack.c.l.b16 %v235
      %v411 = vunpack.c.l.b16 %v236
      %v412 = vunpack.c.l.b16 %v237
      %v413 = vunpack.c.l.b16 %v238
      %v414 = vunpack.c.l.b16 %v239
      %v415 = vunpack.c.l.b16 %v240
      %v416 = vunpack.c.l.b16 %v241
      %v417 = vunpack.c.l.b16 %v242
      %v418 = vunpack.c.l.b16 %v243
      %v419 = vpack.c.b16 %v348, %v347
      %v420 = vpack.c.b16 %v350, %v349
      %v421 = vpack.c.b16 %v352, %v351
      %v422 = vpack.c.b16 %v354, %v353
      %v423 = vpack.c.b16 %v356, %v355
      %v424 = vpack.c.b16 %v358, %v357
      %v425 = vpack.c.b16 %v360, %v359
      %v426 = vpack.c.b16 %v362, %v361
      %v427 = vpack.c.b16 %v364, %v363
      %v428 = vpack.c.b16 %v366, %v365
      %v429 = vpack.c.b16 %v368, %v367
      %v430 = vpack.c.b16 %v370, %v369
      %v431 = vpack.c.b16 %v372, %v371
      %v432 = vpack.c.b16 %v374, %v373
      %v433 = vpack.c.b16 %v376, %v375
      %v434 = vpack.c.b16 %v378, %v377
      %v435 = vpack.c.b16 %v380, %v379
      %v436 = vpack.c.b16 %v382, %v381
      %v437 = vpack.c.b16 %v384, %v383
      %v438 = vpack.c.b16 %v386, %v385
      %v439 = vpack.c.b16 %v388, %v387
      %v440 = vpack.c.b16 %v390, %v389
      %v441 = vpack.c.b16 %v392, %v391
      %v442 = vpack.c.b16 %v394, %v393
      %v443 = vpack.c.b16 %v396, %v395
      %v444 = vpack.c.b16 %v398, %v397
      %v445 = vpack.c.b16 %v400, %v399
      %v446 = vpack.c.b16 %v402, %v401
      %v447 = vpack.c.b16 %v404, %v403
      %v448 = vpack.c.b16 %v406, %v405
      %v449 = vpack.c.b16 %v408, %v407
      %v450 = vpack.c.b16 %v410, %v409
      %v451 = vpack.c.b16 %v412, %v411
      %v452 = vpack.c.b16 %v414, %v413
      %v453 = vpack.c.b16 %v416, %v415
      %v454 = vpack.c.b16 %v418, %v417
      %vm491 = vcmask 523264
      %v493 = vsel %vm491, %v270, 0
      %495 = vmatprep.subr.bf16.mxu0 0
      %496 = vmatpush1.bf16.msra.mxu0 %v419
      %497 = vmatprep.subr.bf16.mxu0 0
      %498 = vmatpush1.bf16.msra.mxu0 %v420
      %499 = vmatprep.subr.bf16.mxu0 0
      %500 = vmatpush1.bf16.msra.mxu0 %v421
      %501 = vmatprep.subr.bf16.mxu0 0
      %502 = vmatpush1.bf16.msra.mxu0 %v422
      %503 = vmatprep.subr.bf16.mxu0 0
      %504 = vmatpush1.bf16.msra.mxu0 %v423
      %505 = vmatprep.subr.bf16.mxu0 0
      %506 = vmatpush1.bf16.msra.mxu0 %v424
      %507 = vmatprep.subr.bf16.mxu0 0
      %508 = vmatpush1.bf16.msra.mxu0 %v425
      %509 = vmatprep.subr.bf16.mxu0 0
      %510 = vmatpush1.bf16.msra.mxu0 %v426
      %511 = vmatprep.subr.bf16.mxu0 0
      %512 = vmatpush1.bf16.msra.mxu0 %v427
      %513 = vmatprep.subr.bf16.mxu0 0
      %514 = vmatpush1.bf16.msra.mxu0 %v428
      %515 = vmatprep.subr.bf16.mxu0 0
      %516 = vmatpush1.bf16.msra.mxu0 %v429
      %517 = vmatprep.subr.bf16.mxu0 0
      %518 = vmatpush1.bf16.msra.mxu0 %v430
      %519 = vmatprep.subr.bf16.mxu0 0
      %520 = vmatpush1.bf16.msra.mxu0 %v431
      %521 = vmatprep.subr.bf16.mxu0 0
      %522 = vmatpush1.bf16.msra.mxu0 %v432
      %523 = vmatprep.subr.bf16.mxu0 0
      %524 = vmatpush1.bf16.msra.mxu0 %v433
      %525 = vmatprep.subr.bf16.mxu0 0
      %526 = vmatpush1.bf16.msra.mxu0 %v434
      %527 = vmatprep.mubr.bf16.mxu0 %v267
      %528 = vmatmul.mubr.bf16.gmra.mrb[0].mxu0 %v266
      %v529 = vpop.f32.mrb[0].mxu0
      %v530 = vadd.f32 0.0, %v529
      %v531 = vpop.f32.mrb[0].mxu0
      %v532 = vpop.f32.mrb[0].mxu0
      %v533 = vadd.f32 0.0, %v532
      %v534 = vpop.f32.mrb[0].mxu0
      %535 = vdwg.mxu0
      %536 = vmatprep.subr.bf16.mxu0 0
      %537 = vmatpush1.bf16.msra.mxu0 %v435
      %538 = vmatprep.subr.bf16.mxu0 0
      %539 = vmatpush1.bf16.msra.mxu0 %v436
      %540 = vmatprep.subr.bf16.mxu0 0
      %541 = vmatpush1.bf16.msra.mxu0 %v437
      %542 = vmatprep.subr.bf16.mxu0 0
      %543 = vmatpush1.bf16.msra.mxu0 %v438
      %544 = vmatprep.subr.bf16.mxu0 0
      %545 = vmatpush1.bf16.msra.mxu0 %v439
      %546 = vmatprep.subr.bf16.mxu0 0
      %547 = vmatpush1.bf16.msra.mxu0 %v440
      %548 = vmatprep.subr.bf16.mxu0 0
      %549 = vmatpush1.bf16.msra.mxu0 %v441
      %550 = vmatprep.subr.bf16.mxu0 0
      %551 = vmatpush1.bf16.msra.mxu0 %v442
      %552 = vmatprep.subr.bf16.mxu0 0
      %553 = vmatpush1.bf16.msra.mxu0 %v443
      %554 = vmatprep.subr.bf16.mxu0 0
      %555 = vmatpush1.bf16.msra.mxu0 %v444
      %556 = vmatprep.subr.bf16.mxu0 0
      %557 = vmatpush1.bf16.msra.mxu0 %v445
      %558 = vmatprep.subr.bf16.mxu0 0
      %559 = vmatpush1.bf16.msra.mxu0 %v446
      %560 = vmatprep.subr.bf16.mxu0 0
      %561 = vmatpush1.bf16.msra.mxu0 %v447
      %562 = vmatprep.subr.bf16.mxu0 0
      %563 = vmatpush1.bf16.msra.mxu0 %v448
      %564 = vmatprep.subr.bf16.mxu0 0
      %565 = vmatpush1.bf16.msra.mxu0 %v449
      %566 = vmatprep.subr.bf16.mxu0 0
      %567 = vmatpush1.bf16.msra.mxu0 %v450
      %568 = vmatprep.mubr.bf16.mxu0 %v269
      %569 = vmatmul.mubr.bf16.gmra.mrb[0].mxu0 %v268
      %v570 = vpop.f32.mrb[0].mxu0
      %v571 = vadd.f32 %v530, %v570
      %v572 = vpop.f32.mrb[0].mxu0
      %v573 = vpop.f32.mrb[0].mxu0
      %v574 = vadd.f32 %v533, %v573
      %v575 = vpop.f32.mrb[0].mxu0
      %576 = vdwg.mxu0
      %577 = vmatprep.subr.bf16.mxu0 0
      %578 = vmatpush1.bf16.msra.mxu0 %v451
      %579 = vmatprep.subr.bf16.mxu0 0
      %580 = vmatpush1.bf16.msra.mxu0 %v452
      %581 = vmatprep.subr.bf16.mxu0 0
      %582 = vmatpush1.bf16.msra.mxu0 %v453
      %583 = vmatprep.subr.bf16.mxu0 0
      %584 = vmatpush1.bf16.msra.mxu0 %v454
      %585 = vmatprep.subr.bf16.mxu0 0
      %586 = vmatpush1.bf16.msra.mxu0 0
      %587 = vmatprep.subr.bf16.mxu0 0
      %588 = vmatpush1.bf16.msra.mxu0 0
      %589 = vmatprep.subr.bf16.mxu0 0
      %590 = vmatpush1.bf16.msra.mxu0 0
      %591 = vmatprep.subr.bf16.mxu0 0
      %592 = vmatpush1.bf16.msra.mxu0 0
      %593 = vmatprep.subr.bf16.mxu0 0
      %594 = vmatpush1.bf16.msra.mxu0 0
      %595 = vmatprep.subr.bf16.mxu0 0
      %596 = vmatpush1.bf16.msra.mxu0 0
      %597 = vmatprep.subr.bf16.mxu0 0
      %598 = vmatpush1.bf16.msra.mxu0 0
      %599 = vmatprep.subr.bf16.mxu0 0
      %600 = vmatpush1.bf16.msra.mxu0 0
      %601 = vmatprep.subr.bf16.mxu0 0
      %602 = vmatpush1.bf16.msra.mxu0 0
      %603 = vmatprep.subr.bf16.mxu0 0
      %604 = vmatpush1.bf16.msra.mxu0 0
      %605 = vmatprep.subr.bf16.mxu0 0
      %606 = vmatpush1.bf16.msra.mxu0 0
      %607 = vmatprep.subr.bf16.mxu0 0
      %608 = vmatpush1.bf16.msra.mxu0 0
      %609 = vmatprep.mubr.bf16.mxu0 0
      %610 = vmatmul.mubr.bf16.gmra.mrb[0].mxu0 %v493
      %v611 = vpop.f32.mrb[0].mxu0
      %v612 = vadd.f32 %v571, %v611
      %v613 = vpop.f32.mrb[0].mxu0
      %v614 = vpop.f32.mrb[0].mxu0
      %v615 = vadd.f32 %v574, %v614
      %v616 = vpop.f32.mrb[0].mxu0
      %617 = vdwg.mxu0
      %s618 = scalar_lea.vmem %s165, 40
      %v619 = vld [vmem:[%s618] sm:$0xff]
      %v620 = vld [vmem:[%s618 + $0x8] sm:$0xff]
      %v621 = vld [vmem:[%s618 + $0x10] sm:$0xf]
      %v622 = vld [vmem:[%s618 + $0x14] sm:$0xff]
      %v623 = vld [vmem:[%s618 + $0x1c] sm:$0xff]
      %v624 = vld [vmem:[%s618 + $0x24] sm:$0xf]
      %v631 = vunpack.c.l.b16 %v619
      %v632 = vunpack.c.h.b16 %v619
      %v633 = vunpack.c.l.b16 %v620
      %v634 = vunpack.c.h.b16 %v620
      %v635 = vunpack.c.l.b16 %v621
      %v636 = vunpack.c.l.b16 %v622
      %v637 = vunpack.c.h.b16 %v622
      %v638 = vunpack.c.l.b16 %v623
      %v639 = vunpack.c.h.b16 %v623
      %v640 = vunpack.c.l.b16 %v624
      %v641 = vpack.c.b16 %v636, %v631
      %v642 = vpack.c.b16 %v637, %v632
      %v643 = vpack.c.b16 %v638, %v633
      %v644 = vpack.c.b16 %v639, %v634
      %v645 = vpack.c.b16 %v640, %v635
      %v651 = vsel %vm491, %v645, 0
      %653 = vmatprep.subr.bf16.mxu0 0
      %654 = vmatpush1.bf16.msra.mxu0 %v419
      %655 = vmatprep.subr.bf16.mxu0 0
      %656 = vmatpush1.bf16.msra.mxu0 %v420
      %657 = vmatprep.subr.bf16.mxu0 0
      %658 = vmatpush1.bf16.msra.mxu0 %v421
      %659 = vmatprep.subr.bf16.mxu0 0
      %660 = vmatpush1.bf16.msra.mxu0 %v422
      %661 = vmatprep.subr.bf16.mxu0 0
      %662 = vmatpush1.bf16.msra.mxu0 %v423
      %663 = vmatprep.subr.bf16.mxu0 0
      %664 = vmatpush1.bf16.msra.mxu0 %v424
      %665 = vmatprep.subr.bf16.mxu0 0
      %666 = vmatpush1.bf16.msra.mxu0 %v425
      %667 = vmatprep.subr.bf16.mxu0 0
      %668 = vmatpush1.bf16.msra.mxu0 %v426
      %669 = vmatprep.subr.bf16.mxu0 0
      %670 = vmatpush1.bf16.msra.mxu0 %v427
      %671 = vmatprep.subr.bf16.mxu0 0
      %672 = vmatpush1.bf16.msra.mxu0 %v428
      %673 = vmatprep.subr.bf16.mxu0 0
      %674 = vmatpush1.bf16.msra.mxu0 %v429
      %675 = vmatprep.subr.bf16.mxu0 0
      %676 = vmatpush1.bf16.msra.mxu0 %v430
      %677 = vmatprep.subr.bf16.mxu0 0
      %678 = vmatpush1.bf16.msra.mxu0 %v431
      %679 = vmatprep.subr.bf16.mxu0 0
      %680 = vmatpush1.bf16.msra.mxu0 %v432
      %681 = vmatprep.subr.bf16.mxu0 0
      %682 = vmatpush1.bf16.msra.mxu0 %v433
      %683 = vmatprep.subr.bf16.mxu0 0
      %684 = vmatpush1.bf16.msra.mxu0 %v434
      %685 = vmatprep.mubr.bf16.mxu0 %v642
      %686 = vmatmul.mubr.bf16.gmra.mrb[0].mxu0 %v641
      %v687 = vpop.f32.mrb[0].mxu0
      %v688 = vadd.f32 0.0, %v687
      %v689 = vpop.f32.mrb[0].mxu0
      %v690 = vpop.f32.mrb[0].mxu0
      %v691 = vadd.f32 0.0, %v690
      %v692 = vpop.f32.mrb[0].mxu0
      %693 = vdwg.mxu0
      %694 = vmatprep.subr.bf16.mxu0 0
      %695 = vmatpush1.bf16.msra.mxu0 %v435
      %696 = vmatprep.subr.bf16.mxu0 0
      %697 = vmatpush1.bf16.msra.mxu0 %v436
      %698 = vmatprep.subr.bf16.mxu0 0
      %699 = vmatpush1.bf16.msra.mxu0 %v437
      %700 = vmatprep.subr.bf16.mxu0 0
      %701 = vmatpush1.bf16.msra.mxu0 %v438
      %702 = vmatprep.subr.bf16.mxu0 0
      %703 = vmatpush1.bf16.msra.mxu0 %v439
      %704 = vmatprep.subr.bf16.mxu0 0
      %705 = vmatpush1.bf16.msra.mxu0 %v440
      %706 = vmatprep.subr.bf16.mxu0 0
      %707 = vmatpush1.bf16.msra.mxu0 %v441
      %708 = vmatprep.subr.bf16.mxu0 0
      %709 = vmatpush1.bf16.msra.mxu0 %v442
      %710 = vmatprep.subr.bf16.mxu0 0
      %711 = vmatpush1.bf16.msra.mxu0 %v443
      %712 = vmatprep.subr.bf16.mxu0 0
      %713 = vmatpush1.bf16.msra.mxu0 %v444
      %714 = vmatprep.subr.bf16.mxu0 0
      %715 = vmatpush1.bf16.msra.mxu0 %v445
      %716 = vmatprep.subr.bf16.mxu0 0
      %717 = vmatpush1.bf16.msra.mxu0 %v446
      %718 = vmatprep.subr.bf16.mxu0 0
      %719 = vmatpush1.bf16.msra.mxu0 %v447
      %720 = vmatprep.subr.bf16.mxu0 0
      %721 = vmatpush1.bf16.msra.mxu0 %v448
      %722 = vmatprep.subr.bf16.mxu0 0
      %723 = vmatpush1.bf16.msra.mxu0 %v449
      %724 = vmatprep.subr.bf16.mxu0 0
      %725 = vmatpush1.bf16.msra.mxu0 %v450
      %726 = vmatprep.mubr.bf16.mxu0 %v644
      %727 = vmatmul.mubr.bf16.gmra.mrb[0].mxu0 %v643
      %v728 = vpop.f32.mrb[0].mxu0
      %v729 = vadd.f32 %v688, %v728
      %v730 = vpop.f32.mrb[0].mxu0
      %v731 = vpop.f32.mrb[0].mxu0
      %v732 = vadd.f32 %v691, %v731
      %v733 = vpop.f32.mrb[0].mxu0
      %734 = vdwg.mxu0
      %735 = vmatprep.subr.bf16.mxu0 0
      %736 = vmatpush1.bf16.msra.mxu0 %v451
      %737 = vmatprep.subr.bf16.mxu0 0
      %738 = vmatpush1.bf16.msra.mxu0 %v452
      %739 = vmatprep.subr.bf16.mxu0 0
      %740 = vmatpush1.bf16.msra.mxu0 %v453
      %741 = vmatprep.subr.bf16.mxu0 0
      %742 = vmatpush1.bf16.msra.mxu0 %v454
      %743 = vmatprep.subr.bf16.mxu0 0
      %744 = vmatpush1.bf16.msra.mxu0 0
      %745 = vmatprep.subr.bf16.mxu0 0
      %746 = vmatpush1.bf16.msra.mxu0 0
      %747 = vmatprep.subr.bf16.mxu0 0
      %748 = vmatpush1.bf16.msra.mxu0 0
      %749 = vmatprep.subr.bf16.mxu0 0
      %750 = vmatpush1.bf16.msra.mxu0 0
      %751 = vmatprep.subr.bf16.mxu0 0
      %752 = vmatpush1.bf16.msra.mxu0 0
      %753 = vmatprep.subr.bf16.mxu0 0
      %754 = vmatpush1.bf16.msra.mxu0 0
      %755 = vmatprep.subr.bf16.mxu0 0
      %756 = vmatpush1.bf16.msra.mxu0 0
      %757 = vmatprep.subr.bf16.mxu0 0
      %758 = vmatpush1.bf16.msra.mxu0 0
      %759 = vmatprep.subr.bf16.mxu0 0
      %760 = vmatpush1.bf16.msra.mxu0 0
      %761 = vmatprep.subr.bf16.mxu0 0
      %762 = vmatpush1.bf16.msra.mxu0 0
      %763 = vmatprep.subr.bf16.mxu0 0
      %764 = vmatpush1.bf16.msra.mxu0 0
      %765 = vmatprep.subr.bf16.mxu0 0
      %766 = vmatpush1.bf16.msra.mxu0 0
      %767 = vmatprep.mubr.bf16.mxu0 0
      %768 = vmatmul.mubr.bf16.gmra.mrb[0].mxu0 %v651
      %v769 = vpop.f32.mrb[0].mxu0
      %v770 = vadd.f32 %v729, %v769
      %v771 = vpop.f32.mrb[0].mxu0
      %v772 = vpop.f32.mrb[0].mxu0
      %v773 = vadd.f32 %v732, %v772
      %v774 = vpop.f32.mrb[0].mxu0
      %775 = vdwg.mxu0
      %v776 = vmax.f32 %v612, %v770
      %v777 = vmax.f32 %v615, %v773
      %s778 = scalar_lea.vmem %s165, 80
      %v779 = vld [vmem:[%s778] sm:$0xff]
      %v780 = vld [vmem:[%s778 + $0x8] sm:$0xff]
      %v781 = vld [vmem:[%s778 + $0x10] sm:$0xf]
      %v782 = vld [vmem:[%s778 + $0x14] sm:$0xff]
      %v783 = vld [vmem:[%s778 + $0x1c] sm:$0xff]
      %v784 = vld [vmem:[%s778 + $0x24] sm:$0xf]
      %v791 = vunpack.c.l.b16 %v779
      %v792 = vunpack.c.h.b16 %v779
      %v793 = vunpack.c.l.b16 %v780
      %v794 = vunpack.c.h.b16 %v780
      %v795 = vunpack.c.l.b16 %v781
      %v796 = vunpack.c.l.b16 %v782
      %v797 = vunpack.c.h.b16 %v782
      %v798 = vunpack.c.l.b16 %v783
      %v799 = vunpack.c.h.b16 %v783
      %v800 = vunpack.c.l.b16 %v784
      %v801 = vpack.c.b16 %v796, %v791
      %v802 = vpack.c.b16 %v797, %v792
      %v803 = vpack.c.b16 %v798, %v793
      %v804 = vpack.c.b16 %v799, %v794
      %v805 = vpack.c.b16 %v800, %v795
      %v811 = vsel %vm491, %v805, 0
      %813 = vmatprep.subr.bf16.mxu0 0
      %814 = vmatpush1.bf16.msra.mxu0 %v419
      %815 = vmatprep.subr.bf16.mxu0 0
      %816 = vmatpush1.bf16.msra.mxu0 %v420
      %817 = vmatprep.subr.bf16.mxu0 0
      %818 = vmatpush1.bf16.msra.mxu0 %v421
      %819 = vmatprep.subr.bf16.mxu0 0
      %820 = vmatpush1.bf16.msra.mxu0 %v422
      %821 = vmatprep.subr.bf16.mxu0 0
      %822 = vmatpush1.bf16.msra.mxu0 %v423
      %823 = vmatprep.subr.bf16.mxu0 0
      %824 = vmatpush1.bf16.msra.mxu0 %v424
      %825 = vmatprep.subr.bf16.mxu0 0
      %826 = vmatpush1.bf16.msra.mxu0 %v425
      %827 = vmatprep.subr.bf16.mxu0 0
      %828 = vmatpush1.bf16.msra.mxu0 %v426
      %829 = vmatprep.subr.bf16.mxu0 0
      %830 = vmatpush1.bf16.msra.mxu0 %v427
      %831 = vmatprep.subr.bf16.mxu0 0
      %832 = vmatpush1.bf16.msra.mxu0 %v428
      %833 = vmatprep.subr.bf16.mxu0 0
      %834 = vmatpush1.bf16.msra.mxu0 %v429
      %835 = vmatprep.subr.bf16.mxu0 0
      %836 = vmatpush1.bf16.msra.mxu0 %v430
      %837 = vmatprep.subr.bf16.mxu0 0
      %838 = vmatpush1.bf16.msra.mxu0 %v431
      %839 = vmatprep.subr.bf16.mxu0 0
      %840 = vmatpush1.bf16.msra.mxu0 %v432
      %841 = vmatprep.subr.bf16.mxu0 0
      %842 = vmatpush1.bf16.msra.mxu0 %v433
      %843 = vmatprep.subr.bf16.mxu0 0
      %844 = vmatpush1.bf16.msra.mxu0 %v434
      %845 = vmatprep.mubr.bf16.mxu0 %v802
      %846 = vmatmul.mubr.bf16.gmra.mrb[0].mxu0 %v801
      %v847 = vpop.f32.mrb[0].mxu0
      %v848 = vadd.f32 0.0, %v847
      %v849 = vpop.f32.mrb[0].mxu0
      %v850 = vpop.f32.mrb[0].mxu0
      %v851 = vadd.f32 0.0, %v850
      %v852 = vpop.f32.mrb[0].mxu0
      %853 = vdwg.mxu0
      %854 = vmatprep.subr.bf16.mxu0 0
      %855 = vmatpush1.bf16.msra.mxu0 %v435
      %856 = vmatprep.subr.bf16.mxu0 0
      %857 = vmatpush1.bf16.msra.mxu0 %v436
      %858 = vmatprep.subr.bf16.mxu0 0
      %859 = vmatpush1.bf16.msra.mxu0 %v437
      %860 = vmatprep.subr.bf16.mxu0 0
      %861 = vmatpush1.bf16.msra.mxu0 %v438
      %862 = vmatprep.subr.bf16.mxu0 0
      %863 = vmatpush1.bf16.msra.mxu0 %v439
      %864 = vmatprep.subr.bf16.mxu0 0
      %865 = vmatpush1.bf16.msra.mxu0 %v440
      %866 = vmatprep.subr.bf16.mxu0 0
      %867 = vmatpush1.bf16.msra.mxu0 %v441
      %868 = vmatprep.subr.bf16.mxu0 0
      %869 = vmatpush1.bf16.msra.mxu0 %v442
      %870 = vmatprep.subr.bf16.mxu0 0
      %871 = vmatpush1.bf16.msra.mxu0 %v443
      %872 = vmatprep.subr.bf16.mxu0 0
      %873 = vmatpush1.bf16.msra.mxu0 %v444
      %874 = vmatprep.subr.bf16.mxu0 0
      %875 = vmatpush1.bf16.msra.mxu0 %v445
      %876 = vmatprep.subr.bf16.mxu0 0
      %877 = vmatpush1.bf16.msra.mxu0 %v446
      %878 = vmatprep.subr.bf16.mxu0 0
      %879 = vmatpush1.bf16.msra.mxu0 %v447
      %880 = vmatprep.subr.bf16.mxu0 0
      %881 = vmatpush1.bf16.msra.mxu0 %v448
      %882 = vmatprep.subr.bf16.mxu0 0
      %883 = vmatpush1.bf16.msra.mxu0 %v449
      %884 = vmatprep.subr.bf16.mxu0 0
      %885 = vmatpush1.bf16.msra.mxu0 %v450
      %886 = vmatprep.mubr.bf16.mxu0 %v804
      %887 = vmatmul.mubr.bf16.gmra.mrb[0].mxu0 %v803
      %v888 = vpop.f32.mrb[0].mxu0
      %v889 = vadd.f32 %v848, %v888
      %v890 = vpop.f32.mrb[0].mxu0
      %v891 = vpop.f32.mrb[0].mxu0
      %v892 = vadd.f32 %v851, %v891
      %v893 = vpop.f32.mrb[0].mxu0
      %894 = vdwg.mxu0
      %895 = vmatprep.subr.bf16.mxu0 0
      %896 = vmatpush1.bf16.msra.mxu0 %v451
      %897 = vmatprep.subr.bf16.mxu0 0
      %898 = vmatpush1.bf16.msra.mxu0 %v452
      %899 = vmatprep.subr.bf16.mxu0 0
      %900 = vmatpush1.bf16.msra.mxu0 %v453
      %901 = vmatprep.subr.bf16.mxu0 0
      %902 = vmatpush1.bf16.msra.mxu0 %v454
      %903 = vmatprep.subr.bf16.mxu0 0
      %904 = vmatpush1.bf16.msra.mxu0 0
      %905 = vmatprep.subr.bf16.mxu0 0
      %906 = vmatpush1.bf16.msra.mxu0 0
      %907 = vmatprep.subr.bf16.mxu0 0
      %908 = vmatpush1.bf16.msra.mxu0 0
      %909 = vmatprep.subr.bf16.mxu0 0
      %910 = vmatpush1.bf16.msra.mxu0 0
      %911 = vmatprep.subr.bf16.mxu0 0
      %912 = vmatpush1.bf16.msra.mxu0 0
      %913 = vmatprep.subr.bf16.mxu0 0
      %914 = vmatpush1.bf16.msra.mxu0 0
      %915 = vmatprep.subr.bf16.mxu0 0
      %916 = vmatpush1.bf16.msra.mxu0 0
      %917 = vmatprep.subr.bf16.mxu0 0
      %918 = vmatpush1.bf16.msra.mxu0 0
      %919 = vmatprep.subr.bf16.mxu0 0
      %920 = vmatpush1.bf16.msra.mxu0 0
      %921 = vmatprep.subr.bf16.mxu0 0
      %922 = vmatpush1.bf16.msra.mxu0 0
      %923 = vmatprep.subr.bf16.mxu0 0
      %924 = vmatpush1.bf16.msra.mxu0 0
      %925 = vmatprep.subr.bf16.mxu0 0
      %926 = vmatpush1.bf16.msra.mxu0 0
      %927 = vmatprep.mubr.bf16.mxu0 0
      %928 = vmatmul.mubr.bf16.gmra.mrb[0].mxu0 %v811
      %v929 = vpop.f32.mrb[0].mxu0
      %v930 = vadd.f32 %v889, %v929
      %v931 = vpop.f32.mrb[0].mxu0
      %v932 = vpop.f32.mrb[0].mxu0
      %v933 = vadd.f32 %v892, %v932
      %v934 = vpop.f32.mrb[0].mxu0
      %935 = vdwg.mxu0
      %v936 = vmax.f32 %v776, %v930
      %v937 = vmax.f32 %v777, %v933
      %s938 = scalar_lea.vmem %s165, 120
      %v939 = vld [vmem:[%s938] sm:$0xff]
      %v940 = vld [vmem:[%s938 + $0x8] sm:$0xff]
      %v941 = vld [vmem:[%s938 + $0x10] sm:$0xf]
      %v942 = vld [vmem:[%s938 + $0x14] sm:$0xff]
      %v943 = vld [vmem:[%s938 + $0x1c] sm:$0xff]
      %v944 = vld [vmem:[%s938 + $0x24] sm:$0xf]
      %v951 = vunpack.c.l.b16 %v939
      %v952 = vunpack.c.h.b16 %v939
      %v953 = vunpack.c.l.b16 %v940
      %v954 = vunpack.c.h.b16 %v940
      %v955 = vunpack.c.l.b16 %v941
      %v956 = vunpack.c.l.b16 %v942
      %v957 = vunpack.c.h.b16 %v942
      %v958 = vunpack.c.l.b16 %v943
      %v959 = vunpack.c.h.b16 %v943
      %v960 = vunpack.c.l.b16 %v944
      %v961 = vpack.c.b16 %v956, %v951
      %v962 = vpack.c.b16 %v957, %v952
      %v963 = vpack.c.b16 %v958, %v953
      %v964 = vpack.c.b16 %v959, %v954
      %v965 = vpack.c.b16 %v960, %v955
      %v971 = vsel %vm491, %v965, 0
      %973 = vmatprep.subr.bf16.mxu0 0
      %974 = vmatpush1.bf16.msra.mxu0 %v419
      %975 = vmatprep.subr.bf16.mxu0 0
      %976 = vmatpush1.bf16.msra.mxu0 %v420
      %977 = vmatprep.subr.bf16.mxu0 0
      %978 = vmatpush1.bf16.msra.mxu0 %v421
      %979 = vmatprep.subr.bf16.mxu0 0
      %980 = vmatpush1.bf16.msra.mxu0 %v422
      %981 = vmatprep.subr.bf16.mxu0 0
      %982 = vmatpush1.bf16.msra.mxu0 %v423
      %983 = vmatprep.subr.bf16.mxu0 0
      %984 = vmatpush1.bf16.msra.mxu0 %v424
      %985 = vmatprep.subr.bf16.mxu0 0
      %986 = vmatpush1.bf16.msra.mxu0 %v425
      %987 = vmatprep.subr.bf16.mxu0 0
      %988 = vmatpush1.bf16.msra.mxu0 %v426
      %989 = vmatprep.subr.bf16.mxu0 0
      %990 = vmatpush1.bf16.msra.mxu0 %v427
      %991 = vmatprep.subr.bf16.mxu0 0
      %992 = vmatpush1.bf16.msra.mxu0 %v428
      %993 = vmatprep.subr.bf16.mxu0 0
      %994 = vmatpush1.bf16.msra.mxu0 %v429
      %995 = vmatprep.subr.bf16.mxu0 0
      %996 = vmatpush1.bf16.msra.mxu0 %v430
      %997 = vmatprep.subr.bf16.mxu0 0
      %998 = vmatpush1.bf16.msra.mxu0 %v431
      %999 = vmatprep.subr.bf16.mxu0 0
      %1000 = vmatpush1.bf16.msra.mxu0 %v432
      %1001 = vmatprep.subr.bf16.mxu0 0
      %1002 = vmatpush1.bf16.msra.mxu0 %v433
      %1003 = vmatprep.subr.bf16.mxu0 0
      %1004 = vmatpush1.bf16.msra.mxu0 %v434
      %1005 = vmatprep.mubr.bf16.mxu0 %v962
      %1006 = vmatmul.mubr.bf16.gmra.mrb[0].mxu0 %v961
      %v1007 = vpop.f32.mrb[0].mxu0
      %v1008 = vadd.f32 0.0, %v1007
      %v1009 = vpop.f32.mrb[0].mxu0
      %v1010 = vpop.f32.mrb[0].mxu0
      %v1011 = vadd.f32 0.0, %v1010
      %v1012 = vpop.f32.mrb[0].mxu0
      %1013 = vdwg.mxu0
      %1014 = vmatprep.subr.bf16.mxu0 0
      %1015 = vmatpush1.bf16.msra.mxu0 %v435
      %1016 = vmatprep.subr.bf16.mxu0 0
      %1017 = vmatpush1.bf16.msra.mxu0 %v436
      %1018 = vmatprep.subr.bf16.mxu0 0
      %1019 = vmatpush1.bf16.msra.mxu0 %v437
      %1020 = vmatprep.subr.bf16.mxu0 0
      %1021 = vmatpush1.bf16.msra.mxu0 %v438
      %1022 = vmatprep.subr.bf16.mxu0 0
      %1023 = vmatpush1.bf16.msra.mxu0 %v439
      %1024 = vmatprep.subr.bf16.mxu0 0
      %1025 = vmatpush1.bf16.msra.mxu0 %v440
      %1026 = vmatprep.subr.bf16.mxu0 0
      %1027 = vmatpush1.bf16.msra.mxu0 %v441
      %1028 = vmatprep.subr.bf16.mxu0 0
      %1029 = vmatpush1.bf16.msra.mxu0 %v442
      %1030 = vmatprep.subr.bf16.mxu0 0
      %1031 = vmatpush1.bf16.msra.mxu0 %v443
      %1032 = vmatprep.subr.bf16.mxu0 0
      %1033 = vmatpush1.bf16.msra.mxu0 %v444
      %1034 = vmatprep.subr.bf16.mxu0 0
      %1035 = vmatpush1.bf16.msra.mxu0 %v445
      %1036 = vmatprep.subr.bf16.mxu0 0
      %1037 = vmatpush1.bf16.msra.mxu0 %v446
      %1038 = vmatprep.subr.bf16.mxu0 0
      %1039 = vmatpush1.bf16.msra.mxu0 %v447
      %1040 = vmatprep.subr.bf16.mxu0 0
      %1041 = vmatpush1.bf16.msra.mxu0 %v448
      %1042 = vmatprep.subr.bf16.mxu0 0
      %1043 = vmatpush1.bf16.msra.mxu0 %v449
      %1044 = vmatprep.subr.bf16.mxu0 0
      %1045 = vmatpush1.bf16.msra.mxu0 %v450
      %1046 = vmatprep.mubr.bf16.mxu0 %v964
      %1047 = vmatmul.mubr.bf16.gmra.mrb[0].mxu0 %v963
      %v1048 = vpop.f32.mrb[0].mxu0
      %v1049 = vadd.f32 %v1008, %v1048
      %v1050 = vpop.f32.mrb[0].mxu0
      %v1051 = vpop.f32.mrb[0].mxu0
      %v1052 = vadd.f32 %v1011, %v1051
      %v1053 = vpop.f32.mrb[0].mxu0
      %1054 = vdwg.mxu0
      %1055 = vmatprep.subr.bf16.mxu0 0
      %1056 = vmatpush1.bf16.msra.mxu0 %v451
      %1057 = vmatprep.subr.bf16.mxu0 0
      %1058 = vmatpush1.bf16.msra.mxu0 %v452
      %1059 = vmatprep.subr.bf16.mxu0 0
      %1060 = vmatpush1.bf16.msra.mxu0 %v453
      %1061 = vmatprep.subr.bf16.mxu0 0
      %1062 = vmatpush1.bf16.msra.mxu0 %v454
      %1063 = vmatprep.subr.bf16.mxu0 0
      %1064 = vmatpush1.bf16.msra.mxu0 0
      %1065 = vmatprep.subr.bf16.mxu0 0
      %1066 = vmatpush1.bf16.msra.mxu0 0
      %1067 = vmatprep.subr.bf16.mxu0 0
      %1068 = vmatpush1.bf16.msra.mxu0 0
      %1069 = vmatprep.subr.bf16.mxu0 0
      %1070 = vmatpush1.bf16.msra.mxu0 0
      %1071 = vmatprep.subr.bf16.mxu0 0
      %1072 = vmatpush1.bf16.msra.mxu0 0
      %1073 = vmatprep.subr.bf16.mxu0 0
      %1074 = vmatpush1.bf16.msra.mxu0 0
      %1075 = vmatprep.subr.bf16.mxu0 0
      %1076 = vmatpush1.bf16.msra.mxu0 0
      %1077 = vmatprep.subr.bf16.mxu0 0
      %1078 = vmatpush1.bf16.msra.mxu0 0
      %1079 = vmatprep.subr.bf16.mxu0 0
      %1080 = vmatpush1.bf16.msra.mxu0 0
      %1081 = vmatprep.subr.bf16.mxu0 0
      %1082 = vmatpush1.bf16.msra.mxu0 0
      %1083 = vmatprep.subr.bf16.mxu0 0
      %1084 = vmatpush1.bf16.msra.mxu0 0
      %1085 = vmatprep.subr.bf16.mxu0 0
      %1086 = vmatpush1.bf16.msra.mxu0 0
      %1087 = vmatprep.mubr.bf16.mxu0 0
      %1088 = vmatmul.mubr.bf16.gmra.mrb[0].mxu0 %v971
      %v1089 = vpop.f32.mrb[0].mxu0
      %v1090 = vadd.f32 %v1049, %v1089
      %v1091 = vpop.f32.mrb[0].mxu0
      %v1092 = vpop.f32.mrb[0].mxu0
      %v1093 = vadd.f32 %v1052, %v1092
      %v1094 = vpop.f32.mrb[0].mxu0
      %1095 = vdwg.mxu0
      %v1096 = vmax.f32 %v936, %v1090
      %v1097 = vmax.f32 %v937, %v1093
      %v1098 = vld [vmem:[%s2] sm:$0x1]
      %v1100 = vlaneseq
      %v1101 = vshrl.u32 %v1100, 7
      %v1102 = vsub.s32 0, %v1101
      %v1103 = vrot.slane %v1098, %v1102
      %v1105 = vadd.f32 %v1096, %v1103
      %v1106 = vadd.f32 %v1097, %v1103
      %v1107 = vmax.f32 %v1105, 0.0
      %v1108 = vmax.f32 %v1106, 0.0
      %v1109 = vpack.c.bf16 %v1108, %v1107
      %v1111 = vunpack.c.l.b16 %v1109
      %v1112 = vunpack.c.h.b16 %v1109
      %v1113 = vpack.c.b16 %v1111, %v1111
      %v1114 = vpack.c.b16 %v1112, %v1112
      %1117 = vst [vmem:[%s170] sm:$0xf] %v1113
      %1118 = vst [vmem:[%s170 + $0x4] sm:$0xf] %v1114
      %p1119 = scmp.lt.s32.totalorder %s14, 1
      %s1120 = scalar_select %p1119, %s14, 1
      %s1121 = smul.addr %s1120, 2
      %s1122 = smul.addr %s1121, 4
      %s1123 = scalar_lea.vmem %s3, %s1122
      // Predicated region
      $region33: #{medical_mnist_cnn_forward.6} parent=31 // pred_check
        %p1124 = pneg %p100
      $region34: #{medical_mnist_cnn_forward.6} parent=31 // pred_check_branch
        %1126 = sbr.rel (%p1124) target = $region36
      $region35: #{medical_mnist_cnn_forward.6} parent=31 // pred_region
        _
      $region36: #{medical_mnist_cnn_forward.6} parent=31 // pred_fallthru
        _
    $region32: #{medical_mnist_cnn_forward.6} parent=5 // pred_fallthru
      _
    %p1127 = scmp.le.s32.totalorder 2, %s9
    // Predicated region
    $region37: #{medical_mnist_cnn_forward.6} parent=5 // pred_check
      %p1128 = pneg %p1127
    $region38: #{medical_mnist_cnn_forward.6} parent=5 // pred_check_branch
      %1130 = sbr.rel (%p1128) target = $region40
    $region39: #{medical_mnist_cnn_forward.6} parent=5 // pred_region
      %s1131 = ssub.s32 %s9, 2
      // Predicated region
      $region41: #{medical_mnist_cnn_forward.6} parent=39 // pred_check
        %p1132 = pneg %p106
      $region42: #{medical_mnist_cnn_forward.6} parent=39 // pred_check_branch
        %1134 = sbr.rel (%p1132) target = $region44
      $region43: #{medical_mnist_cnn_forward.6} parent=39 // pred_region
        %p1135 = scmp.lt.s32.totalorder %s15, 1
        %s1136 = scalar_select %p1135, %s15, 1
        %s1137 = smul.addr %s1136, 2
        %s1138 = smul.addr %s1137, 4
        %s1139 = scalar_lea.vmem %s3, %s1138
      $region44: #{medical_mnist_cnn_forward.6} parent=39 // pred_fallthru
        _
    $region40: #{medical_mnist_cnn_forward.6} parent=5 // pred_fallthru
      _
  $region6: #{medical_mnist_cnn_forward.6} parent=0 // loop_footer
    %s13 = sadd.s32 1, %s9
  $region7: #{medical_mnist_cnn_forward.6} parent=0 // loop_footer_branch
    %8 = sbr.rel target = $region3
  $region8: #{medical_mnist_cnn_forward.6} parent=0 // loop_exit
    _

// kernel: medical_mnist_cnn_forward.7
$region0: #{medical_mnist_cnn_forward.7}
  #allocation0 [shape = 'u32[]', space=smem, size = 0x4, offset = 0x4, fixed_abs, tag = 'smem constant byte address 0x4 - core index']
  #allocation1 [shape = 'u32[144,128]{1,0:T(1,128)}', space=vmem, size = 0x12000, scoped, tag = 'internal scratch']
  %s0 = inlined_call_operand.vmem [shape: bf16[2,4,1,1152], index: 0, kind: input, shape index: {}]
  %s1 = inlined_call_operand.vmem [shape: bf16[1152,256], index: 1, kind: input, shape index: {}]
  %s2 = inlined_call_operand.vmem [shape: f32[1,256], index: 2, kind: input, shape index: {}]
  %s3 = inlined_call_operand.vmem [shape: bf16[256,128], index: 3, kind: input, shape index: {}]
  %s4 = inlined_call_operand.vmem [shape: f32[1,128], index: 4, kind: input, shape index: {}]
  %s5 = inlined_call_operand.vmem [shape: bf16[128,6], index: 5, kind: input, shape index: {}]
  %s6 = inlined_call_operand.vmem [shape: f32[1,6], index: 6, kind: input, shape index: {}]
  %s7 = inlined_call_operand.hbm [shape: f32[2,1,6], index: 7, kind: output, shape index: {}]
  %s8 = sld [smem:[#allocation0]]
  $region61: #{medical_mnist_cnn_forward.7} parent=0
    _
  %s10 = ssub.s32 1, %s8
  %s11 = scalar_select 0, %s10, %s8
  $region1: #{medical_mnist_cnn_forward.7} parent=0
    #allocation2 [shape = 'u8[1024]{0}', space=vmem, size = 0x400, scoped, tag = 'output window, operand 0']
    #allocation3 [shape = 's32[2]{0}', space=sflag, size = 0x8, scoped, tag = 'scoped memory for medical_mnist_cnn_forward.7']
    %12 = vsyncpa [#allocation3], 0
    %s13 = scalar_lea.sflag [#allocation3], 1
    %14 = vsyncpa %s13, 0
    loop: start=0, step=1, limit=4
    $region2: #{medical_mnist_cnn_forward.7} parent=1 // loop_pre_header
      _
    $region3: #{medical_mnist_cnn_forward.7} parent=1 // loop_header
      %s16 = sphi 0, %s20
      %p17 = scmp.ge.s32.totalorder %s16, 4
      %s26 = sphi 0, %s28
      %s29 = sphi 0, %s26
      %s30 = sphi 0, %s29
      %s46 = sphi 0, %s30
      %s50 = sphi 0, %s50
      %s52 = sphi 0, %s50
      %s53 = sphi 0, %s52
      %s67 = sphi 0, %s53
      %s71 = sphi 0, %s71
      %s73 = sphi 0, %s71
      %s74 = sphi 0, %s73
      %s88 = sphi 0, %s74
      %s92 = sphi 0, %s92
      %s94 = sphi 0, %s92
      %s95 = sphi 0, %s94
      %s109 = sphi 0, %s95
      %s113 = sphi 0, %s113
      %s115 = sphi 0, %s113
      %s116 = sphi 0, %s115
      %s130 = sphi 0, %s116
      %s134 = sphi 0, %s134
      %s136 = sphi 0, %s134
      %s137 = sphi 0, %s136
      %s151 = sphi 0, %s137
      %s155 = sphi 0, %s155
      %s157 = sphi 0, %s155
      %s158 = sphi 0, %s157
      %s172 = sphi 0, %s158
      %s178 = sphi 0, %s180
      %s181 = sphi 0, %s178
      %s182 = sphi 0, %s181
      %s198 = sphi 0, %s182
    $region4: #{medical_mnist_cnn_forward.7} parent=1 // loop_header_branch
      %19 = sbr.rel (%p17) target = $region8
    $region5: #{medical_mnist_cnn_forward.7} parent=1 // loop_body
      %s21 = ssub.s32 %s16, 1
      %s22 = ssub.s32 %s16, 2
      %s23 = sadd.s32 %s16, 1
      %s24 = ssub.s32 %s16, %s23
      %p25 = scmp.eq.s32.totalorder %s24, 0
      %s27 = sadd.s32 %s26, 1
      %s28 = scalar_select %p25, %s26, %s27
      %p31 = pneg %p25
      %p32 = scmp.eq.s32.totalorder %s16, 1
      %p33 = por %p31, %p32
      %p34 = scmp.ne.s32.totalorder %s26, %s29
      %p35 = scmp.eq.s32.totalorder %s16, 0
      %p36 = por %p34, %p35
      %p37 = scmp.ne.s32.totalorder %s26, %s29
      %p38 = scmp.eq.s32.totalorder %s21, 1
      %p39 = por %p37, %p38
      %p40 = scmp.ne.s32.totalorder %s29, %s30
      %p41 = scmp.eq.s32.totalorder %s21, 0
      %p42 = por %p40, %p41
      %p43 = scmp.ne.s32.totalorder %s29, %s30
      %p44 = scmp.eq.s32.totalorder %s22, 1
      %p45 = por %p43, %p44
      %p47 = scmp.ne.s32.totalorder %s30, %s46
      %p48 = scmp.eq.s32.totalorder %s22, 0
      %p49 = por %p47, %p48
      %s51 = sadd.s32 %s50, 1
      %p54 = scmp.eq.s32.totalorder %s16, 1
      %p55 = scmp.ne.s32.totalorder %s50, %s52
      %p56 = scmp.eq.s32.totalorder %s16, 0
      %p57 = por %p55, %p56
      %p58 = scmp.ne.s32.totalorder %s50, %s52
      %p59 = scmp.eq.s32.totalorder %s21, 1
      %p60 = por %p58, %p59
      %p61 = scmp.ne.s32.totalorder %s52, %s53
      %p62 = scmp.eq.s32.totalorder %s21, 0
      %p63 = por %p61, %p62
      %p64 = scmp.ne.s32.totalorder %s52, %s53
      %p65 = scmp.eq.s32.totalorder %s22, 1
      %p66 = por %p64, %p65
      %p68 = scmp.ne.s32.totalorder %s53, %s67
      %p69 = scmp.eq.s32.totalorder %s22, 0
      %p70 = por %p68, %p69
      %s72 = sadd.s32 %s71, 1
      %p75 = scmp.eq.s32.totalorder %s16, 1
      %p76 = scmp.ne.s32.totalorder %s71, %s73
      %p77 = scmp.eq.s32.totalorder %s16, 0
      %p78 = por %p76, %p77
      %p79 = scmp.ne.s32.totalorder %s71, %s73
      %p80 = scmp.eq.s32.totalorder %s21, 1
      %p81 = por %p79, %p80
      %p82 = scmp.ne.s32.totalorder %s73, %s74
      %p83 = scmp.eq.s32.totalorder %s21, 0
      %p84 = por %p82, %p83
      %p85 = scmp.ne.s32.totalorder %s73, %s74
      %p86 = scmp.eq.s32.totalorder %s22, 1
      %p87 = por %p85, %p86
      %p89 = scmp.ne.s32.totalorder %s74, %s88
      %p90 = scmp.eq.s32.totalorder %s22, 0
      %p91 = por %p89, %p90
      %s93 = sadd.s32 %s92, 1
      %p96 = scmp.eq.s32.totalorder %s16, 1
      %p97 = scmp.ne.s32.totalorder %s92, %s94
      %p98 = scmp.eq.s32.totalorder %s16, 0
      %p99 = por %p97, %p98
      %p100 = scmp.ne.s32.totalorder %s92, %s94
      %p101 = scmp.eq.s32.totalorder %s21, 1
      %p102 = por %p100, %p101
      %p103 = scmp.ne.s32.totalorder %s94, %s95
      %p104 = scmp.eq.s32.totalorder %s21, 0
      %p105 = por %p103, %p104
      %p106 = scmp.ne.s32.totalorder %s94, %s95
      %p107 = scmp.eq.s32.totalorder %s22, 1
      %p108 = por %p106, %p107
      %p110 = scmp.ne.s32.totalorder %s95, %s109
      %p111 = scmp.eq.s32.totalorder %s22, 0
      %p112 = por %p110, %p111
      %s114 = sadd.s32 %s113, 1
      %p117 = scmp.eq.s32.totalorder %s16, 1
      %p118 = scmp.ne.s32.totalorder %s113, %s115
      %p119 = scmp.eq.s32.totalorder %s16, 0
      %p120 = por %p118, %p119
      %p121 = scmp.ne.s32.totalorder %s113, %s115
      %p122 = scmp.eq.s32.totalorder %s21, 1
      %p123 = por %p121, %p122
      %p124 = scmp.ne.s32.totalorder %s115, %s116
      %p125 = scmp.eq.s32.totalorder %s21, 0
      %p126 = por %p124, %p125
      %p127 = scmp.ne.s32.totalorder %s115, %s116
      %p128 = scmp.eq.s32.totalorder %s22, 1
      %p129 = por %p127, %p128
      %p131 = scmp.ne.s32.totalorder %s116, %s130
      %p132 = scmp.eq.s32.totalorder %s22, 0
      %p133 = por %p131, %p132
      %s135 = sadd.s32 %s134, 1
      %p138 = scmp.eq.s32.totalorder %s16, 1
      %p139 = scmp.ne.s32.totalorder %s134, %s136
      %p140 = scmp.eq.s32.totalorder %s16, 0
      %p141 = por %p139, %p140
      %p142 = scmp.ne.s32.totalorder %s134, %s136
      %p143 = scmp.eq.s32.totalorder %s21, 1
      %p144 = por %p142, %p143
      %p145 = scmp.ne.s32.totalorder %s136, %s137
      %p146 = scmp.eq.s32.totalorder %s21, 0
      %p147 = por %p145, %p146
      %p148 = scmp.ne.s32.totalorder %s136, %s137
      %p149 = scmp.eq.s32.totalorder %s22, 1
      %p150 = por %p148, %p149
      %p152 = scmp.ne.s32.totalorder %s137, %s151
      %p153 = scmp.eq.s32.totalorder %s22, 0
      %p154 = por %p152, %p153
      %s156 = sadd.s32 %s155, 1
      %p159 = scmp.eq.s32.totalorder %s16, 1
      %p160 = scmp.ne.s32.totalorder %s155, %s157
      %p161 = scmp.eq.s32.totalorder %s16, 0
      %p162 = por %p160, %p161
      %p163 = scmp.ne.s32.totalorder %s155, %s157
      %p164 = scmp.eq.s32.totalorder %s21, 1
      %p165 = por %p163, %p164
      %p166 = scmp.ne.s32.totalorder %s157, %s158
      %p167 = scmp.eq.s32.totalorder %s21, 0
      %p168 = por %p166, %p167
      %p169 = scmp.ne.s32.totalorder %s157, %s158
      %p170 = scmp.eq.s32.totalorder %s22, 1
      %p171 = por %p169, %p170
      %p173 = scmp.ne.s32.totalorder %s158, %s172
      %p174 = scmp.eq.s32.totalorder %s22, 0
      %p175 = por %p173, %p174
      %s176 = ssub.s32 %s16, %s23
      %p177 = scmp.eq.s32.totalorder %s176, 0
      %s179 = sadd.s32 %s178, 1
      %s180 = scalar_select %p177, %s178, %s179
      %p183 = pneg %p177
      %p184 = scmp.eq.s32.totalorder %s16, 1
      %p185 = por %p183, %p184
      %p186 = scmp.ne.s32.totalorder %s178, %s181
      %p187 = scmp.eq.s32.totalorder %s16, 0
      %p188 = por %p186, %p187
      %p189 = scmp.ne.s32.totalorder %s178, %s181
      %p190 = scmp.eq.s32.totalorder %s21, 1
      %p191 = por %p189, %p190
      %p192 = scmp.ne.s32.totalorder %s181, %s182
      %p193 = scmp.eq.s32.totalorder %s21, 0
      %p194 = por %p192, %p193
      %p195 = scmp.ne.s32.totalorder %s181, %s182
      %p196 = scmp.eq.s32.totalorder %s22, 1
      %p197 = por %p195, %p196
      %p199 = scmp.ne.s32.totalorder %s182, %s198
      %p200 = scmp.eq.s32.totalorder %s22, 0
      %p201 = por %p199, %p200
      %p202 = scmp.le.s32.totalorder 1, %s16
      %p203 = scmp.lt.s32.totalorder %s16, 3
      %p204 = pnand %p202, %p203
      %p205 = pneg %p204
      // Predicated region
      $region9: #{medical_mnist_cnn_forward.7} parent=5 // pred_check
        _
      $region10: #{medical_mnist_cnn_forward.7} parent=5 // pred_check_branch
        %207 = sbr.rel (%p204) target = $region12
      $region11: #{medical_mnist_cnn_forward.7} parent=5 // pred_region
        %s208 = ssub.s32 %s16, 1
        // Predicated region
        $region13: #{medical_mnist_cnn_forward.7} parent=11 // pred_check
          %p209 = pneg %p63
        $region14: #{medical_mnist_cnn_forward.7} parent=11 // pred_check_branch
          %211 = sbr.rel (%p209) target = $region16
        $region15: #{medical_mnist_cnn_forward.7} parent=11 // pred_region
          _
        $region16: #{medical_mnist_cnn_forward.7} parent=11 // pred_fallthru
          _
        // Predicated region
        $region17: #{medical_mnist_cnn_forward.7} parent=11 // pred_check
          %p212 = pneg %p84
        $region18: #{medical_mnist_cnn_forward.7} parent=11 // pred_check_branch
          %214 = sbr.rel (%p212) target = $region20
        $region19: #{medical_mnist_cnn_forward.7} parent=11 // pred_region
          _
        $region20: #{medical_mnist_cnn_forward.7} parent=11 // pred_fallthru
          _
        // Predicated region
        $region21: #{medical_mnist_cnn_forward.7} parent=11 // pred_check
          %p215 = pneg %p105
        $region22: #{medical_mnist_cnn_forward.7} parent=11 // pred_check_branch
          %217 = sbr.rel (%p215) target = $region24
        $region23: #{medical_mnist_cnn_forward.7} parent=11 // pred_region
          _
        $region24: #{medical_mnist_cnn_forward.7} parent=11 // pred_fallthru
          _
        // Predicated region
        $region25: #{medical_mnist_cnn_forward.7} parent=11 // pred_check
          %p218 = pneg %p126
        $region26: #{medical_mnist_cnn_forward.7} parent=11 // pred_check_branch
          %220 = sbr.rel (%p218) target = $region28
        $region27: #{medical_mnist_cnn_forward.7} parent=11 // pred_region
          _
        $region28: #{medical_mnist_cnn_forward.7} parent=11 // pred_fallthru
          _
        // Predicated region
        $region29: #{medical_mnist_cnn_forward.7} parent=11 // pred_check
          %p221 = pneg %p147
        $region30: #{medical_mnist_cnn_forward.7} parent=11 // pred_check_branch
          %223 = sbr.rel (%p221) target = $region32
        $region31: #{medical_mnist_cnn_forward.7} parent=11 // pred_region
          _
        $region32: #{medical_mnist_cnn_forward.7} parent=11 // pred_fallthru
          _
        // Predicated region
        $region33: #{medical_mnist_cnn_forward.7} parent=11 // pred_check
          %p224 = pneg %p168
        $region34: #{medical_mnist_cnn_forward.7} parent=11 // pred_check_branch
          %226 = sbr.rel (%p224) target = $region36
        $region35: #{medical_mnist_cnn_forward.7} parent=11 // pred_region
          _
        $region36: #{medical_mnist_cnn_forward.7} parent=11 // pred_fallthru
          _
      $region12: #{medical_mnist_cnn_forward.7} parent=5 // pred_fallthru
        _
      %p227 = scmp.lt.s32.totalorder %s16, 2
      // Predicated region
      $region37: #{medical_mnist_cnn_forward.7} parent=5 // pred_check
        %p228 = pneg %p227
      $region38: #{medical_mnist_cnn_forward.7} parent=5 // pred_check_branch
        %230 = sbr.rel (%p228) target = $region40
      $region39: #{medical_mnist_cnn_forward.7} parent=5 // pred_region
        // Predicated region
        $region41: #{medical_mnist_cnn_forward.7} parent=39 // pred_check
          %p231 = pneg %p36
        $region42: #{medical_mnist_cnn_forward.7} parent=39 // pred_check_branch
          %233 = sbr.rel (%p231) target = $region44
        $region43: #{medical_mnist_cnn_forward.7} parent=39 // pred_region
          %p234 = scmp.lt.s32.totalorder %s16, 1
          %s235 = scalar_select %p234, %s16, 1
          %s236 = smul.addr %s235, 36
          %s237 = scalar_lea.vmem %s0, %s236
        $region44: #{medical_mnist_cnn_forward.7} parent=39 // pred_fallthru
          _
      $region40: #{medical_mnist_cnn_forward.7} parent=5 // pred_fallthru
        _
      %p238 = scmp.le.s32.totalorder 1, %s16
      %p239 = scmp.lt.s32.totalorder %s16, 3
      %p240 = pnand %p238, %p239
      %p241 = pneg %p240
      // Predicated region
      $region45: #{medical_mnist_cnn_forward.7} parent=5 // pred_check
        _
      $region46: #{medical_mnist_cnn_forward.7} parent=5 // pred_check_branch
        %243 = sbr.rel (%p240) target = $region48
      $region47: #{medical_mnist_cnn_forward.7} parent=5 // pred_region
        %s244 = ssub.s32 %s16, 1
        %p245 = scmp.lt.s32.totalorder %s21, 1
        %s246 = scalar_select %p245, %s21, 1
        %s247 = smul.addr %s246, 36
        %s248 = scalar_lea.vmem %s0, %s247
        %p249 = pneg %p42
        %p250 = pneg %p39
        %p251 = pneg %p63
        %p252 = pneg %p60
        %p253 = pneg %p84
        %p254 = pneg %p81
        %p255 = pneg %p105
        %p256 = pneg %p102
        %p257 = pneg %p126
        %p258 = pneg %p123
        %p259 = pneg %p147
        %p260 = pneg %p144
        %p261 = pneg %p168
        %p262 = pneg %p165
        %p263 = pneg %p194
        %p264 = pneg %p191
        %s265 = sand.u32 %s181, 1
        %s266 = scalar_lea.sflag [#allocation3], %s265
        %s267 = sand.u32 %s181, 1
        %s268 = scalar_lea.vmem [#allocation2], %s267
        %p269 = scmp.lt.s32.totalorder %s21, 1
        %s270 = scalar_select %p269, %s21, 1
        %s271 = smul.addr %s270, 36
        %s272 = scalar_lea.vmem %s0, %s271
        %v274 = vld [vmem:[%s1] sm:$0xff]
        %v275 = vld [vmem:[%s1 + $0x8] sm:$0xff]
        %v276 = vld [vmem:[%s1 + $0x10] sm:$0xff]
        %v277 = vld [vmem:[%s1 + $0x18] sm:$0xff]
        %v278 = vld [vmem:[%s1 + $0x20] sm:$0xff]
        %v279 = vld [vmem:[%s1 + $0x28] sm:$0xff]
        %v280 = vld [vmem:[%s1 + $0x30] sm:$0xff]
        %v281 = vld [vmem:[%s1 + $0x38] sm:$0xff]
        %v282 = vld [vmem:[%s1 + $0x40] sm:$0xff]
        %v283 = vld [vmem:[%s1 + $0x48] sm:$0xff]
        %v284 = vld [vmem:[%s1 + $0x50] sm:$0xff]
        %v285 = vld [vmem:[%s1 + $0x58] sm:$0xff]
        %v286 = vld [vmem:[%s1 + $0x60] sm:$0xff]
        %v287 = vld [vmem:[%s1 + $0x68] sm:$0xff]
        %v288 = vld [vmem:[%s1 + $0x70] sm:$0xff]
        %v289 = vld [vmem:[%s1 + $0x78] sm:$0xff]
        %v290 = vld [vmem:[%s1 + $0x80] sm:$0xff]
        %v291 = vld [vmem:[%s1 + $0x88] sm:$0xff]
        %v292 = vld [vmem:[%s1 + $0x90] sm:$0xff]
        %v293 = vld [vmem:[%s1 + $0x98] sm:$0xff]
        %v294 = vld [vmem:[%s1 + $0xa0] sm:$0xff]
        %v295 = vld [vmem:[%s1 + $0xa8] sm:$0xff]
        %v296 = vld [vmem:[%s1 + $0xb0] sm:$0xff]
        %v297 = vld [vmem:[%s1 + $0xb8] sm:$0xff]
        %v298 = vld [vmem:[%s1 + $0xc0] sm:$0xff]
        %v299 = vld [vmem:[%s1 + $0xc8] sm:$0xff]
        %v300 = vld [vmem:[%s1 + $0xd0] sm:$0xff]
        %v301 = vld [vmem:[%s1 + $0xd8] sm:$0xff]
        %v302 = vld [vmem:[%s1 + $0xe0] sm:$0xff]
        %v303 = vld [vmem:[%s1 + $0xe8] sm:$0xff]
        %v304 = vld [vmem:[%s1 + $0xf0] sm:$0xff]
        %v305 = vld [vmem:[%s1 + $0xf8] sm:$0xff]
        %v306 = vld [vmem:[%s1 + $0x100] sm:$0xff]
        %v307 = vld [vmem:[%s1 + $0x108] sm:$0xff]
        %v308 = vld [vmem:[%s1 + $0x110] sm:$0xff]
        %v309 = vld [vmem:[%s1 + $0x118] sm:$0xff]
        %v310 = vld [vmem:[%s1 + $0x120] sm:$0xff]
        %v311 = vld [vmem:[%s1 + $0x128] sm:$0xff]
        %v312 = vld [vmem:[%s1 + $0x130] sm:$0xff]
        %v313 = vld [vmem:[%s1 + $0x138] sm:$0xff]
        %v314 = vld [vmem:[%s1 + $0x140] sm:$0xff]
        %v315 = vld [vmem:[%s1 + $0x148] sm:$0xff]
        %v316 = vld [vmem:[%s1 + $0x150] sm:$0xff]
        %v317 = vld [vmem:[%s1 + $0x158] sm:$0xff]
        %v318 = vld [vmem:[%s1 + $0x160] sm:$0xff]
        %v319 = vld [vmem:[%s1 + $0x168] sm:$0xff]
        %v320 = vld [vmem:[%s1 + $0x170] sm:$0xff]
        %v321 = vld [vmem:[%s1 + $0x178] sm:$0xff]
        %v322 = vld [vmem:[%s1 + $0x180] sm:$0xff]
        %v323 = vld [vmem:[%s1 + $0x188] sm:$0xff]
        %v324 = vld [vmem:[%s1 + $0x190] sm:$0xff]
        %v325 = vld [vmem:[%s1 + $0x198] sm:$0xff]
        %v326 = vld [vmem:[%s1 + $0x1a0] sm:$0xff]
        %v327 = vld [vmem:[%s1 + $0x1a8] sm:$0xff]
        %v328 = vld [vmem:[%s1 + $0x1b0] sm:$0xff]
        %v329 = vld [vmem:[%s1 + $0x1b8] sm:$0xff]
        %v330 = vld [vmem:[%s1 + $0x1c0] sm:$0xff]
        %v331 = vld [vmem:[%s1 + $0x1c8] sm:$0xff]
        %v332 = vld [vmem:[%s1 + $0x1d0] sm:$0xff]
        %v333 = vld [vmem:[%s1 + $0x1d8] sm:$0xff]
        %v334 = vld [vmem:[%s1 + $0x1e0] sm:$0xff]
        %v335 = vld [vmem:[%s1 + $0x1e8] sm:$0xff]
        %v336 = vld [vmem:[%s1 + $0x1f0] sm:$0xff]
        %v337 = vld [vmem:[%s1 + $0x1f8] sm:$0xff]
        %v338 = vld [vmem:[%s1 + $0x200] sm:$0xff]
        %v339 = vld [vmem:[%s1 + $0x208] sm:$0xff]
        %v340 = vld [vmem:[%s1 + $0x210] sm:$0xff]
        %v341 = vld [vmem:[%s1 + $0x218] sm:$0xff]
        %v342 = vld [vmem:[%s1 + $0x220] sm:$0xff]
        %v343 = vld [vmem:[%s1 + $0x228] sm:$0xff]
        %v344 = vld [vmem:[%s1 + $0x230] sm:$0xff]
        %v345 = vld [vmem:[%s1 + $0x238] sm:$0xff]
        %v346 = vld [vmem:[%s1 + $0x240] sm:$0xff]
        %v347 = vld [vmem:[%s1 + $0x248] sm:$0xff]
        %v348 = vld [vmem:[%s1 + $0x250] sm:$0xff]
        %v349 = vld [vmem:[%s1 + $0x258] sm:$0xff]
        %v350 = vld [vmem:[%s1 + $0x260] sm:$0xff]
        %v351 = vld [vmem:[%s1 + $0x268] sm:$0xff]
        %v352 = vld [vmem:[%s1 + $0x270] sm:$0xff]
        %v353 = vld [vmem:[%s1 + $0x278] sm:$0xff]
        %v354 = vld [vmem:[%s1 + $0x280] sm:$0xff]
        %v355 = vld [vmem:[%s1 + $0x288] sm:$0xff]
        %v356 = vld [vmem:[%s1 + $0x290] sm:$0xff]
        %v357 = vld [vmem:[%s1 + $0x298] sm:$0xff]
        %v358 = vld [vmem:[%s1 + $0x2a0] sm:$0xff]
        %v359 = vld [vmem:[%s1 + $0x2a8] sm:$0xff]
        %v360 = vld [vmem:[%s1 + $0x2b0] sm:$0xff]
        %v361 = vld [vmem:[%s1 + $0x2b8] sm:$0xff]
        %v362 = vld [vmem:[%s1 + $0x2c0] sm:$0xff]
        %v363 = vld [vmem:[%s1 + $0x2c8] sm:$0xff]
        %v364 = vld [vmem:[%s1 + $0x2d0] sm:$0xff]
        %v365 = vld [vmem:[%s1 + $0x2d8] sm:$0xff]
        %v366 = vld [vmem:[%s1 + $0x2e0] sm:$0xff]
        %v367 = vld [vmem:[%s1 + $0x2e8] sm:$0xff]
        %v368 = vld [vmem:[%s1 + $0x2f0] sm:$0xff]
        %v369 = vld [vmem:[%s1 + $0x2f8] sm:$0xff]
        %v370 = vld [vmem:[%s1 + $0x300] sm:$0xff]
        %v371 = vld [vmem:[%s1 + $0x308] sm:$0xff]
        %v372 = vld [vmem:[%s1 + $0x310] sm:$0xff]
        %v373 = vld [vmem:[%s1 + $0x318] sm:$0xff]
        %v374 = vld [vmem:[%s1 + $0x320] sm:$0xff]
        %v375 = vld [vmem:[%s1 + $0x328] sm:$0xff]
        %v376 = vld [vmem:[%s1 + $0x330] sm:$0xff]
        %v377 = vld [vmem:[%s1 + $0x338] sm:$0xff]
        %v378 = vld [vmem:[%s1 + $0x340] sm:$0xff]
        %v379 = vld [vmem:[%s1 + $0x348] sm:$0xff]
        %v380 = vld [vmem:[%s1 + $0x350] sm:$0xff]
        %v381 = vld [vmem:[%s1 + $0x358] sm:$0xff]
        %v382 = vld [vmem:[%s1 + $0x360] sm:$0xff]
        %v383 = vld [vmem:[%s1 + $0x368] sm:$0xff]
        %v384 = vld [vmem:[%s1 + $0x370] sm:$0xff]
        %v385 = vld [vmem:[%s1 + $0x378] sm:$0xff]
        %v386 = vld [vmem:[%s1 + $0x380] sm:$0xff]
        %v387 = vld [vmem:[%s1 + $0x388] sm:$0xff]
        %v388 = vld [vmem:[%s1 + $0x390] sm:$0xff]
        %v389 = vld [vmem:[%s1 + $0x398] sm:$0xff]
        %v390 = vld [vmem:[%s1 + $0x3a0] sm:$0xff]
        %v391 = vld [vmem:[%s1 + $0x3a8] sm:$0xff]
        %v392 = vld [vmem:[%s1 + $0x3b0] sm:$0xff]
        %v393 = vld [vmem:[%s1 + $0x3b8] sm:$0xff]
        %v394 = vld [vmem:[%s1 + $0x3c0] sm:$0xff]
        %v395 = vld [vmem:[%s1 + $0x3c8] sm:$0xff]
        %v396 = vld [vmem:[%s1 + $0x3d0] sm:$0xff]
        %v397 = vld [vmem:[%s1 + $0x3d8] sm:$0xff]
        %v398 = vld [vmem:[%s1 + $0x3e0] sm:$0xff]
        %v399 = vld [vmem:[%s1 + $0x3e8] sm:$0xff]
        %v400 = vld [vmem:[%s1 + $0x3f0] sm:$0xff]
        %v401 = vld [vmem:[%s1 + $0x3f8] sm:$0xff]
        %v402 = vld [vmem:[%s1 + $0x400] sm:$0xff]
        %v403 = vld [vmem:[%s1 + $0x408] sm:$0xff]
        %v404 = vld [vmem:[%s1 + $0x410] sm:$0xff]
        %v405 = vld [vmem:[%s1 + $0x418] sm:$0xff]
        %v406 = vld [vmem:[%s1 + $0x420] sm:$0xff]
        %v407 = vld [vmem:[%s1 + $0x428] sm:$0xff]
        %v408 = vld [vmem:[%s1 + $0x430] sm:$0xff]
        %v409 = vld [vmem:[%s1 + $0x438] sm:$0xff]
        %v410 = vld [vmem:[%s1 + $0x440] sm:$0xff]
        %v411 = vld [vmem:[%s1 + $0x448] sm:$0xff]
        %v412 = vld [vmem:[%s1 + $0x450] sm:$0xff]
        %v413 = vld [vmem:[%s1 + $0x458] sm:$0xff]
        %v414 = vld [vmem:[%s1 + $0x460] sm:$0xff]
        %v415 = vld [vmem:[%s1 + $0x468] sm:$0xff]
        %v416 = vld [vmem:[%s1 + $0x470] sm:$0xff]
        %v417 = vld [vmem:[%s1 + $0x478] sm:$0xff]
        %v418 = vld [vmem:[%s272] sm:$0xff]
        %v419 = vld [vmem:[%s272 + $0x8] sm:$0x1]
        %v422 = vcombine.high %v418, %v418
        %v424 = vunpack.c.l.s4 1966171168
        %v425 = vunpack.c.0.s8 %v424
        %v426 = vlaneseq
        %v427 = vshrl.u32 %v426, 7
        %v428 = vsub.s32 %v425, %v427
        %v429 = vrot.slane %v418, %v428
        %v431 = vunpack.c.l.s4 1966171168
        %v432 = vunpack.c.0.s8 %v431
        %v433 = vlaneseq
        %v434 = vshrl.u32 %v433, 7
        %v435 = vsub.s32 %v432, %v434
        %v436 = vrot.slane %v422, %v435
        %v437 = vcombine.high %v429, %v429
        %v438 = vcombine.high %v436, %v436
        %v440 = vunpack.c.l.s4 1966171168
        %v441 = vunpack.c.0.s8 %v440
        %v442 = vlaneseq
        %v443 = vshrl.u32 %v442, 7
        %v444 = vsub.s32 %v441, %v443
        %v445 = vrot.slane %v429, %v444
        %v447 = vunpack.c.l.s4 1966171168
        %v448 = vunpack.c.0.s8 %v447
        %v449 = vlaneseq
        %v450 = vshrl.u32 %v449, 7
        %v451 = vsub.s32 %v448, %v450
        %v452 = vrot.slane %v436, %v451
        %v454 = vunpack.c.l.s4 1966171168
        %v455 = vunpack.c.0.s8 %v454
        %v456 = vlaneseq
        %v457 = vshrl.u32 %v456, 7
        %v458 = vsub.s32 %v455, %v457
        %v459 = vrot.slane %v437, %v458
        %v461 = vunpack.c.l.s4 1966171168
        %v462 = vunpack.c.0.s8 %v461
        %v463 = vlaneseq
        %v464 = vshrl.u32 %v463, 7
        %v465 = vsub.s32 %v462, %v464
        %v466 = vrot.slane %v438, %v465
        %v467 = vcombine.high %v445, %v445
        %v468 = vcombine.high %v452, %v452
        %v469 = vcombine.high %v459, %v459
        %v470 = vcombine.high %v466, %v466
        %v472 = vunpack.c.l.s4 1966171168
        %v473 = vunpack.c.0.s8 %v472
        %v474 = vlaneseq
        %v475 = vshrl.u32 %v474, 7
        %v476 = vsub.s32 %v473, %v475
        %v477 = vrot.slane %v419, %v476
        %v479 = vunpack.c.l.s4 1966171168
        %v480 = vunpack.c.0.s8 %v479
        %v481 = vlaneseq
        %v482 = vshrl.u32 %v481, 7
        %v483 = vsub.s32 %v480, %v482
        %v484 = vrot.slane %v477, %v483
        %v638 = vunpack.c.l.b16 %v274
        %v639 = vunpack.c.h.b16 %v274
        %v640 = vunpack.c.l.b16 %v275
        %v641 = vunpack.c.h.b16 %v275
        %v642 = vunpack.c.l.b16 %v276
        %v643 = vunpack.c.h.b16 %v276
        %v644 = vunpack.c.l.b16 %v277
        %v645 = vunpack.c.h.b16 %v277
        %v646 = vunpack.c.l.b16 %v278
        %v647 = vunpack.c.h.b16 %v278
        %v648 = vunpack.c.l.b16 %v279
        %v649 = vunpack.c.h.b16 %v279
        %v650 = vunpack.c.l.b16 %v280
        %v651 = vunpack.c.h.b16 %v280
        %v652 = vunpack.c.l.b16 %v281
        %v653 = vunpack.c.h.b16 %v281
        %v654 = vunpack.c.l.b16 %v282
        %v655 = vunpack.c.h.b16 %v282
        %v656 = vunpack.c.l.b16 %v283
        %v657 = vunpack.c.h.b16 %v283
        %v658 = vunpack.c.l.b16 %v284
        %v659 = vunpack.c.h.b16 %v284
        %v660 = vunpack.c.l.b16 %v285
        %v661 = vunpack.c.h.b16 %v285
        %v662 = vunpack.c.l.b16 %v286
        %v663 = vunpack.c.h.b16 %v286
        %v664 = vunpack.c.l.b16 %v287
        %v665 = vunpack.c.h.b16 %v287
        %v666 = vunpack.c.l.b16 %v288
        %v667 = vunpack.c.h.b16 %v288
        %v668 = vunpack.c.l.b16 %v289
        %v669 = vunpack.c.h.b16 %v289
        %v670 = vunpack.c.l.b16 %v290
        %v671 = vunpack.c.h.b16 %v290
        %v672 = vunpack.c.l.b16 %v291
        %v673 = vunpack.c.h.b16 %v291
        %v674 = vunpack.c.l.b16 %v292
        %v675 = vunpack.c.h.b16 %v292
        %v676 = vunpack.c.l.b16 %v293
        %v677 = vunpack.c.h.b16 %v293
        %v678 = vunpack.c.l.b16 %v294
        %v679 = vunpack.c.h.b16 %v294
        %v680 = vunpack.c.l.b16 %v295
        %v681 = vunpack.c.h.b16 %v295
        %v682 = vunpack.c.l.b16 %v296
        %v683 = vunpack.c.h.b16 %v296
        %v684 = vunpack.c.l.b16 %v297
        %v685 = vunpack.c.h.b16 %v297
        %v686 = vunpack.c.l.b16 %v298
        %v687 = vunpack.c.h.b16 %v298
        %v688 = vunpack.c.l.b16 %v299
        %v689 = vunpack.c.h.b16 %v299
        %v690 = vunpack.c.l.b16 %v300
        %v691 = vunpack.c.h.b16 %v300
        %v692 = vunpack.c.l.b16 %v301
        %v693 = vunpack.c.h.b16 %v301
        %v694 = vunpack.c.l.b16 %v302
        %v695 = vunpack.c.h.b16 %v302
        %v696 = vunpack.c.l.b16 %v303
        %v697 = vunpack.c.h.b16 %v303
        %v698 = vunpack.c.l.b16 %v304
        %v699 = vunpack.c.h.b16 %v304
        %v700 = vunpack.c.l.b16 %v305
        %v701 = vunpack.c.h.b16 %v305
        %v702 = vunpack.c.l.b16 %v306
        %v703 = vunpack.c.h.b16 %v306
        %v704 = vunpack.c.l.b16 %v307
        %v705 = vunpack.c.h.b16 %v307
        %v706 = vunpack.c.l.b16 %v308
        %v707 = vunpack.c.h.b16 %v308
        %v708 = vunpack.c.l.b16 %v309
        %v709 = vunpack.c.h.b16 %v309
        %v710 = vunpack.c.l.b16 %v310
        %v711 = vunpack.c.h.b16 %v310
        %v712 = vunpack.c.l.b16 %v311
        %v713 = vunpack.c.h.b16 %v311
        %v714 = vunpack.c.l.b16 %v312
        %v715 = vunpack.c.h.b16 %v312
        %v716 = vunpack.c.l.b16 %v313
        %v717 = vunpack.c.h.b16 %v313
        %v718 = vunpack.c.l.b16 %v314
        %v719 = vunpack.c.h.b16 %v314
        %v720 = vunpack.c.l.b16 %v315
        %v721 = vunpack.c.h.b16 %v315
        %v722 = vunpack.c.l.b16 %v316
        %v723 = vunpack.c.h.b16 %v316
        %v724 = vunpack.c.l.b16 %v317
        %v725 = vunpack.c.h.b16 %v317
        %v726 = vunpack.c.l.b16 %v318
        %v727 = vunpack.c.h.b16 %v318
        %v728 = vunpack.c.l.b16 %v319
        %v729 = vunpack.c.h.b16 %v319
        %v730 = vunpack.c.l.b16 %v320
        %v731 = vunpack.c.h.b16 %v320
        %v732 = vunpack.c.l.b16 %v321
        %v733 = vunpack.c.h.b16 %v321
        %v734 = vunpack.c.l.b16 %v322
        %v735 = vunpack.c.h.b16 %v322
        %v736 = vunpack.c.l.b16 %v323
        %v737 = vunpack.c.h.b16 %v323
        %v738 = vunpack.c.l.b16 %v324
        %v739 = vunpack.c.h.b16 %v324
        %v740 = vunpack.c.l.b16 %v325
        %v741 = vunpack.c.h.b16 %v325
        %v742 = vunpack.c.l.b16 %v326
        %v743 = vunpack.c.h.b16 %v326
        %v744 = vunpack.c.l.b16 %v327
        %v745 = vunpack.c.h.b16 %v327
        %v746 = vunpack.c.l.b16 %v328
        %v747 = vunpack.c.h.b16 %v328
        %v748 = vunpack.c.l.b16 %v329
        %v749 = vunpack.c.h.b16 %v329
        %v750 = vunpack.c.l.b16 %v330
        %v751 = vunpack.c.h.b16 %v330
        %v752 = vunpack.c.l.b16 %v331
        %v753 = vunpack.c.h.b16 %v331
        %v754 = vunpack.c.l.b16 %v332
        %v755 = vunpack.c.h.b16 %v332
        %v756 = vunpack.c.l.b16 %v333
        %v757 = vunpack.c.h.b16 %v333
        %v758 = vunpack.c.l.b16 %v334
        %v759 = vunpack.c.h.b16 %v334
        %v760 = vunpack.c.l.b16 %v335
        %v761 = vunpack.c.h.b16 %v335
        %v762 = vunpack.c.l.b16 %v336
        %v763 = vunpack.c.h.b16 %v336
        %v764 = vunpack.c.l.b16 %v337
        %v765 = vunpack.c.h.b16 %v337
        %v766 = vunpack.c.l.b16 %v338
        %v767 = vunpack.c.h.b16 %v338
        %v768 = vunpack.c.l.b16 %v339
        %v769 = vunpack.c.h.b16 %v339
        %v770 = vunpack.c.l.b16 %v340
        %v771 = vunpack.c.h.b16 %v340
        %v772 = vunpack.c.l.b16 %v341
        %v773 = vunpack.c.h.b16 %v341
        %v774 = vunpack.c.l.b16 %v342
        %v775 = vunpack.c.h.b16 %v342
        %v776 = vunpack.c.l.b16 %v343
        %v777 = vunpack.c.h.b16 %v343
        %v778 = vunpack.c.l.b16 %v344
        %v779 = vunpack.c.h.b16 %v344
        %v780 = vunpack.c.l.b16 %v345
        %v781 = vunpack.c.h.b16 %v345
        %v782 = vunpack.c.l.b16 %v346
        %v783 = vunpack.c.h.b16 %v346
        %v784 = vunpack.c.l.b16 %v347
        %v785 = vunpack.c.h.b16 %v347
        %v786 = vunpack.c.l.b16 %v348
        %v787 = vunpack.c.h.b16 %v348
        %v788 = vunpack.c.l.b16 %v349
        %v789 = vunpack.c.h.b16 %v349
        %v790 = vunpack.c.l.b16 %v350
        %v791 = vunpack.c.h.b16 %v350
        %v792 = vunpack.c.l.b16 %v351
        %v793 = vunpack.c.h.b16 %v351
        %v794 = vunpack.c.l.b16 %v352
        %v795 = vunpack.c.h.b16 %v352
        %v796 = vunpack.c.l.b16 %v353
        %v797 = vunpack.c.h.b16 %v353
        %v798 = vunpack.c.l.b16 %v354
        %v799 = vunpack.c.h.b16 %v354
        %v800 = vunpack.c.l.b16 %v355
        %v801 = vunpack.c.h.b16 %v355
        %v802 = vunpack.c.l.b16 %v356
        %v803 = vunpack.c.h.b16 %v356
        %v804 = vunpack.c.l.b16 %v357
        %v805 = vunpack.c.h.b16 %v357
        %v806 = vunpack.c.l.b16 %v358
        %v807 = vunpack.c.h.b16 %v358
        %v808 = vunpack.c.l.b16 %v359
        %v809 = vunpack.c.h.b16 %v359
        %v810 = vunpack.c.l.b16 %v360
        %v811 = vunpack.c.h.b16 %v360
        %v812 = vunpack.c.l.b16 %v361
        %v813 = vunpack.c.h.b16 %v361
        %v814 = vunpack.c.l.b16 %v362
        %v815 = vunpack.c.h.b16 %v362
        %v816 = vunpack.c.l.b16 %v363
        %v817 = vunpack.c.h.b16 %v363
        %v818 = vunpack.c.l.b16 %v364
        %v819 = vunpack.c.h.b16 %v364
        %v820 = vunpack.c.l.b16 %v365
        %v821 = vunpack.c.h.b16 %v365
        %v822 = vunpack.c.l.b16 %v366
        %v823 = vunpack.c.h.b16 %v366
        %v824 = vunpack.c.l.b16 %v367
        %v825 = vunpack.c.h.b16 %v367
        %v826 = vunpack.c.l.b16 %v368
        %v827 = vunpack.c.h.b16 %v368
        %v828 = vunpack.c.l.b16 %v369
        %v829 = vunpack.c.h.b16 %v369
        %v830 = vunpack.c.l.b16 %v370
        %v831 = vunpack.c.h.b16 %v370
        %v832 = vunpack.c.l.b16 %v371
        %v833 = vunpack.c.h.b16 %v371
        %v834 = vunpack.c.l.b16 %v372
        %v835 = vunpack.c.h.b16 %v372
        %v836 = vunpack.c.l.b16 %v373
        %v837 = vunpack.c.h.b16 %v373
        %v838 = vunpack.c.l.b16 %v374
        %v839 = vunpack.c.h.b16 %v374
        %v840 = vunpack.c.l.b16 %v375
        %v841 = vunpack.c.h.b16 %v375
        %v842 = vunpack.c.l.b16 %v376
        %v843 = vunpack.c.h.b16 %v376
        %v844 = vunpack.c.l.b16 %v377
        %v845 = vunpack.c.h.b16 %v377
        %v846 = vunpack.c.l.b16 %v378
        %v847 = vunpack.c.h.b16 %v378
        %v848 = vunpack.c.l.b16 %v379
        %v849 = vunpack.c.h.b16 %v379
        %v850 = vunpack.c.l.b16 %v380
        %v851 = vunpack.c.h.b16 %v380
        %v852 = vunpack.c.l.b16 %v381
        %v853 = vunpack.c.h.b16 %v381
        %v854 = vunpack.c.l.b16 %v382
        %v855 = vunpack.c.h.b16 %v382
        %v856 = vunpack.c.l.b16 %v383
        %v857 = vunpack.c.h.b16 %v383
        %v858 = vunpack.c.l.b16 %v384
        %v859 = vunpack.c.h.b16 %v384
        %v860 = vunpack.c.l.b16 %v385
        %v861 = vunpack.c.h.b16 %v385
        %v862 = vunpack.c.l.b16 %v386
        %v863 = vunpack.c.h.b16 %v386
        %v864 = vunpack.c.l.b16 %v387
        %v865 = vunpack.c.h.b16 %v387
        %v866 = vunpack.c.l.b16 %v388
        %v867 = vunpack.c.h.b16 %v388
        %v868 = vunpack.c.l.b16 %v389
        %v869 = vunpack.c.h.b16 %v389
        %v870 = vunpack.c.l.b16 %v390
        %v871 = vunpack.c.h.b16 %v390
        %v872 = vunpack.c.l.b16 %v391
        %v873 = vunpack.c.h.b16 %v391
        %v874 = vunpack.c.l.b16 %v392
        %v875 = vunpack.c.h.b16 %v392
        %v876 = vunpack.c.l.b16 %v393
        %v877 = vunpack.c.h.b16 %v393
        %v878 = vunpack.c.l.b16 %v394
        %v879 = vunpack.c.h.b16 %v394
        %v880 = vunpack.c.l.b16 %v395
        %v881 = vunpack.c.h.b16 %v395
        %v882 = vunpack.c.l.b16 %v396
        %v883 = vunpack.c.h.b16 %v396
        %v884 = vunpack.c.l.b16 %v397
        %v885 = vunpack.c.h.b16 %v397
        %v886 = vunpack.c.l.b16 %v398
        %v887 = vunpack.c.h.b16 %v398
        %v888 = vunpack.c.l.b16 %v399
        %v889 = vunpack.c.h.b16 %v399
        %v890 = vunpack.c.l.b16 %v400
        %v891 = vunpack.c.h.b16 %v400
        %v892 = vunpack.c.l.b16 %v401
        %v893 = vunpack.c.h.b16 %v401
        %v894 = vunpack.c.l.b16 %v402
        %v895 = vunpack.c.h.b16 %v402
        %v896 = vunpack.c.l.b16 %v403
        %v897 = vunpack.c.h.b16 %v403
        %v898 = vunpack.c.l.b16 %v404
        %v899 = vunpack.c.h.b16 %v404
        %v900 = vunpack.c.l.b16 %v405
        %v901 = vunpack.c.h.b16 %v405
        %v902 = vunpack.c.l.b16 %v406
        %v903 = vunpack.c.h.b16 %v406
        %v904 = vunpack.c.l.b16 %v407
        %v905 = vunpack.c.h.b16 %v407
        %v906 = vunpack.c.l.b16 %v408
        %v907 = vunpack.c.h.b16 %v408
        %v908 = vunpack.c.l.b16 %v409
        %v909 = vunpack.c.h.b16 %v409
        %v910 = vunpack.c.l.b16 %v410
        %v911 = vunpack.c.h.b16 %v410
        %v912 = vunpack.c.l.b16 %v411
        %v913 = vunpack.c.h.b16 %v411
        %v914 = vunpack.c.l.b16 %v412
        %v915 = vunpack.c.h.b16 %v412
        %v916 = vunpack.c.l.b16 %v413
        %v917 = vunpack.c.h.b16 %v413
        %v918 = vunpack.c.l.b16 %v414
        %v919 = vunpack.c.h.b16 %v414
        %v920 = vunpack.c.l.b16 %v415
        %v921 = vunpack.c.h.b16 %v415
        %v922 = vunpack.c.l.b16 %v416
        %v923 = vunpack.c.h.b16 %v416
        %v924 = vunpack.c.l.b16 %v417
        %v925 = vunpack.c.h.b16 %v417
        %v926 = vpack.c.b16 %v640, %v638
        %v927 = vpack.c.b16 %v641, %v639
        %v928 = vpack.c.b16 %v644, %v642
        %v929 = vpack.c.b16 %v645, %v643
        %v930 = vpack.c.b16 %v648, %v646
        %v931 = vpack.c.b16 %v649, %v647
        %v932 = vpack.c.b16 %v652, %v650
        %v933 = vpack.c.b16 %v653, %v651
        %v934 = vpack.c.b16 %v656, %v654
        %v935 = vpack.c.b16 %v657, %v655
        %v936 = vpack.c.b16 %v660, %v658
        %v937 = vpack.c.b16 %v661, %v659
        %v938 = vpack.c.b16 %v664, %v662
        %v939 = vpack.c.b16 %v665, %v663
        %v940 = vpack.c.b16 %v668, %v666
        %v941 = vpack.c.b16 %v669, %v667
        %v942 = vpack.c.b16 %v672, %v670
        %v943 = vpack.c.b16 %v673, %v671
        %v944 = vpack.c.b16 %v676, %v674
        %v945 = vpack.c.b16 %v677, %v675
        %v946 = vpack.c.b16 %v680, %v678
        %v947 = vpack.c.b16 %v681, %v679
        %v948 = vpack.c.b16 %v684, %v682
        %v949 = vpack.c.b16 %v685, %v683
        %v950 = vpack.c.b16 %v688, %v686
        %v951 = vpack.c.b16 %v689, %v687
        %v952 = vpack.c.b16 %v692, %v690
        %v953 = vpack.c.b16 %v693, %v691
        %v954 = vpack.c.b16 %v696, %v694
        %v955 = vpack.c.b16 %v697, %v695
        %v956 = vpack.c.b16 %v700, %v698
        %v957 = vpack.c.b16 %v701, %v699
        %v958 = vpack.c.b16 %v704, %v702
        %v959 = vpack.c.b16 %v705, %v703
        %v960 = vpack.c.b16 %v708, %v706
        %v961 = vpack.c.b16 %v709, %v707
        %v962 = vpack.c.b16 %v712, %v710
        %v963 = vpack.c.b16 %v713, %v711
        %v964 = vpack.c.b16 %v716, %v714
        %v965 = vpack.c.b16 %v717, %v715
        %v966 = vpack.c.b16 %v720, %v718
        %v967 = vpack.c.b16 %v721, %v719
        %v968 = vpack.c.b16 %v724, %v722
        %v969 = vpack.c.b16 %v725, %v723
        %v970 = vpack.c.b16 %v728, %v726
        %v971 = vpack.c.b16 %v729, %v727
        %v972 = vpack.c.b16 %v732, %v730
        %v973 = vpack.c.b16 %v733, %v731
        %v974 = vpack.c.b16 %v736, %v734
        %v975 = vpack.c.b16 %v737, %v735
        %v976 = vpack.c.b16 %v740, %v738
        %v977 = vpack.c.b16 %v741, %v739
        %v978 = vpack.c.b16 %v744, %v742
        %v979 = vpack.c.b16 %v745, %v743
        %v980 = vpack.c.b16 %v748, %v746
        %v981 = vpack.c.b16 %v749, %v747
        %v982 = vpack.c.b16 %v752, %v750
        %v983 = vpack.c.b16 %v753, %v751
        %v984 = vpack.c.b16 %v756, %v754
        %v985 = vpack.c.b16 %v757, %v755
        %v986 = vpack.c.b16 %v760, %v758
        %v987 = vpack.c.b16 %v761, %v759
        %v988 = vpack.c.b16 %v764, %v762
        %v989 = vpack.c.b16 %v765, %v763
        %v990 = vpack.c.b16 %v768, %v766
        %v991 = vpack.c.b16 %v769, %v767
        %v992 = vpack.c.b16 %v772, %v770
        %v993 = vpack.c.b16 %v773, %v771
        %v994 = vpack.c.b16 %v776, %v774
        %v995 = vpack.c.b16 %v777, %v775
        %v996 = vpack.c.b16 %v780, %v778
        %v997 = vpack.c.b16 %v781, %v779
        %v998 = vpack.c.b16 %v784, %v782
        %v999 = vpack.c.b16 %v785, %v783
        %v1000 = vpack.c.b16 %v788, %v786
        %v1001 = vpack.c.b16 %v789, %v787
        %v1002 = vpack.c.b16 %v792, %v790
        %v1003 = vpack.c.b16 %v793, %v791
        %v1004 = vpack.c.b16 %v796, %v794
        %v1005 = vpack.c.b16 %v797, %v795
        %v1006 = vpack.c.b16 %v800, %v798
        %v1007 = vpack.c.b16 %v801, %v799
        %v1008 = vpack.c.b16 %v804, %v802
        %v1009 = vpack.c.b16 %v805, %v803
        %v1010 = vpack.c.b16 %v808, %v806
        %v1011 = vpack.c.b16 %v809, %v807
        %v1012 = vpack.c.b16 %v812, %v810
        %v1013 = vpack.c.b16 %v813, %v811
        %v1014 = vpack.c.b16 %v816, %v814
        %v1015 = vpack.c.b16 %v817, %v815
        %v1016 = vpack.c.b16 %v820, %v818
        %v1017 = vpack.c.b16 %v821, %v819
        %v1018 = vpack.c.b16 %v824, %v822
        %v1019 = vpack.c.b16 %v825, %v823
        %v1020 = vpack.c.b16 %v828, %v826
        %v1021 = vpack.c.b16 %v829, %v827
        %v1022 = vpack.c.b16 %v832, %v830
        %v1023 = vpack.c.b16 %v833, %v831
        %v1024 = vpack.c.b16 %v836, %v834
        %v1025 = vpack.c.b16 %v837, %v835
        %v1026 = vpack.c.b16 %v840, %v838
        %v1027 = vpack.c.b16 %v841, %v839
        %v1028 = vpack.c.b16 %v844, %v842
        %v1029 = vpack.c.b16 %v845, %v843
        %v1030 = vpack.c.b16 %v848, %v846
        %v1031 = vpack.c.b16 %v849, %v847
        %v1032 = vpack.c.b16 %v852, %v850
        %v1033 = vpack.c.b16 %v853, %v851
        %v1034 = vpack.c.b16 %v856, %v854
        %v1035 = vpack.c.b16 %v857, %v855
        %v1036 = vpack.c.b16 %v860, %v858
        %v1037 = vpack.c.b16 %v861, %v859
        %v1038 = vpack.c.b16 %v864, %v862
        %v1039 = vpack.c.b16 %v865, %v863
        %v1040 = vpack.c.b16 %v868, %v866
        %v1041 = vpack.c.b16 %v869, %v867
        %v1042 = vpack.c.b16 %v872, %v870
        %v1043 = vpack.c.b16 %v873, %v871
        %v1044 = vpack.c.b16 %v876, %v874
        %v1045 = vpack.c.b16 %v877, %v875
        %v1046 = vpack.c.b16 %v880, %v878
        %v1047 = vpack.c.b16 %v881, %v879
        %v1048 = vpack.c.b16 %v884, %v882
        %v1049 = vpack.c.b16 %v885, %v883
        %v1050 = vpack.c.b16 %v888, %v886
        %v1051 = vpack.c.b16 %v889, %v887
        %v1052 = vpack.c.b16 %v892, %v890
        %v1053 = vpack.c.b16 %v893, %v891
        %v1054 = vpack.c.b16 %v896, %v894
        %v1055 = vpack.c.b16 %v897, %v895
        %v1056 = vpack.c.b16 %v900, %v898
        %v1057 = vpack.c.b16 %v901, %v899
        %v1058 = vpack.c.b16 %v904, %v902
        %v1059 = vpack.c.b16 %v905, %v903
        %v1060 = vpack.c.b16 %v908, %v906
        %v1061 = vpack.c.b16 %v909, %v907
        %v1062 = vpack.c.b16 %v912, %v910
        %v1063 = vpack.c.b16 %v913, %v911
        %v1064 = vpack.c.b16 %v916, %v914
        %v1065 = vpack.c.b16 %v917, %v915
        %v1066 = vpack.c.b16 %v920, %v918
        %v1067 = vpack.c.b16 %v921, %v919
        %v1068 = vpack.c.b16 %v924, %v922
        %v1069 = vpack.c.b16 %v925, %v923
        %1214 = vmatprep.subr.bf16.mxu0 %v927
        %1215 = vmatpush1.bf16.msra.mxu0 %v926
        %1216 = vmatprep.subr.bf16.mxu0 %v929
        %1217 = vmatpush1.bf16.msra.mxu0 %v928
        %1218 = vmatprep.subr.bf16.mxu0 %v931
        %1219 = vmatpush1.bf16.msra.mxu0 %v930
        %1220 = vmatprep.subr.bf16.mxu0 %v933
        %1221 = vmatpush1.bf16.msra.mxu0 %v932
        %1222 = vmatprep.subr.bf16.mxu0 %v935
        %1223 = vmatpush1.bf16.msra.mxu0 %v934
        %1224 = vmatprep.subr.bf16.mxu0 %v937
        %1225 = vmatpush1.bf16.msra.mxu0 %v936
        %1226 = vmatprep.subr.bf16.mxu0 %v939
        %1227 = vmatpush1.bf16.msra.mxu0 %v938
        %1228 = vmatprep.subr.bf16.mxu0 %v941
        %1229 = vmatpush1.bf16.msra.mxu0 %v940
        %1230 = vmatprep.subr.bf16.mxu0 %v943
        %1231 = vmatpush1.bf16.msra.mxu0 %v942
        %1232 = vmatprep.subr.bf16.mxu0 %v945
        %1233 = vmatpush1.bf16.msra.mxu0 %v944
        %1234 = vmatprep.subr.bf16.mxu0 %v947
        %1235 = vmatpush1.bf16.msra.mxu0 %v946
        %1236 = vmatprep.subr.bf16.mxu0 %v949
        %1237 = vmatpush1.bf16.msra.mxu0 %v948
        %1238 = vmatprep.subr.bf16.mxu0 %v951
        %1239 = vmatpush1.bf16.msra.mxu0 %v950
        %1240 = vmatprep.subr.bf16.mxu0 %v953
        %1241 = vmatpush1.bf16.msra.mxu0 %v952
        %1242 = vmatprep.subr.bf16.mxu0 %v955
        %1243 = vmatpush1.bf16.msra.mxu0 %v954
        %1244 = vmatprep.subr.bf16.mxu0 %v957
        %1245 = vmatpush1.bf16.msra.mxu0 %v956
        %1246 = vmatprep.mubr.bf16.mxu0 %v459
        %1247 = vmatmul.mubr.bf16.gmra.mrb[0].mxu0 %v445
        %v1248 = vpop.f32.mrb[0].mxu0
        %v1249 = vadd.f32 0.0, %v1248
        %v1250 = vpop.f32.mrb[0].mxu0
        %v1251 = vadd.f32 0.0, %v1250
        %v1252 = vpop.f32.mrb[0].mxu0
        %v1253 = vpop.f32.mrb[0].mxu0
        %1254 = vdwg.mxu0
        %1255 = vmatprep.subr.bf16.mxu0 %v959
        %1256 = vmatpush1.bf16.msra.mxu0 %v958
        %1257 = vmatprep.subr.bf16.mxu0 %v961
        %1258 = vmatpush1.bf16.msra.mxu0 %v960
        %1259 = vmatprep.subr.bf16.mxu0 %v963
        %1260 = vmatpush1.bf16.msra.mxu0 %v962
        %1261 = vmatprep.subr.bf16.mxu0 %v965
        %1262 = vmatpush1.bf16.msra.mxu0 %v964
        %1263 = vmatprep.subr.bf16.mxu0 %v967
        %1264 = vmatpush1.bf16.msra.mxu0 %v966
        %1265 = vmatprep.subr.bf16.mxu0 %v969
        %1266 = vmatpush1.bf16.msra.mxu0 %v968
        %1267 = vmatprep.subr.bf16.mxu0 %v971
        %1268 = vmatpush1.bf16.msra.mxu0 %v970
        %1269 = vmatprep.subr.bf16.mxu0 %v973
        %1270 = vmatpush1.bf16.msra.mxu0 %v972
        %1271 = vmatprep.subr.bf16.mxu0 %v975
        %1272 = vmatpush1.bf16.msra.mxu0 %v974
        %1273 = vmatprep.subr.bf16.mxu0 %v977
        %1274 = vmatpush1.bf16.msra.mxu0 %v976
        %1275 = vmatprep.subr.bf16.mxu0 %v979
        %1276 = vmatpush1.bf16.msra.mxu0 %v978
        %1277 = vmatprep.subr.bf16.mxu0 %v981
        %1278 = vmatpush1.bf16.msra.mxu0 %v980
        %1279 = vmatprep.subr.bf16.mxu0 %v983
        %1280 = vmatpush1.bf16.msra.mxu0 %v982
        %1281 = vmatprep.subr.bf16.mxu0 %v985
        %1282 = vmatpush1.bf16.msra.mxu0 %v984
        %1283 = vmatprep.subr.bf16.mxu0 %v987
        %1284 = vmatpush1.bf16.msra.mxu0 %v986
        %1285 = vmatprep.subr.bf16.mxu0 %v989
        %1286 = vmatpush1.bf16.msra.mxu0 %v988
        %1287 = vmatprep.mubr.bf16.mxu0 %v469
        %1288 = vmatmul.mubr.bf16.gmra.mrb[0].mxu0 %v467
        %v1289 = vpop.f32.mrb[0].mxu0
        %v1290 = vadd.f32 %v1249, %v1289
        %v1291 = vpop.f32.mrb[0].mxu0
        %v1292 = vadd.f32 %v1251, %v1291
        %v1293 = vpop.f32.mrb[0].mxu0
        %v1294 = vpop.f32.mrb[0].mxu0
        %1295 = vdwg.mxu0
        %1296 = vmatprep.subr.bf16.mxu0 %v991
        %1297 = vmatpush1.bf16.msra.mxu0 %v990
        %1298 = vmatprep.subr.bf16.mxu0 %v993
        %1299 = vmatpush1.bf16.msra.mxu0 %v992
        %1300 = vmatprep.subr.bf16.mxu0 %v995
        %1301 = vmatpush1.bf16.msra.mxu0 %v994
        %1302 = vmatprep.subr.bf16.mxu0 %v997
        %1303 = vmatpush1.bf16.msra.mxu0 %v996
        %1304 = vmatprep.subr.bf16.mxu0 %v999
        %1305 = vmatpush1.bf16.msra.mxu0 %v998
        %1306 = vmatprep.subr.bf16.mxu0 %v1001
        %1307 = vmatpush1.bf16.msra.mxu0 %v1000
        %1308 = vmatprep.subr.bf16.mxu0 %v1003
        %1309 = vmatpush1.bf16.msra.mxu0 %v1002
        %1310 = vmatprep.subr.bf16.mxu0 %v1005
        %1311 = vmatpush1.bf16.msra.mxu0 %v1004
        %1312 = vmatprep.subr.bf16.mxu0 %v1007
        %1313 = vmatpush1.bf16.msra.mxu0 %v1006
        %1314 = vmatprep.subr.bf16.mxu0 %v1009
        %1315 = vmatpush1.bf16.msra.mxu0 %v1008
        %1316 = vmatprep.subr.bf16.mxu0 %v1011
        %1317 = vmatpush1.bf16.msra.mxu0 %v1010
        %1318 = vmatprep.subr.bf16.mxu0 %v1013
        %1319 = vmatpush1.bf16.msra.mxu0 %v1012
        %1320 = vmatprep.subr.bf16.mxu0 %v1015
        %1321 = vmatpush1.bf16.msra.mxu0 %v1014
        %1322 = vmatprep.subr.bf16.mxu0 %v1017
        %1323 = vmatpush1.bf16.msra.mxu0 %v1016
        %1324 = vmatprep.subr.bf16.mxu0 %v1019
        %1325 = vmatpush1.bf16.msra.mxu0 %v1018
        %1326 = vmatprep.subr.bf16.mxu0 %v1021
        %1327 = vmatpush1.bf16.msra.mxu0 %v1020
        %1328 = vmatprep.mubr.bf16.mxu0 %v466
        %1329 = vmatmul.mubr.bf16.gmra.mrb[0].mxu0 %v452
        %v1330 = vpop.f32.mrb[0].mxu0
        %v1331 = vadd.f32 %v1290, %v1330
        %v1332 = vpop.f32.mrb[0].mxu0
        %v1333 = vadd.f32 %v1292, %v1332
        %v1334 = vpop.f32.mrb[0].mxu0
        %v1335 = vpop.f32.mrb[0].mxu0
        %1336 = vdwg.mxu0
        %1337 = vmatprep.subr.bf16.mxu0 %v1023
        %1338 = vmatpush1.bf16.msra.mxu0 %v1022
        %1339 = vmatprep.subr.bf16.mxu0 %v1025
        %1340 = vmatpush1.bf16.msra.mxu0 %v1024
        %1341 = vmatprep.subr.bf16.mxu0 %v1027
        %1342 = vmatpush1.bf16.msra.mxu0 %v1026
        %1343 = vmatprep.subr.bf16.mxu0 %v1029
        %1344 = vmatpush1.bf16.msra.mxu0 %v1028
        %1345 = vmatprep.subr.bf16.mxu0 %v1031
        %1346 = vmatpush1.bf16.msra.mxu0 %v1030
        %1347 = vmatprep.subr.bf16.mxu0 %v1033
        %1348 = vmatpush1.bf16.msra.mxu0 %v1032
        %1349 = vmatprep.subr.bf16.mxu0 %v1035
        %1350 = vmatpush1.bf16.msra.mxu0 %v1034
        %1351 = vmatprep.subr.bf16.mxu0 %v1037
        %1352 = vmatpush1.bf16.msra.mxu0 %v1036
        %1353 = vmatprep.subr.bf16.mxu0 %v1039
        %1354 = vmatpush1.bf16.msra.mxu0 %v1038
        %1355 = vmatprep.subr.bf16.mxu0 %v1041
        %1356 = vmatpush1.bf16.msra.mxu0 %v1040
        %1357 = vmatprep.subr.bf16.mxu0 %v1043
        %1358 = vmatpush1.bf16.msra.mxu0 %v1042
        %1359 = vmatprep.subr.bf16.mxu0 %v1045
        %1360 = vmatpush1.bf16.msra.mxu0 %v1044
        %1361 = vmatprep.subr.bf16.mxu0 %v1047
        %1362 = vmatpush1.bf16.msra.mxu0 %v1046
        %1363 = vmatprep.subr.bf16.mxu0 %v1049
        %1364 = vmatpush1.bf16.msra.mxu0 %v1048
        %1365 = vmatprep.subr.bf16.mxu0 %v1051
        %1366 = vmatpush1.bf16.msra.mxu0 %v1050
        %1367 = vmatprep.subr.bf16.mxu0 %v1053
        %1368 = vmatpush1.bf16.msra.mxu0 %v1052
        %1369 = vmatprep.mubr.bf16.mxu0 %v470
        %1370 = vmatmul.mubr.bf16.gmra.mrb[0].mxu0 %v468
        %v1371 = vpop.f32.mrb[0].mxu0
        %v1372 = vadd.f32 %v1331, %v1371
        %v1373 = vpop.f32.mrb[0].mxu0
        %v1374 = vadd.f32 %v1333, %v1373
        %v1375 = vpop.f32.mrb[0].mxu0
        %v1376 = vpop.f32.mrb[0].mxu0
        %1377 = vdwg.mxu0
        %1378 = vmatprep.subr.bf16.mxu0 %v1055
        %1379 = vmatpush1.bf16.msra.mxu0 %v1054
        %1380 = vmatprep.subr.bf16.mxu0 %v1057
        %1381 = vmatpush1.bf16.msra.mxu0 %v1056
        %1382 = vmatprep.subr.bf16.mxu0 %v1059
        %1383 = vmatpush1.bf16.msra.mxu0 %v1058
        %1384 = vmatprep.subr.bf16.mxu0 %v1061
        %1385 = vmatpush1.bf16.msra.mxu0 %v1060
        %1386 = vmatprep.subr.bf16.mxu0 %v1063
        %1387 = vmatpush1.bf16.msra.mxu0 %v1062
        %1388 = vmatprep.subr.bf16.mxu0 %v1065
        %1389 = vmatpush1.bf16.msra.mxu0 %v1064
        %1390 = vmatprep.subr.bf16.mxu0 %v1067
        %1391 = vmatpush1.bf16.msra.mxu0 %v1066
        %1392 = vmatprep.subr.bf16.mxu0 %v1069
        %1393 = vmatpush1.bf16.msra.mxu0 %v1068
        %1394 = vmatprep.subr.bf16.mxu0 0
        %1395 = vmatpush1.bf16.msra.mxu0 0
        %1396 = vmatprep.subr.bf16.mxu0 0
        %1397 = vmatpush1.bf16.msra.mxu0 0
        %1398 = vmatprep.subr.bf16.mxu0 0
        %1399 = vmatpush1.bf16.msra.mxu0 0
        %1400 = vmatprep.subr.bf16.mxu0 0
        %1401 = vmatpush1.bf16.msra.mxu0 0
        %1402 = vmatprep.subr.bf16.mxu0 0
        %1403 = vmatpush1.bf16.msra.mxu0 0
        %1404 = vmatprep.subr.bf16.mxu0 0
        %1405 = vmatpush1.bf16.msra.mxu0 0
        %1406 = vmatprep.subr.bf16.mxu0 0
        %1407 = vmatpush1.bf16.msra.mxu0 0
        %1408 = vmatprep.subr.bf16.mxu0 0
        %1409 = vmatpush1.bf16.msra.mxu0 0
        %1410 = vmatprep.mubr.bf16.mxu0 0
        %1411 = vmatmul.mubr.bf16.gmra.mrb[0].mxu0 %v484
        %v1412 = vpop.f32.mrb[0].mxu0
        %v1413 = vadd.f32 %v1372, %v1412
        %v1414 = vpop.f32.mrb[0].mxu0
        %v1415 = vadd.f32 %v1374, %v1414
        %v1416 = vpop.f32.mrb[0].mxu0
        %v1417 = vpop.f32.mrb[0].mxu0
        %1418 = vdwg.mxu0
        %s1419 = scalar_lea.vmem %s272, 9
        %v1420 = vld [vmem:[%s1419] sm:$0xff]
        %v1421 = vld [vmem:[%s1419 + $0x8] sm:$0x1]
        %v1424 = vcombine.high %v1420, %v1420
        %v1426 = vunpack.c.l.s4 1966171168
        %v1427 = vunpack.c.0.s8 %v1426
        %v1428 = vlaneseq
        %v1429 = vshrl.u32 %v1428, 7
        %v1430 = vsub.s32 %v1427, %v1429
        %v1431 = vrot.slane %v1420, %v1430
        %v1433 = vunpack.c.l.s4 1966171168
        %v1434 = vunpack.c.0.s8 %v1433
        %v1435 = vlaneseq
        %v1436 = vshrl.u32 %v1435, 7
        %v1437 = vsub.s32 %v1434, %v1436
        %v1438 = vrot.slane %v1424, %v1437
        %v1439 = vcombine.high %v1431, %v1431
        %v1440 = vcombine.high %v1438, %v1438
        %v1442 = vunpack.c.l.s4 1966171168
        %v1443 = vunpack.c.0.s8 %v1442
        %v1444 = vlaneseq
        %v1445 = vshrl.u32 %v1444, 7
        %v1446 = vsub.s32 %v1443, %v1445
        %v1447 = vrot.slane %v1431, %v1446
        %v1449 = vunpack.c.l.s4 1966171168
        %v1450 = vunpack.c.0.s8 %v1449
        %v1451 = vlaneseq
        %v1452 = vshrl.u32 %v1451, 7
        %v1453 = vsub.s32 %v1450, %v1452
        %v1454 = vrot.slane %v1438, %v1453
        %v1456 = vunpack.c.l.s4 1966171168
        %v1457 = vunpack.c.0.s8 %v1456
        %v1458 = vlaneseq
        %v1459 = vshrl.u32 %v1458, 7
        %v1460 = vsub.s32 %v1457, %v1459
        %v1461 = vrot.slane %v1439, %v1460
        %v1463 = vunpack.c.l.s4 1966171168
        %v1464 = vunpack.c.0.s8 %v1463
        %v1465 = vlaneseq
        %v1466 = vshrl.u32 %v1465, 7
        %v1467 = vsub.s32 %v1464, %v1466
        %v1468 = vrot.slane %v1440, %v1467
        %v1469 = vcombine.high %v1447, %v1447
        %v1470 = vcombine.high %v1454, %v1454
        %v1471 = vcombine.high %v1461, %v1461
        %v1472 = vcombine.high %v1468, %v1468
        %v1474 = vunpack.c.l.s4 1966171168
        %v1475 = vunpack.c.0.s8 %v1474
        %v1476 = vlaneseq
        %v1477 = vshrl.u32 %v1476, 7
        %v1478 = vsub.s32 %v1475, %v1477
        %v1479 = vrot.slane %v1421, %v1478
        %v1481 = vunpack.c.l.s4 1966171168
        %v1482 = vunpack.c.0.s8 %v1481
        %v1483 = vlaneseq
        %v1484 = vshrl.u32 %v1483, 7
        %v1485 = vsub.s32 %v1482, %v1484
        %v1486 = vrot.slane %v1479, %v1485
        %1496 = vmatprep.subr.bf16.mxu0 %v927
        %1497 = vmatpush1.bf16.msra.mxu0 %v926
        %1498 = vmatprep.subr.bf16.mxu0 %v929
        %1499 = vmatpush1.bf16.msra.mxu0 %v928
        %1500 = vmatprep.subr.bf16.mxu0 %v931
        %1501 = vmatpush1.bf16.msra.mxu0 %v930
        %1502 = vmatprep.subr.bf16.mxu0 %v933
        %1503 = vmatpush1.bf16.msra.mxu0 %v932
        %1504 = vmatprep.subr.bf16.mxu0 %v935
        %1505 = vmatpush1.bf16.msra.mxu0 %v934
        %1506 = vmatprep.subr.bf16.mxu0 %v937
        %1507 = vmatpush1.bf16.msra.mxu0 %v936
        %1508 = vmatprep.subr.bf16.mxu0 %v939
        %1509 = vmatpush1.bf16.msra.mxu0 %v938
        %1510 = vmatprep.subr.bf16.mxu0 %v941
        %1511 = vmatpush1.bf16.msra.mxu0 %v940
        %1512 = vmatprep.subr.bf16.mxu0 %v943
        %1513 = vmatpush1.bf16.msra.mxu0 %v942
        %1514 = vmatprep.subr.bf16.mxu0 %v945
        %1515 = vmatpush1.bf16.msra.mxu0 %v944
        %1516 = vmatprep.subr.bf16.mxu0 %v947
        %1517 = vmatpush1.bf16.msra.mxu0 %v946
        %1518 = vmatprep.subr.bf16.mxu0 %v949
        %1519 = vmatpush1.bf16.msra.mxu0 %v948
        %1520 = vmatprep.subr.bf16.mxu0 %v951
        %1521 = vmatpush1.bf16.msra.mxu0 %v950
        %1522 = vmatprep.subr.bf16.mxu0 %v953
        %1523 = vmatpush1.bf16.msra.mxu0 %v952
        %1524 = vmatprep.subr.bf16.mxu0 %v955
        %1525 = vmatpush1.bf16.msra.mxu0 %v954
        %1526 = vmatprep.subr.bf16.mxu0 %v957
        %1527 = vmatpush1.bf16.msra.mxu0 %v956
        %1528 = vmatprep.mubr.bf16.mxu0 %v1461
        %1529 = vmatmul.mubr.bf16.gmra.mrb[0].mxu0 %v1447
        %v1530 = vpop.f32.mrb[0].mxu0
        %v1531 = vadd.f32 0.0, %v1530
        %v1532 = vpop.f32.mrb[0].mxu0
        %v1533 = vadd.f32 0.0, %v1532
        %v1534 = vpop.f32.mrb[0].mxu0
        %v1535 = vpop.f32.mrb[0].mxu0
        %1536 = vdwg.mxu0
        %1537 = vmatprep.subr.bf16.mxu0 %v959
        %1538 = vmatpush1.bf16.msra.mxu0 %v958
        %1539 = vmatprep.subr.bf16.mxu0 %v961
        %1540 = vmatpush1.bf16.msra.mxu0 %v960
        %1541 = vmatprep.subr.bf16.mxu0 %v963
        %1542 = vmatpush1.bf16.msra.mxu0 %v962
        %1543 = vmatprep.subr.bf16.mxu0 %v965
        %1544 = vmatpush1.bf16.msra.mxu0 %v964
        %1545 = vmatprep.subr.bf16.mxu0 %v967
        %1546 = vmatpush1.bf16.msra.mxu0 %v966
        %1547 = vmatprep.subr.bf16.mxu0 %v969
        %1548 = vmatpush1.bf16.msra.mxu0 %v968
        %1549 = vmatprep.subr.bf16.mxu0 %v971
        %1550 = vmatpush1.bf16.msra.mxu0 %v970
        %1551 = vmatprep.subr.bf16.mxu0 %v973
        %1552 = vmatpush1.bf16.msra.mxu0 %v972
        %1553 = vmatprep.subr.bf16.mxu0 %v975
        %1554 = vmatpush1.bf16.msra.mxu0 %v974
        %1555 = vmatprep.subr.bf16.mxu0 %v977
        %1556 = vmatpush1.bf16.msra.mxu0 %v976
        %1557 = vmatprep.subr.bf16.mxu0 %v979
        %1558 = vmatpush1.bf16.msra.mxu0 %v978
        %1559 = vmatprep.subr.bf16.mxu0 %v981
        %1560 = vmatpush1.bf16.msra.mxu0 %v980
        %1561 = vmatprep.subr.bf16.mxu0 %v983
        %1562 = vmatpush1.bf16.msra.mxu0 %v982
        %1563 = vmatprep.subr.bf16.mxu0 %v985
        %1564 = vmatpush1.bf16.msra.mxu0 %v984
        %1565 = vmatprep.subr.bf16.mxu0 %v987
        %1566 = vmatpush1.bf16.msra.mxu0 %v986
        %1567 = vmatprep.subr.bf16.mxu0 %v989
        %1568 = vmatpush1.bf16.msra.mxu0 %v988
        %1569 = vmatprep.mubr.bf16.mxu0 %v1471
        %1570 = vmatmul.mubr.bf16.gmra.mrb[0].mxu0 %v1469
        %v1571 = vpop.f32.mrb[0].mxu0
        %v1572 = vadd.f32 %v1531, %v1571
        %v1573 = vpop.f32.mrb[0].mxu0
        %v1574 = vadd.f32 %v1533, %v1573
        %v1575 = vpop.f32.mrb[0].mxu0
        %v1576 = vpop.f32.mrb[0].mxu0
        %1577 = vdwg.mxu0
        %1578 = vmatprep.subr.bf16.mxu0 %v991
        %1579 = vmatpush1.bf16.msra.mxu0 %v990
        %1580 = vmatprep.subr.bf16.mxu0 %v993
        %1581 = vmatpush1.bf16.msra.mxu0 %v992
        %1582 = vmatprep.subr.bf16.mxu0 %v995
        %1583 = vmatpush1.bf16.msra.mxu0 %v994
        %1584 = vmatprep.subr.bf16.mxu0 %v997
        %1585 = vmatpush1.bf16.msra.mxu0 %v996
        %1586 = vmatprep.subr.bf16.mxu0 %v999
        %1587 = vmatpush1.bf16.msra.mxu0 %v998
        %1588 = vmatprep.subr.bf16.mxu0 %v1001
        %1589 = vmatpush1.bf16.msra.mxu0 %v1000
        %1590 = vmatprep.subr.bf16.mxu0 %v1003
        %1591 = vmatpush1.bf16.msra.mxu0 %v1002
        %1592 = vmatprep.subr.bf16.mxu0 %v1005
        %1593 = vmatpush1.bf16.msra.mxu0 %v1004
        %1594 = vmatprep.subr.bf16.mxu0 %v1007
        %1595 = vmatpush1.bf16.msra.mxu0 %v1006
        %1596 = vmatprep.subr.bf16.mxu0 %v1009
        %1597 = vmatpush1.bf16.msra.mxu0 %v1008
        %1598 = vmatprep.subr.bf16.mxu0 %v1011
        %1599 = vmatpush1.bf16.msra.mxu0 %v1010
        %1600 = vmatprep.subr.bf16.mxu0 %v1013
        %1601 = vmatpush1.bf16.msra.mxu0 %v1012
        %1602 = vmatprep.subr.bf16.mxu0 %v1015
        %1603 = vmatpush1.bf16.msra.mxu0 %v1014
        %1604 = vmatprep.subr.bf16.mxu0 %v1017
        %1605 = vmatpush1.bf16.msra.mxu0 %v1016
        %1606 = vmatprep.subr.bf16.mxu0 %v1019
        %1607 = vmatpush1.bf16.msra.mxu0 %v1018
        %1608 = vmatprep.subr.bf16.mxu0 %v1021
        %1609 = vmatpush1.bf16.msra.mxu0 %v1020
        %1610 = vmatprep.mubr.bf16.mxu0 %v1468
        %1611 = vmatmul.mubr.bf16.gmra.mrb[0].mxu0 %v1454
        %v1612 = vpop.f32.mrb[0].mxu0
        %v1613 = vadd.f32 %v1572, %v1612
        %v1614 = vpop.f32.mrb[0].mxu0
        %v1615 = vadd.f32 %v1574, %v1614
        %v1616 = vpop.f32.mrb[0].mxu0
        %v1617 = vpop.f32.mrb[0].mxu0
        %1618 = vdwg.mxu0
        %1619 = vmatprep.subr.bf16.mxu0 %v1023
        %1620 = vmatpush1.bf16.msra.mxu0 %v1022
        %1621 = vmatprep.subr.bf16.mxu0 %v1025
        %1622 = vmatpush1.bf16.msra.mxu0 %v1024
        %1623 = vmatprep.subr.bf16.mxu0 %v1027
        %1624 = vmatpush1.bf16.msra.mxu0 %v1026
        %1625 = vmatprep.subr.bf16.mxu0 %v1029
        %1626 = vmatpush1.bf16.msra.mxu0 %v1028
        %1627 = vmatprep.subr.bf16.mxu0 %v1031
        %1628 = vmatpush1.bf16.msra.mxu0 %v1030
        %1629 = vmatprep.subr.bf16.mxu0 %v1033
        %1630 = vmatpush1.bf16.msra.mxu0 %v1032
        %1631 = vmatprep.subr.bf16.mxu0 %v1035
        %1632 = vmatpush1.bf16.msra.mxu0 %v1034
        %1633 = vmatprep.subr.bf16.mxu0 %v1037
        %1634 = vmatpush1.bf16.msra.mxu0 %v1036
        %1635 = vmatprep.subr.bf16.mxu0 %v1039
        %1636 = vmatpush1.bf16.msra.mxu0 %v1038
        %1637 = vmatprep.subr.bf16.mxu0 %v1041
        %1638 = vmatpush1.bf16.msra.mxu0 %v1040
        %1639 = vmatprep.subr.bf16.mxu0 %v1043
        %1640 = vmatpush1.bf16.msra.mxu0 %v1042
        %1641 = vmatprep.subr.bf16.mxu0 %v1045
        %1642 = vmatpush1.bf16.msra.mxu0 %v1044
        %1643 = vmatprep.subr.bf16.mxu0 %v1047
        %1644 = vmatpush1.bf16.msra.mxu0 %v1046
        %1645 = vmatprep.subr.bf16.mxu0 %v1049
        %1646 = vmatpush1.bf16.msra.mxu0 %v1048
        %1647 = vmatprep.subr.bf16.mxu0 %v1051
        %1648 = vmatpush1.bf16.msra.mxu0 %v1050
        %1649 = vmatprep.subr.bf16.mxu0 %v1053
        %1650 = vmatpush1.bf16.msra.mxu0 %v1052
        %1651 = vmatprep.mubr.bf16.mxu0 %v1472
        %1652 = vmatmul.mubr.bf16.gmra.mrb[0].mxu0 %v1470
        %v1653 = vpop.f32.mrb[0].mxu0
        %v1654 = vadd.f32 %v1613, %v1653
        %v1655 = vpop.f32.mrb[0].mxu0
        %v1656 = vadd.f32 %v1615, %v1655
        %v1657 = vpop.f32.mrb[0].mxu0
        %v1658 = vpop.f32.mrb[0].mxu0
        %1659 = vdwg.mxu0
        %1660 = vmatprep.subr.bf16.mxu0 %v1055
        %1661 = vmatpush1.bf16.msra.mxu0 %v1054
        %1662 = vmatprep.subr.bf16.mxu0 %v1057
        %1663 = vmatpush1.bf16.msra.mxu0 %v1056
        %1664 = vmatprep.subr.bf16.mxu0 %v1059
        %1665 = vmatpush1.bf16.msra.mxu0 %v1058
        %1666 = vmatprep.subr.bf16.mxu0 %v1061
        %1667 = vmatpush1.bf16.msra.mxu0 %v1060
        %1668 = vmatprep.subr.bf16.mxu0 %v1063
        %1669 = vmatpush1.bf16.msra.mxu0 %v1062
        %1670 = vmatprep.subr.bf16.mxu0 %v1065
        %1671 = vmatpush1.bf16.msra.mxu0 %v1064
        %1672 = vmatprep.subr.bf16.mxu0 %v1067
        %1673 = vmatpush1.bf16.msra.mxu0 %v1066
        %1674 = vmatprep.subr.bf16.mxu0 %v1069
        %1675 = vmatpush1.bf16.msra.mxu0 %v1068
        %1676 = vmatprep.subr.bf16.mxu0 0
        %1677 = vmatpush1.bf16.msra.mxu0 0
        %1678 = vmatprep.subr.bf16.mxu0 0
        %1679 = vmatpush1.bf16.msra.mxu0 0
        %1680 = vmatprep.subr.bf16.mxu0 0
        %1681 = vmatpush1.bf16.msra.mxu0 0
        %1682 = vmatprep.subr.bf16.mxu0 0
        %1683 = vmatpush1.bf16.msra.mxu0 0
        %1684 = vmatprep.subr.bf16.mxu0 0
        %1685 = vmatpush1.bf16.msra.mxu0 0
        %1686 = vmatprep.subr.bf16.mxu0 0
        %1687 = vmatpush1.bf16.msra.mxu0 0
        %1688 = vmatprep.subr.bf16.mxu0 0
        %1689 = vmatpush1.bf16.msra.mxu0 0
        %1690 = vmatprep.subr.bf16.mxu0 0
        %1691 = vmatpush1.bf16.msra.mxu0 0
        %1692 = vmatprep.mubr.bf16.mxu0 0
        %1693 = vmatmul.mubr.bf16.gmra.mrb[0].mxu0 %v1486
        %v1694 = vpop.f32.mrb[0].mxu0
        %v1695 = vadd.f32 %v1654, %v1694
        %v1696 = vpop.f32.mrb[0].mxu0
        %v1697 = vadd.f32 %v1656, %v1696
        %v1698 = vpop.f32.mrb[0].mxu0
        %v1699 = vpop.f32.mrb[0].mxu0
        %1700 = vdwg.mxu0
        %v1701 = vmax.f32 %v1413, %v1695
        %v1702 = vmax.f32 %v1415, %v1697
        %s1703 = scalar_lea.vmem %s272, 18
        %v1704 = vld [vmem:[%s1703] sm:$0xff]
        %v1705 = vld [vmem:[%s1703 + $0x8] sm:$0x1]
        %v1708 = vcombine.high %v1704, %v1704
        %v1710 = vunpack.c.l.s4 1966171168
        %v1711 = vunpack.c.0.s8 %v1710
        %v1712 = vlaneseq
        %v1713 = vshrl.u32 %v1712, 7
        %v1714 = vsub.s32 %v1711, %v1713
        %v1715 = vrot.slane %v1704, %v1714
        %v1717 = vunpack.c.l.s4 1966171168
        %v1718 = vunpack.c.0.s8 %v1717
        %v1719 = vlaneseq
        %v1720 = vshrl.u32 %v1719, 7
        %v1721 = vsub.s32 %v1718, %v1720
        %v1722 = vrot.slane %v1708, %v1721
        %v1723 = vcombine.high %v1715, %v1715
        %v1724 = vcombine.high %v1722, %v1722
        %v1726 = vunpack.c.l.s4 1966171168
        %v1727 = vunpack.c.0.s8 %v1726
        %v1728 = vlaneseq
        %v1729 = vshrl.u32 %v1728, 7
        %v1730 = vsub.s32 %v1727, %v1729
        %v1731 = vrot.slane %v1715, %v1730
        %v1733 = vunpack.c.l.s4 1966171168
        %v1734 = vunpack.c.0.s8 %v1733
        %v1735 = vlaneseq
        %v1736 = vshrl.u32 %v1735, 7
        %v1737 = vsub.s32 %v1734, %v1736
        %v1738 = vrot.slane %v1722, %v1737
        %v1740 = vunpack.c.l.s4 1966171168
        %v1741 = vunpack.c.0.s8 %v1740
        %v1742 = vlaneseq
        %v1743 = vshrl.u32 %v1742, 7
        %v1744 = vsub.s32 %v1741, %v1743
        %v1745 = vrot.slane %v1723, %v1744
        %v1747 = vunpack.c.l.s4 1966171168
        %v1748 = vunpack.c.0.s8 %v1747
        %v1749 = vlaneseq
        %v1750 = vshrl.u32 %v1749, 7
        %v1751 = vsub.s32 %v1748, %v1750
        %v1752 = vrot.slane %v1724, %v1751
        %v1753 = vcombine.high %v1731, %v1731
        %v1754 = vcombine.high %v1738, %v1738
        %v1755 = vcombine.high %v1745, %v1745
        %v1756 = vcombine.high %v1752, %v1752
        %v1758 = vunpack.c.l.s4 1966171168
        %v1759 = vunpack.c.0.s8 %v1758
        %v1760 = vlaneseq
        %v1761 = vshrl.u32 %v1760, 7
        %v1762 = vsub.s32 %v1759, %v1761
        %v1763 = vrot.slane %v1705, %v1762
        %v1765 = vunpack.c.l.s4 1966171168
        %v1766 = vunpack.c.0.s8 %v1765
        %v1767 = vlaneseq
        %v1768 = vshrl.u32 %v1767, 7
        %v1769 = vsub.s32 %v1766, %v1768
        %v1770 = vrot.slane %v1763, %v1769
        %1780 = vmatprep.subr.bf16.mxu0 %v927
        %1781 = vmatpush1.bf16.msra.mxu0 %v926
        %1782 = vmatprep.subr.bf16.mxu0 %v929
        %1783 = vmatpush1.bf16.msra.mxu0 %v928
        %1784 = vmatprep.subr.bf16.mxu0 %v931
        %1785 = vmatpush1.bf16.msra.mxu0 %v930
        %1786 = vmatprep.subr.bf16.mxu0 %v933
        %1787 = vmatpush1.bf16.msra.mxu0 %v932
        %1788 = vmatprep.subr.bf16.mxu0 %v935
        %1789 = vmatpush1.bf16.msra.mxu0 %v934
        %1790 = vmatprep.subr.bf16.mxu0 %v937
        %1791 = vmatpush1.bf16.msra.mxu0 %v936
        %1792 = vmatprep.subr.bf16.mxu0 %v939
        %1793 = vmatpush1.bf16.msra.mxu0 %v938
        %1794 = vmatprep.subr.bf16.mxu0 %v941
        %1795 = vmatpush1.bf16.msra.mxu0 %v940
        %1796 = vmatprep.subr.bf16.mxu0 %v943
        %1797 = vmatpush1.bf16.msra.mxu0 %v942
        %1798 = vmatprep.subr.bf16.mxu0 %v945
        %1799 = vmatpush1.bf16.msra.mxu0 %v944
        %1800 = vmatprep.subr.bf16.mxu0 %v947
        %1801 = vmatpush1.bf16.msra.mxu0 %v946
        %1802 = vmatprep.subr.bf16.mxu0 %v949
        %1803 = vmatpush1.bf16.msra.mxu0 %v948
        %1804 = vmatprep.subr.bf16.mxu0 %v951
        %1805 = vmatpush1.bf16.msra.mxu0 %v950
        %1806 = vmatprep.subr.bf16.mxu0 %v953
        %1807 = vmatpush1.bf16.msra.mxu0 %v952
        %1808 = vmatprep.subr.bf16.mxu0 %v955
        %1809 = vmatpush1.bf16.msra.mxu0 %v954
        %1810 = vmatprep.subr.bf16.mxu0 %v957
        %1811 = vmatpush1.bf16.msra.mxu0 %v956
        %1812 = vmatprep.mubr.bf16.mxu0 %v1745
        %1813 = vmatmul.mubr.bf16.gmra.mrb[0].mxu0 %v1731
        %v1814 = vpop.f32.mrb[0].mxu0
        %v1815 = vadd.f32 0.0, %v1814
        %v1816 = vpop.f32.mrb[0].mxu0
        %v1817 = vadd.f32 0.0, %v1816
        %v1818 = vpop.f32.mrb[0].mxu0
        %v1819 = vpop.f32.mrb[0].mxu0
        %1820 = vdwg.mxu0
        %1821 = vmatprep.subr.bf16.mxu0 %v959
        %1822 = vmatpush1.bf16.msra.mxu0 %v958
        %1823 = vmatprep.subr.bf16.mxu0 %v961
        %1824 = vmatpush1.bf16.msra.mxu0 %v960
        %1825 = vmatprep.subr.bf16.mxu0 %v963
        %1826 = vmatpush1.bf16.msra.mxu0 %v962
        %1827 = vmatprep.subr.bf16.mxu0 %v965
        %1828 = vmatpush1.bf16.msra.mxu0 %v964
        %1829 = vmatprep.subr.bf16.mxu0 %v967
        %1830 = vmatpush1.bf16.msra.mxu0 %v966
        %1831 = vmatprep.subr.bf16.mxu0 %v969
        %1832 = vmatpush1.bf16.msra.mxu0 %v968
        %1833 = vmatprep.subr.bf16.mxu0 %v971
        %1834 = vmatpush1.bf16.msra.mxu0 %v970
        %1835 = vmatprep.subr.bf16.mxu0 %v973
        %1836 = vmatpush1.bf16.msra.mxu0 %v972
        %1837 = vmatprep.subr.bf16.mxu0 %v975
        %1838 = vmatpush1.bf16.msra.mxu0 %v974
        %1839 = vmatprep.subr.bf16.mxu0 %v977
        %1840 = vmatpush1.bf16.msra.mxu0 %v976
        %1841 = vmatprep.subr.bf16.mxu0 %v979
        %1842 = vmatpush1.bf16.msra.mxu0 %v978
        %1843 = vmatprep.subr.bf16.mxu0 %v981
        %1844 = vmatpush1.bf16.msra.mxu0 %v980
        %1845 = vmatprep.subr.bf16.mxu0 %v983
        %1846 = vmatpush1.bf16.msra.mxu0 %v982
        %1847 = vmatprep.subr.bf16.mxu0 %v985
        %1848 = vmatpush1.bf16.msra.mxu0 %v984
        %1849 = vmatprep.subr.bf16.mxu0 %v987
        %1850 = vmatpush1.bf16.msra.mxu0 %v986
        %1851 = vmatprep.subr.bf16.mxu0 %v989
        %1852 = vmatpush1.bf16.msra.mxu0 %v988
        %1853 = vmatprep.mubr.bf16.mxu0 %v1755
        %1854 = vmatmul.mubr.bf16.gmra.mrb[0].mxu0 %v1753
        %v1855 = vpop.f32.mrb[0].mxu0
        %v1856 = vadd.f32 %v1815, %v1855
        %v1857 = vpop.f32.mrb[0].mxu0
        %v1858 = vadd.f32 %v1817, %v1857
        %v1859 = vpop.f32.mrb[0].mxu0
        %v1860 = vpop.f32.mrb[0].mxu0
        %1861 = vdwg.mxu0
        %1862 = vmatprep.subr.bf16.mxu0 %v991
        %1863 = vmatpush1.bf16.msra.mxu0 %v990
        %1864 = vmatprep.subr.bf16.mxu0 %v993
        %1865 = vmatpush1.bf16.msra.mxu0 %v992
        %1866 = vmatprep.subr.bf16.mxu0 %v995
        %1867 = vmatpush1.bf16.msra.mxu0 %v994
        %1868 = vmatprep.subr.bf16.mxu0 %v997
        %1869 = vmatpush1.bf16.msra.mxu0 %v996
        %1870 = vmatprep.subr.bf16.mxu0 %v999
        %1871 = vmatpush1.bf16.msra.mxu0 %v998
        %1872 = vmatprep.subr.bf16.mxu0 %v1001
        %1873 = vmatpush1.bf16.msra.mxu0 %v1000
        %1874 = vmatprep.subr.bf16.mxu0 %v1003
        %1875 = vmatpush1.bf16.msra.mxu0 %v1002
        %1876 = vmatprep.subr.bf16.mxu0 %v1005
        %1877 = vmatpush1.bf16.msra.mxu0 %v1004
        %1878 = vmatprep.subr.bf16.mxu0 %v1007
        %1879 = vmatpush1.bf16.msra.mxu0 %v1006
        %1880 = vmatprep.subr.bf16.mxu0 %v1009
        %1881 = vmatpush1.bf16.msra.mxu0 %v1008
        %1882 = vmatprep.subr.bf16.mxu0 %v1011
        %1883 = vmatpush1.bf16.msra.mxu0 %v1010
        %1884 = vmatprep.subr.bf16.mxu0 %v1013
        %1885 = vmatpush1.bf16.msra.mxu0 %v1012
        %1886 = vmatprep.subr.bf16.mxu0 %v1015
        %1887 = vmatpush1.bf16.msra.mxu0 %v1014
        %1888 = vmatprep.subr.bf16.mxu0 %v1017
        %1889 = vmatpush1.bf16.msra.mxu0 %v1016
        %1890 = vmatprep.subr.bf16.mxu0 %v1019
        %1891 = vmatpush1.bf16.msra.mxu0 %v1018
        %1892 = vmatprep.subr.bf16.mxu0 %v1021
        %1893 = vmatpush1.bf16.msra.mxu0 %v1020
        %1894 = vmatprep.mubr.bf16.mxu0 %v1752
        %1895 = vmatmul.mubr.bf16.gmra.mrb[0].mxu0 %v1738
        %v1896 = vpop.f32.mrb[0].mxu0
        %v1897 = vadd.f32 %v1856, %v1896
        %v1898 = vpop.f32.mrb[0].mxu0
        %v1899 = vadd.f32 %v1858, %v1898
        %v1900 = vpop.f32.mrb[0].mxu0
        %v1901 = vpop.f32.mrb[0].mxu0
        %1902 = vdwg.mxu0
        %1903 = vmatprep.subr.bf16.mxu0 %v1023
        %1904 = vmatpush1.bf16.msra.mxu0 %v1022
        %1905 = vmatprep.subr.bf16.mxu0 %v1025
        %1906 = vmatpush1.bf16.msra.mxu0 %v1024
        %1907 = vmatprep.subr.bf16.mxu0 %v1027
        %1908 = vmatpush1.bf16.msra.mxu0 %v1026
        %1909 = vmatprep.subr.bf16.mxu0 %v1029
        %1910 = vmatpush1.bf16.msra.mxu0 %v1028
        %1911 = vmatprep.subr.bf16.mxu0 %v1031
        %1912 = vmatpush1.bf16.msra.mxu0 %v1030
        %1913 = vmatprep.subr.bf16.mxu0 %v1033
        %1914 = vmatpush1.bf16.msra.mxu0 %v1032
        %1915 = vmatprep.subr.bf16.mxu0 %v1035
        %1916 = vmatpush1.bf16.msra.mxu0 %v1034
        %1917 = vmatprep.subr.bf16.mxu0 %v1037
        %1918 = vmatpush1.bf16.msra.mxu0 %v1036
        %1919 = vmatprep.subr.bf16.mxu0 %v1039
        %1920 = vmatpush1.bf16.msra.mxu0 %v1038
        %1921 = vmatprep.subr.bf16.mxu0 %v1041
        %1922 = vmatpush1.bf16.msra.mxu0 %v1040
        %1923 = vmatprep.subr.bf16.mxu0 %v1043
        %1924 = vmatpush1.bf16.msra.mxu0 %v1042
        %1925 = vmatprep.subr.bf16.mxu0 %v1045
        %1926 = vmatpush1.bf16.msra.mxu0 %v1044
        %1927 = vmatprep.subr.bf16.mxu0 %v1047
        %1928 = vmatpush1.bf16.msra.mxu0 %v1046
        %1929 = vmatprep.subr.bf16.mxu0 %v1049
        %1930 = vmatpush1.bf16.msra.mxu0 %v1048
        %1931 = vmatprep.subr.bf16.mxu0 %v1051
        %1932 = vmatpush1.bf16.msra.mxu0 %v1050
        %1933 = vmatprep.subr.bf16.mxu0 %v1053
        %1934 = vmatpush1.bf16.msra.mxu0 %v1052
        %1935 = vmatprep.mubr.bf16.mxu0 %v1756
        %1936 = vmatmul.mubr.bf16.gmra.mrb[0].mxu0 %v1754
        %v1937 = vpop.f32.mrb[0].mxu0
        %v1938 = vadd.f32 %v1897, %v1937
        %v1939 = vpop.f32.mrb[0].mxu0
        %v1940 = vadd.f32 %v1899, %v1939
        %v1941 = vpop.f32.mrb[0].mxu0
        %v1942 = vpop.f32.mrb[0].mxu0
        %1943 = vdwg.mxu0
        %1944 = vmatprep.subr.bf16.mxu0 %v1055
        %1945 = vmatpush1.bf16.msra.mxu0 %v1054
        %1946 = vmatprep.subr.bf16.mxu0 %v1057
        %1947 = vmatpush1.bf16.msra.mxu0 %v1056
        %1948 = vmatprep.subr.bf16.mxu0 %v1059
        %1949 = vmatpush1.bf16.msra.mxu0 %v1058
        %1950 = vmatprep.subr.bf16.mxu0 %v1061
        %1951 = vmatpush1.bf16.msra.mxu0 %v1060
        %1952 = vmatprep.subr.bf16.mxu0 %v1063
        %1953 = vmatpush1.bf16.msra.mxu0 %v1062
        %1954 = vmatprep.subr.bf16.mxu0 %v1065
        %1955 = vmatpush1.bf16.msra.mxu0 %v1064
        %1956 = vmatprep.subr.bf16.mxu0 %v1067
        %1957 = vmatpush1.bf16.msra.mxu0 %v1066
        %1958 = vmatprep.subr.bf16.mxu0 %v1069
        %1959 = vmatpush1.bf16.msra.mxu0 %v1068
        %1960 = vmatprep.subr.bf16.mxu0 0
        %1961 = vmatpush1.bf16.msra.mxu0 0
        %1962 = vmatprep.subr.bf16.mxu0 0
        %1963 = vmatpush1.bf16.msra.mxu0 0
        %1964 = vmatprep.subr.bf16.mxu0 0
        %1965 = vmatpush1.bf16.msra.mxu0 0
        %1966 = vmatprep.subr.bf16.mxu0 0
        %1967 = vmatpush1.bf16.msra.mxu0 0
        %1968 = vmatprep.subr.bf16.mxu0 0
        %1969 = vmatpush1.bf16.msra.mxu0 0
        %1970 = vmatprep.subr.bf16.mxu0 0
        %1971 = vmatpush1.bf16.msra.mxu0 0
        %1972 = vmatprep.subr.bf16.mxu0 0
        %1973 = vmatpush1.bf16.msra.mxu0 0
        %1974 = vmatprep.subr.bf16.mxu0 0
        %1975 = vmatpush1.bf16.msra.mxu0 0
        %1976 = vmatprep.mubr.bf16.mxu0 0
        %1977 = vmatmul.mubr.bf16.gmra.mrb[0].mxu0 %v1770
        %v1978 = vpop.f32.mrb[0].mxu0
        %v1979 = vadd.f32 %v1938, %v1978
        %v1980 = vpop.f32.mrb[0].mxu0
        %v1981 = vadd.f32 %v1940, %v1980
        %v1982 = vpop.f32.mrb[0].mxu0
        %v1983 = vpop.f32.mrb[0].mxu0
        %1984 = vdwg.mxu0
        %v1985 = vmax.f32 %v1701, %v1979
        %v1986 = vmax.f32 %v1702, %v1981
        %s1987 = scalar_lea.vmem %s272, 27
        %v1988 = vld [vmem:[%s1987] sm:$0xff]
        %v1989 = vld [vmem:[%s1987 + $0x8] sm:$0x1]
        %v1992 = vcombine.high %v1988, %v1988
        %v1994 = vunpack.c.l.s4 1966171168
        %v1995 = vunpack.c.0.s8 %v1994
        %v1996 = vlaneseq
        %v1997 = vshrl.u32 %v1996, 7
        %v1998 = vsub.s32 %v1995, %v1997
        %v1999 = vrot.slane %v1988, %v1998
        %v2001 = vunpack.c.l.s4 1966171168
        %v2002 = vunpack.c.0.s8 %v2001
        %v2003 = vlaneseq
        %v2004 = vshrl.u32 %v2003, 7
        %v2005 = vsub.s32 %v2002, %v2004
        %v2006 = vrot.slane %v1992, %v2005
        %v2007 = vcombine.high %v1999, %v1999
        %v2008 = vcombine.high %v2006, %v2006
        %v2010 = vunpack.c.l.s4 1966171168
        %v2011 = vunpack.c.0.s8 %v2010
        %v2012 = vlaneseq
        %v2013 = vshrl.u32 %v2012, 7
        %v2014 = vsub.s32 %v2011, %v2013
        %v2015 = vrot.slane %v1999, %v2014
        %v2017 = vunpack.c.l.s4 1966171168
        %v2018 = vunpack.c.0.s8 %v2017
        %v2019 = vlaneseq
        %v2020 = vshrl.u32 %v2019, 7
        %v2021 = vsub.s32 %v2018, %v2020
        %v2022 = vrot.slane %v2006, %v2021
        %v2024 = vunpack.c.l.s4 1966171168
        %v2025 = vunpack.c.0.s8 %v2024
        %v2026 = vlaneseq
        %v2027 = vshrl.u32 %v2026, 7
        %v2028 = vsub.s32 %v2025, %v2027
        %v2029 = vrot.slane %v2007, %v2028
        %v2031 = vunpack.c.l.s4 1966171168
        %v2032 = vunpack.c.0.s8 %v2031
        %v2033 = vlaneseq
        %v2034 = vshrl.u32 %v2033, 7
        %v2035 = vsub.s32 %v2032, %v2034
        %v2036 = vrot.slane %v2008, %v2035
        %v2037 = vcombine.high %v2015, %v2015
        %v2038 = vcombine.high %v2022, %v2022
        %v2039 = vcombine.high %v2029, %v2029
        %v2040 = vcombine.high %v2036, %v2036
        %v2042 = vunpack.c.l.s4 1966171168
        %v2043 = vunpack.c.0.s8 %v2042
        %v2044 = vlaneseq
        %v2045 = vshrl.u32 %v2044, 7
        %v2046 = vsub.s32 %v2043, %v2045
        %v2047 = vrot.slane %v1989, %v2046
        %v2049 = vunpack.c.l.s4 1966171168
        %v2050 = vunpack.c.0.s8 %v2049
        %v2051 = vlaneseq
        %v2052 = vshrl.u32 %v2051, 7
        %v2053 = vsub.s32 %v2050, %v2052
        %v2054 = vrot.slane %v2047, %v2053
        %2064 = vmatprep.subr.bf16.mxu0 %v927
        %2065 = vmatpush1.bf16.msra.mxu0 %v926
        %2066 = vmatprep.subr.bf16.mxu0 %v929
        %2067 = vmatpush1.bf16.msra.mxu0 %v928
        %2068 = vmatprep.subr.bf16.mxu0 %v931
        %2069 = vmatpush1.bf16.msra.mxu0 %v930
        %2070 = vmatprep.subr.bf16.mxu0 %v933
        %2071 = vmatpush1.bf16.msra.mxu0 %v932
        %2072 = vmatprep.subr.bf16.mxu0 %v935
        %2073 = vmatpush1.bf16.msra.mxu0 %v934
        %2074 = vmatprep.subr.bf16.mxu0 %v937
        %2075 = vmatpush1.bf16.msra.mxu0 %v936
        %2076 = vmatprep.subr.bf16.mxu0 %v939
        %2077 = vmatpush1.bf16.msra.mxu0 %v938
        %2078 = vmatprep.subr.bf16.mxu0 %v941
        %2079 = vmatpush1.bf16.msra.mxu0 %v940
        %2080 = vmatprep.subr.bf16.mxu0 %v943
        %2081 = vmatpush1.bf16.msra.mxu0 %v942
        %2082 = vmatprep.subr.bf16.mxu0 %v945
        %2083 = vmatpush1.bf16.msra.mxu0 %v944
        %2084 = vmatprep.subr.bf16.mxu0 %v947
        %2085 = vmatpush1.bf16.msra.mxu0 %v946
        %2086 = vmatprep.subr.bf16.mxu0 %v949
        %2087 = vmatpush1.bf16.msra.mxu0 %v948
        %2088 = vmatprep.subr.bf16.mxu0 %v951
        %2089 = vmatpush1.bf16.msra.mxu0 %v950
        %2090 = vmatprep.subr.bf16.mxu0 %v953
        %2091 = vmatpush1.bf16.msra.mxu0 %v952
        %2092 = vmatprep.subr.bf16.mxu0 %v955
        %2093 = vmatpush1.bf16.msra.mxu0 %v954
        %2094 = vmatprep.subr.bf16.mxu0 %v957
        %2095 = vmatpush1.bf16.msra.mxu0 %v956
        %2096 = vmatprep.mubr.bf16.mxu0 %v2029
        %2097 = vmatmul.mubr.bf16.gmra.mrb[0].mxu0 %v2015
        %v2098 = vpop.f32.mrb[0].mxu0
        %v2099 = vadd.f32 0.0, %v2098
        %v2100 = vpop.f32.mrb[0].mxu0
        %v2101 = vadd.f32 0.0, %v2100
        %v2102 = vpop.f32.mrb[0].mxu0
        %v2103 = vpop.f32.mrb[0].mxu0
        %2104 = vdwg.mxu0
        %2105 = vmatprep.subr.bf16.mxu0 %v959
        %2106 = vmatpush1.bf16.msra.mxu0 %v958
        %2107 = vmatprep.subr.bf16.mxu0 %v961
        %2108 = vmatpush1.bf16.msra.mxu0 %v960
        %2109 = vmatprep.subr.bf16.mxu0 %v963
        %2110 = vmatpush1.bf16.msra.mxu0 %v962
        %2111 = vmatprep.subr.bf16.mxu0 %v965
        %2112 = vmatpush1.bf16.msra.mxu0 %v964
        %2113 = vmatprep.subr.bf16.mxu0 %v967
        %2114 = vmatpush1.bf16.msra.mxu0 %v966
        %2115 = vmatprep.subr.bf16.mxu0 %v969
        %2116 = vmatpush1.bf16.msra.mxu0 %v968
        %2117 = vmatprep.subr.bf16.mxu0 %v971
        %2118 = vmatpush1.bf16.msra.mxu0 %v970
        %2119 = vmatprep.subr.bf16.mxu0 %v973
        %2120 = vmatpush1.bf16.msra.mxu0 %v972
        %2121 = vmatprep.subr.bf16.mxu0 %v975
        %2122 = vmatpush1.bf16.msra.mxu0 %v974
        %2123 = vmatprep.subr.bf16.mxu0 %v977
        %2124 = vmatpush1.bf16.msra.mxu0 %v976
        %2125 = vmatprep.subr.bf16.mxu0 %v979
        %2126 = vmatpush1.bf16.msra.mxu0 %v978
        %2127 = vmatprep.subr.bf16.mxu0 %v981
        %2128 = vmatpush1.bf16.msra.mxu0 %v980
        %2129 = vmatprep.subr.bf16.mxu0 %v983
        %2130 = vmatpush1.bf16.msra.mxu0 %v982
        %2131 = vmatprep.subr.bf16.mxu0 %v985
        %2132 = vmatpush1.bf16.msra.mxu0 %v984
        %2133 = vmatprep.subr.bf16.mxu0 %v987
        %2134 = vmatpush1.bf16.msra.mxu0 %v986
        %2135 = vmatprep.subr.bf16.mxu0 %v989
        %2136 = vmatpush1.bf16.msra.mxu0 %v988
        %2137 = vmatprep.mubr.bf16.mxu0 %v2039
        %2138 = vmatmul.mubr.bf16.gmra.mrb[0].mxu0 %v2037
        %v2139 = vpop.f32.mrb[0].mxu0
        %v2140 = vadd.f32 %v2099, %v2139
        %v2141 = vpop.f32.mrb[0].mxu0
        %v2142 = vadd.f32 %v2101, %v2141
        %v2143 = vpop.f32.mrb[0].mxu0
        %v2144 = vpop.f32.mrb[0].mxu0
        %2145 = vdwg.mxu0
        %2146 = vmatprep.subr.bf16.mxu0 %v991
        %2147 = vmatpush1.bf16.msra.mxu0 %v990
        %2148 = vmatprep.subr.bf16.mxu0 %v993
        %2149 = vmatpush1.bf16.msra.mxu0 %v992
        %2150 = vmatprep.subr.bf16.mxu0 %v995
        %2151 = vmatpush1.bf16.msra.mxu0 %v994
        %2152 = vmatprep.subr.bf16.mxu0 %v997
        %2153 = vmatpush1.bf16.msra.mxu0 %v996
        %2154 = vmatprep.subr.bf16.mxu0 %v999
        %2155 = vmatpush1.bf16.msra.mxu0 %v998
        %2156 = vmatprep.subr.bf16.mxu0 %v1001
        %2157 = vmatpush1.bf16.msra.mxu0 %v1000
        %2158 = vmatprep.subr.bf16.mxu0 %v1003
        %2159 = vmatpush1.bf16.msra.mxu0 %v1002
        %2160 = vmatprep.subr.bf16.mxu0 %v1005
        %2161 = vmatpush1.bf16.msra.mxu0 %v1004
        %2162 = vmatprep.subr.bf16.mxu0 %v1007
        %2163 = vmatpush1.bf16.msra.mxu0 %v1006
        %2164 = vmatprep.subr.bf16.mxu0 %v1009
        %2165 = vmatpush1.bf16.msra.mxu0 %v1008
        %2166 = vmatprep.subr.bf16.mxu0 %v1011
        %2167 = vmatpush1.bf16.msra.mxu0 %v1010
        %2168 = vmatprep.subr.bf16.mxu0 %v1013
        %2169 = vmatpush1.bf16.msra.mxu0 %v1012
        %2170 = vmatprep.subr.bf16.mxu0 %v1015
        %2171 = vmatpush1.bf16.msra.mxu0 %v1014
        %2172 = vmatprep.subr.bf16.mxu0 %v1017
        %2173 = vmatpush1.bf16.msra.mxu0 %v1016
        %2174 = vmatprep.subr.bf16.mxu0 %v1019
        %2175 = vmatpush1.bf16.msra.mxu0 %v1018
        %2176 = vmatprep.subr.bf16.mxu0 %v1021
        %2177 = vmatpush1.bf16.msra.mxu0 %v1020
        %2178 = vmatprep.mubr.bf16.mxu0 %v2036
        %2179 = vmatmul.mubr.bf16.gmra.mrb[0].mxu0 %v2022
        %v2180 = vpop.f32.mrb[0].mxu0
        %v2181 = vadd.f32 %v2140, %v2180
        %v2182 = vpop.f32.mrb[0].mxu0
        %v2183 = vadd.f32 %v2142, %v2182
        %v2184 = vpop.f32.mrb[0].mxu0
        %v2185 = vpop.f32.mrb[0].mxu0
        %2186 = vdwg.mxu0
        %2187 = vmatprep.subr.bf16.mxu0 %v1023
        %2188 = vmatpush1.bf16.msra.mxu0 %v1022
        %2189 = vmatprep.subr.bf16.mxu0 %v1025
        %2190 = vmatpush1.bf16.msra.mxu0 %v1024
        %2191 = vmatprep.subr.bf16.mxu0 %v1027
        %2192 = vmatpush1.bf16.msra.mxu0 %v1026
        %2193 = vmatprep.subr.bf16.mxu0 %v1029
        %2194 = vmatpush1.bf16.msra.mxu0 %v1028
        %2195 = vmatprep.subr.bf16.mxu0 %v1031
        %2196 = vmatpush1.bf16.msra.mxu0 %v1030
        %2197 = vmatprep.subr.bf16.mxu0 %v1033
        %2198 = vmatpush1.bf16.msra.mxu0 %v1032
        %2199 = vmatprep.subr.bf16.mxu0 %v1035
        %2200 = vmatpush1.bf16.msra.mxu0 %v1034
        %2201 = vmatprep.subr.bf16.mxu0 %v1037
        %2202 = vmatpush1.bf16.msra.mxu0 %v1036
        %2203 = vmatprep.subr.bf16.mxu0 %v1039
        %2204 = vmatpush1.bf16.msra.mxu0 %v1038
        %2205 = vmatprep.subr.bf16.mxu0 %v1041
        %2206 = vmatpush1.bf16.msra.mxu0 %v1040
        %2207 = vmatprep.subr.bf16.mxu0 %v1043
        %2208 = vmatpush1.bf16.msra.mxu0 %v1042
        %2209 = vmatprep.subr.bf16.mxu0 %v1045
        %2210 = vmatpush1.bf16.msra.mxu0 %v1044
        %2211 = vmatprep.subr.bf16.mxu0 %v1047
        %2212 = vmatpush1.bf16.msra.mxu0 %v1046
        %2213 = vmatprep.subr.bf16.mxu0 %v1049
        %2214 = vmatpush1.bf16.msra.mxu0 %v1048
        %2215 = vmatprep.subr.bf16.mxu0 %v1051
        %2216 = vmatpush1.bf16.msra.mxu0 %v1050
        %2217 = vmatprep.subr.bf16.mxu0 %v1053
        %2218 = vmatpush1.bf16.msra.mxu0 %v1052
        %2219 = vmatprep.mubr.bf16.mxu0 %v2040
        %2220 = vmatmul.mubr.bf16.gmra.mrb[0].mxu0 %v2038
        %v2221 = vpop.f32.mrb[0].mxu0
        %v2222 = vadd.f32 %v2181, %v2221
        %v2223 = vpop.f32.mrb[0].mxu0
        %v2224 = vadd.f32 %v2183, %v2223
        %v2225 = vpop.f32.mrb[0].mxu0
        %v2226 = vpop.f32.mrb[0].mxu0
        %2227 = vdwg.mxu0
        %2228 = vmatprep.subr.bf16.mxu0 %v1055
        %2229 = vmatpush1.bf16.msra.mxu0 %v1054
        %2230 = vmatprep.subr.bf16.mxu0 %v1057
        %2231 = vmatpush1.bf16.msra.mxu0 %v1056
        %2232 = vmatprep.subr.bf16.mxu0 %v1059
        %2233 = vmatpush1.bf16.msra.mxu0 %v1058
        %2234 = vmatprep.subr.bf16.mxu0 %v1061
        %2235 = vmatpush1.bf16.msra.mxu0 %v1060
        %2236 = vmatprep.subr.bf16.mxu0 %v1063
        %2237 = vmatpush1.bf16.msra.mxu0 %v1062
        %2238 = vmatprep.subr.bf16.mxu0 %v1065
        %2239 = vmatpush1.bf16.msra.mxu0 %v1064
        %2240 = vmatprep.subr.bf16.mxu0 %v1067
        %2241 = vmatpush1.bf16.msra.mxu0 %v1066
        %2242 = vmatprep.subr.bf16.mxu0 %v1069
        %2243 = vmatpush1.bf16.msra.mxu0 %v1068
        %2244 = vmatprep.subr.bf16.mxu0 0
        %2245 = vmatpush1.bf16.msra.mxu0 0
        %2246 = vmatprep.subr.bf16.mxu0 0
        %2247 = vmatpush1.bf16.msra.mxu0 0
        %2248 = vmatprep.subr.bf16.mxu0 0
        %2249 = vmatpush1.bf16.msra.mxu0 0
        %2250 = vmatprep.subr.bf16.mxu0 0
        %2251 = vmatpush1.bf16.msra.mxu0 0
        %2252 = vmatprep.subr.bf16.mxu0 0
        %2253 = vmatpush1.bf16.msra.mxu0 0
        %2254 = vmatprep.subr.bf16.mxu0 0
        %2255 = vmatpush1.bf16.msra.mxu0 0
        %2256 = vmatprep.subr.bf16.mxu0 0
        %2257 = vmatpush1.bf16.msra.mxu0 0
        %2258 = vmatprep.subr.bf16.mxu0 0
        %2259 = vmatpush1.bf16.msra.mxu0 0
        %2260 = vmatprep.mubr.bf16.mxu0 0
        %2261 = vmatmul.mubr.bf16.gmra.mrb[0].mxu0 %v2054
        %v2262 = vpop.f32.mrb[0].mxu0
        %v2263 = vadd.f32 %v2222, %v2262
        %v2264 = vpop.f32.mrb[0].mxu0
        %v2265 = vadd.f32 %v2224, %v2264
        %v2266 = vpop.f32.mrb[0].mxu0
        %v2267 = vpop.f32.mrb[0].mxu0
        %2268 = vdwg.mxu0
        %v2269 = vmax.f32 %v1985, %v2263
        %v2270 = vmax.f32 %v1986, %v2265
        %v2271 = vld [vmem:[%s2] sm:$0x3]
        %v2273 = vlaneseq
        %v2274 = vshrl.u32 %v2273, 7
        %v2275 = vsub.s32 0, %v2274
        %v2276 = vrot.slane %v2271, %v2275
        %v2277 = vlaneseq
        %v2278 = vshrl.u32 %v2277, 7
        %v2279 = vsub.s32 1, %v2278
        %v2280 = vrot.slane %v2271, %v2279
        %v2283 = vadd.f32 %v2269, %v2276
        %v2284 = vadd.f32 %v2270, %v2280
        %v2285 = vmax.f32 %v2283, 0.0
        %v2286 = vmax.f32 %v2284, 0.0
        %v2287 = vadd.f32 %v2285, 0.0
        %v2288 = vadd.f32 %v2286, 0.0
        %v2289 = vpack.c.bf16 %v2287, %v2287
        %v2290 = vpack.c.bf16 %v2288, %v2288
        %v2291 = vld [vmem:[%s3] sm:$0xf]
        %v2292 = vld [vmem:[%s3 + $0x4] sm:$0xf]
        %v2293 = vld [vmem:[%s3 + $0x8] sm:$0xf]
        %v2294 = vld [vmem:[%s3 + $0xc] sm:$0xf]
        %v2295 = vld [vmem:[%s3 + $0x10] sm:$0xf]
        %v2296 = vld [vmem:[%s3 + $0x14] sm:$0xf]
        %v2297 = vld [vmem:[%s3 + $0x18] sm:$0xf]
        %v2298 = vld [vmem:[%s3 + $0x1c] sm:$0xf]
        %v2299 = vld [vmem:[%s3 + $0x20] sm:$0xf]
        %v2300 = vld [vmem:[%s3 + $0x24] sm:$0xf]
        %v2301 = vld [vmem:[%s3 + $0x28] sm:$0xf]
        %v2302 = vld [vmem:[%s3 + $0x2c] sm:$0xf]
        %v2303 = vld [vmem:[%s3 + $0x30] sm:$0xf]
        %v2304 = vld [vmem:[%s3 + $0x34] sm:$0xf]
        %v2305 = vld [vmem:[%s3 + $0x38] sm:$0xf]
        %v2306 = vld [vmem:[%s3 + $0x3c] sm:$0xf]
        %v2307 = vld [vmem:[%s3 + $0x40] sm:$0xf]
        %v2308 = vld [vmem:[%s3 + $0x44] sm:$0xf]
        %v2309 = vld [vmem:[%s3 + $0x48] sm:$0xf]
        %v2310 = vld [vmem:[%s3 + $0x4c] sm:$0xf]
        %v2311 = vld [vmem:[%s3 + $0x50] sm:$0xf]
        %v2312 = vld [vmem:[%s3 + $0x54] sm:$0xf]
        %v2313 = vld [vmem:[%s3 + $0x58] sm:$0xf]
        %v2314 = vld [vmem:[%s3 + $0x5c] sm:$0xf]
        %v2315 = vld [vmem:[%s3 + $0x60] sm:$0xf]
        %v2316 = vld [vmem:[%s3 + $0x64] sm:$0xf]
        %v2317 = vld [vmem:[%s3 + $0x68] sm:$0xf]
        %v2318 = vld [vmem:[%s3 + $0x6c] sm:$0xf]
        %v2319 = vld [vmem:[%s3 + $0x70] sm:$0xf]
        %v2320 = vld [vmem:[%s3 + $0x74] sm:$0xf]
        %v2321 = vld [vmem:[%s3 + $0x78] sm:$0xf]
        %v2322 = vld [vmem:[%s3 + $0x7c] sm:$0xf]
        %v2323 = vld [vmem:[%s4] sm:$0x1]
        %v2356 = vunpack.c.l.b16 %v2291
        %v2357 = vunpack.c.l.b16 %v2292
        %v2358 = vunpack.c.l.b16 %v2293
        %v2359 = vunpack.c.l.b16 %v2294
        %v2360 = vunpack.c.l.b16 %v2295
        %v2361 = vunpack.c.l.b16 %v2296
        %v2362 = vunpack.c.l.b16 %v2297
        %v2363 = vunpack.c.l.b16 %v2298
        %v2364 = vunpack.c.l.b16 %v2299
        %v2365 = vunpack.c.l.b16 %v2300
        %v2366 = vunpack.c.l.b16 %v2301
        %v2367 = vunpack.c.l.b16 %v2302
        %v2368 = vunpack.c.l.b16 %v2303
        %v2369 = vunpack.c.l.b16 %v2304
        %v2370 = vunpack.c.l.b16 %v2305
        %v2371 = vunpack.c.l.b16 %v2306
        %v2372 = vunpack.c.l.b16 %v2307
        %v2373 = vunpack.c.l.b16 %v2308
        %v2374 = vunpack.c.l.b16 %v2309
        %v2375 = vunpack.c.l.b16 %v2310
        %v2376 = vunpack.c.l.b16 %v2311
        %v2377 = vunpack.c.l.b16 %v2312
        %v2378 = vunpack.c.l.b16 %v2313
        %v2379 = vunpack.c.l.b16 %v2314
        %v2380 = vunpack.c.l.b16 %v2315
        %v2381 = vunpack.c.l.b16 %v2316
        %v2382 = vunpack.c.l.b16 %v2317
        %v2383 = vunpack.c.l.b16 %v2318
        %v2384 = vunpack.c.l.b16 %v2319
        %v2385 = vunpack.c.l.b16 %v2320
        %v2386 = vunpack.c.l.b16 %v2321
        %v2387 = vunpack.c.l.b16 %v2322
        %v2388 = vpack.c.b16 %v2357, %v2356
        %v2389 = vpack.c.b16 %v2359, %v2358
        %v2390 = vpack.c.b16 %v2361, %v2360
        %v2391 = vpack.c.b16 %v2363, %v2362
        %v2392 = vpack.c.b16 %v2365, %v2364
        %v2393 = vpack.c.b16 %v2367, %v2366
        %v2394 = vpack.c.b16 %v2369, %v2368
        %v2395 = vpack.c.b16 %v2371, %v2370
        %v2396 = vpack.c.b16 %v2373, %v2372
        %v2397 = vpack.c.b16 %v2375, %v2374
        %v2398 = vpack.c.b16 %v2377, %v2376
        %v2399 = vpack.c.b16 %v2379, %v2378
        %v2400 = vpack.c.b16 %v2381, %v2380
        %v2401 = vpack.c.b16 %v2383, %v2382
        %v2402 = vpack.c.b16 %v2385, %v2384
        %v2403 = vpack.c.b16 %v2387, %v2386
        %2420 = vmatprep.subr.bf16.mxu0 0
        %2421 = vmatpush1.bf16.msra.mxu0 %v2388
        %2422 = vmatprep.subr.bf16.mxu0 0
        %2423 = vmatpush1.bf16.msra.mxu0 %v2389
        %2424 = vmatprep.subr.bf16.mxu0 0
        %2425 = vmatpush1.bf16.msra.mxu0 %v2390
        %2426 = vmatprep.subr.bf16.mxu0 0
        %2427 = vmatpush1.bf16.msra.mxu0 %v2391
        %2428 = vmatprep.subr.bf16.mxu0 0
        %2429 = vmatpush1.bf16.msra.mxu0 %v2392
        %2430 = vmatprep.subr.bf16.mxu0 0
        %2431 = vmatpush1.bf16.msra.mxu0 %v2393
        %2432 = vmatprep.subr.bf16.mxu0 0
        %2433 = vmatpush1.bf16.msra.mxu0 %v2394
        %2434 = vmatprep.subr.bf16.mxu0 0
        %2435 = vmatpush1.bf16.msra.mxu0 %v2395
        %2436 = vmatprep.subr.bf16.mxu0 0
        %2437 = vmatpush1.bf16.msra.mxu0 %v2396
        %2438 = vmatprep.subr.bf16.mxu0 0
        %2439 = vmatpush1.bf16.msra.mxu0 %v2397
        %2440 = vmatprep.subr.bf16.mxu0 0
        %2441 = vmatpush1.bf16.msra.mxu0 %v2398
        %2442 = vmatprep.subr.bf16.mxu0 0
        %2443 = vmatpush1.bf16.msra.mxu0 %v2399
        %2444 = vmatprep.subr.bf16.mxu0 0
        %2445 = vmatpush1.bf16.msra.mxu0 %v2400
        %2446 = vmatprep.subr.bf16.mxu0 0
        %2447 = vmatpush1.bf16.msra.mxu0 %v2401
        %2448 = vmatprep.subr.bf16.mxu0 0
        %2449 = vmatpush1.bf16.msra.mxu0 %v2402
        %2450 = vmatprep.subr.bf16.mxu0 0
        %2451 = vmatpush1.bf16.msra.mxu0 %v2403
        %2452 = vmatprep.mubr.bf16.mxu0 %v2290
        %2453 = vmatmul.mubr.bf16.gmra.mrb[0].mxu0 %v2289
        %v2454 = vpop.f32.mrb[0].mxu0
        %v2455 = vadd.f32 %v2323, %v2454
        %v2456 = vpop.f32.mrb[0].mxu0
        %v2457 = vpop.f32.mrb[0].mxu0
        %v2458 = vpop.f32.mrb[0].mxu0
        %2459 = vdwg.mxu0
        %v2460 = vpack.c.bf16 %v2455, %v2455
        %v2461 = vld [vmem:[%s5] sm:$0xf]
        %v2462 = vld [vmem:[%s5 + $0x4] sm:$0xf]
        %v2463 = vld [vmem:[%s5 + $0x8] sm:$0xf]
        %v2464 = vld [vmem:[%s5 + $0xc] sm:$0xf]
        %v2465 = vld [vmem:[%s5 + $0x10] sm:$0xf]
        %v2466 = vld [vmem:[%s5 + $0x14] sm:$0xf]
        %v2467 = vld [vmem:[%s5 + $0x18] sm:$0xf]
        %v2468 = vld [vmem:[%s5 + $0x1c] sm:$0xf]
        %v2469 = vld [vmem:[%s5 + $0x20] sm:$0xf]
        %v2470 = vld [vmem:[%s5 + $0x24] sm:$0xf]
        %v2471 = vld [vmem:[%s5 + $0x28] sm:$0xf]
        %v2472 = vld [vmem:[%s5 + $0x2c] sm:$0xf]
        %v2473 = vld [vmem:[%s5 + $0x30] sm:$0xf]
        %v2474 = vld [vmem:[%s5 + $0x34] sm:$0xf]
        %v2475 = vld [vmem:[%s5 + $0x38] sm:$0xf]
        %v2476 = vld [vmem:[%s5 + $0x3c] sm:$0xf]
        %v2477 = vld [vmem:[%s6] sm:$0x1]
        %v2494 = vunpack.c.l.b16 %v2461
        %v2495 = vunpack.c.l.b16 %v2462
        %v2496 = vunpack.c.l.b16 %v2463
        %v2497 = vunpack.c.l.b16 %v2464
        %v2498 = vunpack.c.l.b16 %v2465
        %v2499 = vunpack.c.l.b16 %v2466
        %v2500 = vunpack.c.l.b16 %v2467
        %v2501 = vunpack.c.l.b16 %v2468
        %v2502 = vunpack.c.l.b16 %v2469
        %v2503 = vunpack.c.l.b16 %v2470
        %v2504 = vunpack.c.l.b16 %v2471
        %v2505 = vunpack.c.l.b16 %v2472
        %v2506 = vunpack.c.l.b16 %v2473
        %v2507 = vunpack.c.l.b16 %v2474
        %v2508 = vunpack.c.l.b16 %v2475
        %v2509 = vunpack.c.l.b16 %v2476
        %v2510 = vpack.c.b16 %v2495, %v2494
        %v2511 = vpack.c.b16 %v2497, %v2496
        %v2512 = vpack.c.b16 %v2499, %v2498
        %v2513 = vpack.c.b16 %v2501, %v2500
        %v2514 = vpack.c.b16 %v2503, %v2502
        %v2515 = vpack.c.b16 %v2505, %v2504
        %v2516 = vpack.c.b16 %v2507, %v2506
        %v2517 = vpack.c.b16 %v2509, %v2508
        %2526 = vmatprep.subr.bf16.mxu0 0
        %2527 = vmatpush1.bf16.msra.mxu0 %v2510
        %2528 = vmatprep.subr.bf16.mxu0 0
        %2529 = vmatpush1.bf16.msra.mxu0 %v2511
        %2530 = vmatprep.subr.bf16.mxu0 0
        %2531 = vmatpush1.bf16.msra.mxu0 %v2512
        %2532 = vmatprep.subr.bf16.mxu0 0
        %2533 = vmatpush1.bf16.msra.mxu0 %v2513
        %2534 = vmatprep.subr.bf16.mxu0 0
        %2535 = vmatpush1.bf16.msra.mxu0 %v2514
        %2536 = vmatprep.subr.bf16.mxu0 0
        %2537 = vmatpush1.bf16.msra.mxu0 %v2515
        %2538 = vmatprep.subr.bf16.mxu0 0
        %2539 = vmatpush1.bf16.msra.mxu0 %v2516
        %2540 = vmatprep.subr.bf16.mxu0 0
        %2541 = vmatpush1.bf16.msra.mxu0 %v2517
        %2542 = vmatprep.subr.bf16.mxu0 0
        %2543 = vmatpush1.bf16.msra.mxu0 0
        %2544 = vmatprep.subr.bf16.mxu0 0
        %2545 = vmatpush1.bf16.msra.mxu0 0
        %2546 = vmatprep.subr.bf16.mxu0 0
        %2547 = vmatpush1.bf16.msra.mxu0 0
        %2548 = vmatprep.subr.bf16.mxu0 0
        %2549 = vmatpush1.bf16.msra.mxu0 0
        %2550 = vmatprep.subr.bf16.mxu0 0
        %2551 = vmatpush1.bf16.msra.mxu0 0
        %2552 = vmatprep.subr.bf16.mxu0 0
        %2553 = vmatpush1.bf16.msra.mxu0 0
        %2554 = vmatprep.subr.bf16.mxu0 0
        %2555 = vmatpush1.bf16.msra.mxu0 0
        %2556 = vmatprep.subr.bf16.mxu0 0
        %2557 = vmatpush1.bf16.msra.mxu0 0
        %2558 = vmatprep.mubr.bf16.mxu0 0
        %2559 = vmatmul.mubr.bf16.gmra.mrb[0].mxu0 %v2460
        %v2560 = vpop.f32.mrb[0].mxu0
        %v2561 = vadd.f32 %v2477, %v2560
        %v2562 = vpop.f32.mrb[0].mxu0
        %v2563 = vpop.f32.mrb[0].mxu0
        %v2564 = vpop.f32.mrb[0].mxu0
        %2565 = vdwg.mxu0
        %vm2566 = vcmask 40960
        %2567 = vst.msk [vmem:[%s268] sm:$0x1] %vm2566, %v2561
        %s2568 = sand.u32 %s181, 1
        %s2569 = scalar_lea.sflag [#allocation3], %s2568
        %s2570 = sand.u32 %s181, 1
        %s2571 = scalar_lea.vmem [#allocation2], %s2570
        // Predicated region
        $region49: #{medical_mnist_cnn_forward.7} parent=47 // pred_check
          %p2572 = pneg %p191
        $region50: #{medical_mnist_cnn_forward.7} parent=47 // pred_check_branch
          %2574 = sbr.rel (%p2572) target = $region52
        $region51: #{medical_mnist_cnn_forward.7} parent=47 // pred_region
          %s2576 = ssub.s32 16, 16
          %2577 = vsyncadd %s2569, %s2576
          %s2578 = smul.addr %s21, 16
          %s2579 = scalar_lea.hbm %s7, %s2578
          %s2581 = sshll.u32 %s2571, 4
          %s2582 = int_to_ptr.vmem [resolvable:$true] %s2581
          %2584 = dma.vmem_to_hbm [thread:$0]  %s2582, 16, %s2579, %s2569
        $region52: #{medical_mnist_cnn_forward.7} parent=47 // pred_fallthru
          _
      $region48: #{medical_mnist_cnn_forward.7} parent=5 // pred_fallthru
        _
      %p2585 = scmp.le.s32.totalorder 2, %s16
      // Predicated region
      $region53: #{medical_mnist_cnn_forward.7} parent=5 // pred_check
        %p2586 = pneg %p2585
      $region54: #{medical_mnist_cnn_forward.7} parent=5 // pred_check_branch
        %2588 = sbr.rel (%p2586) target = $region56
      $region55: #{medical_mnist_cnn_forward.7} parent=5 // pred_region
        %s2589 = ssub.s32 %s16, 2
        // Predicated region
        $region57: #{medical_mnist_cnn_forward.7} parent=55 // pred_check
          %p2590 = pneg %p197
        $region58: #{medical_mnist_cnn_forward.7} parent=55 // pred_check_branch
          %2592 = sbr.rel (%p2590) target = $region60
        $region59: #{medical_mnist_cnn_forward.7} parent=55 // pred_region
          %s2593 = sand.u32 %s182, 1
          %s2594 = scalar_lea.sflag [#allocation3], %s2593
          %s2595 = sand.u32 %s182, 1
          %s2596 = scalar_lea.vmem [#allocation2], %s2595
          %2597 = dma.done %s2594, 16
        $region60: #{medical_mnist_cnn_forward.7} parent=55 // pred_fallthru
          _
      $region56: #{medical_mnist_cnn_forward.7} parent=5 // pred_fallthru
        _
    $region6: #{medical_mnist_cnn_forward.7} parent=1 // loop_footer
      %s20 = sadd.s32 1, %s16
    $region7: #{medical_mnist_cnn_forward.7} parent=1 // loop_footer_branch
      %15 = sbr.rel target = $region3
    $region8: #{medical_mnist_cnn_forward.7} parent=1 // loop_exit
      _
    %2598 = vsyncpa [#allocation3], 1
    %s2599 = scalar_lea.sflag [#allocation3], 1
    %2600 = vsyncpa %s2599, 1

</llo_original>
